<compile_context>
chip_gen: v5e
topology: v5e:2x2
jax: 0.10.0
libtpu: 0.0.40
codegen_flags: <defaults>
</compile_context>

<pallas_src>
import math
import functools

import jax
import jax.numpy as jnp
from jax import lax
from jax.experimental import pallas as pl
from jax.experimental.pallas import tpu as pltpu


# ---------------------------------------------------------------------------
# Fused 3x3x3 conv (stride 1, pad 1, no bias) + folded BN + (residual) + ReLU
# ---------------------------------------------------------------------------

def _make_conv_kernel(Cout, M, offsets, res_off, add_residual):
    """Kernel body: 27 shifted matmuls over the padded, flattened volume.

    x_ref : (1, Cin, PF)    bf16  zero-padded channels-first flat volume
    w_ref : (27, Cout, Cin) bf16  BN-scale-folded weights, tap-major
    b_ref : (Cout, 1)       f32   folded BN bias
    r_ref : (1, Cout, PF)   bf16  (optional) padded residual volume
    o_ref : (1, Cout, M)          over-complete output; wrapper strips h>=H,
                                  w>=W garbage rows
    """
    def kernel(*refs):
        if add_residual:
            x_ref, w_ref, b_ref, r_ref, o_ref = refs
        else:
            x_ref, w_ref, b_ref, o_ref = refs
            r_ref = None

        # 27 MXU matmuls with K = Cin, f32 accumulation.  Tap windows are
        # static lane-offset slices of the padded volume; fully unrolled.
        acc = jnp.zeros((Cout, M), dtype=jnp.float32)
        for t, off in enumerate(offsets):
            acc = acc + jnp.dot(w_ref[t], x_ref[0, :, off:off + M],
                                preferred_element_type=jnp.float32)

        y = acc + b_ref[...]                              # folded BN bias
        if r_ref is not None:                             # residual window
            y = y + r_ref[0, :, res_off:res_off + M].astype(jnp.float32)
        y = jnp.maximum(y, 0.0)                           # ReLU
        o_ref[0, :, :] = y.astype(o_ref.dtype)            # one lane-dense store

    return kernel


def _tile_bytes(block_shape, dtype):
    """VMEM bytes of one block after (sublane, lane) tile padding."""
    itemsize = jnp.dtype(dtype).itemsize
    sub = max(1, 32 // itemsize)
    dims = list(block_shape)
    if len(dims) >= 1:
        dims[-1] = -(-dims[-1] // 128) * 128
    if len(dims) >= 2:
        dims[-2] = -(-dims[-2] // sub) * sub
    n = 1
    for d in dims:
        n *= d
    return n * itemsize


def pad_flatten_ncdhw(x):
    """(N, C, D, H, W) -> (N, C, PF) zero-padded channels-first flat volume.

    PF = (D+2)*(H+2)*(W+2) + 2*(W+2) + 2; the small tail covers the halo
    over-read by the (stripped) garbage positions of the last depth slice.
    """
    N, C, D, H, W = x.shape
    S1, S2 = W + 2, (H + 2) * (W + 2)
    xp = jnp.pad(x, ((0, 0), (0, 0), (1, 1), (1, 1), (1, 1)))
    xp = xp.reshape(N, C, (D + 2) * S2)
    return jnp.pad(xp, ((0, 0), (0, 0), (0, 2 * S1 + 2)))


def conv3x3x3_bn_relu(x_flat, w27, bias, D, H, W, residual=None,
                      out_dtype=jnp.bfloat16):
    """Fused 3x3x3 conv + folded BN + optional residual + ReLU.

    x_flat   : (N, Cin, PF)  bf16   from pad_flatten_ncdhw
    w27      : (27, Cout, Cin) bf16 scale-folded, tap-major (kd, kh, kw)
    bias     : (Cout,) f32          folded BN bias
    residual : optional (N, Cout, PF) bf16 padded residual volume
    returns  : (N, Cout, D*(H+2)*(W+2)) over-complete result (channels-first)
    """
    N, Cin, PF = x_flat.shape
    S1, S2 = W + 2, (H + 2) * (W + 2)
    assert PF == (D + 2) * S2 + 2 * S1 + 2
    M = D * S2
    Cout = w27.shape[1]
    assert w27.shape == (27, Cout, Cin)

    offsets = [kd * S2 + kh * S1 + kw
               for kd in range(3) for kh in range(3) for kw in range(3)]
    res_off = S2 + S1 + 1          # padded-flat position of voxel (d, h, w)
    bias2 = bias.reshape(Cout, 1).astype(jnp.float32)

    in_specs = [
        pl.BlockSpec((1, Cin, PF), lambda n: (n, 0, 0)),
        pl.BlockSpec((27, Cout, Cin), lambda n: (0, 0, 0)),
        pl.BlockSpec((Cout, 1), lambda n: (0, 0)),
    ]
    args = [x_flat, w27, bias2]
    add_residual = residual is not None
    if add_residual:
        assert residual.shape == (N, Cout, PF)
        in_specs.append(pl.BlockSpec((1, Cout, PF), lambda n: (n, 0, 0)))
        args.append(residual.astype(jnp.bfloat16))

    # --- per-grid-step VMEM accounting: all double-buffered blocks + work ---
    need = 2 * (_tile_bytes((1, Cin, PF), jnp.bfloat16)
                + _tile_bytes((27, Cout, Cin), jnp.bfloat16)
                + _tile_bytes((Cout, 1), jnp.float32)
                + (_tile_bytes((1, Cout, PF), jnp.bfloat16) if add_residual else 0)
                + _tile_bytes((1, Cout, M), out_dtype))
    need += 4 * _tile_bytes((Cout, M), jnp.float32)     # f32 acc + temporaries
    need += 2 * 1024 * 1024                              # margin
    # TODO(synk): for volumes where `need` exceeds the v7x budget, switch to
    #   depth-slab manual DMA (pl.ANY + pltpu.make_async_copy double buffer)
    #   instead of whole-sample blocks.
    assert need <= 48 * 1024 * 1024, (
        f"per-step VMEM estimate {need >> 20} MiB exceeds the v7x-safe budget;"
        " depth-slab tiling is required for this volume size")
    vmem_limit = int(min(max(need, 32 * 1024 * 1024), 96 * 1024 * 1024))

    kernel = _make_conv_kernel(Cout, M, offsets, res_off, add_residual)
    # TODO(synk): for N == 1 add a second "parallel" grid axis over M-chunks
    #   so both v7x TensorCores are used.
    return pl.pallas_call(
        kernel,
        out_shape=jax.ShapeDtypeStruct((N, Cout, M), out_dtype),
        grid=(N,),
        in_specs=in_specs,
        out_specs=pl.BlockSpec((1, Cout, M), lambda n: (n, 0, 0)),
        compiler_params=pltpu.CompilerParams(
            dimension_semantics=("parallel",),
            vmem_limit_bytes=vmem_limit),
    )(*args)


# ---------------------------------------------------------------------------
# BasicBlock module
# ---------------------------------------------------------------------------

class BasicBlockPallas:
    """JAX/Pallas port of the PyTorch 3D-ResNet BasicBlock forward (eval BN)."""
    expansion = 1

    def __init__(self, inplanes, planes, key, eps=1e-5):
        # TODO(synk): stride > 1 and the optional `downsample` branch are not
        #   implemented (module defaults stride=1, downsample=None are used).
        # TODO(synk): training-mode BatchNorm (batch statistics) is not
        #   implemented; eval-mode running stats are folded into the weights.
        assert inplanes == planes, "identity residual needs inplanes == planes"
        ks = jax.random.split(key, 10)
        fan1, fan2 = 27 * inplanes, 27 * planes
        # conv weights in PyTorch OIDHW layout
        w1 = jax.random.normal(ks[0], (planes, inplanes, 3, 3, 3),
                               jnp.float32) * math.sqrt(2.0 / fan1)
        w2 = jax.random.normal(ks[1], (planes, planes, 3, 3, 3),
                               jnp.float32) * math.sqrt(2.0 / fan2)
        # BatchNorm3d params / running stats (deterministic, non-trivial)
        g1 = 1.0 + 0.1 * jax.random.normal(ks[2], (planes,), jnp.float32)
        b1 = 0.1 * jax.random.normal(ks[3], (planes,), jnp.float32)
        m1 = 0.1 * jax.random.normal(ks[4], (planes,), jnp.float32)
        v1 = jax.random.uniform(ks[5], (planes,), jnp.float32, 0.5, 1.5)
        g2 = 1.0 + 0.1 * jax.random.normal(ks[6], (planes,), jnp.float32)
        b2 = 0.1 * jax.random.normal(ks[7], (planes,), jnp.float32)
        m2 = 0.1 * jax.random.normal(ks[8], (planes,), jnp.float32)
        v2 = jax.random.uniform(ks[9], (planes,), jnp.float32, 0.5, 1.5)
        # fold eval-mode BN: y = s*conv(x) + (beta - s*mean), s = g/sqrt(v+eps)
        s1 = g1 / jnp.sqrt(v1 + eps)
        s2 = g2 / jnp.sqrt(v2 + eps)
        self.bias1 = b1 - m1 * s1
        self.bias2 = b2 - m2 * s2
        # BN scale folded into conv weights (f32), then cast to bf16 MXU operands.
        w1f = w1 * s1[:, None, None, None, None]
        w2f = w2 * s2[:, None, None, None, None]
        self.w1_bf16 = w1f.astype(jnp.bfloat16)          # OIDHW, for reference
        self.w2_bf16 = w2f.astype(jnp.bfloat16)
        # tap-major (kd, kh, kw) x (Cout, Cin) for the 27 shifted matmuls.
        # TODO(synk): for Cin >= 128, an in-kernel kw-grouped K=3*Cin operand
        #   would better fill the MXU contraction depth (128 on v5e, 256 on
        #   v6e/v7x); with K=Cin it is left unaligned.
        self.w27_1 = jnp.transpose(self.w1_bf16, (2, 3, 4, 0, 1)).reshape(
            27, planes, inplanes)
        self.w27_2 = jnp.transpose(self.w2_bf16, (2, 3, 4, 0, 1)).reshape(
            27, planes, planes)
        self.planes = planes

    def __call__(self, x_ncdhw):
        N, C, D, H, W = x_ncdhw.shape
        # One zero-padded bf16 copy of the input: conv1's input volume and
        # (window at offset S2+S1+1) conv2's residual.
        xpad = pad_flatten_ncdhw(x_ncdhw.astype(jnp.bfloat16))
        # conv1 -> bn1 -> relu   (bf16 inter-layer activation)
        h1 = conv3x3x3_bn_relu(xpad, self.w27_1, self.bias1, D, H, W,
                               out_dtype=jnp.bfloat16)
        # strip over-complete h/w rows and re-pad for conv2.
        # TODO(synk): fuse conv1+conv2 into one kernel (h1 resident in VMEM
        #   with a 1-slice depth halo) to drop this HBM round trip.
        h1 = h1.reshape(N, self.planes, D, H + 2, W + 2)[:, :, :, :H, :W]
        h1pad = pad_flatten_ncdhw(h1)
        # conv2 -> bn2 -> (+residual) -> relu
        # (residual added from the bf16 padded x, matching the bf16 conv inputs)
        out = conv3x3x3_bn_relu(h1pad, self.w27_2, self.bias2, D, H, W,
                                residual=xpad, out_dtype=jnp.float32)
        out = out.reshape(N, self.planes, D, H + 2, W + 2)[:, :, :, :H, :W]
        return out                                   # NCDHW f32, like PyTorch


# ---------------------------------------------------------------------------
# Pure-JAX reference (lax.conv) mirroring the kernel's bf16/f32 strategy
# ---------------------------------------------------------------------------

def _reference_forward(x_ncdhw, blk):
    x = x_ncdhw.astype(jnp.bfloat16)
    conv = functools.partial(
        lax.conv_general_dilated,
        window_strides=(1, 1, 1), padding="SAME",
        dimension_numbers=("NCDHW", "OIDHW", "NCDHW"),
        preferred_element_type=jnp.float32)
    b1 = blk.bias1[None, :, None, None, None]
    b2 = blk.bias2[None, :, None, None, None]
    o = jnp.maximum(conv(x, blk.w1_bf16) + b1, 0.0).astype(jnp.bfloat16)
    o = conv(o, blk.w2_bf16) + b2 + x.astype(jnp.float32)
    return jnp.maximum(o, 0.0)


if __name__ == "__main__":
    N, C, D, H, W = 2, 4, 8, 8, 8          # small shapes: batch=2, channels=4
    key = jax.random.PRNGKey(0)
    kparam, kx = jax.random.split(key)

    block = BasicBlockPallas(inplanes=C, planes=C, key=kparam)
    x = jax.random.normal(kx, (N, C, D, H, W), jnp.float32)   # NCDHW (PyTorch)

    fwd = jax.jit(block.__call__)
    out = jax.block_until_ready(fwd(x))
    ref = jax.block_until_ready(_reference_forward(x, block))

    assert out.shape == (N, C, D, H, W), out.shape
    max_err = float(jnp.max(jnp.abs(out - ref)))
    assert max_err < 2e-2, f"mismatch vs reference: max abs err = {max_err}"
    print("KERNEL_OK")
</pallas_src>

<mosaic_0001>
module attributes {stable_mosaic.version = 11 : i64} {
  func.func @kernel(%arg0: i32, %arg1: memref<1x4x1022xbf16, #tpu.memory_space<vmem>>, %arg2: memref<27x4x4xbf16, #tpu.memory_space<vmem>>, %arg3: memref<4x1xf32, #tpu.memory_space<vmem>>, %arg4: memref<1x4x800xbf16, #tpu.memory_space<vmem>>) attributes {dimension_semantics = [#tpu.dimension_semantics<parallel>], iteration_bounds = array<i64: 2>, scalar_prefetch = 0 : i64, scratch_operands = 0 : i64, tpu.core_type = #tpu.core_type<tc>, window_params = [{transform_indices = @transform_0, window_bounds = array<i64: 1, 4, 1022>}, {pipeline_mode = #tpu.pipeline_mode<synchronous>, transform_indices = @transform_1, window_bounds = array<i64: 27, 4, 4>}, {pipeline_mode = #tpu.pipeline_mode<synchronous>, transform_indices = @transform_2, window_bounds = array<i64: 4, 1>}, {transform_indices = @transform_3, window_bounds = array<i64: 1, 4, 800>}]} {
    %cst = arith.constant 0.000000e+00 : f32
    %0 = vector.broadcast %cst : f32 to vector<4x800xf32>
    %c0 = arith.constant 0 : index
    %c0_0 = arith.constant 0 : index
    %c0_1 = arith.constant 0 : index
    %1 = vector.load %arg2[%c0, %c0_0, %c0_1] : memref<27x4x4xbf16, #tpu.memory_space<vmem>>, vector<1x4x4xbf16>
    %2 = vector.shape_cast %1 : vector<1x4x4xbf16> to vector<4x4xbf16>
    %c0_2 = arith.constant 0 : index
    %c0_3 = arith.constant 0 : index
    %c0_4 = arith.constant 0 : index
    %3 = vector.load %arg1[%c0_2, %c0_3, %c0_4] : memref<1x4x1022xbf16, #tpu.memory_space<vmem>>, vector<1x4x800xbf16>
    %4 = vector.shape_cast %3 : vector<1x4x800xbf16> to vector<4x800xbf16>
    %cst_5 = arith.constant dense<0.000000e+00> : vector<4x800xf32>
    %5 = tpu.matmul %2, %4, %cst_5 {dimension_numbers = #tpu.dot_dimension_numbers<[1], [0], [0], [1], [0, 0, 1, 1], [], []>} : vector<4x4xbf16>, vector<4x800xbf16>, vector<4x800xf32> -> vector<4x800xf32>
    %6 = arith.addf %0, %5 : vector<4x800xf32>
    %c1 = arith.constant 1 : index
    %c0_6 = arith.constant 0 : index
    %c0_7 = arith.constant 0 : index
    %7 = vector.load %arg2[%c1, %c0_6, %c0_7] : memref<27x4x4xbf16, #tpu.memory_space<vmem>>, vector<1x4x4xbf16>
    %8 = vector.shape_cast %7 : vector<1x4x4xbf16> to vector<4x4xbf16>
    %c0_8 = arith.constant 0 : index
    %c0_9 = arith.constant 0 : index
    %c1_10 = arith.constant 1 : index
    %9 = vector.load %arg1[%c0_8, %c0_9, %c1_10] : memref<1x4x1022xbf16, #tpu.memory_space<vmem>>, vector<1x4x800xbf16>
    %10 = vector.shape_cast %9 : vector<1x4x800xbf16> to vector<4x800xbf16>
    %cst_11 = arith.constant dense<0.000000e+00> : vector<4x800xf32>
    %11 = tpu.matmul %8, %10, %cst_11 {dimension_numbers = #tpu.dot_dimension_numbers<[1], [0], [0], [1], [0, 0, 1, 1], [], []>} : vector<4x4xbf16>, vector<4x800xbf16>, vector<4x800xf32> -> vector<4x800xf32>
    %12 = arith.addf %6, %11 : vector<4x800xf32>
    %c2 = arith.constant 2 : index
    %c0_12 = arith.constant 0 : index
    %c0_13 = arith.constant 0 : index
    %13 = vector.load %arg2[%c2, %c0_12, %c0_13] : memref<27x4x4xbf16, #tpu.memory_space<vmem>>, vector<1x4x4xbf16>
    %14 = vector.shape_cast %13 : vector<1x4x4xbf16> to vector<4x4xbf16>
    %c0_14 = arith.constant 0 : index
    %c0_15 = arith.constant 0 : index
    %c2_16 = arith.constant 2 : index
    %15 = vector.load %arg1[%c0_14, %c0_15, %c2_16] : memref<1x4x1022xbf16, #tpu.memory_space<vmem>>, vector<1x4x800xbf16>
    %16 = vector.shape_cast %15 : vector<1x4x800xbf16> to vector<4x800xbf16>
    %cst_17 = arith.constant dense<0.000000e+00> : vector<4x800xf32>
    %17 = tpu.matmul %14, %16, %cst_17 {dimension_numbers = #tpu.dot_dimension_numbers<[1], [0], [0], [1], [0, 0, 1, 1], [], []>} : vector<4x4xbf16>, vector<4x800xbf16>, vector<4x800xf32> -> vector<4x800xf32>
    %18 = arith.addf %12, %17 : vector<4x800xf32>
    %c3 = arith.constant 3 : index
    %c0_18 = arith.constant 0 : index
    %c0_19 = arith.constant 0 : index
    %19 = vector.load %arg2[%c3, %c0_18, %c0_19] : memref<27x4x4xbf16, #tpu.memory_space<vmem>>, vector<1x4x4xbf16>
    %20 = vector.shape_cast %19 : vector<1x4x4xbf16> to vector<4x4xbf16>
    %c0_20 = arith.constant 0 : index
    %c0_21 = arith.constant 0 : index
    %c10 = arith.constant 10 : index
    %21 = vector.load %arg1[%c0_20, %c0_21, %c10] : memref<1x4x1022xbf16, #tpu.memory_space<vmem>>, vector<1x4x800xbf16>
    %22 = vector.shape_cast %21 : vector<1x4x800xbf16> to vector<4x800xbf16>
    %cst_22 = arith.constant dense<0.000000e+00> : vector<4x800xf32>
    %23 = tpu.matmul %20, %22, %cst_22 {dimension_numbers = #tpu.dot_dimension_numbers<[1], [0], [0], [1], [0, 0, 1, 1], [], []>} : vector<4x4xbf16>, vector<4x800xbf16>, vector<4x800xf32> -> vector<4x800xf32>
    %24 = arith.addf %18, %23 : vector<4x800xf32>
    %c4 = arith.constant 4 : index
    %c0_23 = arith.constant 0 : index
    %c0_24 = arith.constant 0 : index
    %25 = vector.load %arg2[%c4, %c0_23, %c0_24] : memref<27x4x4xbf16, #tpu.memory_space<vmem>>, vector<1x4x4xbf16>
    %26 = vector.shape_cast %25 : vector<1x4x4xbf16> to vector<4x4xbf16>
    %c0_25 = arith.constant 0 : index
    %c0_26 = arith.constant 0 : index
    %c11 = arith.constant 11 : index
    %27 = vector.load %arg1[%c0_25, %c0_26, %c11] : memref<1x4x1022xbf16, #tpu.memory_space<vmem>>, vector<1x4x800xbf16>
    %28 = vector.shape_cast %27 : vector<1x4x800xbf16> to vector<4x800xbf16>
    %cst_27 = arith.constant dense<0.000000e+00> : vector<4x800xf32>
    %29 = tpu.matmul %26, %28, %cst_27 {dimension_numbers = #tpu.dot_dimension_numbers<[1], [0], [0], [1], [0, 0, 1, 1], [], []>} : vector<4x4xbf16>, vector<4x800xbf16>, vector<4x800xf32> -> vector<4x800xf32>
    %30 = arith.addf %24, %29 : vector<4x800xf32>
    %c5 = arith.constant 5 : index
    %c0_28 = arith.constant 0 : index
    %c0_29 = arith.constant 0 : index
    %31 = vector.load %arg2[%c5, %c0_28, %c0_29] : memref<27x4x4xbf16, #tpu.memory_space<vmem>>, vector<1x4x4xbf16>
    %32 = vector.shape_cast %31 : vector<1x4x4xbf16> to vector<4x4xbf16>
    %c0_30 = arith.constant 0 : index
    %c0_31 = arith.constant 0 : index
    %c12 = arith.constant 12 : index
    %33 = vector.load %arg1[%c0_30, %c0_31, %c12] : memref<1x4x1022xbf16, #tpu.memory_space<vmem>>, vector<1x4x800xbf16>
    %34 = vector.shape_cast %33 : vector<1x4x800xbf16> to vector<4x800xbf16>
    %cst_32 = arith.constant dense<0.000000e+00> : vector<4x800xf32>
    %35 = tpu.matmul %32, %34, %cst_32 {dimension_numbers = #tpu.dot_dimension_numbers<[1], [0], [0], [1], [0, 0, 1, 1], [], []>} : vector<4x4xbf16>, vector<4x800xbf16>, vector<4x800xf32> -> vector<4x800xf32>
    %36 = arith.addf %30, %35 : vector<4x800xf32>
    %c6 = arith.constant 6 : index
    %c0_33 = arith.constant 0 : index
    %c0_34 = arith.constant 0 : index
    %37 = vector.load %arg2[%c6, %c0_33, %c0_34] : memref<27x4x4xbf16, #tpu.memory_space<vmem>>, vector<1x4x4xbf16>
    %38 = vector.shape_cast %37 : vector<1x4x4xbf16> to vector<4x4xbf16>
    %c0_35 = arith.constant 0 : index
    %c0_36 = arith.constant 0 : index
    %c20 = arith.constant 20 : index
    %39 = vector.load %arg1[%c0_35, %c0_36, %c20] : memref<1x4x1022xbf16, #tpu.memory_space<vmem>>, vector<1x4x800xbf16>
    %40 = vector.shape_cast %39 : vector<1x4x800xbf16> to vector<4x800xbf16>
    %cst_37 = arith.constant dense<0.000000e+00> : vector<4x800xf32>
    %41 = tpu.matmul %38, %40, %cst_37 {dimension_numbers = #tpu.dot_dimension_numbers<[1], [0], [0], [1], [0, 0, 1, 1], [], []>} : vector<4x4xbf16>, vector<4x800xbf16>, vector<4x800xf32> -> vector<4x800xf32>
    %42 = arith.addf %36, %41 : vector<4x800xf32>
    %c7 = arith.constant 7 : index
    %c0_38 = arith.constant 0 : index
    %c0_39 = arith.constant 0 : index
    %43 = vector.load %arg2[%c7, %c0_38, %c0_39] : memref<27x4x4xbf16, #tpu.memory_space<vmem>>, vector<1x4x4xbf16>
    %44 = vector.shape_cast %43 : vector<1x4x4xbf16> to vector<4x4xbf16>
    %c0_40 = arith.constant 0 : index
    %c0_41 = arith.constant 0 : index
    %c21 = arith.constant 21 : index
    %45 = vector.load %arg1[%c0_40, %c0_41, %c21] : memref<1x4x1022xbf16, #tpu.memory_space<vmem>>, vector<1x4x800xbf16>
    %46 = vector.shape_cast %45 : vector<1x4x800xbf16> to vector<4x800xbf16>
    %cst_42 = arith.constant dense<0.000000e+00> : vector<4x800xf32>
    %47 = tpu.matmul %44, %46, %cst_42 {dimension_numbers = #tpu.dot_dimension_numbers<[1], [0], [0], [1], [0, 0, 1, 1], [], []>} : vector<4x4xbf16>, vector<4x800xbf16>, vector<4x800xf32> -> vector<4x800xf32>
    %48 = arith.addf %42, %47 : vector<4x800xf32>
    %c8 = arith.constant 8 : index
    %c0_43 = arith.constant 0 : index
    %c0_44 = arith.constant 0 : index
    %49 = vector.load %arg2[%c8, %c0_43, %c0_44] : memref<27x4x4xbf16, #tpu.memory_space<vmem>>, vector<1x4x4xbf16>
    %50 = vector.shape_cast %49 : vector<1x4x4xbf16> to vector<4x4xbf16>
    %c0_45 = arith.constant 0 : index
    %c0_46 = arith.constant 0 : index
    %c22 = arith.constant 22 : index
    %51 = vector.load %arg1[%c0_45, %c0_46, %c22] : memref<1x4x1022xbf16, #tpu.memory_space<vmem>>, vector<1x4x800xbf16>
    %52 = vector.shape_cast %51 : vector<1x4x800xbf16> to vector<4x800xbf16>
    %cst_47 = arith.constant dense<0.000000e+00> : vector<4x800xf32>
    %53 = tpu.matmul %50, %52, %cst_47 {dimension_numbers = #tpu.dot_dimension_numbers<[1], [0], [0], [1], [0, 0, 1, 1], [], []>} : vector<4x4xbf16>, vector<4x800xbf16>, vector<4x800xf32> -> vector<4x800xf32>
    %54 = arith.addf %48, %53 : vector<4x800xf32>
    %c9 = arith.constant 9 : index
    %c0_48 = arith.constant 0 : index
    %c0_49 = arith.constant 0 : index
    %55 = vector.load %arg2[%c9, %c0_48, %c0_49] : memref<27x4x4xbf16, #tpu.memory_space<vmem>>, vector<1x4x4xbf16>
    %56 = vector.shape_cast %55 : vector<1x4x4xbf16> to vector<4x4xbf16>
    %c0_50 = arith.constant 0 : index
    %c0_51 = arith.constant 0 : index
    %c100 = arith.constant 100 : index
    %57 = vector.load %arg1[%c0_50, %c0_51, %c100] : memref<1x4x1022xbf16, #tpu.memory_space<vmem>>, vector<1x4x800xbf16>
    %58 = vector.shape_cast %57 : vector<1x4x800xbf16> to vector<4x800xbf16>
    %cst_52 = arith.constant dense<0.000000e+00> : vector<4x800xf32>
    %59 = tpu.matmul %56, %58, %cst_52 {dimension_numbers = #tpu.dot_dimension_numbers<[1], [0], [0], [1], [0, 0, 1, 1], [], []>} : vector<4x4xbf16>, vector<4x800xbf16>, vector<4x800xf32> -> vector<4x800xf32>
    %60 = arith.addf %54, %59 : vector<4x800xf32>
    %c10_53 = arith.constant 10 : index
    %c0_54 = arith.constant 0 : index
    %c0_55 = arith.constant 0 : index
    %61 = vector.load %arg2[%c10_53, %c0_54, %c0_55] : memref<27x4x4xbf16, #tpu.memory_space<vmem>>, vector<1x4x4xbf16>
    %62 = vector.shape_cast %61 : vector<1x4x4xbf16> to vector<4x4xbf16>
    %c0_56 = arith.constant 0 : index
    %c0_57 = arith.constant 0 : index
    %c101 = arith.constant 101 : index
    %63 = vector.load %arg1[%c0_56, %c0_57, %c101] : memref<1x4x1022xbf16, #tpu.memory_space<vmem>>, vector<1x4x800xbf16>
    %64 = vector.shape_cast %63 : vector<1x4x800xbf16> to vector<4x800xbf16>
    %cst_58 = arith.constant dense<0.000000e+00> : vector<4x800xf32>
    %65 = tpu.matmul %62, %64, %cst_58 {dimension_numbers = #tpu.dot_dimension_numbers<[1], [0], [0], [1], [0, 0, 1, 1], [], []>} : vector<4x4xbf16>, vector<4x800xbf16>, vector<4x800xf32> -> vector<4x800xf32>
    %66 = arith.addf %60, %65 : vector<4x800xf32>
    %c11_59 = arith.constant 11 : index
    %c0_60 = arith.constant 0 : index
    %c0_61 = arith.constant 0 : index
    %67 = vector.load %arg2[%c11_59, %c0_60, %c0_61] : memref<27x4x4xbf16, #tpu.memory_space<vmem>>, vector<1x4x4xbf16>
    %68 = vector.shape_cast %67 : vector<1x4x4xbf16> to vector<4x4xbf16>
    %c0_62 = arith.constant 0 : index
    %c0_63 = arith.constant 0 : index
    %c102 = arith.constant 102 : index
    %69 = vector.load %arg1[%c0_62, %c0_63, %c102] : memref<1x4x1022xbf16, #tpu.memory_space<vmem>>, vector<1x4x800xbf16>
    %70 = vector.shape_cast %69 : vector<1x4x800xbf16> to vector<4x800xbf16>
    %cst_64 = arith.constant dense<0.000000e+00> : vector<4x800xf32>
    %71 = tpu.matmul %68, %70, %cst_64 {dimension_numbers = #tpu.dot_dimension_numbers<[1], [0], [0], [1], [0, 0, 1, 1], [], []>} : vector<4x4xbf16>, vector<4x800xbf16>, vector<4x800xf32> -> vector<4x800xf32>
    %72 = arith.addf %66, %71 : vector<4x800xf32>
    %c12_65 = arith.constant 12 : index
    %c0_66 = arith.constant 0 : index
    %c0_67 = arith.constant 0 : index
    %73 = vector.load %arg2[%c12_65, %c0_66, %c0_67] : memref<27x4x4xbf16, #tpu.memory_space<vmem>>, vector<1x4x4xbf16>
    %74 = vector.shape_cast %73 : vector<1x4x4xbf16> to vector<4x4xbf16>
    %c0_68 = arith.constant 0 : index
    %c0_69 = arith.constant 0 : index
    %c110 = arith.constant 110 : index
    %75 = vector.load %arg1[%c0_68, %c0_69, %c110] : memref<1x4x1022xbf16, #tpu.memory_space<vmem>>, vector<1x4x800xbf16>
    %76 = vector.shape_cast %75 : vector<1x4x800xbf16> to vector<4x800xbf16>
    %cst_70 = arith.constant dense<0.000000e+00> : vector<4x800xf32>
    %77 = tpu.matmul %74, %76, %cst_70 {dimension_numbers = #tpu.dot_dimension_numbers<[1], [0], [0], [1], [0, 0, 1, 1], [], []>} : vector<4x4xbf16>, vector<4x800xbf16>, vector<4x800xf32> -> vector<4x800xf32>
    %78 = arith.addf %72, %77 : vector<4x800xf32>
    %c13 = arith.constant 13 : index
    %c0_71 = arith.constant 0 : index
    %c0_72 = arith.constant 0 : index
    %79 = vector.load %arg2[%c13, %c0_71, %c0_72] : memref<27x4x4xbf16, #tpu.memory_space<vmem>>, vector<1x4x4xbf16>
    %80 = vector.shape_cast %79 : vector<1x4x4xbf16> to vector<4x4xbf16>
    %c0_73 = arith.constant 0 : index
    %c0_74 = arith.constant 0 : index
    %c111 = arith.constant 111 : index
    %81 = vector.load %arg1[%c0_73, %c0_74, %c111] : memref<1x4x1022xbf16, #tpu.memory_space<vmem>>, vector<1x4x800xbf16>
    %82 = vector.shape_cast %81 : vector<1x4x800xbf16> to vector<4x800xbf16>
    %cst_75 = arith.constant dense<0.000000e+00> : vector<4x800xf32>
    %83 = tpu.matmul %80, %82, %cst_75 {dimension_numbers = #tpu.dot_dimension_numbers<[1], [0], [0], [1], [0, 0, 1, 1], [], []>} : vector<4x4xbf16>, vector<4x800xbf16>, vector<4x800xf32> -> vector<4x800xf32>
    %84 = arith.addf %78, %83 : vector<4x800xf32>
    %c14 = arith.constant 14 : index
    %c0_76 = arith.constant 0 : index
    %c0_77 = arith.constant 0 : index
    %85 = vector.load %arg2[%c14, %c0_76, %c0_77] : memref<27x4x4xbf16, #tpu.memory_space<vmem>>, vector<1x4x4xbf16>
    %86 = vector.shape_cast %85 : vector<1x4x4xbf16> to vector<4x4xbf16>
    %c0_78 = arith.constant 0 : index
    %c0_79 = arith.constant 0 : index
    %c112 = arith.constant 112 : index
    %87 = vector.load %arg1[%c0_78, %c0_79, %c112] : memref<1x4x1022xbf16, #tpu.memory_space<vmem>>, vector<1x4x800xbf16>
    %88 = vector.shape_cast %87 : vector<1x4x800xbf16> to vector<4x800xbf16>
    %cst_80 = arith.constant dense<0.000000e+00> : vector<4x800xf32>
    %89 = tpu.matmul %86, %88, %cst_80 {dimension_numbers = #tpu.dot_dimension_numbers<[1], [0], [0], [1], [0, 0, 1, 1], [], []>} : vector<4x4xbf16>, vector<4x800xbf16>, vector<4x800xf32> -> vector<4x800xf32>
    %90 = arith.addf %84, %89 : vector<4x800xf32>
    %c15 = arith.constant 15 : index
    %c0_81 = arith.constant 0 : index
    %c0_82 = arith.constant 0 : index
    %91 = vector.load %arg2[%c15, %c0_81, %c0_82] : memref<27x4x4xbf16, #tpu.memory_space<vmem>>, vector<1x4x4xbf16>
    %92 = vector.shape_cast %91 : vector<1x4x4xbf16> to vector<4x4xbf16>
    %c0_83 = arith.constant 0 : index
    %c0_84 = arith.constant 0 : index
    %c120 = arith.constant 120 : index
    %93 = vector.load %arg1[%c0_83, %c0_84, %c120] : memref<1x4x1022xbf16, #tpu.memory_space<vmem>>, vector<1x4x800xbf16>
    %94 = vector.shape_cast %93 : vector<1x4x800xbf16> to vector<4x800xbf16>
    %cst_85 = arith.constant dense<0.000000e+00> : vector<4x800xf32>
    %95 = tpu.matmul %92, %94, %cst_85 {dimension_numbers = #tpu.dot_dimension_numbers<[1], [0], [0], [1], [0, 0, 1, 1], [], []>} : vector<4x4xbf16>, vector<4x800xbf16>, vector<4x800xf32> -> vector<4x800xf32>
    %96 = arith.addf %90, %95 : vector<4x800xf32>
    %c16 = arith.constant 16 : index
    %c0_86 = arith.constant 0 : index
    %c0_87 = arith.constant 0 : index
    %97 = vector.load %arg2[%c16, %c0_86, %c0_87] : memref<27x4x4xbf16, #tpu.memory_space<vmem>>, vector<1x4x4xbf16>
    %98 = vector.shape_cast %97 : vector<1x4x4xbf16> to vector<4x4xbf16>
    %c0_88 = arith.constant 0 : index
    %c0_89 = arith.constant 0 : index
    %c121 = arith.constant 121 : index
    %99 = vector.load %arg1[%c0_88, %c0_89, %c121] : memref<1x4x1022xbf16, #tpu.memory_space<vmem>>, vector<1x4x800xbf16>
    %100 = vector.shape_cast %99 : vector<1x4x800xbf16> to vector<4x800xbf16>
    %cst_90 = arith.constant dense<0.000000e+00> : vector<4x800xf32>
    %101 = tpu.matmul %98, %100, %cst_90 {dimension_numbers = #tpu.dot_dimension_numbers<[1], [0], [0], [1], [0, 0, 1, 1], [], []>} : vector<4x4xbf16>, vector<4x800xbf16>, vector<4x800xf32> -> vector<4x800xf32>
    %102 = arith.addf %96, %101 : vector<4x800xf32>
    %c17 = arith.constant 17 : index
    %c0_91 = arith.constant 0 : index
    %c0_92 = arith.constant 0 : index
    %103 = vector.load %arg2[%c17, %c0_91, %c0_92] : memref<27x4x4xbf16, #tpu.memory_space<vmem>>, vector<1x4x4xbf16>
    %104 = vector.shape_cast %103 : vector<1x4x4xbf16> to vector<4x4xbf16>
    %c0_93 = arith.constant 0 : index
    %c0_94 = arith.constant 0 : index
    %c122 = arith.constant 122 : index
    %105 = vector.load %arg1[%c0_93, %c0_94, %c122] : memref<1x4x1022xbf16, #tpu.memory_space<vmem>>, vector<1x4x800xbf16>
    %106 = vector.shape_cast %105 : vector<1x4x800xbf16> to vector<4x800xbf16>
    %cst_95 = arith.constant dense<0.000000e+00> : vector<4x800xf32>
    %107 = tpu.matmul %104, %106, %cst_95 {dimension_numbers = #tpu.dot_dimension_numbers<[1], [0], [0], [1], [0, 0, 1, 1], [], []>} : vector<4x4xbf16>, vector<4x800xbf16>, vector<4x800xf32> -> vector<4x800xf32>
    %108 = arith.addf %102, %107 : vector<4x800xf32>
    %c18 = arith.constant 18 : index
    %c0_96 = arith.constant 0 : index
    %c0_97 = arith.constant 0 : index
    %109 = vector.load %arg2[%c18, %c0_96, %c0_97] : memref<27x4x4xbf16, #tpu.memory_space<vmem>>, vector<1x4x4xbf16>
    %110 = vector.shape_cast %109 : vector<1x4x4xbf16> to vector<4x4xbf16>
    %c0_98 = arith.constant 0 : index
    %c0_99 = arith.constant 0 : index
    %c200 = arith.constant 200 : index
    %111 = vector.load %arg1[%c0_98, %c0_99, %c200] : memref<1x4x1022xbf16, #tpu.memory_space<vmem>>, vector<1x4x800xbf16>
    %112 = vector.shape_cast %111 : vector<1x4x800xbf16> to vector<4x800xbf16>
    %cst_100 = arith.constant dense<0.000000e+00> : vector<4x800xf32>
    %113 = tpu.matmul %110, %112, %cst_100 {dimension_numbers = #tpu.dot_dimension_numbers<[1], [0], [0], [1], [0, 0, 1, 1], [], []>} : vector<4x4xbf16>, vector<4x800xbf16>, vector<4x800xf32> -> vector<4x800xf32>
    %114 = arith.addf %108, %113 : vector<4x800xf32>
    %c19 = arith.constant 19 : index
    %c0_101 = arith.constant 0 : index
    %c0_102 = arith.constant 0 : index
    %115 = vector.load %arg2[%c19, %c0_101, %c0_102] : memref<27x4x4xbf16, #tpu.memory_space<vmem>>, vector<1x4x4xbf16>
    %116 = vector.shape_cast %115 : vector<1x4x4xbf16> to vector<4x4xbf16>
    %c0_103 = arith.constant 0 : index
    %c0_104 = arith.constant 0 : index
    %c201 = arith.constant 201 : index
    %117 = vector.load %arg1[%c0_103, %c0_104, %c201] : memref<1x4x1022xbf16, #tpu.memory_space<vmem>>, vector<1x4x800xbf16>
    %118 = vector.shape_cast %117 : vector<1x4x800xbf16> to vector<4x800xbf16>
    %cst_105 = arith.constant dense<0.000000e+00> : vector<4x800xf32>
    %119 = tpu.matmul %116, %118, %cst_105 {dimension_numbers = #tpu.dot_dimension_numbers<[1], [0], [0], [1], [0, 0, 1, 1], [], []>} : vector<4x4xbf16>, vector<4x800xbf16>, vector<4x800xf32> -> vector<4x800xf32>
    %120 = arith.addf %114, %119 : vector<4x800xf32>
    %c20_106 = arith.constant 20 : index
    %c0_107 = arith.constant 0 : index
    %c0_108 = arith.constant 0 : index
    %121 = vector.load %arg2[%c20_106, %c0_107, %c0_108] : memref<27x4x4xbf16, #tpu.memory_space<vmem>>, vector<1x4x4xbf16>
    %122 = vector.shape_cast %121 : vector<1x4x4xbf16> to vector<4x4xbf16>
    %c0_109 = arith.constant 0 : index
    %c0_110 = arith.constant 0 : index
    %c202 = arith.constant 202 : index
    %123 = vector.load %arg1[%c0_109, %c0_110, %c202] : memref<1x4x1022xbf16, #tpu.memory_space<vmem>>, vector<1x4x800xbf16>
    %124 = vector.shape_cast %123 : vector<1x4x800xbf16> to vector<4x800xbf16>
    %cst_111 = arith.constant dense<0.000000e+00> : vector<4x800xf32>
    %125 = tpu.matmul %122, %124, %cst_111 {dimension_numbers = #tpu.dot_dimension_numbers<[1], [0], [0], [1], [0, 0, 1, 1], [], []>} : vector<4x4xbf16>, vector<4x800xbf16>, vector<4x800xf32> -> vector<4x800xf32>
    %126 = arith.addf %120, %125 : vector<4x800xf32>
    %c21_112 = arith.constant 21 : index
    %c0_113 = arith.constant 0 : index
    %c0_114 = arith.constant 0 : index
    %127 = vector.load %arg2[%c21_112, %c0_113, %c0_114] : memref<27x4x4xbf16, #tpu.memory_space<vmem>>, vector<1x4x4xbf16>
    %128 = vector.shape_cast %127 : vector<1x4x4xbf16> to vector<4x4xbf16>
    %c0_115 = arith.constant 0 : index
    %c0_116 = arith.constant 0 : index
    %c210 = arith.constant 210 : index
    %129 = vector.load %arg1[%c0_115, %c0_116, %c210] : memref<1x4x1022xbf16, #tpu.memory_space<vmem>>, vector<1x4x800xbf16>
    %130 = vector.shape_cast %129 : vector<1x4x800xbf16> to vector<4x800xbf16>
    %cst_117 = arith.constant dense<0.000000e+00> : vector<4x800xf32>
    %131 = tpu.matmul %128, %130, %cst_117 {dimension_numbers = #tpu.dot_dimension_numbers<[1], [0], [0], [1], [0, 0, 1, 1], [], []>} : vector<4x4xbf16>, vector<4x800xbf16>, vector<4x800xf32> -> vector<4x800xf32>
    %132 = arith.addf %126, %131 : vector<4x800xf32>
    %c22_118 = arith.constant 22 : index
    %c0_119 = arith.constant 0 : index
    %c0_120 = arith.constant 0 : index
    %133 = vector.load %arg2[%c22_118, %c0_119, %c0_120] : memref<27x4x4xbf16, #tpu.memory_space<vmem>>, vector<1x4x4xbf16>
    %134 = vector.shape_cast %133 : vector<1x4x4xbf16> to vector<4x4xbf16>
    %c0_121 = arith.constant 0 : index
    %c0_122 = arith.constant 0 : index
    %c211 = arith.constant 211 : index
    %135 = vector.load %arg1[%c0_121, %c0_122, %c211] : memref<1x4x1022xbf16, #tpu.memory_space<vmem>>, vector<1x4x800xbf16>
    %136 = vector.shape_cast %135 : vector<1x4x800xbf16> to vector<4x800xbf16>
    %cst_123 = arith.constant dense<0.000000e+00> : vector<4x800xf32>
    %137 = tpu.matmul %134, %136, %cst_123 {dimension_numbers = #tpu.dot_dimension_numbers<[1], [0], [0], [1], [0, 0, 1, 1], [], []>} : vector<4x4xbf16>, vector<4x800xbf16>, vector<4x800xf32> -> vector<4x800xf32>
    %138 = arith.addf %132, %137 : vector<4x800xf32>
    %c23 = arith.constant 23 : index
    %c0_124 = arith.constant 0 : index
    %c0_125 = arith.constant 0 : index
    %139 = vector.load %arg2[%c23, %c0_124, %c0_125] : memref<27x4x4xbf16, #tpu.memory_space<vmem>>, vector<1x4x4xbf16>
    %140 = vector.shape_cast %139 : vector<1x4x4xbf16> to vector<4x4xbf16>
    %c0_126 = arith.constant 0 : index
    %c0_127 = arith.constant 0 : index
    %c212 = arith.constant 212 : index
    %141 = vector.load %arg1[%c0_126, %c0_127, %c212] : memref<1x4x1022xbf16, #tpu.memory_space<vmem>>, vector<1x4x800xbf16>
    %142 = vector.shape_cast %141 : vector<1x4x800xbf16> to vector<4x800xbf16>
    %cst_128 = arith.constant dense<0.000000e+00> : vector<4x800xf32>
    %143 = tpu.matmul %140, %142, %cst_128 {dimension_numbers = #tpu.dot_dimension_numbers<[1], [0], [0], [1], [0, 0, 1, 1], [], []>} : vector<4x4xbf16>, vector<4x800xbf16>, vector<4x800xf32> -> vector<4x800xf32>
    %144 = arith.addf %138, %143 : vector<4x800xf32>
    %c24 = arith.constant 24 : index
    %c0_129 = arith.constant 0 : index
    %c0_130 = arith.constant 0 : index
    %145 = vector.load %arg2[%c24, %c0_129, %c0_130] : memref<27x4x4xbf16, #tpu.memory_space<vmem>>, vector<1x4x4xbf16>
    %146 = vector.shape_cast %145 : vector<1x4x4xbf16> to vector<4x4xbf16>
    %c0_131 = arith.constant 0 : index
    %c0_132 = arith.constant 0 : index
    %c220 = arith.constant 220 : index
    %147 = vector.load %arg1[%c0_131, %c0_132, %c220] : memref<1x4x1022xbf16, #tpu.memory_space<vmem>>, vector<1x4x800xbf16>
    %148 = vector.shape_cast %147 : vector<1x4x800xbf16> to vector<4x800xbf16>
    %cst_133 = arith.constant dense<0.000000e+00> : vector<4x800xf32>
    %149 = tpu.matmul %146, %148, %cst_133 {dimension_numbers = #tpu.dot_dimension_numbers<[1], [0], [0], [1], [0, 0, 1, 1], [], []>} : vector<4x4xbf16>, vector<4x800xbf16>, vector<4x800xf32> -> vector<4x800xf32>
    %150 = arith.addf %144, %149 : vector<4x800xf32>
    %c25 = arith.constant 25 : index
    %c0_134 = arith.constant 0 : index
    %c0_135 = arith.constant 0 : index
    %151 = vector.load %arg2[%c25, %c0_134, %c0_135] : memref<27x4x4xbf16, #tpu.memory_space<vmem>>, vector<1x4x4xbf16>
    %152 = vector.shape_cast %151 : vector<1x4x4xbf16> to vector<4x4xbf16>
    %c0_136 = arith.constant 0 : index
    %c0_137 = arith.constant 0 : index
    %c221 = arith.constant 221 : index
    %153 = vector.load %arg1[%c0_136, %c0_137, %c221] : memref<1x4x1022xbf16, #tpu.memory_space<vmem>>, vector<1x4x800xbf16>
    %154 = vector.shape_cast %153 : vector<1x4x800xbf16> to vector<4x800xbf16>
    %cst_138 = arith.constant dense<0.000000e+00> : vector<4x800xf32>
    %155 = tpu.matmul %152, %154, %cst_138 {dimension_numbers = #tpu.dot_dimension_numbers<[1], [0], [0], [1], [0, 0, 1, 1], [], []>} : vector<4x4xbf16>, vector<4x800xbf16>, vector<4x800xf32> -> vector<4x800xf32>
    %156 = arith.addf %150, %155 : vector<4x800xf32>
    %c26 = arith.constant 26 : index
    %c0_139 = arith.constant 0 : index
    %c0_140 = arith.constant 0 : index
    %157 = vector.load %arg2[%c26, %c0_139, %c0_140] : memref<27x4x4xbf16, #tpu.memory_space<vmem>>, vector<1x4x4xbf16>
    %158 = vector.shape_cast %157 : vector<1x4x4xbf16> to vector<4x4xbf16>
    %c0_141 = arith.constant 0 : index
    %c0_142 = arith.constant 0 : index
    %c222 = arith.constant 222 : index
    %159 = vector.load %arg1[%c0_141, %c0_142, %c222] : memref<1x4x1022xbf16, #tpu.memory_space<vmem>>, vector<1x4x800xbf16>
    %160 = vector.shape_cast %159 : vector<1x4x800xbf16> to vector<4x800xbf16>
    %cst_143 = arith.constant dense<0.000000e+00> : vector<4x800xf32>
    %161 = tpu.matmul %158, %160, %cst_143 {dimension_numbers = #tpu.dot_dimension_numbers<[1], [0], [0], [1], [0, 0, 1, 1], [], []>} : vector<4x4xbf16>, vector<4x800xbf16>, vector<4x800xf32> -> vector<4x800xf32>
    %162 = arith.addf %156, %161 : vector<4x800xf32>
    %c0_144 = arith.constant 0 : index
    %c0_145 = arith.constant 0 : index
    %163 = vector.load %arg3[%c0_144, %c0_145] : memref<4x1xf32, #tpu.memory_space<vmem>>, vector<4x1xf32>
    %164 = vector.broadcast %163 : vector<4x1xf32> to vector<4x800xf32>
    %165 = arith.addf %162, %164 : vector<4x800xf32>
    %cst_146 = arith.constant 0.000000e+00 : f32
    %166 = vector.broadcast %cst_146 : f32 to vector<4x800xf32>
    %167 = arith.maximumf %165, %166 : vector<4x800xf32>
    %168 = arith.truncf %167 : vector<4x800xf32> to vector<4x800xbf16>
    %c0_147 = arith.constant 0 : index
    %c0_148 = arith.constant 0 : index
    %c0_149 = arith.constant 0 : index
    %169 = vector.load %arg4[%c0_147, %c0_148, %c0_149] : memref<1x4x800xbf16, #tpu.memory_space<vmem>>, vector<1x4x800xbf16>
    %170 = vector.shape_cast %169 : vector<1x4x800xbf16> to vector<4x800xbf16>
    %171 = vector.shape_cast %168 : vector<4x800xbf16> to vector<1x4x800xbf16>
    tpu.vector_store %arg4[%c0_147, %c0_148, %c0_149], %171 {strides = array<i32>} : memref<1x4x800xbf16, #tpu.memory_space<vmem>>, vector<1x4x800xbf16>,
    return
  }
  func.func @transform_0(%arg0: i32) -> (i32, i32, i32) {
    %c0_i32 = arith.constant 0 : i32
    %c0_i32_0 = arith.constant 0 : i32
    %c0_i32_1 = arith.constant 0 : i32
    return %arg0, %c0_i32, %c0_i32_0 : i32, i32, i32
  }
  func.func @transform_1(%arg0: i32) -> (i32, i32, i32) {
    %c0_i32 = arith.constant 0 : i32
    %c0_i32_0 = arith.constant 0 : i32
    %c0_i32_1 = arith.constant 0 : i32
    %c0_i32_2 = arith.constant 0 : i32
    return %c0_i32, %c0_i32_0, %c0_i32_1 : i32, i32, i32
  }
  func.func @transform_2(%arg0: i32) -> (i32, i32) {
    %c0_i32 = arith.constant 0 : i32
    %c0_i32_0 = arith.constant 0 : i32
    %c0_i32_1 = arith.constant 0 : i32
    return %c0_i32, %c0_i32_0 : i32, i32
  }
  func.func @transform_3(%arg0: i32) -> (i32, i32, i32) {
    %c0_i32 = arith.constant 0 : i32
    %c0_i32_0 = arith.constant 0 : i32
    %c0_i32_1 = arith.constant 0 : i32
    return %arg0, %c0_i32, %c0_i32_0 : i32, i32, i32
  }
}

module attributes {stable_mosaic.version = 11 : i64} {
  func.func @kernel(%arg0: i32, %arg1: memref<1x4x1022xbf16, #tpu.memory_space<vmem>>, %arg2: memref<27x4x4xbf16, #tpu.memory_space<vmem>>, %arg3: memref<4x1xf32, #tpu.memory_space<vmem>>, %arg4: memref<1x4x1022xbf16, #tpu.memory_space<vmem>>, %arg5: memref<1x4x800xf32, #tpu.memory_space<vmem>>) attributes {dimension_semantics = [#tpu.dimension_semantics<parallel>], iteration_bounds = array<i64: 2>, scalar_prefetch = 0 : i64, scratch_operands = 0 : i64, tpu.core_type = #tpu.core_type<tc>, window_params = [{transform_indices = @transform_0, window_bounds = array<i64: 1, 4, 1022>}, {pipeline_mode = #tpu.pipeline_mode<synchronous>, transform_indices = @transform_1, window_bounds = array<i64: 27, 4, 4>}, {pipeline_mode = #tpu.pipeline_mode<synchronous>, transform_indices = @transform_2, window_bounds = array<i64: 4, 1>}, {transform_indices = @transform_3, window_bounds = array<i64: 1, 4, 1022>}, {transform_indices = @transform_4, window_bounds = array<i64: 1, 4, 800>}]} {
    %cst = arith.constant 0.000000e+00 : f32
    %0 = vector.broadcast %cst : f32 to vector<4x800xf32>
    %c0 = arith.constant 0 : index
    %c0_0 = arith.constant 0 : index
    %c0_1 = arith.constant 0 : index
    %1 = vector.load %arg2[%c0, %c0_0, %c0_1] : memref<27x4x4xbf16, #tpu.memory_space<vmem>>, vector<1x4x4xbf16>
    %2 = vector.shape_cast %1 : vector<1x4x4xbf16> to vector<4x4xbf16>
    %c0_2 = arith.constant 0 : index
    %c0_3 = arith.constant 0 : index
    %c0_4 = arith.constant 0 : index
    %3 = vector.load %arg1[%c0_2, %c0_3, %c0_4] : memref<1x4x1022xbf16, #tpu.memory_space<vmem>>, vector<1x4x800xbf16>
    %4 = vector.shape_cast %3 : vector<1x4x800xbf16> to vector<4x800xbf16>
    %cst_5 = arith.constant dense<0.000000e+00> : vector<4x800xf32>
    %5 = tpu.matmul %2, %4, %cst_5 {dimension_numbers = #tpu.dot_dimension_numbers<[1], [0], [0], [1], [0, 0, 1, 1], [], []>} : vector<4x4xbf16>, vector<4x800xbf16>, vector<4x800xf32> -> vector<4x800xf32>
    %6 = arith.addf %0, %5 : vector<4x800xf32>
    %c1 = arith.constant 1 : index
    %c0_6 = arith.constant 0 : index
    %c0_7 = arith.constant 0 : index
    %7 = vector.load %arg2[%c1, %c0_6, %c0_7] : memref<27x4x4xbf16, #tpu.memory_space<vmem>>, vector<1x4x4xbf16>
    %8 = vector.shape_cast %7 : vector<1x4x4xbf16> to vector<4x4xbf16>
    %c0_8 = arith.constant 0 : index
    %c0_9 = arith.constant 0 : index
    %c1_10 = arith.constant 1 : index
    %9 = vector.load %arg1[%c0_8, %c0_9, %c1_10] : memref<1x4x1022xbf16, #tpu.memory_space<vmem>>, vector<1x4x800xbf16>
    %10 = vector.shape_cast %9 : vector<1x4x800xbf16> to vector<4x800xbf16>
    %cst_11 = arith.constant dense<0.000000e+00> : vector<4x800xf32>
    %11 = tpu.matmul %8, %10, %cst_11 {dimension_numbers = #tpu.dot_dimension_numbers<[1], [0], [0], [1], [0, 0, 1, 1], [], []>} : vector<4x4xbf16>, vector<4x800xbf16>, vector<4x800xf32> -> vector<4x800xf32>
    %12 = arith.addf %6, %11 : vector<4x800xf32>
    %c2 = arith.constant 2 : index
    %c0_12 = arith.constant 0 : index
    %c0_13 = arith.constant 0 : index
    %13 = vector.load %arg2[%c2, %c0_12, %c0_13] : memref<27x4x4xbf16, #tpu.memory_space<vmem>>, vector<1x4x4xbf16>
    %14 = vector.shape_cast %13 : vector<1x4x4xbf16> to vector<4x4xbf16>
    %c0_14 = arith.constant 0 : index
    %c0_15 = arith.constant 0 : index
    %c2_16 = arith.constant 2 : index
    %15 = vector.load %arg1[%c0_14, %c0_15, %c2_16] : memref<1x4x1022xbf16, #tpu.memory_space<vmem>>, vector<1x4x800xbf16>
    %16 = vector.shape_cast %15 : vector<1x4x800xbf16> to vector<4x800xbf16>
    %cst_17 = arith.constant dense<0.000000e+00> : vector<4x800xf32>
    %17 = tpu.matmul %14, %16, %cst_17 {dimension_numbers = #tpu.dot_dimension_numbers<[1], [0], [0], [1], [0, 0, 1, 1], [], []>} : vector<4x4xbf16>, vector<4x800xbf16>, vector<4x800xf32> -> vector<4x800xf32>
    %18 = arith.addf %12, %17 : vector<4x800xf32>
    %c3 = arith.constant 3 : index
    %c0_18 = arith.constant 0 : index
    %c0_19 = arith.constant 0 : index
    %19 = vector.load %arg2[%c3, %c0_18, %c0_19] : memref<27x4x4xbf16, #tpu.memory_space<vmem>>, vector<1x4x4xbf16>
    %20 = vector.shape_cast %19 : vector<1x4x4xbf16> to vector<4x4xbf16>
    %c0_20 = arith.constant 0 : index
    %c0_21 = arith.constant 0 : index
    %c10 = arith.constant 10 : index
    %21 = vector.load %arg1[%c0_20, %c0_21, %c10] : memref<1x4x1022xbf16, #tpu.memory_space<vmem>>, vector<1x4x800xbf16>
    %22 = vector.shape_cast %21 : vector<1x4x800xbf16> to vector<4x800xbf16>
    %cst_22 = arith.constant dense<0.000000e+00> : vector<4x800xf32>
    %23 = tpu.matmul %20, %22, %cst_22 {dimension_numbers = #tpu.dot_dimension_numbers<[1], [0], [0], [1], [0, 0, 1, 1], [], []>} : vector<4x4xbf16>, vector<4x800xbf16>, vector<4x800xf32> -> vector<4x800xf32>
    %24 = arith.addf %18, %23 : vector<4x800xf32>
    %c4 = arith.constant 4 : index
    %c0_23 = arith.constant 0 : index
    %c0_24 = arith.constant 0 : index
    %25 = vector.load %arg2[%c4, %c0_23, %c0_24] : memref<27x4x4xbf16, #tpu.memory_space<vmem>>, vector<1x4x4xbf16>
    %26 = vector.shape_cast %25 : vector<1x4x4xbf16> to vector<4x4xbf16>
    %c0_25 = arith.constant 0 : index
    %c0_26 = arith.constant 0 : index
    %c11 = arith.constant 11 : index
    %27 = vector.load %arg1[%c0_25, %c0_26, %c11] : memref<1x4x1022xbf16, #tpu.memory_space<vmem>>, vector<1x4x800xbf16>
    %28 = vector.shape_cast %27 : vector<1x4x800xbf16> to vector<4x800xbf16>
    %cst_27 = arith.constant dense<0.000000e+00> : vector<4x800xf32>
    %29 = tpu.matmul %26, %28, %cst_27 {dimension_numbers = #tpu.dot_dimension_numbers<[1], [0], [0], [1], [0, 0, 1, 1], [], []>} : vector<4x4xbf16>, vector<4x800xbf16>, vector<4x800xf32> -> vector<4x800xf32>
    %30 = arith.addf %24, %29 : vector<4x800xf32>
    %c5 = arith.constant 5 : index
    %c0_28 = arith.constant 0 : index
    %c0_29 = arith.constant 0 : index
    %31 = vector.load %arg2[%c5, %c0_28, %c0_29] : memref<27x4x4xbf16, #tpu.memory_space<vmem>>, vector<1x4x4xbf16>
    %32 = vector.shape_cast %31 : vector<1x4x4xbf16> to vector<4x4xbf16>
    %c0_30 = arith.constant 0 : index
    %c0_31 = arith.constant 0 : index
    %c12 = arith.constant 12 : index
    %33 = vector.load %arg1[%c0_30, %c0_31, %c12] : memref<1x4x1022xbf16, #tpu.memory_space<vmem>>, vector<1x4x800xbf16>
    %34 = vector.shape_cast %33 : vector<1x4x800xbf16> to vector<4x800xbf16>
    %cst_32 = arith.constant dense<0.000000e+00> : vector<4x800xf32>
    %35 = tpu.matmul %32, %34, %cst_32 {dimension_numbers = #tpu.dot_dimension_numbers<[1], [0], [0], [1], [0, 0, 1, 1], [], []>} : vector<4x4xbf16>, vector<4x800xbf16>, vector<4x800xf32> -> vector<4x800xf32>
    %36 = arith.addf %30, %35 : vector<4x800xf32>
    %c6 = arith.constant 6 : index
    %c0_33 = arith.constant 0 : index
    %c0_34 = arith.constant 0 : index
    %37 = vector.load %arg2[%c6, %c0_33, %c0_34] : memref<27x4x4xbf16, #tpu.memory_space<vmem>>, vector<1x4x4xbf16>
    %38 = vector.shape_cast %37 : vector<1x4x4xbf16> to vector<4x4xbf16>
    %c0_35 = arith.constant 0 : index
    %c0_36 = arith.constant 0 : index
    %c20 = arith.constant 20 : index
    %39 = vector.load %arg1[%c0_35, %c0_36, %c20] : memref<1x4x1022xbf16, #tpu.memory_space<vmem>>, vector<1x4x800xbf16>
    %40 = vector.shape_cast %39 : vector<1x4x800xbf16> to vector<4x800xbf16>
    %cst_37 = arith.constant dense<0.000000e+00> : vector<4x800xf32>
    %41 = tpu.matmul %38, %40, %cst_37 {dimension_numbers = #tpu.dot_dimension_numbers<[1], [0], [0], [1], [0, 0, 1, 1], [], []>} : vector<4x4xbf16>, vector<4x800xbf16>, vector<4x800xf32> -> vector<4x800xf32>
    %42 = arith.addf %36, %41 : vector<4x800xf32>
    %c7 = arith.constant 7 : index
    %c0_38 = arith.constant 0 : index
    %c0_39 = arith.constant 0 : index
    %43 = vector.load %arg2[%c7, %c0_38, %c0_39] : memref<27x4x4xbf16, #tpu.memory_space<vmem>>, vector<1x4x4xbf16>
    %44 = vector.shape_cast %43 : vector<1x4x4xbf16> to vector<4x4xbf16>
    %c0_40 = arith.constant 0 : index
    %c0_41 = arith.constant 0 : index
    %c21 = arith.constant 21 : index
    %45 = vector.load %arg1[%c0_40, %c0_41, %c21] : memref<1x4x1022xbf16, #tpu.memory_space<vmem>>, vector<1x4x800xbf16>
    %46 = vector.shape_cast %45 : vector<1x4x800xbf16> to vector<4x800xbf16>
    %cst_42 = arith.constant dense<0.000000e+00> : vector<4x800xf32>
    %47 = tpu.matmul %44, %46, %cst_42 {dimension_numbers = #tpu.dot_dimension_numbers<[1], [0], [0], [1], [0, 0, 1, 1], [], []>} : vector<4x4xbf16>, vector<4x800xbf16>, vector<4x800xf32> -> vector<4x800xf32>
    %48 = arith.addf %42, %47 : vector<4x800xf32>
    %c8 = arith.constant 8 : index
    %c0_43 = arith.constant 0 : index
    %c0_44 = arith.constant 0 : index
    %49 = vector.load %arg2[%c8, %c0_43, %c0_44] : memref<27x4x4xbf16, #tpu.memory_space<vmem>>, vector<1x4x4xbf16>
    %50 = vector.shape_cast %49 : vector<1x4x4xbf16> to vector<4x4xbf16>
    %c0_45 = arith.constant 0 : index
    %c0_46 = arith.constant 0 : index
    %c22 = arith.constant 22 : index
    %51 = vector.load %arg1[%c0_45, %c0_46, %c22] : memref<1x4x1022xbf16, #tpu.memory_space<vmem>>, vector<1x4x800xbf16>
    %52 = vector.shape_cast %51 : vector<1x4x800xbf16> to vector<4x800xbf16>
    %cst_47 = arith.constant dense<0.000000e+00> : vector<4x800xf32>
    %53 = tpu.matmul %50, %52, %cst_47 {dimension_numbers = #tpu.dot_dimension_numbers<[1], [0], [0], [1], [0, 0, 1, 1], [], []>} : vector<4x4xbf16>, vector<4x800xbf16>, vector<4x800xf32> -> vector<4x800xf32>
    %54 = arith.addf %48, %53 : vector<4x800xf32>
    %c9 = arith.constant 9 : index
    %c0_48 = arith.constant 0 : index
    %c0_49 = arith.constant 0 : index
    %55 = vector.load %arg2[%c9, %c0_48, %c0_49] : memref<27x4x4xbf16, #tpu.memory_space<vmem>>, vector<1x4x4xbf16>
    %56 = vector.shape_cast %55 : vector<1x4x4xbf16> to vector<4x4xbf16>
    %c0_50 = arith.constant 0 : index
    %c0_51 = arith.constant 0 : index
    %c100 = arith.constant 100 : index
    %57 = vector.load %arg1[%c0_50, %c0_51, %c100] : memref<1x4x1022xbf16, #tpu.memory_space<vmem>>, vector<1x4x800xbf16>
    %58 = vector.shape_cast %57 : vector<1x4x800xbf16> to vector<4x800xbf16>
    %cst_52 = arith.constant dense<0.000000e+00> : vector<4x800xf32>
    %59 = tpu.matmul %56, %58, %cst_52 {dimension_numbers = #tpu.dot_dimension_numbers<[1], [0], [0], [1], [0, 0, 1, 1], [], []>} : vector<4x4xbf16>, vector<4x800xbf16>, vector<4x800xf32> -> vector<4x800xf32>
    %60 = arith.addf %54, %59 : vector<4x800xf32>
    %c10_53 = arith.constant 10 : index
    %c0_54 = arith.constant 0 : index
    %c0_55 = arith.constant 0 : index
    %61 = vector.load %arg2[%c10_53, %c0_54, %c0_55] : memref<27x4x4xbf16, #tpu.memory_space<vmem>>, vector<1x4x4xbf16>
    %62 = vector.shape_cast %61 : vector<1x4x4xbf16> to vector<4x4xbf16>
    %c0_56 = arith.constant 0 : index
    %c0_57 = arith.constant 0 : index
    %c101 = arith.constant 101 : index
    %63 = vector.load %arg1[%c0_56, %c0_57, %c101] : memref<1x4x1022xbf16, #tpu.memory_space<vmem>>, vector<1x4x800xbf16>
    %64 = vector.shape_cast %63 : vector<1x4x800xbf16> to vector<4x800xbf16>
    %cst_58 = arith.constant dense<0.000000e+00> : vector<4x800xf32>
    %65 = tpu.matmul %62, %64, %cst_58 {dimension_numbers = #tpu.dot_dimension_numbers<[1], [0], [0], [1], [0, 0, 1, 1], [], []>} : vector<4x4xbf16>, vector<4x800xbf16>, vector<4x800xf32> -> vector<4x800xf32>
    %66 = arith.addf %60, %65 : vector<4x800xf32>
    %c11_59 = arith.constant 11 : index
    %c0_60 = arith.constant 0 : index
    %c0_61 = arith.constant 0 : index
    %67 = vector.load %arg2[%c11_59, %c0_60, %c0_61] : memref<27x4x4xbf16, #tpu.memory_space<vmem>>, vector<1x4x4xbf16>
    %68 = vector.shape_cast %67 : vector<1x4x4xbf16> to vector<4x4xbf16>
    %c0_62 = arith.constant 0 : index
    %c0_63 = arith.constant 0 : index
    %c102 = arith.constant 102 : index
    %69 = vector.load %arg1[%c0_62, %c0_63, %c102] : memref<1x4x1022xbf16, #tpu.memory_space<vmem>>, vector<1x4x800xbf16>
    %70 = vector.shape_cast %69 : vector<1x4x800xbf16> to vector<4x800xbf16>
    %cst_64 = arith.constant dense<0.000000e+00> : vector<4x800xf32>
    %71 = tpu.matmul %68, %70, %cst_64 {dimension_numbers = #tpu.dot_dimension_numbers<[1], [0], [0], [1], [0, 0, 1, 1], [], []>} : vector<4x4xbf16>, vector<4x800xbf16>, vector<4x800xf32> -> vector<4x800xf32>
    %72 = arith.addf %66, %71 : vector<4x800xf32>
    %c12_65 = arith.constant 12 : index
    %c0_66 = arith.constant 0 : index
    %c0_67 = arith.constant 0 : index
    %73 = vector.load %arg2[%c12_65, %c0_66, %c0_67] : memref<27x4x4xbf16, #tpu.memory_space<vmem>>, vector<1x4x4xbf16>
    %74 = vector.shape_cast %73 : vector<1x4x4xbf16> to vector<4x4xbf16>
    %c0_68 = arith.constant 0 : index
    %c0_69 = arith.constant 0 : index
    %c110 = arith.constant 110 : index
    %75 = vector.load %arg1[%c0_68, %c0_69, %c110] : memref<1x4x1022xbf16, #tpu.memory_space<vmem>>, vector<1x4x800xbf16>
    %76 = vector.shape_cast %75 : vector<1x4x800xbf16> to vector<4x800xbf16>
    %cst_70 = arith.constant dense<0.000000e+00> : vector<4x800xf32>
    %77 = tpu.matmul %74, %76, %cst_70 {dimension_numbers = #tpu.dot_dimension_numbers<[1], [0], [0], [1], [0, 0, 1, 1], [], []>} : vector<4x4xbf16>, vector<4x800xbf16>, vector<4x800xf32> -> vector<4x800xf32>
    %78 = arith.addf %72, %77 : vector<4x800xf32>
    %c13 = arith.constant 13 : index
    %c0_71 = arith.constant 0 : index
    %c0_72 = arith.constant 0 : index
    %79 = vector.load %arg2[%c13, %c0_71, %c0_72] : memref<27x4x4xbf16, #tpu.memory_space<vmem>>, vector<1x4x4xbf16>
    %80 = vector.shape_cast %79 : vector<1x4x4xbf16> to vector<4x4xbf16>
    %c0_73 = arith.constant 0 : index
    %c0_74 = arith.constant 0 : index
    %c111 = arith.constant 111 : index
    %81 = vector.load %arg1[%c0_73, %c0_74, %c111] : memref<1x4x1022xbf16, #tpu.memory_space<vmem>>, vector<1x4x800xbf16>
    %82 = vector.shape_cast %81 : vector<1x4x800xbf16> to vector<4x800xbf16>
    %cst_75 = arith.constant dense<0.000000e+00> : vector<4x800xf32>
    %83 = tpu.matmul %80, %82, %cst_75 {dimension_numbers = #tpu.dot_dimension_numbers<[1], [0], [0], [1], [0, 0, 1, 1], [], []>} : vector<4x4xbf16>, vector<4x800xbf16>, vector<4x800xf32> -> vector<4x800xf32>
    %84 = arith.addf %78, %83 : vector<4x800xf32>
    %c14 = arith.constant 14 : index
    %c0_76 = arith.constant 0 : index
    %c0_77 = arith.constant 0 : index
    %85 = vector.load %arg2[%c14, %c0_76, %c0_77] : memref<27x4x4xbf16, #tpu.memory_space<vmem>>, vector<1x4x4xbf16>
    %86 = vector.shape_cast %85 : vector<1x4x4xbf16> to vector<4x4xbf16>
    %c0_78 = arith.constant 0 : index
    %c0_79 = arith.constant 0 : index
    %c112 = arith.constant 112 : index
    %87 = vector.load %arg1[%c0_78, %c0_79, %c112] : memref<1x4x1022xbf16, #tpu.memory_space<vmem>>, vector<1x4x800xbf16>
    %88 = vector.shape_cast %87 : vector<1x4x800xbf16> to vector<4x800xbf16>
    %cst_80 = arith.constant dense<0.000000e+00> : vector<4x800xf32>
    %89 = tpu.matmul %86, %88, %cst_80 {dimension_numbers = #tpu.dot_dimension_numbers<[1], [0], [0], [1], [0, 0, 1, 1], [], []>} : vector<4x4xbf16>, vector<4x800xbf16>, vector<4x800xf32> -> vector<4x800xf32>
    %90 = arith.addf %84, %89 : vector<4x800xf32>
    %c15 = arith.constant 15 : index
    %c0_81 = arith.constant 0 : index
    %c0_82 = arith.constant 0 : index
    %91 = vector.load %arg2[%c15, %c0_81, %c0_82] : memref<27x4x4xbf16, #tpu.memory_space<vmem>>, vector<1x4x4xbf16>
    %92 = vector.shape_cast %91 : vector<1x4x4xbf16> to vector<4x4xbf16>
    %c0_83 = arith.constant 0 : index
    %c0_84 = arith.constant 0 : index
    %c120 = arith.constant 120 : index
    %93 = vector.load %arg1[%c0_83, %c0_84, %c120] : memref<1x4x1022xbf16, #tpu.memory_space<vmem>>, vector<1x4x800xbf16>
    %94 = vector.shape_cast %93 : vector<1x4x800xbf16> to vector<4x800xbf16>
    %cst_85 = arith.constant dense<0.000000e+00> : vector<4x800xf32>
    %95 = tpu.matmul %92, %94, %cst_85 {dimension_numbers = #tpu.dot_dimension_numbers<[1], [0], [0], [1], [0, 0, 1, 1], [], []>} : vector<4x4xbf16>, vector<4x800xbf16>, vector<4x800xf32> -> vector<4x800xf32>
    %96 = arith.addf %90, %95 : vector<4x800xf32>
    %c16 = arith.constant 16 : index
    %c0_86 = arith.constant 0 : index
    %c0_87 = arith.constant 0 : index
    %97 = vector.load %arg2[%c16, %c0_86, %c0_87] : memref<27x4x4xbf16, #tpu.memory_space<vmem>>, vector<1x4x4xbf16>
    %98 = vector.shape_cast %97 : vector<1x4x4xbf16> to vector<4x4xbf16>
    %c0_88 = arith.constant 0 : index
    %c0_89 = arith.constant 0 : index
    %c121 = arith.constant 121 : index
    %99 = vector.load %arg1[%c0_88, %c0_89, %c121] : memref<1x4x1022xbf16, #tpu.memory_space<vmem>>, vector<1x4x800xbf16>
    %100 = vector.shape_cast %99 : vector<1x4x800xbf16> to vector<4x800xbf16>
    %cst_90 = arith.constant dense<0.000000e+00> : vector<4x800xf32>
    %101 = tpu.matmul %98, %100, %cst_90 {dimension_numbers = #tpu.dot_dimension_numbers<[1], [0], [0], [1], [0, 0, 1, 1], [], []>} : vector<4x4xbf16>, vector<4x800xbf16>, vector<4x800xf32> -> vector<4x800xf32>
    %102 = arith.addf %96, %101 : vector<4x800xf32>
    %c17 = arith.constant 17 : index
    %c0_91 = arith.constant 0 : index
    %c0_92 = arith.constant 0 : index
    %103 = vector.load %arg2[%c17, %c0_91, %c0_92] : memref<27x4x4xbf16, #tpu.memory_space<vmem>>, vector<1x4x4xbf16>
    %104 = vector.shape_cast %103 : vector<1x4x4xbf16> to vector<4x4xbf16>
    %c0_93 = arith.constant 0 : index
    %c0_94 = arith.constant 0 : index
    %c122 = arith.constant 122 : index
    %105 = vector.load %arg1[%c0_93, %c0_94, %c122] : memref<1x4x1022xbf16, #tpu.memory_space<vmem>>, vector<1x4x800xbf16>
    %106 = vector.shape_cast %105 : vector<1x4x800xbf16> to vector<4x800xbf16>
    %cst_95 = arith.constant dense<0.000000e+00> : vector<4x800xf32>
    %107 = tpu.matmul %104, %106, %cst_95 {dimension_numbers = #tpu.dot_dimension_numbers<[1], [0], [0], [1], [0, 0, 1, 1], [], []>} : vector<4x4xbf16>, vector<4x800xbf16>, vector<4x800xf32> -> vector<4x800xf32>
    %108 = arith.addf %102, %107 : vector<4x800xf32>
    %c18 = arith.constant 18 : index
    %c0_96 = arith.constant 0 : index
    %c0_97 = arith.constant 0 : index
    %109 = vector.load %arg2[%c18, %c0_96, %c0_97] : memref<27x4x4xbf16, #tpu.memory_space<vmem>>, vector<1x4x4xbf16>
    %110 = vector.shape_cast %109 : vector<1x4x4xbf16> to vector<4x4xbf16>
    %c0_98 = arith.constant 0 : index
    %c0_99 = arith.constant 0 : index
    %c200 = arith.constant 200 : index
    %111 = vector.load %arg1[%c0_98, %c0_99, %c200] : memref<1x4x1022xbf16, #tpu.memory_space<vmem>>, vector<1x4x800xbf16>
    %112 = vector.shape_cast %111 : vector<1x4x800xbf16> to vector<4x800xbf16>
    %cst_100 = arith.constant dense<0.000000e+00> : vector<4x800xf32>
    %113 = tpu.matmul %110, %112, %cst_100 {dimension_numbers = #tpu.dot_dimension_numbers<[1], [0], [0], [1], [0, 0, 1, 1], [], []>} : vector<4x4xbf16>, vector<4x800xbf16>, vector<4x800xf32> -> vector<4x800xf32>
    %114 = arith.addf %108, %113 : vector<4x800xf32>
    %c19 = arith.constant 19 : index
    %c0_101 = arith.constant 0 : index
    %c0_102 = arith.constant 0 : index
    %115 = vector.load %arg2[%c19, %c0_101, %c0_102] : memref<27x4x4xbf16, #tpu.memory_space<vmem>>, vector<1x4x4xbf16>
    %116 = vector.shape_cast %115 : vector<1x4x4xbf16> to vector<4x4xbf16>
    %c0_103 = arith.constant 0 : index
    %c0_104 = arith.constant 0 : index
    %c201 = arith.constant 201 : index
    %117 = vector.load %arg1[%c0_103, %c0_104, %c201] : memref<1x4x1022xbf16, #tpu.memory_space<vmem>>, vector<1x4x800xbf16>
    %118 = vector.shape_cast %117 : vector<1x4x800xbf16> to vector<4x800xbf16>
    %cst_105 = arith.constant dense<0.000000e+00> : vector<4x800xf32>
    %119 = tpu.matmul %116, %118, %cst_105 {dimension_numbers = #tpu.dot_dimension_numbers<[1], [0], [0], [1], [0, 0, 1, 1], [], []>} : vector<4x4xbf16>, vector<4x800xbf16>, vector<4x800xf32> -> vector<4x800xf32>
    %120 = arith.addf %114, %119 : vector<4x800xf32>
    %c20_106 = arith.constant 20 : index
    %c0_107 = arith.constant 0 : index
    %c0_108 = arith.constant 0 : index
    %121 = vector.load %arg2[%c20_106, %c0_107, %c0_108] : memref<27x4x4xbf16, #tpu.memory_space<vmem>>, vector<1x4x4xbf16>
    %122 = vector.shape_cast %121 : vector<1x4x4xbf16> to vector<4x4xbf16>
    %c0_109 = arith.constant 0 : index
    %c0_110 = arith.constant 0 : index
    %c202 = arith.constant 202 : index
    %123 = vector.load %arg1[%c0_109, %c0_110, %c202] : memref<1x4x1022xbf16, #tpu.memory_space<vmem>>, vector<1x4x800xbf16>
    %124 = vector.shape_cast %123 : vector<1x4x800xbf16> to vector<4x800xbf16>
    %cst_111 = arith.constant dense<0.000000e+00> : vector<4x800xf32>
    %125 = tpu.matmul %122, %124, %cst_111 {dimension_numbers = #tpu.dot_dimension_numbers<[1], [0], [0], [1], [0, 0, 1, 1], [], []>} : vector<4x4xbf16>, vector<4x800xbf16>, vector<4x800xf32> -> vector<4x800xf32>
    %126 = arith.addf %120, %125 : vector<4x800xf32>
    %c21_112 = arith.constant 21 : index
    %c0_113 = arith.constant 0 : index
    %c0_114 = arith.constant 0 : index
    %127 = vector.load %arg2[%c21_112, %c0_113, %c0_114] : memref<27x4x4xbf16, #tpu.memory_space<vmem>>, vector<1x4x4xbf16>
    %128 = vector.shape_cast %127 : vector<1x4x4xbf16> to vector<4x4xbf16>
    %c0_115 = arith.constant 0 : index
    %c0_116 = arith.constant 0 : index
    %c210 = arith.constant 210 : index
    %129 = vector.load %arg1[%c0_115, %c0_116, %c210] : memref<1x4x1022xbf16, #tpu.memory_space<vmem>>, vector<1x4x800xbf16>
    %130 = vector.shape_cast %129 : vector<1x4x800xbf16> to vector<4x800xbf16>
    %cst_117 = arith.constant dense<0.000000e+00> : vector<4x800xf32>
    %131 = tpu.matmul %128, %130, %cst_117 {dimension_numbers = #tpu.dot_dimension_numbers<[1], [0], [0], [1], [0, 0, 1, 1], [], []>} : vector<4x4xbf16>, vector<4x800xbf16>, vector<4x800xf32> -> vector<4x800xf32>
    %132 = arith.addf %126, %131 : vector<4x800xf32>
    %c22_118 = arith.constant 22 : index
    %c0_119 = arith.constant 0 : index
    %c0_120 = arith.constant 0 : index
    %133 = vector.load %arg2[%c22_118, %c0_119, %c0_120] : memref<27x4x4xbf16, #tpu.memory_space<vmem>>, vector<1x4x4xbf16>
    %134 = vector.shape_cast %133 : vector<1x4x4xbf16> to vector<4x4xbf16>
    %c0_121 = arith.constant 0 : index
    %c0_122 = arith.constant 0 : index
    %c211 = arith.constant 211 : index
    %135 = vector.load %arg1[%c0_121, %c0_122, %c211] : memref<1x4x1022xbf16, #tpu.memory_space<vmem>>, vector<1x4x800xbf16>
    %136 = vector.shape_cast %135 : vector<1x4x800xbf16> to vector<4x800xbf16>
    %cst_123 = arith.constant dense<0.000000e+00> : vector<4x800xf32>
    %137 = tpu.matmul %134, %136, %cst_123 {dimension_numbers = #tpu.dot_dimension_numbers<[1], [0], [0], [1], [0, 0, 1, 1], [], []>} : vector<4x4xbf16>, vector<4x800xbf16>, vector<4x800xf32> -> vector<4x800xf32>
    %138 = arith.addf %132, %137 : vector<4x800xf32>
    %c23 = arith.constant 23 : index
    %c0_124 = arith.constant 0 : index
    %c0_125 = arith.constant 0 : index
    %139 = vector.load %arg2[%c23, %c0_124, %c0_125] : memref<27x4x4xbf16, #tpu.memory_space<vmem>>, vector<1x4x4xbf16>
    %140 = vector.shape_cast %139 : vector<1x4x4xbf16> to vector<4x4xbf16>
    %c0_126 = arith.constant 0 : index
    %c0_127 = arith.constant 0 : index
    %c212 = arith.constant 212 : index
    %141 = vector.load %arg1[%c0_126, %c0_127, %c212] : memref<1x4x1022xbf16, #tpu.memory_space<vmem>>, vector<1x4x800xbf16>
    %142 = vector.shape_cast %141 : vector<1x4x800xbf16> to vector<4x800xbf16>
    %cst_128 = arith.constant dense<0.000000e+00> : vector<4x800xf32>
    %143 = tpu.matmul %140, %142, %cst_128 {dimension_numbers = #tpu.dot_dimension_numbers<[1], [0], [0], [1], [0, 0, 1, 1], [], []>} : vector<4x4xbf16>, vector<4x800xbf16>, vector<4x800xf32> -> vector<4x800xf32>
    %144 = arith.addf %138, %143 : vector<4x800xf32>
    %c24 = arith.constant 24 : index
    %c0_129 = arith.constant 0 : index
    %c0_130 = arith.constant 0 : index
    %145 = vector.load %arg2[%c24, %c0_129, %c0_130] : memref<27x4x4xbf16, #tpu.memory_space<vmem>>, vector<1x4x4xbf16>
    %146 = vector.shape_cast %145 : vector<1x4x4xbf16> to vector<4x4xbf16>
    %c0_131 = arith.constant 0 : index
    %c0_132 = arith.constant 0 : index
    %c220 = arith.constant 220 : index
    %147 = vector.load %arg1[%c0_131, %c0_132, %c220] : memref<1x4x1022xbf16, #tpu.memory_space<vmem>>, vector<1x4x800xbf16>
    %148 = vector.shape_cast %147 : vector<1x4x800xbf16> to vector<4x800xbf16>
    %cst_133 = arith.constant dense<0.000000e+00> : vector<4x800xf32>
    %149 = tpu.matmul %146, %148, %cst_133 {dimension_numbers = #tpu.dot_dimension_numbers<[1], [0], [0], [1], [0, 0, 1, 1], [], []>} : vector<4x4xbf16>, vector<4x800xbf16>, vector<4x800xf32> -> vector<4x800xf32>
    %150 = arith.addf %144, %149 : vector<4x800xf32>
    %c25 = arith.constant 25 : index
    %c0_134 = arith.constant 0 : index
    %c0_135 = arith.constant 0 : index
    %151 = vector.load %arg2[%c25, %c0_134, %c0_135] : memref<27x4x4xbf16, #tpu.memory_space<vmem>>, vector<1x4x4xbf16>
    %152 = vector.shape_cast %151 : vector<1x4x4xbf16> to vector<4x4xbf16>
    %c0_136 = arith.constant 0 : index
    %c0_137 = arith.constant 0 : index
    %c221 = arith.constant 221 : index
    %153 = vector.load %arg1[%c0_136, %c0_137, %c221] : memref<1x4x1022xbf16, #tpu.memory_space<vmem>>, vector<1x4x800xbf16>
    %154 = vector.shape_cast %153 : vector<1x4x800xbf16> to vector<4x800xbf16>
    %cst_138 = arith.constant dense<0.000000e+00> : vector<4x800xf32>
    %155 = tpu.matmul %152, %154, %cst_138 {dimension_numbers = #tpu.dot_dimension_numbers<[1], [0], [0], [1], [0, 0, 1, 1], [], []>} : vector<4x4xbf16>, vector<4x800xbf16>, vector<4x800xf32> -> vector<4x800xf32>
    %156 = arith.addf %150, %155 : vector<4x800xf32>
    %c26 = arith.constant 26 : index
    %c0_139 = arith.constant 0 : index
    %c0_140 = arith.constant 0 : index
    %157 = vector.load %arg2[%c26, %c0_139, %c0_140] : memref<27x4x4xbf16, #tpu.memory_space<vmem>>, vector<1x4x4xbf16>
    %158 = vector.shape_cast %157 : vector<1x4x4xbf16> to vector<4x4xbf16>
    %c0_141 = arith.constant 0 : index
    %c0_142 = arith.constant 0 : index
    %c222 = arith.constant 222 : index
    %159 = vector.load %arg1[%c0_141, %c0_142, %c222] : memref<1x4x1022xbf16, #tpu.memory_space<vmem>>, vector<1x4x800xbf16>
    %160 = vector.shape_cast %159 : vector<1x4x800xbf16> to vector<4x800xbf16>
    %cst_143 = arith.constant dense<0.000000e+00> : vector<4x800xf32>
    %161 = tpu.matmul %158, %160, %cst_143 {dimension_numbers = #tpu.dot_dimension_numbers<[1], [0], [0], [1], [0, 0, 1, 1], [], []>} : vector<4x4xbf16>, vector<4x800xbf16>, vector<4x800xf32> -> vector<4x800xf32>
    %162 = arith.addf %156, %161 : vector<4x800xf32>
    %c0_144 = arith.constant 0 : index
    %c0_145 = arith.constant 0 : index
    %163 = vector.load %arg3[%c0_144, %c0_145] : memref<4x1xf32, #tpu.memory_space<vmem>>, vector<4x1xf32>
    %164 = vector.broadcast %163 : vector<4x1xf32> to vector<4x800xf32>
    %165 = arith.addf %162, %164 : vector<4x800xf32>
    %c0_146 = arith.constant 0 : index
    %c0_147 = arith.constant 0 : index
    %c111_148 = arith.constant 111 : index
    %166 = vector.load %arg4[%c0_146, %c0_147, %c111_148] : memref<1x4x1022xbf16, #tpu.memory_space<vmem>>, vector<1x4x800xbf16>
    %167 = vector.shape_cast %166 : vector<1x4x800xbf16> to vector<4x800xbf16>
    %168 = arith.extf %167 : vector<4x800xbf16> to vector<4x800xf32>
    %169 = arith.addf %165, %168 : vector<4x800xf32>
    %cst_149 = arith.constant 0.000000e+00 : f32
    %170 = vector.broadcast %cst_149 : f32 to vector<4x800xf32>
    %171 = arith.maximumf %169, %170 : vector<4x800xf32>
    %c0_150 = arith.constant 0 : index
    %c0_151 = arith.constant 0 : index
    %c0_152 = arith.constant 0 : index
    %172 = vector.load %arg5[%c0_150, %c0_151, %c0_152] : memref<1x4x800xf32, #tpu.memory_space<vmem>>, vector<1x4x800xf32>
    %173 = vector.shape_cast %172 : vector<1x4x800xf32> to vector<4x800xf32>
    %174 = vector.shape_cast %171 : vector<4x800xf32> to vector<1x4x800xf32>
    tpu.vector_store %arg5[%c0_150, %c0_151, %c0_152], %174 {strides = array<i32>} : memref<1x4x800xf32, #tpu.memory_space<vmem>>, vector<1x4x800xf32>,
    return
  }
  func.func @transform_0(%arg0: i32) -> (i32, i32, i32) {
    %c0_i32 = arith.constant 0 : i32
    %c0_i32_0 = arith.constant 0 : i32
    %c0_i32_1 = arith.constant 0 : i32
    return %arg0, %c0_i32, %c0_i32_0 : i32, i32, i32
  }
  func.func @transform_1(%arg0: i32) -> (i32, i32, i32) {
    %c0_i32 = arith.constant 0 : i32
    %c0_i32_0 = arith.constant 0 : i32
    %c0_i32_1 = arith.constant 0 : i32
    %c0_i32_2 = arith.constant 0 : i32
    return %c0_i32, %c0_i32_0, %c0_i32_1 : i32, i32, i32
  }
  func.func @transform_2(%arg0: i32) -> (i32, i32) {
    %c0_i32 = arith.constant 0 : i32
    %c0_i32_0 = arith.constant 0 : i32
    %c0_i32_1 = arith.constant 0 : i32
    return %c0_i32, %c0_i32_0 : i32, i32
  }
  func.func @transform_3(%arg0: i32) -> (i32, i32, i32) {
    %c0_i32 = arith.constant 0 : i32
    %c0_i32_0 = arith.constant 0 : i32
    %c0_i32_1 = arith.constant 0 : i32
    return %arg0, %c0_i32, %c0_i32_0 : i32, i32, i32
  }
  func.func @transform_4(%arg0: i32) -> (i32, i32, i32) {
    %c0_i32 = arith.constant 0 : i32
    %c0_i32_0 = arith.constant 0 : i32
    %c0_i32_1 = arith.constant 0 : i32
    return %arg0, %c0_i32, %c0_i32_0 : i32, i32, i32
  }
}

</mosaic_0001>

<llo_original>
// kernel: a_call__.2
$region0: #{a_call__.2}
  #allocation0 [shape = 'u32[]', space=smem, size = 0x4, offset = 0x4, fixed_abs, tag = 'smem constant byte address 0x4 - core index']
  #allocation1 [shape = 'u32[72,128]{1,0:T(1,128)}', space=vmem, size = 0x9000, scoped, tag = 'internal scratch']
  %s0 = inlined_call_operand.vmem [shape: bf16[2,4,1022], index: 0, kind: input, shape index: {}]
  %s1 = inlined_call_operand.vmem [shape: bf16[27,4,4], index: 1, kind: input, shape index: {}]
  %s2 = inlined_call_operand.vmem [shape: f32[4,1], index: 2, kind: input, shape index: {}]
  %s3 = inlined_call_operand.vmem [shape: bf16[2,4,800], index: 3, kind: output, shape index: {}]
  %s4 = sld [smem:[#allocation0]]
  $region45: #{a_call__.2} parent=0
    _
  %s6 = ssub.s32 1, %s4
  %s7 = scalar_select 0, %s6, %s4
  loop: start=0, step=1, limit=4
  $region2: #{a_call__.2} parent=0 // loop_pre_header
    _
  $region3: #{a_call__.2} parent=0 // loop_header
    %s9 = sphi 0, %s13
    %p10 = scmp.ge.s32.totalorder %s9, 4
    %s19 = sphi 0, %s21
    %s22 = sphi 0, %s19
    %s23 = sphi 0, %s22
    %s39 = sphi 0, %s23
    %s43 = sphi 0, %s43
    %s45 = sphi 0, %s43
    %s46 = sphi 0, %s45
    %s60 = sphi 0, %s46
    %s64 = sphi 0, %s64
    %s66 = sphi 0, %s64
    %s67 = sphi 0, %s66
    %s81 = sphi 0, %s67
    %s87 = sphi 0, %s89
    %s90 = sphi 0, %s87
    %s91 = sphi 0, %s90
    %s107 = sphi 0, %s91
  $region4: #{a_call__.2} parent=0 // loop_header_branch
    %12 = sbr.rel (%p10) target = $region8
  $region5: #{a_call__.2} parent=0 // loop_body
    %s14 = ssub.s32 %s9, 1
    %s15 = ssub.s32 %s9, 2
    %s16 = sadd.s32 %s9, 1
    %s17 = ssub.s32 %s9, %s16
    %p18 = scmp.eq.s32.totalorder %s17, 0
    %s20 = sadd.s32 %s19, 1
    %s21 = scalar_select %p18, %s19, %s20
    %p24 = pneg %p18
    %p25 = scmp.eq.s32.totalorder %s9, 1
    %p26 = por %p24, %p25
    %p27 = scmp.ne.s32.totalorder %s19, %s22
    %p28 = scmp.eq.s32.totalorder %s9, 0
    %p29 = por %p27, %p28
    %p30 = scmp.ne.s32.totalorder %s19, %s22
    %p31 = scmp.eq.s32.totalorder %s14, 1
    %p32 = por %p30, %p31
    %p33 = scmp.ne.s32.totalorder %s22, %s23
    %p34 = scmp.eq.s32.totalorder %s14, 0
    %p35 = por %p33, %p34
    %p36 = scmp.ne.s32.totalorder %s22, %s23
    %p37 = scmp.eq.s32.totalorder %s15, 1
    %p38 = por %p36, %p37
    %p40 = scmp.ne.s32.totalorder %s23, %s39
    %p41 = scmp.eq.s32.totalorder %s15, 0
    %p42 = por %p40, %p41
    %s44 = sadd.s32 %s43, 1
    %p47 = scmp.eq.s32.totalorder %s9, 1
    %p48 = scmp.ne.s32.totalorder %s43, %s45
    %p49 = scmp.eq.s32.totalorder %s9, 0
    %p50 = por %p48, %p49
    %p51 = scmp.ne.s32.totalorder %s43, %s45
    %p52 = scmp.eq.s32.totalorder %s14, 1
    %p53 = por %p51, %p52
    %p54 = scmp.ne.s32.totalorder %s45, %s46
    %p55 = scmp.eq.s32.totalorder %s14, 0
    %p56 = por %p54, %p55
    %p57 = scmp.ne.s32.totalorder %s45, %s46
    %p58 = scmp.eq.s32.totalorder %s15, 1
    %p59 = por %p57, %p58
    %p61 = scmp.ne.s32.totalorder %s46, %s60
    %p62 = scmp.eq.s32.totalorder %s15, 0
    %p63 = por %p61, %p62
    %s65 = sadd.s32 %s64, 1
    %p68 = scmp.eq.s32.totalorder %s9, 1
    %p69 = scmp.ne.s32.totalorder %s64, %s66
    %p70 = scmp.eq.s32.totalorder %s9, 0
    %p71 = por %p69, %p70
    %p72 = scmp.ne.s32.totalorder %s64, %s66
    %p73 = scmp.eq.s32.totalorder %s14, 1
    %p74 = por %p72, %p73
    %p75 = scmp.ne.s32.totalorder %s66, %s67
    %p76 = scmp.eq.s32.totalorder %s14, 0
    %p77 = por %p75, %p76
    %p78 = scmp.ne.s32.totalorder %s66, %s67
    %p79 = scmp.eq.s32.totalorder %s15, 1
    %p80 = por %p78, %p79
    %p82 = scmp.ne.s32.totalorder %s67, %s81
    %p83 = scmp.eq.s32.totalorder %s15, 0
    %p84 = por %p82, %p83
    %s85 = ssub.s32 %s9, %s16
    %p86 = scmp.eq.s32.totalorder %s85, 0
    %s88 = sadd.s32 %s87, 1
    %s89 = scalar_select %p86, %s87, %s88
    %p92 = pneg %p86
    %p93 = scmp.eq.s32.totalorder %s9, 1
    %p94 = por %p92, %p93
    %p95 = scmp.ne.s32.totalorder %s87, %s90
    %p96 = scmp.eq.s32.totalorder %s9, 0
    %p97 = por %p95, %p96
    %p98 = scmp.ne.s32.totalorder %s87, %s90
    %p99 = scmp.eq.s32.totalorder %s14, 1
    %p100 = por %p98, %p99
    %p101 = scmp.ne.s32.totalorder %s90, %s91
    %p102 = scmp.eq.s32.totalorder %s14, 0
    %p103 = por %p101, %p102
    %p104 = scmp.ne.s32.totalorder %s90, %s91
    %p105 = scmp.eq.s32.totalorder %s15, 1
    %p106 = por %p104, %p105
    %p108 = scmp.ne.s32.totalorder %s91, %s107
    %p109 = scmp.eq.s32.totalorder %s15, 0
    %p110 = por %p108, %p109
    %p111 = scmp.le.s32.totalorder 1, %s9
    %p112 = scmp.lt.s32.totalorder %s9, 3
    %p113 = pnand %p111, %p112
    %p114 = pneg %p113
    // Predicated region
    $region9: #{a_call__.2} parent=5 // pred_check
      _
    $region10: #{a_call__.2} parent=5 // pred_check_branch
      %116 = sbr.rel (%p113) target = $region12
    $region11: #{a_call__.2} parent=5 // pred_region
      %s117 = ssub.s32 %s9, 1
      // Predicated region
      $region13: #{a_call__.2} parent=11 // pred_check
        %p118 = pneg %p56
      $region14: #{a_call__.2} parent=11 // pred_check_branch
        %120 = sbr.rel (%p118) target = $region16
      $region15: #{a_call__.2} parent=11 // pred_region
        _
      $region16: #{a_call__.2} parent=11 // pred_fallthru
        _
      // Predicated region
      $region17: #{a_call__.2} parent=11 // pred_check
        %p121 = pneg %p77
      $region18: #{a_call__.2} parent=11 // pred_check_branch
        %123 = sbr.rel (%p121) target = $region20
      $region19: #{a_call__.2} parent=11 // pred_region
        _
      $region20: #{a_call__.2} parent=11 // pred_fallthru
        _
    $region12: #{a_call__.2} parent=5 // pred_fallthru
      _
    %p124 = scmp.lt.s32.totalorder %s9, 2
    // Predicated region
    $region21: #{a_call__.2} parent=5 // pred_check
      %p125 = pneg %p124
    $region22: #{a_call__.2} parent=5 // pred_check_branch
      %127 = sbr.rel (%p125) target = $region24
    $region23: #{a_call__.2} parent=5 // pred_region
      // Predicated region
      $region25: #{a_call__.2} parent=23 // pred_check
        %p128 = pneg %p29
      $region26: #{a_call__.2} parent=23 // pred_check_branch
        %130 = sbr.rel (%p128) target = $region28
      $region27: #{a_call__.2} parent=23 // pred_region
        %p131 = scmp.lt.s32.totalorder %s9, 1
        %s132 = scalar_select %p131, %s9, 1
        %s133 = smul.addr %s132, 8
        %s134 = smul.addr %s133, 2
        %s135 = scalar_lea.vmem %s0, %s134
      $region28: #{a_call__.2} parent=23 // pred_fallthru
        _
    $region24: #{a_call__.2} parent=5 // pred_fallthru
      _
    %p136 = scmp.le.s32.totalorder 1, %s9
    %p137 = scmp.lt.s32.totalorder %s9, 3
    %p138 = pnand %p136, %p137
    %p139 = pneg %p138
    // Predicated region
    $region29: #{a_call__.2} parent=5 // pred_check
      _
    $region30: #{a_call__.2} parent=5 // pred_check_branch
      %141 = sbr.rel (%p138) target = $region32
    $region31: #{a_call__.2} parent=5 // pred_region
      %s142 = ssub.s32 %s9, 1
      %p143 = scmp.lt.s32.totalorder %s14, 1
      %s144 = scalar_select %p143, %s14, 1
      %s145 = smul.addr %s144, 8
      %s146 = smul.addr %s145, 2
      %s147 = scalar_lea.vmem %s0, %s146
      %p148 = pneg %p35
      %p149 = pneg %p32
      %p150 = pneg %p56
      %p151 = pneg %p53
      %p152 = pneg %p77
      %p153 = pneg %p74
      %p154 = pneg %p103
      %p155 = pneg %p100
      %p156 = scmp.lt.s32.totalorder %s14, 1
      %s157 = scalar_select %p156, %s14, 1
      %s158 = smul.addr %s157, 7
      %s159 = smul.addr %s158, 2
      %s160 = scalar_lea.vmem %s3, %s159
      %p161 = scmp.lt.s32.totalorder %s14, 1
      %s162 = scalar_select %p161, %s14, 1
      %s163 = smul.addr %s162, 8
      %s164 = smul.addr %s163, 2
      %s165 = scalar_lea.vmem %s0, %s164
      %p166 = scmp.lt.s32.totalorder %s14, 1
      %s167 = scalar_select %p166, %s14, 1
      %s168 = smul.addr %s167, 7
      %s169 = smul.addr %s168, 2
      %s170 = scalar_lea.vmem %s3, %s169
      %v172 = vld [vmem:[%s1] sm:$0x3]
      %v173 = vld [vmem:[%s165] sm:$0xff]
      %v174 = vld [vmem:[%s165 + $0x8] sm:$0x3f]
      %s175 = scalar_lea.vmem %s1, 2
      %v176 = vld [vmem:[%s175] sm:$0x3]
      %178 = vst [vmem:[#allocation1] ss:$4 sm:$0xff] %v173
      %s180 = scalar_lea.vmem [#allocation1], 32
      %181 = vst [vmem:[%s180] ss:$4 sm:$0xff] %v174
      %v182 = vld.sshfl [vmem:[#allocation1] sm:$0xff pattern:$0x73625140]
      %v184 = vld.sshfl [vmem:[#allocation1 + $0x8] sm:$0xff pattern:$0x73625140]
      %v186 = vld.sshfl [vmem:[#allocation1 + $0x10] sm:$0xff pattern:$0x73625140]
      %v188 = vld.sshfl [vmem:[#allocation1 + $0x18] sm:$0xff pattern:$0x73625140]
      %v190 = vld.sshfl [vmem:[#allocation1 + $0x20] sm:$0xff pattern:$0x73625140]
      %v192 = vld.sshfl [vmem:[#allocation1 + $0x28] sm:$0xff pattern:$0x73625140]
      %v194 = vld.sshfl [vmem:[#allocation1 + $0x30] sm:$0xff pattern:$0x73625140]
      %196 = vrot.lane.b32.xlu0 %v182, 127
      %v197 = vpop.permute.xlu0 %196
      %198 = vrot.lane.b32.xlu0 %v184, 127
      %v199 = vpop.permute.xlu0 %198
      %200 = vrot.lane.b32.xlu0 %v186, 127
      %v201 = vpop.permute.xlu0 %200
      %202 = vrot.lane.b32.xlu0 %v188, 127
      %v203 = vpop.permute.xlu0 %202
      %204 = vrot.lane.b32.xlu0 %v190, 127
      %v205 = vpop.permute.xlu0 %204
      %206 = vrot.lane.b32.xlu0 %v192, 127
      %v207 = vpop.permute.xlu0 %206
      %208 = vrot.lane.b32.xlu0 %v194, 127
      %v209 = vpop.permute.xlu0 %208
      %vm210 = vcmask 1039360
      %v211 = vsel %vm210, %v197, %v199
      %v212 = vsel %vm210, %v199, %v201
      %v213 = vsel %vm210, %v201, %v203
      %v214 = vsel %vm210, %v203, %v205
      %v215 = vsel %vm210, %v205, %v207
      %v216 = vsel %vm210, %v207, %v209
      %vm217 = vcmask 31744
      %v219 = vsel %vm217, %v176, 0
      %vm221 = vcmask 1041408
      %v223 = vsel %vm221, %v211, 0
      %v226 = vsel %vm221, %v212, 0
      %v229 = vsel %vm221, %v213, 0
      %v232 = vsel %vm221, %v214, 0
      %v235 = vsel %vm221, %v215, 0
      %v238 = vsel %vm221, %v216, 0
      %v241 = vsel %vm221, %v209, 0
      %243 = vmatpush.bf16.msra.mxu0 0
      %244 = vmatpush.bf16.msra.mxu0 0
      %245 = vmatpush.bf16.msra.mxu0 0
      %246 = vmatpush.bf16.msra.mxu0 0
      %247 = vmatpush.bf16.msra.mxu0 0
      %248 = vmatpush.bf16.msra.mxu0 0
      %249 = vmatpush.bf16.msra.mxu0 0
      %250 = vmatpush.bf16.msra.mxu0 %v223
      %251 = vmatmul.bf16.gmra.mxu0 %v219
      %v252 = vpop.f32.mrf.mxu0
      %v253 = vadd.f32 0.0, %v252
      %v254 = vpop.f32.mrf.mxu0
      %255 = vdwg.mxu0
      %256 = vmatpush.bf16.msra.mxu0 0
      %257 = vmatpush.bf16.msra.mxu0 0
      %258 = vmatpush.bf16.msra.mxu0 0
      %259 = vmatpush.bf16.msra.mxu0 0
      %260 = vmatpush.bf16.msra.mxu0 0
      %261 = vmatpush.bf16.msra.mxu0 0
      %262 = vmatpush.bf16.msra.mxu0 0
      %263 = vmatpush.bf16.msra.mxu0 %v226
      %264 = vmatmul.bf16.gmra.mxu0 %v219
      %v265 = vpop.f32.mrf.mxu0
      %v266 = vadd.f32 0.0, %v265
      %v267 = vpop.f32.mrf.mxu0
      %268 = vdwg.mxu0
      %269 = vmatpush.bf16.msra.mxu0 0
      %270 = vmatpush.bf16.msra.mxu0 0
      %271 = vmatpush.bf16.msra.mxu0 0
      %272 = vmatpush.bf16.msra.mxu0 0
      %273 = vmatpush.bf16.msra.mxu0 0
      %274 = vmatpush.bf16.msra.mxu0 0
      %275 = vmatpush.bf16.msra.mxu0 0
      %276 = vmatpush.bf16.msra.mxu0 %v229
      %277 = vmatmul.bf16.gmra.mxu0 %v219
      %v278 = vpop.f32.mrf.mxu0
      %v279 = vadd.f32 0.0, %v278
      %v280 = vpop.f32.mrf.mxu0
      %281 = vdwg.mxu0
      %282 = vmatpush.bf16.msra.mxu0 0
      %283 = vmatpush.bf16.msra.mxu0 0
      %284 = vmatpush.bf16.msra.mxu0 0
      %285 = vmatpush.bf16.msra.mxu0 0
      %286 = vmatpush.bf16.msra.mxu0 0
      %287 = vmatpush.bf16.msra.mxu0 0
      %288 = vmatpush.bf16.msra.mxu0 0
      %289 = vmatpush.bf16.msra.mxu0 %v232
      %290 = vmatmul.bf16.gmra.mxu0 %v219
      %v291 = vpop.f32.mrf.mxu0
      %v292 = vadd.f32 0.0, %v291
      %v293 = vpop.f32.mrf.mxu0
      %294 = vdwg.mxu0
      %295 = vmatpush.bf16.msra.mxu0 0
      %296 = vmatpush.bf16.msra.mxu0 0
      %297 = vmatpush.bf16.msra.mxu0 0
      %298 = vmatpush.bf16.msra.mxu0 0
      %299 = vmatpush.bf16.msra.mxu0 0
      %300 = vmatpush.bf16.msra.mxu0 0
      %301 = vmatpush.bf16.msra.mxu0 0
      %302 = vmatpush.bf16.msra.mxu0 %v235
      %303 = vmatmul.bf16.gmra.mxu0 %v219
      %v304 = vpop.f32.mrf.mxu0
      %v305 = vadd.f32 0.0, %v304
      %v306 = vpop.f32.mrf.mxu0
      %307 = vdwg.mxu0
      %308 = vmatpush.bf16.msra.mxu0 0
      %309 = vmatpush.bf16.msra.mxu0 0
      %310 = vmatpush.bf16.msra.mxu0 0
      %311 = vmatpush.bf16.msra.mxu0 0
      %312 = vmatpush.bf16.msra.mxu0 0
      %313 = vmatpush.bf16.msra.mxu0 0
      %314 = vmatpush.bf16.msra.mxu0 0
      %315 = vmatpush.bf16.msra.mxu0 %v238
      %316 = vmatmul.bf16.gmra.mxu0 %v219
      %v317 = vpop.f32.mrf.mxu0
      %v318 = vadd.f32 0.0, %v317
      %v319 = vpop.f32.mrf.mxu0
      %320 = vdwg.mxu0
      %321 = vmatpush.bf16.msra.mxu0 0
      %322 = vmatpush.bf16.msra.mxu0 0
      %323 = vmatpush.bf16.msra.mxu0 0
      %324 = vmatpush.bf16.msra.mxu0 0
      %325 = vmatpush.bf16.msra.mxu0 0
      %326 = vmatpush.bf16.msra.mxu0 0
      %327 = vmatpush.bf16.msra.mxu0 0
      %328 = vmatpush.bf16.msra.mxu0 %v241
      %329 = vmatmul.bf16.gmra.mxu0 %v219
      %v330 = vpop.f32.mrf.mxu0
      %v331 = vadd.f32 0.0, %v330
      %v332 = vpop.f32.mrf.mxu0
      %333 = vdwg.mxu0
      %334 = vst [vmem:[#allocation1] ss:$4 sm:$0xff] %v173
      %s335 = scalar_lea.vmem [#allocation1], 32
      %336 = vst [vmem:[%s335] ss:$4 sm:$0xff] %v174
      %v337 = vld.sshfl [vmem:[#allocation1] sm:$0xff pattern:$0x73625140]
      %v338 = vld.sshfl [vmem:[#allocation1 + $0x8] sm:$0xff pattern:$0x73625140]
      %v339 = vld.sshfl [vmem:[#allocation1 + $0x10] sm:$0xff pattern:$0x73625140]
      %v340 = vld.sshfl [vmem:[#allocation1 + $0x18] sm:$0xff pattern:$0x73625140]
      %v341 = vld.sshfl [vmem:[#allocation1 + $0x20] sm:$0xff pattern:$0x73625140]
      %v342 = vld.sshfl [vmem:[#allocation1 + $0x28] sm:$0xff pattern:$0x73625140]
      %v343 = vld.sshfl [vmem:[#allocation1 + $0x30] sm:$0xff pattern:$0x73625140]
      %v345 = vsel %vm217, %v172, 0
      %v347 = vsel %vm221, %v337, 0
      %v349 = vsel %vm221, %v338, 0
      %v351 = vsel %vm221, %v339, 0
      %v353 = vsel %vm221, %v340, 0
      %v355 = vsel %vm221, %v341, 0
      %v357 = vsel %vm221, %v342, 0
      %v359 = vsel %vm221, %v343, 0
      %361 = vmatpush.bf16.msra.mxu0 0
      %362 = vmatpush.bf16.msra.mxu0 0
      %363 = vmatpush.bf16.msra.mxu0 0
      %364 = vmatpush.bf16.msra.mxu0 0
      %365 = vmatpush.bf16.msra.mxu0 0
      %366 = vmatpush.bf16.msra.mxu0 0
      %367 = vmatpush.bf16.msra.mxu0 0
      %368 = vmatpush.bf16.msra.mxu0 %v347
      %369 = vmatmul.bf16.gmra.mxu0 %v345
      %v370 = vpop.f32.mrf.mxu0
      %v371 = vadd.f32 %v253, %v370
      %v372 = vpop.f32.mrf.mxu0
      %373 = vdwg.mxu0
      %374 = vmatpush.bf16.msra.mxu0 0
      %375 = vmatpush.bf16.msra.mxu0 0
      %376 = vmatpush.bf16.msra.mxu0 0
      %377 = vmatpush.bf16.msra.mxu0 0
      %378 = vmatpush.bf16.msra.mxu0 0
      %379 = vmatpush.bf16.msra.mxu0 0
      %380 = vmatpush.bf16.msra.mxu0 0
      %381 = vmatpush.bf16.msra.mxu0 %v349
      %382 = vmatmul.bf16.gmra.mxu0 %v345
      %v383 = vpop.f32.mrf.mxu0
      %v384 = vadd.f32 %v266, %v383
      %v385 = vpop.f32.mrf.mxu0
      %386 = vdwg.mxu0
      %387 = vmatpush.bf16.msra.mxu0 0
      %388 = vmatpush.bf16.msra.mxu0 0
      %389 = vmatpush.bf16.msra.mxu0 0
      %390 = vmatpush.bf16.msra.mxu0 0
      %391 = vmatpush.bf16.msra.mxu0 0
      %392 = vmatpush.bf16.msra.mxu0 0
      %393 = vmatpush.bf16.msra.mxu0 0
      %394 = vmatpush.bf16.msra.mxu0 %v351
      %395 = vmatmul.bf16.gmra.mxu0 %v345
      %v396 = vpop.f32.mrf.mxu0
      %v397 = vadd.f32 %v279, %v396
      %v398 = vpop.f32.mrf.mxu0
      %399 = vdwg.mxu0
      %400 = vmatpush.bf16.msra.mxu0 0
      %401 = vmatpush.bf16.msra.mxu0 0
      %402 = vmatpush.bf16.msra.mxu0 0
      %403 = vmatpush.bf16.msra.mxu0 0
      %404 = vmatpush.bf16.msra.mxu0 0
      %405 = vmatpush.bf16.msra.mxu0 0
      %406 = vmatpush.bf16.msra.mxu0 0
      %407 = vmatpush.bf16.msra.mxu0 %v353
      %408 = vmatmul.bf16.gmra.mxu0 %v345
      %v409 = vpop.f32.mrf.mxu0
      %v410 = vadd.f32 %v292, %v409
      %v411 = vpop.f32.mrf.mxu0
      %412 = vdwg.mxu0
      %413 = vmatpush.bf16.msra.mxu0 0
      %414 = vmatpush.bf16.msra.mxu0 0
      %415 = vmatpush.bf16.msra.mxu0 0
      %416 = vmatpush.bf16.msra.mxu0 0
      %417 = vmatpush.bf16.msra.mxu0 0
      %418 = vmatpush.bf16.msra.mxu0 0
      %419 = vmatpush.bf16.msra.mxu0 0
      %420 = vmatpush.bf16.msra.mxu0 %v355
      %421 = vmatmul.bf16.gmra.mxu0 %v345
      %v422 = vpop.f32.mrf.mxu0
      %v423 = vadd.f32 %v305, %v422
      %v424 = vpop.f32.mrf.mxu0
      %425 = vdwg.mxu0
      %426 = vmatpush.bf16.msra.mxu0 0
      %427 = vmatpush.bf16.msra.mxu0 0
      %428 = vmatpush.bf16.msra.mxu0 0
      %429 = vmatpush.bf16.msra.mxu0 0
      %430 = vmatpush.bf16.msra.mxu0 0
      %431 = vmatpush.bf16.msra.mxu0 0
      %432 = vmatpush.bf16.msra.mxu0 0
      %433 = vmatpush.bf16.msra.mxu0 %v357
      %434 = vmatmul.bf16.gmra.mxu0 %v345
      %v435 = vpop.f32.mrf.mxu0
      %v436 = vadd.f32 %v318, %v435
      %v437 = vpop.f32.mrf.mxu0
      %438 = vdwg.mxu0
      %439 = vmatpush.bf16.msra.mxu0 0
      %440 = vmatpush.bf16.msra.mxu0 0
      %441 = vmatpush.bf16.msra.mxu0 0
      %442 = vmatpush.bf16.msra.mxu0 0
      %443 = vmatpush.bf16.msra.mxu0 0
      %444 = vmatpush.bf16.msra.mxu0 0
      %445 = vmatpush.bf16.msra.mxu0 0
      %446 = vmatpush.bf16.msra.mxu0 %v359
      %447 = vmatmul.bf16.gmra.mxu0 %v345
      %v448 = vpop.f32.mrf.mxu0
      %v449 = vadd.f32 %v331, %v448
      %v450 = vpop.f32.mrf.mxu0
      %451 = vdwg.mxu0
      %s452 = scalar_lea.vmem %s1, 4
      %v453 = vld [vmem:[%s452] sm:$0x3]
      %v454 = vld [vmem:[%s165] sm:$0xff]
      %v455 = vld [vmem:[%s165 + $0x8] sm:$0x3f]
      %457 = vst [vmem:[#allocation1] ss:$4 sm:$0xff] %v454
      %s459 = scalar_lea.vmem [#allocation1], 32
      %460 = vst [vmem:[%s459] ss:$4 sm:$0xff] %v455
      %v461 = vld.sshfl [vmem:[#allocation1] sm:$0xff pattern:$0x73625140]
      %v463 = vld.sshfl [vmem:[#allocation1 + $0x8] sm:$0xff pattern:$0x73625140]
      %v465 = vld.sshfl [vmem:[#allocation1 + $0x10] sm:$0xff pattern:$0x73625140]
      %v467 = vld.sshfl [vmem:[#allocation1 + $0x18] sm:$0xff pattern:$0x73625140]
      %v469 = vld.sshfl [vmem:[#allocation1 + $0x20] sm:$0xff pattern:$0x73625140]
      %v471 = vld.sshfl [vmem:[#allocation1 + $0x28] sm:$0xff pattern:$0x73625140]
      %v473 = vld.sshfl [vmem:[#allocation1 + $0x30] sm:$0xff pattern:$0x73625140]
      %475 = vrot.lane.b32.xlu0 %v461, 126
      %v476 = vpop.permute.xlu0 %475
      %477 = vrot.lane.b32.xlu0 %v463, 126
      %v478 = vpop.permute.xlu0 %477
      %479 = vrot.lane.b32.xlu0 %v465, 126
      %v480 = vpop.permute.xlu0 %479
      %481 = vrot.lane.b32.xlu0 %v467, 126
      %v482 = vpop.permute.xlu0 %481
      %483 = vrot.lane.b32.xlu0 %v469, 126
      %v484 = vpop.permute.xlu0 %483
      %485 = vrot.lane.b32.xlu0 %v471, 126
      %v486 = vpop.permute.xlu0 %485
      %487 = vrot.lane.b32.xlu0 %v473, 126
      %v488 = vpop.permute.xlu0 %487
      %vm489 = vcmask 1031168
      %v490 = vsel %vm489, %v476, %v478
      %v491 = vsel %vm489, %v478, %v480
      %v492 = vsel %vm489, %v480, %v482
      %v493 = vsel %vm489, %v482, %v484
      %v494 = vsel %vm489, %v484, %v486
      %v495 = vsel %vm489, %v486, %v488
      %v497 = vsel %vm217, %v453, 0
      %v500 = vsel %vm221, %v490, 0
      %v503 = vsel %vm221, %v491, 0
      %v506 = vsel %vm221, %v492, 0
      %v509 = vsel %vm221, %v493, 0
      %v512 = vsel %vm221, %v494, 0
      %v515 = vsel %vm221, %v495, 0
      %v518 = vsel %vm221, %v488, 0
      %520 = vmatpush.bf16.msra.mxu0 0
      %521 = vmatpush.bf16.msra.mxu0 0
      %522 = vmatpush.bf16.msra.mxu0 0
      %523 = vmatpush.bf16.msra.mxu0 0
      %524 = vmatpush.bf16.msra.mxu0 0
      %525 = vmatpush.bf16.msra.mxu0 0
      %526 = vmatpush.bf16.msra.mxu0 0
      %527 = vmatpush.bf16.msra.mxu0 %v500
      %528 = vmatmul.bf16.gmra.mxu0 %v497
      %v529 = vpop.f32.mrf.mxu0
      %v530 = vadd.f32 0.0, %v529
      %v531 = vpop.f32.mrf.mxu0
      %532 = vdwg.mxu0
      %533 = vmatpush.bf16.msra.mxu0 0
      %534 = vmatpush.bf16.msra.mxu0 0
      %535 = vmatpush.bf16.msra.mxu0 0
      %536 = vmatpush.bf16.msra.mxu0 0
      %537 = vmatpush.bf16.msra.mxu0 0
      %538 = vmatpush.bf16.msra.mxu0 0
      %539 = vmatpush.bf16.msra.mxu0 0
      %540 = vmatpush.bf16.msra.mxu0 %v503
      %541 = vmatmul.bf16.gmra.mxu0 %v497
      %v542 = vpop.f32.mrf.mxu0
      %v543 = vadd.f32 0.0, %v542
      %v544 = vpop.f32.mrf.mxu0
      %545 = vdwg.mxu0
      %546 = vmatpush.bf16.msra.mxu0 0
      %547 = vmatpush.bf16.msra.mxu0 0
      %548 = vmatpush.bf16.msra.mxu0 0
      %549 = vmatpush.bf16.msra.mxu0 0
      %550 = vmatpush.bf16.msra.mxu0 0
      %551 = vmatpush.bf16.msra.mxu0 0
      %552 = vmatpush.bf16.msra.mxu0 0
      %553 = vmatpush.bf16.msra.mxu0 %v506
      %554 = vmatmul.bf16.gmra.mxu0 %v497
      %v555 = vpop.f32.mrf.mxu0
      %v556 = vadd.f32 0.0, %v555
      %v557 = vpop.f32.mrf.mxu0
      %558 = vdwg.mxu0
      %559 = vmatpush.bf16.msra.mxu0 0
      %560 = vmatpush.bf16.msra.mxu0 0
      %561 = vmatpush.bf16.msra.mxu0 0
      %562 = vmatpush.bf16.msra.mxu0 0
      %563 = vmatpush.bf16.msra.mxu0 0
      %564 = vmatpush.bf16.msra.mxu0 0
      %565 = vmatpush.bf16.msra.mxu0 0
      %566 = vmatpush.bf16.msra.mxu0 %v509
      %567 = vmatmul.bf16.gmra.mxu0 %v497
      %v568 = vpop.f32.mrf.mxu0
      %v569 = vadd.f32 0.0, %v568
      %v570 = vpop.f32.mrf.mxu0
      %571 = vdwg.mxu0
      %572 = vmatpush.bf16.msra.mxu0 0
      %573 = vmatpush.bf16.msra.mxu0 0
      %574 = vmatpush.bf16.msra.mxu0 0
      %575 = vmatpush.bf16.msra.mxu0 0
      %576 = vmatpush.bf16.msra.mxu0 0
      %577 = vmatpush.bf16.msra.mxu0 0
      %578 = vmatpush.bf16.msra.mxu0 0
      %579 = vmatpush.bf16.msra.mxu0 %v512
      %580 = vmatmul.bf16.gmra.mxu0 %v497
      %v581 = vpop.f32.mrf.mxu0
      %v582 = vadd.f32 0.0, %v581
      %v583 = vpop.f32.mrf.mxu0
      %584 = vdwg.mxu0
      %585 = vmatpush.bf16.msra.mxu0 0
      %586 = vmatpush.bf16.msra.mxu0 0
      %587 = vmatpush.bf16.msra.mxu0 0
      %588 = vmatpush.bf16.msra.mxu0 0
      %589 = vmatpush.bf16.msra.mxu0 0
      %590 = vmatpush.bf16.msra.mxu0 0
      %591 = vmatpush.bf16.msra.mxu0 0
      %592 = vmatpush.bf16.msra.mxu0 %v515
      %593 = vmatmul.bf16.gmra.mxu0 %v497
      %v594 = vpop.f32.mrf.mxu0
      %v595 = vadd.f32 0.0, %v594
      %v596 = vpop.f32.mrf.mxu0
      %597 = vdwg.mxu0
      %598 = vmatpush.bf16.msra.mxu0 0
      %599 = vmatpush.bf16.msra.mxu0 0
      %600 = vmatpush.bf16.msra.mxu0 0
      %601 = vmatpush.bf16.msra.mxu0 0
      %602 = vmatpush.bf16.msra.mxu0 0
      %603 = vmatpush.bf16.msra.mxu0 0
      %604 = vmatpush.bf16.msra.mxu0 0
      %605 = vmatpush.bf16.msra.mxu0 %v518
      %606 = vmatmul.bf16.gmra.mxu0 %v497
      %v607 = vpop.f32.mrf.mxu0
      %v608 = vadd.f32 0.0, %v607
      %v609 = vpop.f32.mrf.mxu0
      %610 = vdwg.mxu0
      %v611 = vadd.f32 %v371, %v530
      %v612 = vadd.f32 %v384, %v543
      %v613 = vadd.f32 %v397, %v556
      %v614 = vadd.f32 %v410, %v569
      %v615 = vadd.f32 %v423, %v582
      %v616 = vadd.f32 %v436, %v595
      %v617 = vadd.f32 %v449, %v608
      %s618 = scalar_lea.vmem %s1, 6
      %v619 = vld [vmem:[%s618] sm:$0x3]
      %v620 = vld [vmem:[%s165] sm:$0xff]
      %v621 = vld [vmem:[%s165 + $0x8] sm:$0x3f]
      %623 = vst [vmem:[#allocation1] ss:$4 sm:$0xff] %v620
      %s625 = scalar_lea.vmem [#allocation1], 32
      %626 = vst [vmem:[%s625] ss:$4 sm:$0xff] %v621
      %v627 = vld.sshfl [vmem:[#allocation1] sm:$0xff pattern:$0x73625140]
      %v629 = vld.sshfl [vmem:[#allocation1 + $0x8] sm:$0xff pattern:$0x73625140]
      %v631 = vld.sshfl [vmem:[#allocation1 + $0x10] sm:$0xff pattern:$0x73625140]
      %v633 = vld.sshfl [vmem:[#allocation1 + $0x18] sm:$0xff pattern:$0x73625140]
      %v635 = vld.sshfl [vmem:[#allocation1 + $0x20] sm:$0xff pattern:$0x73625140]
      %v637 = vld.sshfl [vmem:[#allocation1 + $0x28] sm:$0xff pattern:$0x73625140]
      %v639 = vld.sshfl [vmem:[#allocation1 + $0x30] sm:$0xff pattern:$0x73625140]
      %641 = vrot.lane.b32.xlu0 %v627, 118
      %v642 = vpop.permute.xlu0 %641
      %643 = vrot.lane.b32.xlu0 %v629, 118
      %v644 = vpop.permute.xlu0 %643
      %645 = vrot.lane.b32.xlu0 %v631, 118
      %v646 = vpop.permute.xlu0 %645
      %647 = vrot.lane.b32.xlu0 %v633, 118
      %v648 = vpop.permute.xlu0 %647
      %649 = vrot.lane.b32.xlu0 %v635, 118
      %v650 = vpop.permute.xlu0 %649
      %651 = vrot.lane.b32.xlu0 %v637, 118
      %v652 = vpop.permute.xlu0 %651
      %653 = vrot.lane.b32.xlu0 %v639, 118
      %v654 = vpop.permute.xlu0 %653
      %vm655 = vcmask 965632
      %v656 = vsel %vm655, %v642, %v644
      %v657 = vsel %vm655, %v644, %v646
      %v658 = vsel %vm655, %v646, %v648
      %v659 = vsel %vm655, %v648, %v650
      %v660 = vsel %vm655, %v650, %v652
      %v661 = vsel %vm655, %v652, %v654
      %v663 = vsel %vm217, %v619, 0
      %v666 = vsel %vm221, %v656, 0
      %v669 = vsel %vm221, %v657, 0
      %v672 = vsel %vm221, %v658, 0
      %v675 = vsel %vm221, %v659, 0
      %v678 = vsel %vm221, %v660, 0
      %v681 = vsel %vm221, %v661, 0
      %v684 = vsel %vm221, %v654, 0
      %686 = vmatpush.bf16.msra.mxu0 0
      %687 = vmatpush.bf16.msra.mxu0 0
      %688 = vmatpush.bf16.msra.mxu0 0
      %689 = vmatpush.bf16.msra.mxu0 0
      %690 = vmatpush.bf16.msra.mxu0 0
      %691 = vmatpush.bf16.msra.mxu0 0
      %692 = vmatpush.bf16.msra.mxu0 0
      %693 = vmatpush.bf16.msra.mxu0 %v666
      %694 = vmatmul.bf16.gmra.mxu0 %v663
      %v695 = vpop.f32.mrf.mxu0
      %v696 = vadd.f32 0.0, %v695
      %v697 = vpop.f32.mrf.mxu0
      %698 = vdwg.mxu0
      %699 = vmatpush.bf16.msra.mxu0 0
      %700 = vmatpush.bf16.msra.mxu0 0
      %701 = vmatpush.bf16.msra.mxu0 0
      %702 = vmatpush.bf16.msra.mxu0 0
      %703 = vmatpush.bf16.msra.mxu0 0
      %704 = vmatpush.bf16.msra.mxu0 0
      %705 = vmatpush.bf16.msra.mxu0 0
      %706 = vmatpush.bf16.msra.mxu0 %v669
      %707 = vmatmul.bf16.gmra.mxu0 %v663
      %v708 = vpop.f32.mrf.mxu0
      %v709 = vadd.f32 0.0, %v708
      %v710 = vpop.f32.mrf.mxu0
      %711 = vdwg.mxu0
      %712 = vmatpush.bf16.msra.mxu0 0
      %713 = vmatpush.bf16.msra.mxu0 0
      %714 = vmatpush.bf16.msra.mxu0 0
      %715 = vmatpush.bf16.msra.mxu0 0
      %716 = vmatpush.bf16.msra.mxu0 0
      %717 = vmatpush.bf16.msra.mxu0 0
      %718 = vmatpush.bf16.msra.mxu0 0
      %719 = vmatpush.bf16.msra.mxu0 %v672
      %720 = vmatmul.bf16.gmra.mxu0 %v663
      %v721 = vpop.f32.mrf.mxu0
      %v722 = vadd.f32 0.0, %v721
      %v723 = vpop.f32.mrf.mxu0
      %724 = vdwg.mxu0
      %725 = vmatpush.bf16.msra.mxu0 0
      %726 = vmatpush.bf16.msra.mxu0 0
      %727 = vmatpush.bf16.msra.mxu0 0
      %728 = vmatpush.bf16.msra.mxu0 0
      %729 = vmatpush.bf16.msra.mxu0 0
      %730 = vmatpush.bf16.msra.mxu0 0
      %731 = vmatpush.bf16.msra.mxu0 0
      %732 = vmatpush.bf16.msra.mxu0 %v675
      %733 = vmatmul.bf16.gmra.mxu0 %v663
      %v734 = vpop.f32.mrf.mxu0
      %v735 = vadd.f32 0.0, %v734
      %v736 = vpop.f32.mrf.mxu0
      %737 = vdwg.mxu0
      %738 = vmatpush.bf16.msra.mxu0 0
      %739 = vmatpush.bf16.msra.mxu0 0
      %740 = vmatpush.bf16.msra.mxu0 0
      %741 = vmatpush.bf16.msra.mxu0 0
      %742 = vmatpush.bf16.msra.mxu0 0
      %743 = vmatpush.bf16.msra.mxu0 0
      %744 = vmatpush.bf16.msra.mxu0 0
      %745 = vmatpush.bf16.msra.mxu0 %v678
      %746 = vmatmul.bf16.gmra.mxu0 %v663
      %v747 = vpop.f32.mrf.mxu0
      %v748 = vadd.f32 0.0, %v747
      %v749 = vpop.f32.mrf.mxu0
      %750 = vdwg.mxu0
      %751 = vmatpush.bf16.msra.mxu0 0
      %752 = vmatpush.bf16.msra.mxu0 0
      %753 = vmatpush.bf16.msra.mxu0 0
      %754 = vmatpush.bf16.msra.mxu0 0
      %755 = vmatpush.bf16.msra.mxu0 0
      %756 = vmatpush.bf16.msra.mxu0 0
      %757 = vmatpush.bf16.msra.mxu0 0
      %758 = vmatpush.bf16.msra.mxu0 %v681
      %759 = vmatmul.bf16.gmra.mxu0 %v663
      %v760 = vpop.f32.mrf.mxu0
      %v761 = vadd.f32 0.0, %v760
      %v762 = vpop.f32.mrf.mxu0
      %763 = vdwg.mxu0
      %764 = vmatpush.bf16.msra.mxu0 0
      %765 = vmatpush.bf16.msra.mxu0 0
      %766 = vmatpush.bf16.msra.mxu0 0
      %767 = vmatpush.bf16.msra.mxu0 0
      %768 = vmatpush.bf16.msra.mxu0 0
      %769 = vmatpush.bf16.msra.mxu0 0
      %770 = vmatpush.bf16.msra.mxu0 0
      %771 = vmatpush.bf16.msra.mxu0 %v684
      %772 = vmatmul.bf16.gmra.mxu0 %v663
      %v773 = vpop.f32.mrf.mxu0
      %v774 = vadd.f32 0.0, %v773
      %v775 = vpop.f32.mrf.mxu0
      %776 = vdwg.mxu0
      %v777 = vadd.f32 %v611, %v696
      %v778 = vadd.f32 %v612, %v709
      %v779 = vadd.f32 %v613, %v722
      %v780 = vadd.f32 %v614, %v735
      %v781 = vadd.f32 %v615, %v748
      %v782 = vadd.f32 %v616, %v761
      %v783 = vadd.f32 %v617, %v774
      %s784 = scalar_lea.vmem %s1, 8
      %v785 = vld [vmem:[%s784] sm:$0x3]
      %v786 = vld [vmem:[%s165] sm:$0xff]
      %v787 = vld [vmem:[%s165 + $0x8] sm:$0x3f]
      %789 = vst [vmem:[#allocation1] ss:$4 sm:$0xff] %v786
      %s791 = scalar_lea.vmem [#allocation1], 32
      %792 = vst [vmem:[%s791] ss:$4 sm:$0xff] %v787
      %v793 = vld.sshfl [vmem:[#allocation1] sm:$0xff pattern:$0x73625140]
      %v795 = vld.sshfl [vmem:[#allocation1 + $0x8] sm:$0xff pattern:$0x73625140]
      %v797 = vld.sshfl [vmem:[#allocation1 + $0x10] sm:$0xff pattern:$0x73625140]
      %v799 = vld.sshfl [vmem:[#allocation1 + $0x18] sm:$0xff pattern:$0x73625140]
      %v801 = vld.sshfl [vmem:[#allocation1 + $0x20] sm:$0xff pattern:$0x73625140]
      %v803 = vld.sshfl [vmem:[#allocation1 + $0x28] sm:$0xff pattern:$0x73625140]
      %v805 = vld.sshfl [vmem:[#allocation1 + $0x30] sm:$0xff pattern:$0x73625140]
      %807 = vrot.lane.b32.xlu0 %v793, 117
      %v808 = vpop.permute.xlu0 %807
      %809 = vrot.lane.b32.xlu0 %v795, 117
      %v810 = vpop.permute.xlu0 %809
      %811 = vrot.lane.b32.xlu0 %v797, 117
      %v812 = vpop.permute.xlu0 %811
      %813 = vrot.lane.b32.xlu0 %v799, 117
      %v814 = vpop.permute.xlu0 %813
      %815 = vrot.lane.b32.xlu0 %v801, 117
      %v816 = vpop.permute.xlu0 %815
      %817 = vrot.lane.b32.xlu0 %v803, 117
      %v818 = vpop.permute.xlu0 %817
      %819 = vrot.lane.b32.xlu0 %v805, 117
      %v820 = vpop.permute.xlu0 %819
      %vm821 = vcmask 957440
      %v822 = vsel %vm821, %v808, %v810
      %v823 = vsel %vm821, %v810, %v812
      %v824 = vsel %vm821, %v812, %v814
      %v825 = vsel %vm821, %v814, %v816
      %v826 = vsel %vm821, %v816, %v818
      %v827 = vsel %vm821, %v818, %v820
      %v829 = vsel %vm217, %v785, 0
      %v832 = vsel %vm221, %v822, 0
      %v835 = vsel %vm221, %v823, 0
      %v838 = vsel %vm221, %v824, 0
      %v841 = vsel %vm221, %v825, 0
      %v844 = vsel %vm221, %v826, 0
      %v847 = vsel %vm221, %v827, 0
      %v850 = vsel %vm221, %v820, 0
      %852 = vmatpush.bf16.msra.mxu0 0
      %853 = vmatpush.bf16.msra.mxu0 0
      %854 = vmatpush.bf16.msra.mxu0 0
      %855 = vmatpush.bf16.msra.mxu0 0
      %856 = vmatpush.bf16.msra.mxu0 0
      %857 = vmatpush.bf16.msra.mxu0 0
      %858 = vmatpush.bf16.msra.mxu0 0
      %859 = vmatpush.bf16.msra.mxu0 %v832
      %860 = vmatmul.bf16.gmra.mxu0 %v829
      %v861 = vpop.f32.mrf.mxu0
      %v862 = vadd.f32 0.0, %v861
      %v863 = vpop.f32.mrf.mxu0
      %864 = vdwg.mxu0
      %865 = vmatpush.bf16.msra.mxu0 0
      %866 = vmatpush.bf16.msra.mxu0 0
      %867 = vmatpush.bf16.msra.mxu0 0
      %868 = vmatpush.bf16.msra.mxu0 0
      %869 = vmatpush.bf16.msra.mxu0 0
      %870 = vmatpush.bf16.msra.mxu0 0
      %871 = vmatpush.bf16.msra.mxu0 0
      %872 = vmatpush.bf16.msra.mxu0 %v835
      %873 = vmatmul.bf16.gmra.mxu0 %v829
      %v874 = vpop.f32.mrf.mxu0
      %v875 = vadd.f32 0.0, %v874
      %v876 = vpop.f32.mrf.mxu0
      %877 = vdwg.mxu0
      %878 = vmatpush.bf16.msra.mxu0 0
      %879 = vmatpush.bf16.msra.mxu0 0
      %880 = vmatpush.bf16.msra.mxu0 0
      %881 = vmatpush.bf16.msra.mxu0 0
      %882 = vmatpush.bf16.msra.mxu0 0
      %883 = vmatpush.bf16.msra.mxu0 0
      %884 = vmatpush.bf16.msra.mxu0 0
      %885 = vmatpush.bf16.msra.mxu0 %v838
      %886 = vmatmul.bf16.gmra.mxu0 %v829
      %v887 = vpop.f32.mrf.mxu0
      %v888 = vadd.f32 0.0, %v887
      %v889 = vpop.f32.mrf.mxu0
      %890 = vdwg.mxu0
      %891 = vmatpush.bf16.msra.mxu0 0
      %892 = vmatpush.bf16.msra.mxu0 0
      %893 = vmatpush.bf16.msra.mxu0 0
      %894 = vmatpush.bf16.msra.mxu0 0
      %895 = vmatpush.bf16.msra.mxu0 0
      %896 = vmatpush.bf16.msra.mxu0 0
      %897 = vmatpush.bf16.msra.mxu0 0
      %898 = vmatpush.bf16.msra.mxu0 %v841
      %899 = vmatmul.bf16.gmra.mxu0 %v829
      %v900 = vpop.f32.mrf.mxu0
      %v901 = vadd.f32 0.0, %v900
      %v902 = vpop.f32.mrf.mxu0
      %903 = vdwg.mxu0
      %904 = vmatpush.bf16.msra.mxu0 0
      %905 = vmatpush.bf16.msra.mxu0 0
      %906 = vmatpush.bf16.msra.mxu0 0
      %907 = vmatpush.bf16.msra.mxu0 0
      %908 = vmatpush.bf16.msra.mxu0 0
      %909 = vmatpush.bf16.msra.mxu0 0
      %910 = vmatpush.bf16.msra.mxu0 0
      %911 = vmatpush.bf16.msra.mxu0 %v844
      %912 = vmatmul.bf16.gmra.mxu0 %v829
      %v913 = vpop.f32.mrf.mxu0
      %v914 = vadd.f32 0.0, %v913
      %v915 = vpop.f32.mrf.mxu0
      %916 = vdwg.mxu0
      %917 = vmatpush.bf16.msra.mxu0 0
      %918 = vmatpush.bf16.msra.mxu0 0
      %919 = vmatpush.bf16.msra.mxu0 0
      %920 = vmatpush.bf16.msra.mxu0 0
      %921 = vmatpush.bf16.msra.mxu0 0
      %922 = vmatpush.bf16.msra.mxu0 0
      %923 = vmatpush.bf16.msra.mxu0 0
      %924 = vmatpush.bf16.msra.mxu0 %v847
      %925 = vmatmul.bf16.gmra.mxu0 %v829
      %v926 = vpop.f32.mrf.mxu0
      %v927 = vadd.f32 0.0, %v926
      %v928 = vpop.f32.mrf.mxu0
      %929 = vdwg.mxu0
      %930 = vmatpush.bf16.msra.mxu0 0
      %931 = vmatpush.bf16.msra.mxu0 0
      %932 = vmatpush.bf16.msra.mxu0 0
      %933 = vmatpush.bf16.msra.mxu0 0
      %934 = vmatpush.bf16.msra.mxu0 0
      %935 = vmatpush.bf16.msra.mxu0 0
      %936 = vmatpush.bf16.msra.mxu0 0
      %937 = vmatpush.bf16.msra.mxu0 %v850
      %938 = vmatmul.bf16.gmra.mxu0 %v829
      %v939 = vpop.f32.mrf.mxu0
      %v940 = vadd.f32 0.0, %v939
      %v941 = vpop.f32.mrf.mxu0
      %942 = vdwg.mxu0
      %v943 = vadd.f32 %v777, %v862
      %v944 = vadd.f32 %v778, %v875
      %v945 = vadd.f32 %v779, %v888
      %v946 = vadd.f32 %v780, %v901
      %v947 = vadd.f32 %v781, %v914
      %v948 = vadd.f32 %v782, %v927
      %v949 = vadd.f32 %v783, %v940
      %s950 = scalar_lea.vmem %s1, 10
      %v951 = vld [vmem:[%s950] sm:$0x3]
      %v952 = vld [vmem:[%s165] sm:$0xff]
      %v953 = vld [vmem:[%s165 + $0x8] sm:$0x3f]
      %955 = vst [vmem:[#allocation1] ss:$4 sm:$0xff] %v952
      %s957 = scalar_lea.vmem [#allocation1], 32
      %958 = vst [vmem:[%s957] ss:$4 sm:$0xff] %v953
      %v959 = vld.sshfl [vmem:[#allocation1] sm:$0xff pattern:$0x73625140]
      %v961 = vld.sshfl [vmem:[#allocation1 + $0x8] sm:$0xff pattern:$0x73625140]
      %v963 = vld.sshfl [vmem:[#allocation1 + $0x10] sm:$0xff pattern:$0x73625140]
      %v965 = vld.sshfl [vmem:[#allocation1 + $0x18] sm:$0xff pattern:$0x73625140]
      %v967 = vld.sshfl [vmem:[#allocation1 + $0x20] sm:$0xff pattern:$0x73625140]
      %v969 = vld.sshfl [vmem:[#allocation1 + $0x28] sm:$0xff pattern:$0x73625140]
      %v971 = vld.sshfl [vmem:[#allocation1 + $0x30] sm:$0xff pattern:$0x73625140]
      %973 = vrot.lane.b32.xlu0 %v959, 116
      %v974 = vpop.permute.xlu0 %973
      %975 = vrot.lane.b32.xlu0 %v961, 116
      %v976 = vpop.permute.xlu0 %975
      %977 = vrot.lane.b32.xlu0 %v963, 116
      %v978 = vpop.permute.xlu0 %977
      %979 = vrot.lane.b32.xlu0 %v965, 116
      %v980 = vpop.permute.xlu0 %979
      %981 = vrot.lane.b32.xlu0 %v967, 116
      %v982 = vpop.permute.xlu0 %981
      %983 = vrot.lane.b32.xlu0 %v969, 116
      %v984 = vpop.permute.xlu0 %983
      %985 = vrot.lane.b32.xlu0 %v971, 116
      %v986 = vpop.permute.xlu0 %985
      %vm987 = vcmask 949248
      %v988 = vsel %vm987, %v974, %v976
      %v989 = vsel %vm987, %v976, %v978
      %v990 = vsel %vm987, %v978, %v980
      %v991 = vsel %vm987, %v980, %v982
      %v992 = vsel %vm987, %v982, %v984
      %v993 = vsel %vm987, %v984, %v986
      %v995 = vsel %vm217, %v951, 0
      %v998 = vsel %vm221, %v988, 0
      %v1001 = vsel %vm221, %v989, 0
      %v1004 = vsel %vm221, %v990, 0
      %v1007 = vsel %vm221, %v991, 0
      %v1010 = vsel %vm221, %v992, 0
      %v1013 = vsel %vm221, %v993, 0
      %v1016 = vsel %vm221, %v986, 0
      %1018 = vmatpush.bf16.msra.mxu0 0
      %1019 = vmatpush.bf16.msra.mxu0 0
      %1020 = vmatpush.bf16.msra.mxu0 0
      %1021 = vmatpush.bf16.msra.mxu0 0
      %1022 = vmatpush.bf16.msra.mxu0 0
      %1023 = vmatpush.bf16.msra.mxu0 0
      %1024 = vmatpush.bf16.msra.mxu0 0
      %1025 = vmatpush.bf16.msra.mxu0 %v998
      %1026 = vmatmul.bf16.gmra.mxu0 %v995
      %v1027 = vpop.f32.mrf.mxu0
      %v1028 = vadd.f32 0.0, %v1027
      %v1029 = vpop.f32.mrf.mxu0
      %1030 = vdwg.mxu0
      %1031 = vmatpush.bf16.msra.mxu0 0
      %1032 = vmatpush.bf16.msra.mxu0 0
      %1033 = vmatpush.bf16.msra.mxu0 0
      %1034 = vmatpush.bf16.msra.mxu0 0
      %1035 = vmatpush.bf16.msra.mxu0 0
      %1036 = vmatpush.bf16.msra.mxu0 0
      %1037 = vmatpush.bf16.msra.mxu0 0
      %1038 = vmatpush.bf16.msra.mxu0 %v1001
      %1039 = vmatmul.bf16.gmra.mxu0 %v995
      %v1040 = vpop.f32.mrf.mxu0
      %v1041 = vadd.f32 0.0, %v1040
      %v1042 = vpop.f32.mrf.mxu0
      %1043 = vdwg.mxu0
      %1044 = vmatpush.bf16.msra.mxu0 0
      %1045 = vmatpush.bf16.msra.mxu0 0
      %1046 = vmatpush.bf16.msra.mxu0 0
      %1047 = vmatpush.bf16.msra.mxu0 0
      %1048 = vmatpush.bf16.msra.mxu0 0
      %1049 = vmatpush.bf16.msra.mxu0 0
      %1050 = vmatpush.bf16.msra.mxu0 0
      %1051 = vmatpush.bf16.msra.mxu0 %v1004
      %1052 = vmatmul.bf16.gmra.mxu0 %v995
      %v1053 = vpop.f32.mrf.mxu0
      %v1054 = vadd.f32 0.0, %v1053
      %v1055 = vpop.f32.mrf.mxu0
      %1056 = vdwg.mxu0
      %1057 = vmatpush.bf16.msra.mxu0 0
      %1058 = vmatpush.bf16.msra.mxu0 0
      %1059 = vmatpush.bf16.msra.mxu0 0
      %1060 = vmatpush.bf16.msra.mxu0 0
      %1061 = vmatpush.bf16.msra.mxu0 0
      %1062 = vmatpush.bf16.msra.mxu0 0
      %1063 = vmatpush.bf16.msra.mxu0 0
      %1064 = vmatpush.bf16.msra.mxu0 %v1007
      %1065 = vmatmul.bf16.gmra.mxu0 %v995
      %v1066 = vpop.f32.mrf.mxu0
      %v1067 = vadd.f32 0.0, %v1066
      %v1068 = vpop.f32.mrf.mxu0
      %1069 = vdwg.mxu0
      %1070 = vmatpush.bf16.msra.mxu0 0
      %1071 = vmatpush.bf16.msra.mxu0 0
      %1072 = vmatpush.bf16.msra.mxu0 0
      %1073 = vmatpush.bf16.msra.mxu0 0
      %1074 = vmatpush.bf16.msra.mxu0 0
      %1075 = vmatpush.bf16.msra.mxu0 0
      %1076 = vmatpush.bf16.msra.mxu0 0
      %1077 = vmatpush.bf16.msra.mxu0 %v1010
      %1078 = vmatmul.bf16.gmra.mxu0 %v995
      %v1079 = vpop.f32.mrf.mxu0
      %v1080 = vadd.f32 0.0, %v1079
      %v1081 = vpop.f32.mrf.mxu0
      %1082 = vdwg.mxu0
      %1083 = vmatpush.bf16.msra.mxu0 0
      %1084 = vmatpush.bf16.msra.mxu0 0
      %1085 = vmatpush.bf16.msra.mxu0 0
      %1086 = vmatpush.bf16.msra.mxu0 0
      %1087 = vmatpush.bf16.msra.mxu0 0
      %1088 = vmatpush.bf16.msra.mxu0 0
      %1089 = vmatpush.bf16.msra.mxu0 0
      %1090 = vmatpush.bf16.msra.mxu0 %v1013
      %1091 = vmatmul.bf16.gmra.mxu0 %v995
      %v1092 = vpop.f32.mrf.mxu0
      %v1093 = vadd.f32 0.0, %v1092
      %v1094 = vpop.f32.mrf.mxu0
      %1095 = vdwg.mxu0
      %1096 = vmatpush.bf16.msra.mxu0 0
      %1097 = vmatpush.bf16.msra.mxu0 0
      %1098 = vmatpush.bf16.msra.mxu0 0
      %1099 = vmatpush.bf16.msra.mxu0 0
      %1100 = vmatpush.bf16.msra.mxu0 0
      %1101 = vmatpush.bf16.msra.mxu0 0
      %1102 = vmatpush.bf16.msra.mxu0 0
      %1103 = vmatpush.bf16.msra.mxu0 %v1016
      %1104 = vmatmul.bf16.gmra.mxu0 %v995
      %v1105 = vpop.f32.mrf.mxu0
      %v1106 = vadd.f32 0.0, %v1105
      %v1107 = vpop.f32.mrf.mxu0
      %1108 = vdwg.mxu0
      %v1109 = vadd.f32 %v943, %v1028
      %v1110 = vadd.f32 %v944, %v1041
      %v1111 = vadd.f32 %v945, %v1054
      %v1112 = vadd.f32 %v946, %v1067
      %v1113 = vadd.f32 %v947, %v1080
      %v1114 = vadd.f32 %v948, %v1093
      %v1115 = vadd.f32 %v949, %v1106
      %s1116 = scalar_lea.vmem %s1, 12
      %v1117 = vld [vmem:[%s1116] sm:$0x3]
      %v1118 = vld [vmem:[%s165] sm:$0xff]
      %v1119 = vld [vmem:[%s165 + $0x8] sm:$0x3f]
      %1121 = vst [vmem:[#allocation1] ss:$4 sm:$0xff] %v1118
      %s1123 = scalar_lea.vmem [#allocation1], 32
      %1124 = vst [vmem:[%s1123] ss:$4 sm:$0xff] %v1119
      %v1125 = vld.sshfl [vmem:[#allocation1] sm:$0xff pattern:$0x73625140]
      %v1127 = vld.sshfl [vmem:[#allocation1 + $0x8] sm:$0xff pattern:$0x73625140]
      %v1129 = vld.sshfl [vmem:[#allocation1 + $0x10] sm:$0xff pattern:$0x73625140]
      %v1131 = vld.sshfl [vmem:[#allocation1 + $0x18] sm:$0xff pattern:$0x73625140]
      %v1133 = vld.sshfl [vmem:[#allocation1 + $0x20] sm:$0xff pattern:$0x73625140]
      %v1135 = vld.sshfl [vmem:[#allocation1 + $0x28] sm:$0xff pattern:$0x73625140]
      %v1137 = vld.sshfl [vmem:[#allocation1 + $0x30] sm:$0xff pattern:$0x73625140]
      %1139 = vrot.lane.b32.xlu0 %v1125, 108
      %v1140 = vpop.permute.xlu0 %1139
      %1141 = vrot.lane.b32.xlu0 %v1127, 108
      %v1142 = vpop.permute.xlu0 %1141
      %1143 = vrot.lane.b32.xlu0 %v1129, 108
      %v1144 = vpop.permute.xlu0 %1143
      %1145 = vrot.lane.b32.xlu0 %v1131, 108
      %v1146 = vpop.permute.xlu0 %1145
      %1147 = vrot.lane.b32.xlu0 %v1133, 108
      %v1148 = vpop.permute.xlu0 %1147
      %1149 = vrot.lane.b32.xlu0 %v1135, 108
      %v1150 = vpop.permute.xlu0 %1149
      %1151 = vrot.lane.b32.xlu0 %v1137, 108
      %v1152 = vpop.permute.xlu0 %1151
      %vm1153 = vcmask 883712
      %v1154 = vsel %vm1153, %v1140, %v1142
      %v1155 = vsel %vm1153, %v1142, %v1144
      %v1156 = vsel %vm1153, %v1144, %v1146
      %v1157 = vsel %vm1153, %v1146, %v1148
      %v1158 = vsel %vm1153, %v1148, %v1150
      %v1159 = vsel %vm1153, %v1150, %v1152
      %v1161 = vsel %vm217, %v1117, 0
      %v1164 = vsel %vm221, %v1154, 0
      %v1167 = vsel %vm221, %v1155, 0
      %v1170 = vsel %vm221, %v1156, 0
      %v1173 = vsel %vm221, %v1157, 0
      %v1176 = vsel %vm221, %v1158, 0
      %v1179 = vsel %vm221, %v1159, 0
      %v1182 = vsel %vm221, %v1152, 0
      %1184 = vmatpush.bf16.msra.mxu0 0
      %1185 = vmatpush.bf16.msra.mxu0 0
      %1186 = vmatpush.bf16.msra.mxu0 0
      %1187 = vmatpush.bf16.msra.mxu0 0
      %1188 = vmatpush.bf16.msra.mxu0 0
      %1189 = vmatpush.bf16.msra.mxu0 0
      %1190 = vmatpush.bf16.msra.mxu0 0
      %1191 = vmatpush.bf16.msra.mxu0 %v1164
      %1192 = vmatmul.bf16.gmra.mxu0 %v1161
      %v1193 = vpop.f32.mrf.mxu0
      %v1194 = vadd.f32 0.0, %v1193
      %v1195 = vpop.f32.mrf.mxu0
      %1196 = vdwg.mxu0
      %1197 = vmatpush.bf16.msra.mxu0 0
      %1198 = vmatpush.bf16.msra.mxu0 0
      %1199 = vmatpush.bf16.msra.mxu0 0
      %1200 = vmatpush.bf16.msra.mxu0 0
      %1201 = vmatpush.bf16.msra.mxu0 0
      %1202 = vmatpush.bf16.msra.mxu0 0
      %1203 = vmatpush.bf16.msra.mxu0 0
      %1204 = vmatpush.bf16.msra.mxu0 %v1167
      %1205 = vmatmul.bf16.gmra.mxu0 %v1161
      %v1206 = vpop.f32.mrf.mxu0
      %v1207 = vadd.f32 0.0, %v1206
      %v1208 = vpop.f32.mrf.mxu0
      %1209 = vdwg.mxu0
      %1210 = vmatpush.bf16.msra.mxu0 0
      %1211 = vmatpush.bf16.msra.mxu0 0
      %1212 = vmatpush.bf16.msra.mxu0 0
      %1213 = vmatpush.bf16.msra.mxu0 0
      %1214 = vmatpush.bf16.msra.mxu0 0
      %1215 = vmatpush.bf16.msra.mxu0 0
      %1216 = vmatpush.bf16.msra.mxu0 0
      %1217 = vmatpush.bf16.msra.mxu0 %v1170
      %1218 = vmatmul.bf16.gmra.mxu0 %v1161
      %v1219 = vpop.f32.mrf.mxu0
      %v1220 = vadd.f32 0.0, %v1219
      %v1221 = vpop.f32.mrf.mxu0
      %1222 = vdwg.mxu0
      %1223 = vmatpush.bf16.msra.mxu0 0
      %1224 = vmatpush.bf16.msra.mxu0 0
      %1225 = vmatpush.bf16.msra.mxu0 0
      %1226 = vmatpush.bf16.msra.mxu0 0
      %1227 = vmatpush.bf16.msra.mxu0 0
      %1228 = vmatpush.bf16.msra.mxu0 0
      %1229 = vmatpush.bf16.msra.mxu0 0
      %1230 = vmatpush.bf16.msra.mxu0 %v1173
      %1231 = vmatmul.bf16.gmra.mxu0 %v1161
      %v1232 = vpop.f32.mrf.mxu0
      %v1233 = vadd.f32 0.0, %v1232
      %v1234 = vpop.f32.mrf.mxu0
      %1235 = vdwg.mxu0
      %1236 = vmatpush.bf16.msra.mxu0 0
      %1237 = vmatpush.bf16.msra.mxu0 0
      %1238 = vmatpush.bf16.msra.mxu0 0
      %1239 = vmatpush.bf16.msra.mxu0 0
      %1240 = vmatpush.bf16.msra.mxu0 0
      %1241 = vmatpush.bf16.msra.mxu0 0
      %1242 = vmatpush.bf16.msra.mxu0 0
      %1243 = vmatpush.bf16.msra.mxu0 %v1176
      %1244 = vmatmul.bf16.gmra.mxu0 %v1161
      %v1245 = vpop.f32.mrf.mxu0
      %v1246 = vadd.f32 0.0, %v1245
      %v1247 = vpop.f32.mrf.mxu0
      %1248 = vdwg.mxu0
      %1249 = vmatpush.bf16.msra.mxu0 0
      %1250 = vmatpush.bf16.msra.mxu0 0
      %1251 = vmatpush.bf16.msra.mxu0 0
      %1252 = vmatpush.bf16.msra.mxu0 0
      %1253 = vmatpush.bf16.msra.mxu0 0
      %1254 = vmatpush.bf16.msra.mxu0 0
      %1255 = vmatpush.bf16.msra.mxu0 0
      %1256 = vmatpush.bf16.msra.mxu0 %v1179
      %1257 = vmatmul.bf16.gmra.mxu0 %v1161
      %v1258 = vpop.f32.mrf.mxu0
      %v1259 = vadd.f32 0.0, %v1258
      %v1260 = vpop.f32.mrf.mxu0
      %1261 = vdwg.mxu0
      %1262 = vmatpush.bf16.msra.mxu0 0
      %1263 = vmatpush.bf16.msra.mxu0 0
      %1264 = vmatpush.bf16.msra.mxu0 0
      %1265 = vmatpush.bf16.msra.mxu0 0
      %1266 = vmatpush.bf16.msra.mxu0 0
      %1267 = vmatpush.bf16.msra.mxu0 0
      %1268 = vmatpush.bf16.msra.mxu0 0
      %1269 = vmatpush.bf16.msra.mxu0 %v1182
      %1270 = vmatmul.bf16.gmra.mxu0 %v1161
      %v1271 = vpop.f32.mrf.mxu0
      %v1272 = vadd.f32 0.0, %v1271
      %v1273 = vpop.f32.mrf.mxu0
      %1274 = vdwg.mxu0
      %v1275 = vadd.f32 %v1109, %v1194
      %v1276 = vadd.f32 %v1110, %v1207
      %v1277 = vadd.f32 %v1111, %v1220
      %v1278 = vadd.f32 %v1112, %v1233
      %v1279 = vadd.f32 %v1113, %v1246
      %v1280 = vadd.f32 %v1114, %v1259
      %v1281 = vadd.f32 %v1115, %v1272
      %s1282 = scalar_lea.vmem %s1, 14
      %v1283 = vld [vmem:[%s1282] sm:$0x3]
      %v1284 = vld [vmem:[%s165] sm:$0xff]
      %v1285 = vld [vmem:[%s165 + $0x8] sm:$0x3f]
      %1287 = vst [vmem:[#allocation1] ss:$4 sm:$0xff] %v1284
      %s1289 = scalar_lea.vmem [#allocation1], 32
      %1290 = vst [vmem:[%s1289] ss:$4 sm:$0xff] %v1285
      %v1291 = vld.sshfl [vmem:[#allocation1] sm:$0xff pattern:$0x73625140]
      %v1293 = vld.sshfl [vmem:[#allocation1 + $0x8] sm:$0xff pattern:$0x73625140]
      %v1295 = vld.sshfl [vmem:[#allocation1 + $0x10] sm:$0xff pattern:$0x73625140]
      %v1297 = vld.sshfl [vmem:[#allocation1 + $0x18] sm:$0xff pattern:$0x73625140]
      %v1299 = vld.sshfl [vmem:[#allocation1 + $0x20] sm:$0xff pattern:$0x73625140]
      %v1301 = vld.sshfl [vmem:[#allocation1 + $0x28] sm:$0xff pattern:$0x73625140]
      %v1303 = vld.sshfl [vmem:[#allocation1 + $0x30] sm:$0xff pattern:$0x73625140]
      %1305 = vrot.lane.b32.xlu0 %v1291, 107
      %v1306 = vpop.permute.xlu0 %1305
      %1307 = vrot.lane.b32.xlu0 %v1293, 107
      %v1308 = vpop.permute.xlu0 %1307
      %1309 = vrot.lane.b32.xlu0 %v1295, 107
      %v1310 = vpop.permute.xlu0 %1309
      %1311 = vrot.lane.b32.xlu0 %v1297, 107
      %v1312 = vpop.permute.xlu0 %1311
      %1313 = vrot.lane.b32.xlu0 %v1299, 107
      %v1314 = vpop.permute.xlu0 %1313
      %1315 = vrot.lane.b32.xlu0 %v1301, 107
      %v1316 = vpop.permute.xlu0 %1315
      %1317 = vrot.lane.b32.xlu0 %v1303, 107
      %v1318 = vpop.permute.xlu0 %1317
      %vm1319 = vcmask 875520
      %v1320 = vsel %vm1319, %v1306, %v1308
      %v1321 = vsel %vm1319, %v1308, %v1310
      %v1322 = vsel %vm1319, %v1310, %v1312
      %v1323 = vsel %vm1319, %v1312, %v1314
      %v1324 = vsel %vm1319, %v1314, %v1316
      %v1325 = vsel %vm1319, %v1316, %v1318
      %v1327 = vsel %vm217, %v1283, 0
      %v1330 = vsel %vm221, %v1320, 0
      %v1333 = vsel %vm221, %v1321, 0
      %v1336 = vsel %vm221, %v1322, 0
      %v1339 = vsel %vm221, %v1323, 0
      %v1342 = vsel %vm221, %v1324, 0
      %v1345 = vsel %vm221, %v1325, 0
      %v1348 = vsel %vm221, %v1318, 0
      %1350 = vmatpush.bf16.msra.mxu0 0
      %1351 = vmatpush.bf16.msra.mxu0 0
      %1352 = vmatpush.bf16.msra.mxu0 0
      %1353 = vmatpush.bf16.msra.mxu0 0
      %1354 = vmatpush.bf16.msra.mxu0 0
      %1355 = vmatpush.bf16.msra.mxu0 0
      %1356 = vmatpush.bf16.msra.mxu0 0
      %1357 = vmatpush.bf16.msra.mxu0 %v1330
      %1358 = vmatmul.bf16.gmra.mxu0 %v1327
      %v1359 = vpop.f32.mrf.mxu0
      %v1360 = vadd.f32 0.0, %v1359
      %v1361 = vpop.f32.mrf.mxu0
      %1362 = vdwg.mxu0
      %1363 = vmatpush.bf16.msra.mxu0 0
      %1364 = vmatpush.bf16.msra.mxu0 0
      %1365 = vmatpush.bf16.msra.mxu0 0
      %1366 = vmatpush.bf16.msra.mxu0 0
      %1367 = vmatpush.bf16.msra.mxu0 0
      %1368 = vmatpush.bf16.msra.mxu0 0
      %1369 = vmatpush.bf16.msra.mxu0 0
      %1370 = vmatpush.bf16.msra.mxu0 %v1333
      %1371 = vmatmul.bf16.gmra.mxu0 %v1327
      %v1372 = vpop.f32.mrf.mxu0
      %v1373 = vadd.f32 0.0, %v1372
      %v1374 = vpop.f32.mrf.mxu0
      %1375 = vdwg.mxu0
      %1376 = vmatpush.bf16.msra.mxu0 0
      %1377 = vmatpush.bf16.msra.mxu0 0
      %1378 = vmatpush.bf16.msra.mxu0 0
      %1379 = vmatpush.bf16.msra.mxu0 0
      %1380 = vmatpush.bf16.msra.mxu0 0
      %1381 = vmatpush.bf16.msra.mxu0 0
      %1382 = vmatpush.bf16.msra.mxu0 0
      %1383 = vmatpush.bf16.msra.mxu0 %v1336
      %1384 = vmatmul.bf16.gmra.mxu0 %v1327
      %v1385 = vpop.f32.mrf.mxu0
      %v1386 = vadd.f32 0.0, %v1385
      %v1387 = vpop.f32.mrf.mxu0
      %1388 = vdwg.mxu0
      %1389 = vmatpush.bf16.msra.mxu0 0
      %1390 = vmatpush.bf16.msra.mxu0 0
      %1391 = vmatpush.bf16.msra.mxu0 0
      %1392 = vmatpush.bf16.msra.mxu0 0
      %1393 = vmatpush.bf16.msra.mxu0 0
      %1394 = vmatpush.bf16.msra.mxu0 0
      %1395 = vmatpush.bf16.msra.mxu0 0
      %1396 = vmatpush.bf16.msra.mxu0 %v1339
      %1397 = vmatmul.bf16.gmra.mxu0 %v1327
      %v1398 = vpop.f32.mrf.mxu0
      %v1399 = vadd.f32 0.0, %v1398
      %v1400 = vpop.f32.mrf.mxu0
      %1401 = vdwg.mxu0
      %1402 = vmatpush.bf16.msra.mxu0 0
      %1403 = vmatpush.bf16.msra.mxu0 0
      %1404 = vmatpush.bf16.msra.mxu0 0
      %1405 = vmatpush.bf16.msra.mxu0 0
      %1406 = vmatpush.bf16.msra.mxu0 0
      %1407 = vmatpush.bf16.msra.mxu0 0
      %1408 = vmatpush.bf16.msra.mxu0 0
      %1409 = vmatpush.bf16.msra.mxu0 %v1342
      %1410 = vmatmul.bf16.gmra.mxu0 %v1327
      %v1411 = vpop.f32.mrf.mxu0
      %v1412 = vadd.f32 0.0, %v1411
      %v1413 = vpop.f32.mrf.mxu0
      %1414 = vdwg.mxu0
      %1415 = vmatpush.bf16.msra.mxu0 0
      %1416 = vmatpush.bf16.msra.mxu0 0
      %1417 = vmatpush.bf16.msra.mxu0 0
      %1418 = vmatpush.bf16.msra.mxu0 0
      %1419 = vmatpush.bf16.msra.mxu0 0
      %1420 = vmatpush.bf16.msra.mxu0 0
      %1421 = vmatpush.bf16.msra.mxu0 0
      %1422 = vmatpush.bf16.msra.mxu0 %v1345
      %1423 = vmatmul.bf16.gmra.mxu0 %v1327
      %v1424 = vpop.f32.mrf.mxu0
      %v1425 = vadd.f32 0.0, %v1424
      %v1426 = vpop.f32.mrf.mxu0
      %1427 = vdwg.mxu0
      %1428 = vmatpush.bf16.msra.mxu0 0
      %1429 = vmatpush.bf16.msra.mxu0 0
      %1430 = vmatpush.bf16.msra.mxu0 0
      %1431 = vmatpush.bf16.msra.mxu0 0
      %1432 = vmatpush.bf16.msra.mxu0 0
      %1433 = vmatpush.bf16.msra.mxu0 0
      %1434 = vmatpush.bf16.msra.mxu0 0
      %1435 = vmatpush.bf16.msra.mxu0 %v1348
      %1436 = vmatmul.bf16.gmra.mxu0 %v1327
      %v1437 = vpop.f32.mrf.mxu0
      %v1438 = vadd.f32 0.0, %v1437
      %v1439 = vpop.f32.mrf.mxu0
      %1440 = vdwg.mxu0
      %v1441 = vadd.f32 %v1275, %v1360
      %v1442 = vadd.f32 %v1276, %v1373
      %v1443 = vadd.f32 %v1277, %v1386
      %v1444 = vadd.f32 %v1278, %v1399
      %v1445 = vadd.f32 %v1279, %v1412
      %v1446 = vadd.f32 %v1280, %v1425
      %v1447 = vadd.f32 %v1281, %v1438
      %s1448 = scalar_lea.vmem %s1, 16
      %v1449 = vld [vmem:[%s1448] sm:$0x3]
      %v1450 = vld [vmem:[%s165] sm:$0xff]
      %v1451 = vld [vmem:[%s165 + $0x8] sm:$0x3f]
      %1453 = vst [vmem:[#allocation1] ss:$4 sm:$0xff] %v1450
      %s1455 = scalar_lea.vmem [#allocation1], 32
      %1456 = vst [vmem:[%s1455] ss:$4 sm:$0xff] %v1451
      %v1457 = vld.sshfl [vmem:[#allocation1] sm:$0xff pattern:$0x73625140]
      %v1459 = vld.sshfl [vmem:[#allocation1 + $0x8] sm:$0xff pattern:$0x73625140]
      %v1461 = vld.sshfl [vmem:[#allocation1 + $0x10] sm:$0xff pattern:$0x73625140]
      %v1463 = vld.sshfl [vmem:[#allocation1 + $0x18] sm:$0xff pattern:$0x73625140]
      %v1465 = vld.sshfl [vmem:[#allocation1 + $0x20] sm:$0xff pattern:$0x73625140]
      %v1467 = vld.sshfl [vmem:[#allocation1 + $0x28] sm:$0xff pattern:$0x73625140]
      %v1469 = vld.sshfl [vmem:[#allocation1 + $0x30] sm:$0xff pattern:$0x73625140]
      %1471 = vrot.lane.b32.xlu0 %v1457, 106
      %v1472 = vpop.permute.xlu0 %1471
      %1473 = vrot.lane.b32.xlu0 %v1459, 106
      %v1474 = vpop.permute.xlu0 %1473
      %1475 = vrot.lane.b32.xlu0 %v1461, 106
      %v1476 = vpop.permute.xlu0 %1475
      %1477 = vrot.lane.b32.xlu0 %v1463, 106
      %v1478 = vpop.permute.xlu0 %1477
      %1479 = vrot.lane.b32.xlu0 %v1465, 106
      %v1480 = vpop.permute.xlu0 %1479
      %1481 = vrot.lane.b32.xlu0 %v1467, 106
      %v1482 = vpop.permute.xlu0 %1481
      %1483 = vrot.lane.b32.xlu0 %v1469, 106
      %v1484 = vpop.permute.xlu0 %1483
      %vm1485 = vcmask 867328
      %v1486 = vsel %vm1485, %v1472, %v1474
      %v1487 = vsel %vm1485, %v1474, %v1476
      %v1488 = vsel %vm1485, %v1476, %v1478
      %v1489 = vsel %vm1485, %v1478, %v1480
      %v1490 = vsel %vm1485, %v1480, %v1482
      %v1491 = vsel %vm1485, %v1482, %v1484
      %v1493 = vsel %vm217, %v1449, 0
      %v1496 = vsel %vm221, %v1486, 0
      %v1499 = vsel %vm221, %v1487, 0
      %v1502 = vsel %vm221, %v1488, 0
      %v1505 = vsel %vm221, %v1489, 0
      %v1508 = vsel %vm221, %v1490, 0
      %v1511 = vsel %vm221, %v1491, 0
      %v1514 = vsel %vm221, %v1484, 0
      %1516 = vmatpush.bf16.msra.mxu0 0
      %1517 = vmatpush.bf16.msra.mxu0 0
      %1518 = vmatpush.bf16.msra.mxu0 0
      %1519 = vmatpush.bf16.msra.mxu0 0
      %1520 = vmatpush.bf16.msra.mxu0 0
      %1521 = vmatpush.bf16.msra.mxu0 0
      %1522 = vmatpush.bf16.msra.mxu0 0
      %1523 = vmatpush.bf16.msra.mxu0 %v1496
      %1524 = vmatmul.bf16.gmra.mxu0 %v1493
      %v1525 = vpop.f32.mrf.mxu0
      %v1526 = vadd.f32 0.0, %v1525
      %v1527 = vpop.f32.mrf.mxu0
      %1528 = vdwg.mxu0
      %1529 = vmatpush.bf16.msra.mxu0 0
      %1530 = vmatpush.bf16.msra.mxu0 0
      %1531 = vmatpush.bf16.msra.mxu0 0
      %1532 = vmatpush.bf16.msra.mxu0 0
      %1533 = vmatpush.bf16.msra.mxu0 0
      %1534 = vmatpush.bf16.msra.mxu0 0
      %1535 = vmatpush.bf16.msra.mxu0 0
      %1536 = vmatpush.bf16.msra.mxu0 %v1499
      %1537 = vmatmul.bf16.gmra.mxu0 %v1493
      %v1538 = vpop.f32.mrf.mxu0
      %v1539 = vadd.f32 0.0, %v1538
      %v1540 = vpop.f32.mrf.mxu0
      %1541 = vdwg.mxu0
      %1542 = vmatpush.bf16.msra.mxu0 0
      %1543 = vmatpush.bf16.msra.mxu0 0
      %1544 = vmatpush.bf16.msra.mxu0 0
      %1545 = vmatpush.bf16.msra.mxu0 0
      %1546 = vmatpush.bf16.msra.mxu0 0
      %1547 = vmatpush.bf16.msra.mxu0 0
      %1548 = vmatpush.bf16.msra.mxu0 0
      %1549 = vmatpush.bf16.msra.mxu0 %v1502
      %1550 = vmatmul.bf16.gmra.mxu0 %v1493
      %v1551 = vpop.f32.mrf.mxu0
      %v1552 = vadd.f32 0.0, %v1551
      %v1553 = vpop.f32.mrf.mxu0
      %1554 = vdwg.mxu0
      %1555 = vmatpush.bf16.msra.mxu0 0
      %1556 = vmatpush.bf16.msra.mxu0 0
      %1557 = vmatpush.bf16.msra.mxu0 0
      %1558 = vmatpush.bf16.msra.mxu0 0
      %1559 = vmatpush.bf16.msra.mxu0 0
      %1560 = vmatpush.bf16.msra.mxu0 0
      %1561 = vmatpush.bf16.msra.mxu0 0
      %1562 = vmatpush.bf16.msra.mxu0 %v1505
      %1563 = vmatmul.bf16.gmra.mxu0 %v1493
      %v1564 = vpop.f32.mrf.mxu0
      %v1565 = vadd.f32 0.0, %v1564
      %v1566 = vpop.f32.mrf.mxu0
      %1567 = vdwg.mxu0
      %1568 = vmatpush.bf16.msra.mxu0 0
      %1569 = vmatpush.bf16.msra.mxu0 0
      %1570 = vmatpush.bf16.msra.mxu0 0
      %1571 = vmatpush.bf16.msra.mxu0 0
      %1572 = vmatpush.bf16.msra.mxu0 0
      %1573 = vmatpush.bf16.msra.mxu0 0
      %1574 = vmatpush.bf16.msra.mxu0 0
      %1575 = vmatpush.bf16.msra.mxu0 %v1508
      %1576 = vmatmul.bf16.gmra.mxu0 %v1493
      %v1577 = vpop.f32.mrf.mxu0
      %v1578 = vadd.f32 0.0, %v1577
      %v1579 = vpop.f32.mrf.mxu0
      %1580 = vdwg.mxu0
      %1581 = vmatpush.bf16.msra.mxu0 0
      %1582 = vmatpush.bf16.msra.mxu0 0
      %1583 = vmatpush.bf16.msra.mxu0 0
      %1584 = vmatpush.bf16.msra.mxu0 0
      %1585 = vmatpush.bf16.msra.mxu0 0
      %1586 = vmatpush.bf16.msra.mxu0 0
      %1587 = vmatpush.bf16.msra.mxu0 0
      %1588 = vmatpush.bf16.msra.mxu0 %v1511
      %1589 = vmatmul.bf16.gmra.mxu0 %v1493
      %v1590 = vpop.f32.mrf.mxu0
      %v1591 = vadd.f32 0.0, %v1590
      %v1592 = vpop.f32.mrf.mxu0
      %1593 = vdwg.mxu0
      %1594 = vmatpush.bf16.msra.mxu0 0
      %1595 = vmatpush.bf16.msra.mxu0 0
      %1596 = vmatpush.bf16.msra.mxu0 0
      %1597 = vmatpush.bf16.msra.mxu0 0
      %1598 = vmatpush.bf16.msra.mxu0 0
      %1599 = vmatpush.bf16.msra.mxu0 0
      %1600 = vmatpush.bf16.msra.mxu0 0
      %1601 = vmatpush.bf16.msra.mxu0 %v1514
      %1602 = vmatmul.bf16.gmra.mxu0 %v1493
      %v1603 = vpop.f32.mrf.mxu0
      %v1604 = vadd.f32 0.0, %v1603
      %v1605 = vpop.f32.mrf.mxu0
      %1606 = vdwg.mxu0
      %v1607 = vadd.f32 %v1441, %v1526
      %v1608 = vadd.f32 %v1442, %v1539
      %v1609 = vadd.f32 %v1443, %v1552
      %v1610 = vadd.f32 %v1444, %v1565
      %v1611 = vadd.f32 %v1445, %v1578
      %v1612 = vadd.f32 %v1446, %v1591
      %v1613 = vadd.f32 %v1447, %v1604
      %s1614 = scalar_lea.vmem %s1, 18
      %v1615 = vld [vmem:[%s1614] sm:$0x3]
      %v1616 = vld [vmem:[%s165] sm:$0xff]
      %v1617 = vld [vmem:[%s165 + $0x8] sm:$0xff]
      %1619 = vst [vmem:[#allocation1] ss:$4 sm:$0xff] %v1616
      %s1621 = scalar_lea.vmem [#allocation1], 32
      %1622 = vst [vmem:[%s1621] ss:$4 sm:$0xff] %v1617
      %v1623 = vld.sshfl [vmem:[#allocation1] sm:$0xff pattern:$0x73625140]
      %v1625 = vld.sshfl [vmem:[#allocation1 + $0x8] sm:$0xff pattern:$0x73625140]
      %v1627 = vld.sshfl [vmem:[#allocation1 + $0x10] sm:$0xff pattern:$0x73625140]
      %v1629 = vld.sshfl [vmem:[#allocation1 + $0x18] sm:$0xff pattern:$0x73625140]
      %v1631 = vld.sshfl [vmem:[#allocation1 + $0x20] sm:$0xff pattern:$0x73625140]
      %v1633 = vld.sshfl [vmem:[#allocation1 + $0x28] sm:$0xff pattern:$0x73625140]
      %v1635 = vld.sshfl [vmem:[#allocation1 + $0x30] sm:$0xff pattern:$0x73625140]
      %v1637 = vld.sshfl [vmem:[#allocation1 + $0x38] sm:$0xff pattern:$0x73625140]
      %1639 = vrot.lane.b32.xlu0 %v1623, 28
      %v1640 = vpop.permute.xlu0 %1639
      %1641 = vrot.lane.b32.xlu0 %v1625, 28
      %v1642 = vpop.permute.xlu0 %1641
      %1643 = vrot.lane.b32.xlu0 %v1627, 28
      %v1644 = vpop.permute.xlu0 %1643
      %1645 = vrot.lane.b32.xlu0 %v1629, 28
      %v1646 = vpop.permute.xlu0 %1645
      %1647 = vrot.lane.b32.xlu0 %v1631, 28
      %v1648 = vpop.permute.xlu0 %1647
      %1649 = vrot.lane.b32.xlu0 %v1633, 28
      %v1650 = vpop.permute.xlu0 %1649
      %1651 = vrot.lane.b32.xlu0 %v1635, 28
      %v1652 = vpop.permute.xlu0 %1651
      %1653 = vrot.lane.b32.xlu0 %v1637, 28
      %v1654 = vpop.permute.xlu0 %1653
      %vm1655 = vcmask 228352
      %v1656 = vsel %vm1655, %v1640, %v1642
      %v1657 = vsel %vm1655, %v1642, %v1644
      %v1658 = vsel %vm1655, %v1644, %v1646
      %v1659 = vsel %vm1655, %v1646, %v1648
      %v1660 = vsel %vm1655, %v1648, %v1650
      %v1661 = vsel %vm1655, %v1650, %v1652
      %v1662 = vsel %vm1655, %v1652, %v1654
      %v1664 = vsel %vm217, %v1615, 0
      %v1667 = vsel %vm221, %v1656, 0
      %v1670 = vsel %vm221, %v1657, 0
      %v1673 = vsel %vm221, %v1658, 0
      %v1676 = vsel %vm221, %v1659, 0
      %v1679 = vsel %vm221, %v1660, 0
      %v1682 = vsel %vm221, %v1661, 0
      %v1685 = vsel %vm221, %v1662, 0
      %1687 = vmatpush.bf16.msra.mxu0 0
      %1688 = vmatpush.bf16.msra.mxu0 0
      %1689 = vmatpush.bf16.msra.mxu0 0
      %1690 = vmatpush.bf16.msra.mxu0 0
      %1691 = vmatpush.bf16.msra.mxu0 0
      %1692 = vmatpush.bf16.msra.mxu0 0
      %1693 = vmatpush.bf16.msra.mxu0 0
      %1694 = vmatpush.bf16.msra.mxu0 %v1667
      %1695 = vmatmul.bf16.gmra.mxu0 %v1664
      %v1696 = vpop.f32.mrf.mxu0
      %v1697 = vadd.f32 0.0, %v1696
      %v1698 = vpop.f32.mrf.mxu0
      %1699 = vdwg.mxu0
      %1700 = vmatpush.bf16.msra.mxu0 0
      %1701 = vmatpush.bf16.msra.mxu0 0
      %1702 = vmatpush.bf16.msra.mxu0 0
      %1703 = vmatpush.bf16.msra.mxu0 0
      %1704 = vmatpush.bf16.msra.mxu0 0
      %1705 = vmatpush.bf16.msra.mxu0 0
      %1706 = vmatpush.bf16.msra.mxu0 0
      %1707 = vmatpush.bf16.msra.mxu0 %v1670
      %1708 = vmatmul.bf16.gmra.mxu0 %v1664
      %v1709 = vpop.f32.mrf.mxu0
      %v1710 = vadd.f32 0.0, %v1709
      %v1711 = vpop.f32.mrf.mxu0
      %1712 = vdwg.mxu0
      %1713 = vmatpush.bf16.msra.mxu0 0
      %1714 = vmatpush.bf16.msra.mxu0 0
      %1715 = vmatpush.bf16.msra.mxu0 0
      %1716 = vmatpush.bf16.msra.mxu0 0
      %1717 = vmatpush.bf16.msra.mxu0 0
      %1718 = vmatpush.bf16.msra.mxu0 0
      %1719 = vmatpush.bf16.msra.mxu0 0
      %1720 = vmatpush.bf16.msra.mxu0 %v1673
      %1721 = vmatmul.bf16.gmra.mxu0 %v1664
      %v1722 = vpop.f32.mrf.mxu0
      %v1723 = vadd.f32 0.0, %v1722
      %v1724 = vpop.f32.mrf.mxu0
      %1725 = vdwg.mxu0
      %1726 = vmatpush.bf16.msra.mxu0 0
      %1727 = vmatpush.bf16.msra.mxu0 0
      %1728 = vmatpush.bf16.msra.mxu0 0
      %1729 = vmatpush.bf16.msra.mxu0 0
      %1730 = vmatpush.bf16.msra.mxu0 0
      %1731 = vmatpush.bf16.msra.mxu0 0
      %1732 = vmatpush.bf16.msra.mxu0 0
      %1733 = vmatpush.bf16.msra.mxu0 %v1676
      %1734 = vmatmul.bf16.gmra.mxu0 %v1664
      %v1735 = vpop.f32.mrf.mxu0
      %v1736 = vadd.f32 0.0, %v1735
      %v1737 = vpop.f32.mrf.mxu0
      %1738 = vdwg.mxu0
      %1739 = vmatpush.bf16.msra.mxu0 0
      %1740 = vmatpush.bf16.msra.mxu0 0
      %1741 = vmatpush.bf16.msra.mxu0 0
      %1742 = vmatpush.bf16.msra.mxu0 0
      %1743 = vmatpush.bf16.msra.mxu0 0
      %1744 = vmatpush.bf16.msra.mxu0 0
      %1745 = vmatpush.bf16.msra.mxu0 0
      %1746 = vmatpush.bf16.msra.mxu0 %v1679
      %1747 = vmatmul.bf16.gmra.mxu0 %v1664
      %v1748 = vpop.f32.mrf.mxu0
      %v1749 = vadd.f32 0.0, %v1748
      %v1750 = vpop.f32.mrf.mxu0
      %1751 = vdwg.mxu0
      %1752 = vmatpush.bf16.msra.mxu0 0
      %1753 = vmatpush.bf16.msra.mxu0 0
      %1754 = vmatpush.bf16.msra.mxu0 0
      %1755 = vmatpush.bf16.msra.mxu0 0
      %1756 = vmatpush.bf16.msra.mxu0 0
      %1757 = vmatpush.bf16.msra.mxu0 0
      %1758 = vmatpush.bf16.msra.mxu0 0
      %1759 = vmatpush.bf16.msra.mxu0 %v1682
      %1760 = vmatmul.bf16.gmra.mxu0 %v1664
      %v1761 = vpop.f32.mrf.mxu0
      %v1762 = vadd.f32 0.0, %v1761
      %v1763 = vpop.f32.mrf.mxu0
      %1764 = vdwg.mxu0
      %1765 = vmatpush.bf16.msra.mxu0 0
      %1766 = vmatpush.bf16.msra.mxu0 0
      %1767 = vmatpush.bf16.msra.mxu0 0
      %1768 = vmatpush.bf16.msra.mxu0 0
      %1769 = vmatpush.bf16.msra.mxu0 0
      %1770 = vmatpush.bf16.msra.mxu0 0
      %1771 = vmatpush.bf16.msra.mxu0 0
      %1772 = vmatpush.bf16.msra.mxu0 %v1685
      %1773 = vmatmul.bf16.gmra.mxu0 %v1664
      %v1774 = vpop.f32.mrf.mxu0
      %v1775 = vadd.f32 0.0, %v1774
      %v1776 = vpop.f32.mrf.mxu0
      %1777 = vdwg.mxu0
      %v1778 = vadd.f32 %v1607, %v1697
      %v1779 = vadd.f32 %v1608, %v1710
      %v1780 = vadd.f32 %v1609, %v1723
      %v1781 = vadd.f32 %v1610, %v1736
      %v1782 = vadd.f32 %v1611, %v1749
      %v1783 = vadd.f32 %v1612, %v1762
      %v1784 = vadd.f32 %v1613, %v1775
      %s1785 = scalar_lea.vmem %s1, 20
      %v1786 = vld [vmem:[%s1785] sm:$0x3]
      %v1787 = vld [vmem:[%s165] sm:$0xff]
      %v1788 = vld [vmem:[%s165 + $0x8] sm:$0xff]
      %1790 = vst [vmem:[#allocation1] ss:$4 sm:$0xff] %v1787
      %s1792 = scalar_lea.vmem [#allocation1], 32
      %1793 = vst [vmem:[%s1792] ss:$4 sm:$0xff] %v1788
      %v1794 = vld.sshfl [vmem:[#allocation1] sm:$0xff pattern:$0x73625140]
      %v1796 = vld.sshfl [vmem:[#allocation1 + $0x8] sm:$0xff pattern:$0x73625140]
      %v1798 = vld.sshfl [vmem:[#allocation1 + $0x10] sm:$0xff pattern:$0x73625140]
      %v1800 = vld.sshfl [vmem:[#allocation1 + $0x18] sm:$0xff pattern:$0x73625140]
      %v1802 = vld.sshfl [vmem:[#allocation1 + $0x20] sm:$0xff pattern:$0x73625140]
      %v1804 = vld.sshfl [vmem:[#allocation1 + $0x28] sm:$0xff pattern:$0x73625140]
      %v1806 = vld.sshfl [vmem:[#allocation1 + $0x30] sm:$0xff pattern:$0x73625140]
      %v1808 = vld.sshfl [vmem:[#allocation1 + $0x38] sm:$0xff pattern:$0x73625140]
      %1810 = vrot.lane.b32.xlu0 %v1794, 27
      %v1811 = vpop.permute.xlu0 %1810
      %1812 = vrot.lane.b32.xlu0 %v1796, 27
      %v1813 = vpop.permute.xlu0 %1812
      %1814 = vrot.lane.b32.xlu0 %v1798, 27
      %v1815 = vpop.permute.xlu0 %1814
      %1816 = vrot.lane.b32.xlu0 %v1800, 27
      %v1817 = vpop.permute.xlu0 %1816
      %1818 = vrot.lane.b32.xlu0 %v1802, 27
      %v1819 = vpop.permute.xlu0 %1818
      %1820 = vrot.lane.b32.xlu0 %v1804, 27
      %v1821 = vpop.permute.xlu0 %1820
      %1822 = vrot.lane.b32.xlu0 %v1806, 27
      %v1823 = vpop.permute.xlu0 %1822
      %1824 = vrot.lane.b32.xlu0 %v1808, 27
      %v1825 = vpop.permute.xlu0 %1824
      %vm1826 = vcmask 220160
      %v1827 = vsel %vm1826, %v1811, %v1813
      %v1828 = vsel %vm1826, %v1813, %v1815
      %v1829 = vsel %vm1826, %v1815, %v1817
      %v1830 = vsel %vm1826, %v1817, %v1819
      %v1831 = vsel %vm1826, %v1819, %v1821
      %v1832 = vsel %vm1826, %v1821, %v1823
      %v1833 = vsel %vm1826, %v1823, %v1825
      %v1835 = vsel %vm217, %v1786, 0
      %v1838 = vsel %vm221, %v1827, 0
      %v1841 = vsel %vm221, %v1828, 0
      %v1844 = vsel %vm221, %v1829, 0
      %v1847 = vsel %vm221, %v1830, 0
      %v1850 = vsel %vm221, %v1831, 0
      %v1853 = vsel %vm221, %v1832, 0
      %v1856 = vsel %vm221, %v1833, 0
      %1858 = vmatpush.bf16.msra.mxu0 0
      %1859 = vmatpush.bf16.msra.mxu0 0
      %1860 = vmatpush.bf16.msra.mxu0 0
      %1861 = vmatpush.bf16.msra.mxu0 0
      %1862 = vmatpush.bf16.msra.mxu0 0
      %1863 = vmatpush.bf16.msra.mxu0 0
      %1864 = vmatpush.bf16.msra.mxu0 0
      %1865 = vmatpush.bf16.msra.mxu0 %v1838
      %1866 = vmatmul.bf16.gmra.mxu0 %v1835
      %v1867 = vpop.f32.mrf.mxu0
      %v1868 = vadd.f32 0.0, %v1867
      %v1869 = vpop.f32.mrf.mxu0
      %1870 = vdwg.mxu0
      %1871 = vmatpush.bf16.msra.mxu0 0
      %1872 = vmatpush.bf16.msra.mxu0 0
      %1873 = vmatpush.bf16.msra.mxu0 0
      %1874 = vmatpush.bf16.msra.mxu0 0
      %1875 = vmatpush.bf16.msra.mxu0 0
      %1876 = vmatpush.bf16.msra.mxu0 0
      %1877 = vmatpush.bf16.msra.mxu0 0
      %1878 = vmatpush.bf16.msra.mxu0 %v1841
      %1879 = vmatmul.bf16.gmra.mxu0 %v1835
      %v1880 = vpop.f32.mrf.mxu0
      %v1881 = vadd.f32 0.0, %v1880
      %v1882 = vpop.f32.mrf.mxu0
      %1883 = vdwg.mxu0
      %1884 = vmatpush.bf16.msra.mxu0 0
      %1885 = vmatpush.bf16.msra.mxu0 0
      %1886 = vmatpush.bf16.msra.mxu0 0
      %1887 = vmatpush.bf16.msra.mxu0 0
      %1888 = vmatpush.bf16.msra.mxu0 0
      %1889 = vmatpush.bf16.msra.mxu0 0
      %1890 = vmatpush.bf16.msra.mxu0 0
      %1891 = vmatpush.bf16.msra.mxu0 %v1844
      %1892 = vmatmul.bf16.gmra.mxu0 %v1835
      %v1893 = vpop.f32.mrf.mxu0
      %v1894 = vadd.f32 0.0, %v1893
      %v1895 = vpop.f32.mrf.mxu0
      %1896 = vdwg.mxu0
      %1897 = vmatpush.bf16.msra.mxu0 0
      %1898 = vmatpush.bf16.msra.mxu0 0
      %1899 = vmatpush.bf16.msra.mxu0 0
      %1900 = vmatpush.bf16.msra.mxu0 0
      %1901 = vmatpush.bf16.msra.mxu0 0
      %1902 = vmatpush.bf16.msra.mxu0 0
      %1903 = vmatpush.bf16.msra.mxu0 0
      %1904 = vmatpush.bf16.msra.mxu0 %v1847
      %1905 = vmatmul.bf16.gmra.mxu0 %v1835
      %v1906 = vpop.f32.mrf.mxu0
      %v1907 = vadd.f32 0.0, %v1906
      %v1908 = vpop.f32.mrf.mxu0
      %1909 = vdwg.mxu0
      %1910 = vmatpush.bf16.msra.mxu0 0
      %1911 = vmatpush.bf16.msra.mxu0 0
      %1912 = vmatpush.bf16.msra.mxu0 0
      %1913 = vmatpush.bf16.msra.mxu0 0
      %1914 = vmatpush.bf16.msra.mxu0 0
      %1915 = vmatpush.bf16.msra.mxu0 0
      %1916 = vmatpush.bf16.msra.mxu0 0
      %1917 = vmatpush.bf16.msra.mxu0 %v1850
      %1918 = vmatmul.bf16.gmra.mxu0 %v1835
      %v1919 = vpop.f32.mrf.mxu0
      %v1920 = vadd.f32 0.0, %v1919
      %v1921 = vpop.f32.mrf.mxu0
      %1922 = vdwg.mxu0
      %1923 = vmatpush.bf16.msra.mxu0 0
      %1924 = vmatpush.bf16.msra.mxu0 0
      %1925 = vmatpush.bf16.msra.mxu0 0
      %1926 = vmatpush.bf16.msra.mxu0 0
      %1927 = vmatpush.bf16.msra.mxu0 0
      %1928 = vmatpush.bf16.msra.mxu0 0
      %1929 = vmatpush.bf16.msra.mxu0 0
      %1930 = vmatpush.bf16.msra.mxu0 %v1853
      %1931 = vmatmul.bf16.gmra.mxu0 %v1835
      %v1932 = vpop.f32.mrf.mxu0
      %v1933 = vadd.f32 0.0, %v1932
      %v1934 = vpop.f32.mrf.mxu0
      %1935 = vdwg.mxu0
      %1936 = vmatpush.bf16.msra.mxu0 0
      %1937 = vmatpush.bf16.msra.mxu0 0
      %1938 = vmatpush.bf16.msra.mxu0 0
      %1939 = vmatpush.bf16.msra.mxu0 0
      %1940 = vmatpush.bf16.msra.mxu0 0
      %1941 = vmatpush.bf16.msra.mxu0 0
      %1942 = vmatpush.bf16.msra.mxu0 0
      %1943 = vmatpush.bf16.msra.mxu0 %v1856
      %1944 = vmatmul.bf16.gmra.mxu0 %v1835
      %v1945 = vpop.f32.mrf.mxu0
      %v1946 = vadd.f32 0.0, %v1945
      %v1947 = vpop.f32.mrf.mxu0
      %1948 = vdwg.mxu0
      %v1949 = vadd.f32 %v1778, %v1868
      %v1950 = vadd.f32 %v1779, %v1881
      %v1951 = vadd.f32 %v1780, %v1894
      %v1952 = vadd.f32 %v1781, %v1907
      %v1953 = vadd.f32 %v1782, %v1920
      %v1954 = vadd.f32 %v1783, %v1933
      %v1955 = vadd.f32 %v1784, %v1946
      %s1956 = scalar_lea.vmem %s1, 22
      %v1957 = vld [vmem:[%s1956] sm:$0x3]
      %v1958 = vld [vmem:[%s165] sm:$0xff]
      %v1959 = vld [vmem:[%s165 + $0x8] sm:$0xff]
      %1961 = vst [vmem:[#allocation1] ss:$4 sm:$0xff] %v1958
      %s1963 = scalar_lea.vmem [#allocation1], 32
      %1964 = vst [vmem:[%s1963] ss:$4 sm:$0xff] %v1959
      %v1965 = vld.sshfl [vmem:[#allocation1] sm:$0xff pattern:$0x73625140]
      %v1967 = vld.sshfl [vmem:[#allocation1 + $0x8] sm:$0xff pattern:$0x73625140]
      %v1969 = vld.sshfl [vmem:[#allocation1 + $0x10] sm:$0xff pattern:$0x73625140]
      %v1971 = vld.sshfl [vmem:[#allocation1 + $0x18] sm:$0xff pattern:$0x73625140]
      %v1973 = vld.sshfl [vmem:[#allocation1 + $0x20] sm:$0xff pattern:$0x73625140]
      %v1975 = vld.sshfl [vmem:[#allocation1 + $0x28] sm:$0xff pattern:$0x73625140]
      %v1977 = vld.sshfl [vmem:[#allocation1 + $0x30] sm:$0xff pattern:$0x73625140]
      %v1979 = vld.sshfl [vmem:[#allocation1 + $0x38] sm:$0xff pattern:$0x73625140]
      %1981 = vrot.lane.b32.xlu0 %v1965, 26
      %v1982 = vpop.permute.xlu0 %1981
      %1983 = vrot.lane.b32.xlu0 %v1967, 26
      %v1984 = vpop.permute.xlu0 %1983
      %1985 = vrot.lane.b32.xlu0 %v1969, 26
      %v1986 = vpop.permute.xlu0 %1985
      %1987 = vrot.lane.b32.xlu0 %v1971, 26
      %v1988 = vpop.permute.xlu0 %1987
      %1989 = vrot.lane.b32.xlu0 %v1973, 26
      %v1990 = vpop.permute.xlu0 %1989
      %1991 = vrot.lane.b32.xlu0 %v1975, 26
      %v1992 = vpop.permute.xlu0 %1991
      %1993 = vrot.lane.b32.xlu0 %v1977, 26
      %v1994 = vpop.permute.xlu0 %1993
      %1995 = vrot.lane.b32.xlu0 %v1979, 26
      %v1996 = vpop.permute.xlu0 %1995
      %vm1997 = vcmask 211968
      %v1998 = vsel %vm1997, %v1982, %v1984
      %v1999 = vsel %vm1997, %v1984, %v1986
      %v2000 = vsel %vm1997, %v1986, %v1988
      %v2001 = vsel %vm1997, %v1988, %v1990
      %v2002 = vsel %vm1997, %v1990, %v1992
      %v2003 = vsel %vm1997, %v1992, %v1994
      %v2004 = vsel %vm1997, %v1994, %v1996
      %v2006 = vsel %vm217, %v1957, 0
      %v2009 = vsel %vm221, %v1998, 0
      %v2012 = vsel %vm221, %v1999, 0
      %v2015 = vsel %vm221, %v2000, 0
      %v2018 = vsel %vm221, %v2001, 0
      %v2021 = vsel %vm221, %v2002, 0
      %v2024 = vsel %vm221, %v2003, 0
      %v2027 = vsel %vm221, %v2004, 0
      %2029 = vmatpush.bf16.msra.mxu0 0
      %2030 = vmatpush.bf16.msra.mxu0 0
      %2031 = vmatpush.bf16.msra.mxu0 0
      %2032 = vmatpush.bf16.msra.mxu0 0
      %2033 = vmatpush.bf16.msra.mxu0 0
      %2034 = vmatpush.bf16.msra.mxu0 0
      %2035 = vmatpush.bf16.msra.mxu0 0
      %2036 = vmatpush.bf16.msra.mxu0 %v2009
      %2037 = vmatmul.bf16.gmra.mxu0 %v2006
      %v2038 = vpop.f32.mrf.mxu0
      %v2039 = vadd.f32 0.0, %v2038
      %v2040 = vpop.f32.mrf.mxu0
      %2041 = vdwg.mxu0
      %2042 = vmatpush.bf16.msra.mxu0 0
      %2043 = vmatpush.bf16.msra.mxu0 0
      %2044 = vmatpush.bf16.msra.mxu0 0
      %2045 = vmatpush.bf16.msra.mxu0 0
      %2046 = vmatpush.bf16.msra.mxu0 0
      %2047 = vmatpush.bf16.msra.mxu0 0
      %2048 = vmatpush.bf16.msra.mxu0 0
      %2049 = vmatpush.bf16.msra.mxu0 %v2012
      %2050 = vmatmul.bf16.gmra.mxu0 %v2006
      %v2051 = vpop.f32.mrf.mxu0
      %v2052 = vadd.f32 0.0, %v2051
      %v2053 = vpop.f32.mrf.mxu0
      %2054 = vdwg.mxu0
      %2055 = vmatpush.bf16.msra.mxu0 0
      %2056 = vmatpush.bf16.msra.mxu0 0
      %2057 = vmatpush.bf16.msra.mxu0 0
      %2058 = vmatpush.bf16.msra.mxu0 0
      %2059 = vmatpush.bf16.msra.mxu0 0
      %2060 = vmatpush.bf16.msra.mxu0 0
      %2061 = vmatpush.bf16.msra.mxu0 0
      %2062 = vmatpush.bf16.msra.mxu0 %v2015
      %2063 = vmatmul.bf16.gmra.mxu0 %v2006
      %v2064 = vpop.f32.mrf.mxu0
      %v2065 = vadd.f32 0.0, %v2064
      %v2066 = vpop.f32.mrf.mxu0
      %2067 = vdwg.mxu0
      %2068 = vmatpush.bf16.msra.mxu0 0
      %2069 = vmatpush.bf16.msra.mxu0 0
      %2070 = vmatpush.bf16.msra.mxu0 0
      %2071 = vmatpush.bf16.msra.mxu0 0
      %2072 = vmatpush.bf16.msra.mxu0 0
      %2073 = vmatpush.bf16.msra.mxu0 0
      %2074 = vmatpush.bf16.msra.mxu0 0
      %2075 = vmatpush.bf16.msra.mxu0 %v2018
      %2076 = vmatmul.bf16.gmra.mxu0 %v2006
      %v2077 = vpop.f32.mrf.mxu0
      %v2078 = vadd.f32 0.0, %v2077
      %v2079 = vpop.f32.mrf.mxu0
      %2080 = vdwg.mxu0
      %2081 = vmatpush.bf16.msra.mxu0 0
      %2082 = vmatpush.bf16.msra.mxu0 0
      %2083 = vmatpush.bf16.msra.mxu0 0
      %2084 = vmatpush.bf16.msra.mxu0 0
      %2085 = vmatpush.bf16.msra.mxu0 0
      %2086 = vmatpush.bf16.msra.mxu0 0
      %2087 = vmatpush.bf16.msra.mxu0 0
      %2088 = vmatpush.bf16.msra.mxu0 %v2021
      %2089 = vmatmul.bf16.gmra.mxu0 %v2006
      %v2090 = vpop.f32.mrf.mxu0
      %v2091 = vadd.f32 0.0, %v2090
      %v2092 = vpop.f32.mrf.mxu0
      %2093 = vdwg.mxu0
      %2094 = vmatpush.bf16.msra.mxu0 0
      %2095 = vmatpush.bf16.msra.mxu0 0
      %2096 = vmatpush.bf16.msra.mxu0 0
      %2097 = vmatpush.bf16.msra.mxu0 0
      %2098 = vmatpush.bf16.msra.mxu0 0
      %2099 = vmatpush.bf16.msra.mxu0 0
      %2100 = vmatpush.bf16.msra.mxu0 0
      %2101 = vmatpush.bf16.msra.mxu0 %v2024
      %2102 = vmatmul.bf16.gmra.mxu0 %v2006
      %v2103 = vpop.f32.mrf.mxu0
      %v2104 = vadd.f32 0.0, %v2103
      %v2105 = vpop.f32.mrf.mxu0
      %2106 = vdwg.mxu0
      %2107 = vmatpush.bf16.msra.mxu0 0
      %2108 = vmatpush.bf16.msra.mxu0 0
      %2109 = vmatpush.bf16.msra.mxu0 0
      %2110 = vmatpush.bf16.msra.mxu0 0
      %2111 = vmatpush.bf16.msra.mxu0 0
      %2112 = vmatpush.bf16.msra.mxu0 0
      %2113 = vmatpush.bf16.msra.mxu0 0
      %2114 = vmatpush.bf16.msra.mxu0 %v2027
      %2115 = vmatmul.bf16.gmra.mxu0 %v2006
      %v2116 = vpop.f32.mrf.mxu0
      %v2117 = vadd.f32 0.0, %v2116
      %v2118 = vpop.f32.mrf.mxu0
      %2119 = vdwg.mxu0
      %v2120 = vadd.f32 %v1949, %v2039
      %v2121 = vadd.f32 %v1950, %v2052
      %v2122 = vadd.f32 %v1951, %v2065
      %v2123 = vadd.f32 %v1952, %v2078
      %v2124 = vadd.f32 %v1953, %v2091
      %v2125 = vadd.f32 %v1954, %v2104
      %v2126 = vadd.f32 %v1955, %v2117
      %s2127 = scalar_lea.vmem %s1, 24
      %v2128 = vld [vmem:[%s2127] sm:$0x3]
      %v2129 = vld [vmem:[%s165] sm:$0xff]
      %v2130 = vld [vmem:[%s165 + $0x8] sm:$0xff]
      %2132 = vst [vmem:[#allocation1] ss:$4 sm:$0xff] %v2129
      %s2134 = scalar_lea.vmem [#allocation1], 32
      %2135 = vst [vmem:[%s2134] ss:$4 sm:$0xff] %v2130
      %v2136 = vld.sshfl [vmem:[#allocation1] sm:$0xff pattern:$0x73625140]
      %v2138 = vld.sshfl [vmem:[#allocation1 + $0x8] sm:$0xff pattern:$0x73625140]
      %v2140 = vld.sshfl [vmem:[#allocation1 + $0x10] sm:$0xff pattern:$0x73625140]
      %v2142 = vld.sshfl [vmem:[#allocation1 + $0x18] sm:$0xff pattern:$0x73625140]
      %v2144 = vld.sshfl [vmem:[#allocation1 + $0x20] sm:$0xff pattern:$0x73625140]
      %v2146 = vld.sshfl [vmem:[#allocation1 + $0x28] sm:$0xff pattern:$0x73625140]
      %v2148 = vld.sshfl [vmem:[#allocation1 + $0x30] sm:$0xff pattern:$0x73625140]
      %v2150 = vld.sshfl [vmem:[#allocation1 + $0x38] sm:$0xff pattern:$0x73625140]
      %2152 = vrot.lane.b32.xlu0 %v2136, 18
      %v2153 = vpop.permute.xlu0 %2152
      %2154 = vrot.lane.b32.xlu0 %v2138, 18
      %v2155 = vpop.permute.xlu0 %2154
      %2156 = vrot.lane.b32.xlu0 %v2140, 18
      %v2157 = vpop.permute.xlu0 %2156
      %2158 = vrot.lane.b32.xlu0 %v2142, 18
      %v2159 = vpop.permute.xlu0 %2158
      %2160 = vrot.lane.b32.xlu0 %v2144, 18
      %v2161 = vpop.permute.xlu0 %2160
      %2162 = vrot.lane.b32.xlu0 %v2146, 18
      %v2163 = vpop.permute.xlu0 %2162
      %2164 = vrot.lane.b32.xlu0 %v2148, 18
      %v2165 = vpop.permute.xlu0 %2164
      %2166 = vrot.lane.b32.xlu0 %v2150, 18
      %v2167 = vpop.permute.xlu0 %2166
      %vm2168 = vcmask 146432
      %v2169 = vsel %vm2168, %v2153, %v2155
      %v2170 = vsel %vm2168, %v2155, %v2157
      %v2171 = vsel %vm2168, %v2157, %v2159
      %v2172 = vsel %vm2168, %v2159, %v2161
      %v2173 = vsel %vm2168, %v2161, %v2163
      %v2174 = vsel %vm2168, %v2163, %v2165
      %v2175 = vsel %vm2168, %v2165, %v2167
      %v2177 = vsel %vm217, %v2128, 0
      %v2180 = vsel %vm221, %v2169, 0
      %v2183 = vsel %vm221, %v2170, 0
      %v2186 = vsel %vm221, %v2171, 0
      %v2189 = vsel %vm221, %v2172, 0
      %v2192 = vsel %vm221, %v2173, 0
      %v2195 = vsel %vm221, %v2174, 0
      %v2198 = vsel %vm221, %v2175, 0
      %2200 = vmatpush.bf16.msra.mxu0 0
      %2201 = vmatpush.bf16.msra.mxu0 0
      %2202 = vmatpush.bf16.msra.mxu0 0
      %2203 = vmatpush.bf16.msra.mxu0 0
      %2204 = vmatpush.bf16.msra.mxu0 0
      %2205 = vmatpush.bf16.msra.mxu0 0
      %2206 = vmatpush.bf16.msra.mxu0 0
      %2207 = vmatpush.bf16.msra.mxu0 %v2180
      %2208 = vmatmul.bf16.gmra.mxu0 %v2177
      %v2209 = vpop.f32.mrf.mxu0
      %v2210 = vadd.f32 0.0, %v2209
      %v2211 = vpop.f32.mrf.mxu0
      %2212 = vdwg.mxu0
      %2213 = vmatpush.bf16.msra.mxu0 0
      %2214 = vmatpush.bf16.msra.mxu0 0
      %2215 = vmatpush.bf16.msra.mxu0 0
      %2216 = vmatpush.bf16.msra.mxu0 0
      %2217 = vmatpush.bf16.msra.mxu0 0
      %2218 = vmatpush.bf16.msra.mxu0 0
      %2219 = vmatpush.bf16.msra.mxu0 0
      %2220 = vmatpush.bf16.msra.mxu0 %v2183
      %2221 = vmatmul.bf16.gmra.mxu0 %v2177
      %v2222 = vpop.f32.mrf.mxu0
      %v2223 = vadd.f32 0.0, %v2222
      %v2224 = vpop.f32.mrf.mxu0
      %2225 = vdwg.mxu0
      %2226 = vmatpush.bf16.msra.mxu0 0
      %2227 = vmatpush.bf16.msra.mxu0 0
      %2228 = vmatpush.bf16.msra.mxu0 0
      %2229 = vmatpush.bf16.msra.mxu0 0
      %2230 = vmatpush.bf16.msra.mxu0 0
      %2231 = vmatpush.bf16.msra.mxu0 0
      %2232 = vmatpush.bf16.msra.mxu0 0
      %2233 = vmatpush.bf16.msra.mxu0 %v2186
      %2234 = vmatmul.bf16.gmra.mxu0 %v2177
      %v2235 = vpop.f32.mrf.mxu0
      %v2236 = vadd.f32 0.0, %v2235
      %v2237 = vpop.f32.mrf.mxu0
      %2238 = vdwg.mxu0
      %2239 = vmatpush.bf16.msra.mxu0 0
      %2240 = vmatpush.bf16.msra.mxu0 0
      %2241 = vmatpush.bf16.msra.mxu0 0
      %2242 = vmatpush.bf16.msra.mxu0 0
      %2243 = vmatpush.bf16.msra.mxu0 0
      %2244 = vmatpush.bf16.msra.mxu0 0
      %2245 = vmatpush.bf16.msra.mxu0 0
      %2246 = vmatpush.bf16.msra.mxu0 %v2189
      %2247 = vmatmul.bf16.gmra.mxu0 %v2177
      %v2248 = vpop.f32.mrf.mxu0
      %v2249 = vadd.f32 0.0, %v2248
      %v2250 = vpop.f32.mrf.mxu0
      %2251 = vdwg.mxu0
      %2252 = vmatpush.bf16.msra.mxu0 0
      %2253 = vmatpush.bf16.msra.mxu0 0
      %2254 = vmatpush.bf16.msra.mxu0 0
      %2255 = vmatpush.bf16.msra.mxu0 0
      %2256 = vmatpush.bf16.msra.mxu0 0
      %2257 = vmatpush.bf16.msra.mxu0 0
      %2258 = vmatpush.bf16.msra.mxu0 0
      %2259 = vmatpush.bf16.msra.mxu0 %v2192
      %2260 = vmatmul.bf16.gmra.mxu0 %v2177
      %v2261 = vpop.f32.mrf.mxu0
      %v2262 = vadd.f32 0.0, %v2261
      %v2263 = vpop.f32.mrf.mxu0
      %2264 = vdwg.mxu0
      %2265 = vmatpush.bf16.msra.mxu0 0
      %2266 = vmatpush.bf16.msra.mxu0 0
      %2267 = vmatpush.bf16.msra.mxu0 0
      %2268 = vmatpush.bf16.msra.mxu0 0
      %2269 = vmatpush.bf16.msra.mxu0 0
      %2270 = vmatpush.bf16.msra.mxu0 0
      %2271 = vmatpush.bf16.msra.mxu0 0
      %2272 = vmatpush.bf16.msra.mxu0 %v2195
      %2273 = vmatmul.bf16.gmra.mxu0 %v2177
      %v2274 = vpop.f32.mrf.mxu0
      %v2275 = vadd.f32 0.0, %v2274
      %v2276 = vpop.f32.mrf.mxu0
      %2277 = vdwg.mxu0
      %2278 = vmatpush.bf16.msra.mxu0 0
      %2279 = vmatpush.bf16.msra.mxu0 0
      %2280 = vmatpush.bf16.msra.mxu0 0
      %2281 = vmatpush.bf16.msra.mxu0 0
      %2282 = vmatpush.bf16.msra.mxu0 0
      %2283 = vmatpush.bf16.msra.mxu0 0
      %2284 = vmatpush.bf16.msra.mxu0 0
      %2285 = vmatpush.bf16.msra.mxu0 %v2198
      %2286 = vmatmul.bf16.gmra.mxu0 %v2177
      %v2287 = vpop.f32.mrf.mxu0
      %v2288 = vadd.f32 0.0, %v2287
      %v2289 = vpop.f32.mrf.mxu0
      %2290 = vdwg.mxu0
      %v2291 = vadd.f32 %v2120, %v2210
      %v2292 = vadd.f32 %v2121, %v2223
      %v2293 = vadd.f32 %v2122, %v2236
      %v2294 = vadd.f32 %v2123, %v2249
      %v2295 = vadd.f32 %v2124, %v2262
      %v2296 = vadd.f32 %v2125, %v2275
      %v2297 = vadd.f32 %v2126, %v2288
      %s2298 = scalar_lea.vmem %s1, 26
      %v2299 = vld [vmem:[%s2298] sm:$0x3]
      %v2300 = vld [vmem:[%s165] sm:$0xff]
      %v2301 = vld [vmem:[%s165 + $0x8] sm:$0xff]
      %2303 = vst [vmem:[#allocation1] ss:$4 sm:$0xff] %v2300
      %s2305 = scalar_lea.vmem [#allocation1], 32
      %2306 = vst [vmem:[%s2305] ss:$4 sm:$0xff] %v2301
      %v2307 = vld.sshfl [vmem:[#allocation1] sm:$0xff pattern:$0x73625140]
      %v2309 = vld.sshfl [vmem:[#allocation1 + $0x8] sm:$0xff pattern:$0x73625140]
      %v2311 = vld.sshfl [vmem:[#allocation1 + $0x10] sm:$0xff pattern:$0x73625140]
      %v2313 = vld.sshfl [vmem:[#allocation1 + $0x18] sm:$0xff pattern:$0x73625140]
      %v2315 = vld.sshfl [vmem:[#allocation1 + $0x20] sm:$0xff pattern:$0x73625140]
      %v2317 = vld.sshfl [vmem:[#allocation1 + $0x28] sm:$0xff pattern:$0x73625140]
      %v2319 = vld.sshfl [vmem:[#allocation1 + $0x30] sm:$0xff pattern:$0x73625140]
      %v2321 = vld.sshfl [vmem:[#allocation1 + $0x38] sm:$0xff pattern:$0x73625140]
      %2323 = vrot.lane.b32.xlu0 %v2307, 17
      %v2324 = vpop.permute.xlu0 %2323
      %2325 = vrot.lane.b32.xlu0 %v2309, 17
      %v2326 = vpop.permute.xlu0 %2325
      %2327 = vrot.lane.b32.xlu0 %v2311, 17
      %v2328 = vpop.permute.xlu0 %2327
      %2329 = vrot.lane.b32.xlu0 %v2313, 17
      %v2330 = vpop.permute.xlu0 %2329
      %2331 = vrot.lane.b32.xlu0 %v2315, 17
      %v2332 = vpop.permute.xlu0 %2331
      %2333 = vrot.lane.b32.xlu0 %v2317, 17
      %v2334 = vpop.permute.xlu0 %2333
      %2335 = vrot.lane.b32.xlu0 %v2319, 17
      %v2336 = vpop.permute.xlu0 %2335
      %2337 = vrot.lane.b32.xlu0 %v2321, 17
      %v2338 = vpop.permute.xlu0 %2337
      %vm2339 = vcmask 138240
      %v2340 = vsel %vm2339, %v2324, %v2326
      %v2341 = vsel %vm2339, %v2326, %v2328
      %v2342 = vsel %vm2339, %v2328, %v2330
      %v2343 = vsel %vm2339, %v2330, %v2332
      %v2344 = vsel %vm2339, %v2332, %v2334
      %v2345 = vsel %vm2339, %v2334, %v2336
      %v2346 = vsel %vm2339, %v2336, %v2338
      %v2348 = vsel %vm217, %v2299, 0
      %v2351 = vsel %vm221, %v2340, 0
      %v2354 = vsel %vm221, %v2341, 0
      %v2357 = vsel %vm221, %v2342, 0
      %v2360 = vsel %vm221, %v2343, 0
      %v2363 = vsel %vm221, %v2344, 0
      %v2366 = vsel %vm221, %v2345, 0
      %v2369 = vsel %vm221, %v2346, 0
      %2371 = vmatpush.bf16.msra.mxu0 0
      %2372 = vmatpush.bf16.msra.mxu0 0
      %2373 = vmatpush.bf16.msra.mxu0 0
      %2374 = vmatpush.bf16.msra.mxu0 0
      %2375 = vmatpush.bf16.msra.mxu0 0
      %2376 = vmatpush.bf16.msra.mxu0 0
      %2377 = vmatpush.bf16.msra.mxu0 0
      %2378 = vmatpush.bf16.msra.mxu0 %v2351
      %2379 = vmatmul.bf16.gmra.mxu0 %v2348
      %v2380 = vpop.f32.mrf.mxu0
      %v2381 = vadd.f32 0.0, %v2380
      %v2382 = vpop.f32.mrf.mxu0
      %2383 = vdwg.mxu0
      %2384 = vmatpush.bf16.msra.mxu0 0
      %2385 = vmatpush.bf16.msra.mxu0 0
      %2386 = vmatpush.bf16.msra.mxu0 0
      %2387 = vmatpush.bf16.msra.mxu0 0
      %2388 = vmatpush.bf16.msra.mxu0 0
      %2389 = vmatpush.bf16.msra.mxu0 0
      %2390 = vmatpush.bf16.msra.mxu0 0
      %2391 = vmatpush.bf16.msra.mxu0 %v2354
      %2392 = vmatmul.bf16.gmra.mxu0 %v2348
      %v2393 = vpop.f32.mrf.mxu0
      %v2394 = vadd.f32 0.0, %v2393
      %v2395 = vpop.f32.mrf.mxu0
      %2396 = vdwg.mxu0
      %2397 = vmatpush.bf16.msra.mxu0 0
      %2398 = vmatpush.bf16.msra.mxu0 0
      %2399 = vmatpush.bf16.msra.mxu0 0
      %2400 = vmatpush.bf16.msra.mxu0 0
      %2401 = vmatpush.bf16.msra.mxu0 0
      %2402 = vmatpush.bf16.msra.mxu0 0
      %2403 = vmatpush.bf16.msra.mxu0 0
      %2404 = vmatpush.bf16.msra.mxu0 %v2357
      %2405 = vmatmul.bf16.gmra.mxu0 %v2348
      %v2406 = vpop.f32.mrf.mxu0
      %v2407 = vadd.f32 0.0, %v2406
      %v2408 = vpop.f32.mrf.mxu0
      %2409 = vdwg.mxu0
      %2410 = vmatpush.bf16.msra.mxu0 0
      %2411 = vmatpush.bf16.msra.mxu0 0
      %2412 = vmatpush.bf16.msra.mxu0 0
      %2413 = vmatpush.bf16.msra.mxu0 0
      %2414 = vmatpush.bf16.msra.mxu0 0
      %2415 = vmatpush.bf16.msra.mxu0 0
      %2416 = vmatpush.bf16.msra.mxu0 0
      %2417 = vmatpush.bf16.msra.mxu0 %v2360
      %2418 = vmatmul.bf16.gmra.mxu0 %v2348
      %v2419 = vpop.f32.mrf.mxu0
      %v2420 = vadd.f32 0.0, %v2419
      %v2421 = vpop.f32.mrf.mxu0
      %2422 = vdwg.mxu0
      %2423 = vmatpush.bf16.msra.mxu0 0
      %2424 = vmatpush.bf16.msra.mxu0 0
      %2425 = vmatpush.bf16.msra.mxu0 0
      %2426 = vmatpush.bf16.msra.mxu0 0
      %2427 = vmatpush.bf16.msra.mxu0 0
      %2428 = vmatpush.bf16.msra.mxu0 0
      %2429 = vmatpush.bf16.msra.mxu0 0
      %2430 = vmatpush.bf16.msra.mxu0 %v2363
      %2431 = vmatmul.bf16.gmra.mxu0 %v2348
      %v2432 = vpop.f32.mrf.mxu0
      %v2433 = vadd.f32 0.0, %v2432
      %v2434 = vpop.f32.mrf.mxu0
      %2435 = vdwg.mxu0
      %2436 = vmatpush.bf16.msra.mxu0 0
      %2437 = vmatpush.bf16.msra.mxu0 0
      %2438 = vmatpush.bf16.msra.mxu0 0
      %2439 = vmatpush.bf16.msra.mxu0 0
      %2440 = vmatpush.bf16.msra.mxu0 0
      %2441 = vmatpush.bf16.msra.mxu0 0
      %2442 = vmatpush.bf16.msra.mxu0 0
      %2443 = vmatpush.bf16.msra.mxu0 %v2366
      %2444 = vmatmul.bf16.gmra.mxu0 %v2348
      %v2445 = vpop.f32.mrf.mxu0
      %v2446 = vadd.f32 0.0, %v2445
      %v2447 = vpop.f32.mrf.mxu0
      %2448 = vdwg.mxu0
      %2449 = vmatpush.bf16.msra.mxu0 0
      %2450 = vmatpush.bf16.msra.mxu0 0
      %2451 = vmatpush.bf16.msra.mxu0 0
      %2452 = vmatpush.bf16.msra.mxu0 0
      %2453 = vmatpush.bf16.msra.mxu0 0
      %2454 = vmatpush.bf16.msra.mxu0 0
      %2455 = vmatpush.bf16.msra.mxu0 0
      %2456 = vmatpush.bf16.msra.mxu0 %v2369
      %2457 = vmatmul.bf16.gmra.mxu0 %v2348
      %v2458 = vpop.f32.mrf.mxu0
      %v2459 = vadd.f32 0.0, %v2458
      %v2460 = vpop.f32.mrf.mxu0
      %2461 = vdwg.mxu0
      %v2462 = vadd.f32 %v2291, %v2381
      %v2463 = vadd.f32 %v2292, %v2394
      %v2464 = vadd.f32 %v2293, %v2407
      %v2465 = vadd.f32 %v2294, %v2420
      %v2466 = vadd.f32 %v2295, %v2433
      %v2467 = vadd.f32 %v2296, %v2446
      %v2468 = vadd.f32 %v2297, %v2459
      %s2469 = scalar_lea.vmem %s1, 28
      %v2470 = vld [vmem:[%s2469] sm:$0x3]
      %v2471 = vld [vmem:[%s165] sm:$0xff]
      %v2472 = vld [vmem:[%s165 + $0x8] sm:$0xff]
      %2474 = vst [vmem:[#allocation1] ss:$4 sm:$0xff] %v2471
      %s2476 = scalar_lea.vmem [#allocation1], 32
      %2477 = vst [vmem:[%s2476] ss:$4 sm:$0xff] %v2472
      %v2478 = vld.sshfl [vmem:[#allocation1] sm:$0xff pattern:$0x73625140]
      %v2480 = vld.sshfl [vmem:[#allocation1 + $0x8] sm:$0xff pattern:$0x73625140]
      %v2482 = vld.sshfl [vmem:[#allocation1 + $0x10] sm:$0xff pattern:$0x73625140]
      %v2484 = vld.sshfl [vmem:[#allocation1 + $0x18] sm:$0xff pattern:$0x73625140]
      %v2486 = vld.sshfl [vmem:[#allocation1 + $0x20] sm:$0xff pattern:$0x73625140]
      %v2488 = vld.sshfl [vmem:[#allocation1 + $0x28] sm:$0xff pattern:$0x73625140]
      %v2490 = vld.sshfl [vmem:[#allocation1 + $0x30] sm:$0xff pattern:$0x73625140]
      %v2492 = vld.sshfl [vmem:[#allocation1 + $0x38] sm:$0xff pattern:$0x73625140]
      %2494 = vrot.lane.b32.xlu0 %v2478, 16
      %v2495 = vpop.permute.xlu0 %2494
      %2496 = vrot.lane.b32.xlu0 %v2480, 16
      %v2497 = vpop.permute.xlu0 %2496
      %2498 = vrot.lane.b32.xlu0 %v2482, 16
      %v2499 = vpop.permute.xlu0 %2498
      %2500 = vrot.lane.b32.xlu0 %v2484, 16
      %v2501 = vpop.permute.xlu0 %2500
      %2502 = vrot.lane.b32.xlu0 %v2486, 16
      %v2503 = vpop.permute.xlu0 %2502
      %2504 = vrot.lane.b32.xlu0 %v2488, 16
      %v2505 = vpop.permute.xlu0 %2504
      %2506 = vrot.lane.b32.xlu0 %v2490, 16
      %v2507 = vpop.permute.xlu0 %2506
      %2508 = vrot.lane.b32.xlu0 %v2492, 16
      %v2509 = vpop.permute.xlu0 %2508
      %vm2510 = vcmask 130048
      %v2511 = vsel %vm2510, %v2495, %v2497
      %v2512 = vsel %vm2510, %v2497, %v2499
      %v2513 = vsel %vm2510, %v2499, %v2501
      %v2514 = vsel %vm2510, %v2501, %v2503
      %v2515 = vsel %vm2510, %v2503, %v2505
      %v2516 = vsel %vm2510, %v2505, %v2507
      %v2517 = vsel %vm2510, %v2507, %v2509
      %v2519 = vsel %vm217, %v2470, 0
      %v2522 = vsel %vm221, %v2511, 0
      %v2525 = vsel %vm221, %v2512, 0
      %v2528 = vsel %vm221, %v2513, 0
      %v2531 = vsel %vm221, %v2514, 0
      %v2534 = vsel %vm221, %v2515, 0
      %v2537 = vsel %vm221, %v2516, 0
      %v2540 = vsel %vm221, %v2517, 0
      %2542 = vmatpush.bf16.msra.mxu0 0
      %2543 = vmatpush.bf16.msra.mxu0 0
      %2544 = vmatpush.bf16.msra.mxu0 0
      %2545 = vmatpush.bf16.msra.mxu0 0
      %2546 = vmatpush.bf16.msra.mxu0 0
      %2547 = vmatpush.bf16.msra.mxu0 0
      %2548 = vmatpush.bf16.msra.mxu0 0
      %2549 = vmatpush.bf16.msra.mxu0 %v2522
      %2550 = vmatmul.bf16.gmra.mxu0 %v2519
      %v2551 = vpop.f32.mrf.mxu0
      %v2552 = vadd.f32 0.0, %v2551
      %v2553 = vpop.f32.mrf.mxu0
      %2554 = vdwg.mxu0
      %2555 = vmatpush.bf16.msra.mxu0 0
      %2556 = vmatpush.bf16.msra.mxu0 0
      %2557 = vmatpush.bf16.msra.mxu0 0
      %2558 = vmatpush.bf16.msra.mxu0 0
      %2559 = vmatpush.bf16.msra.mxu0 0
      %2560 = vmatpush.bf16.msra.mxu0 0
      %2561 = vmatpush.bf16.msra.mxu0 0
      %2562 = vmatpush.bf16.msra.mxu0 %v2525
      %2563 = vmatmul.bf16.gmra.mxu0 %v2519
      %v2564 = vpop.f32.mrf.mxu0
      %v2565 = vadd.f32 0.0, %v2564
      %v2566 = vpop.f32.mrf.mxu0
      %2567 = vdwg.mxu0
      %2568 = vmatpush.bf16.msra.mxu0 0
      %2569 = vmatpush.bf16.msra.mxu0 0
      %2570 = vmatpush.bf16.msra.mxu0 0
      %2571 = vmatpush.bf16.msra.mxu0 0
      %2572 = vmatpush.bf16.msra.mxu0 0
      %2573 = vmatpush.bf16.msra.mxu0 0
      %2574 = vmatpush.bf16.msra.mxu0 0
      %2575 = vmatpush.bf16.msra.mxu0 %v2528
      %2576 = vmatmul.bf16.gmra.mxu0 %v2519
      %v2577 = vpop.f32.mrf.mxu0
      %v2578 = vadd.f32 0.0, %v2577
      %v2579 = vpop.f32.mrf.mxu0
      %2580 = vdwg.mxu0
      %2581 = vmatpush.bf16.msra.mxu0 0
      %2582 = vmatpush.bf16.msra.mxu0 0
      %2583 = vmatpush.bf16.msra.mxu0 0
      %2584 = vmatpush.bf16.msra.mxu0 0
      %2585 = vmatpush.bf16.msra.mxu0 0
      %2586 = vmatpush.bf16.msra.mxu0 0
      %2587 = vmatpush.bf16.msra.mxu0 0
      %2588 = vmatpush.bf16.msra.mxu0 %v2531
      %2589 = vmatmul.bf16.gmra.mxu0 %v2519
      %v2590 = vpop.f32.mrf.mxu0
      %v2591 = vadd.f32 0.0, %v2590
      %v2592 = vpop.f32.mrf.mxu0
      %2593 = vdwg.mxu0
      %2594 = vmatpush.bf16.msra.mxu0 0
      %2595 = vmatpush.bf16.msra.mxu0 0
      %2596 = vmatpush.bf16.msra.mxu0 0
      %2597 = vmatpush.bf16.msra.mxu0 0
      %2598 = vmatpush.bf16.msra.mxu0 0
      %2599 = vmatpush.bf16.msra.mxu0 0
      %2600 = vmatpush.bf16.msra.mxu0 0
      %2601 = vmatpush.bf16.msra.mxu0 %v2534
      %2602 = vmatmul.bf16.gmra.mxu0 %v2519
      %v2603 = vpop.f32.mrf.mxu0
      %v2604 = vadd.f32 0.0, %v2603
      %v2605 = vpop.f32.mrf.mxu0
      %2606 = vdwg.mxu0
      %2607 = vmatpush.bf16.msra.mxu0 0
      %2608 = vmatpush.bf16.msra.mxu0 0
      %2609 = vmatpush.bf16.msra.mxu0 0
      %2610 = vmatpush.bf16.msra.mxu0 0
      %2611 = vmatpush.bf16.msra.mxu0 0
      %2612 = vmatpush.bf16.msra.mxu0 0
      %2613 = vmatpush.bf16.msra.mxu0 0
      %2614 = vmatpush.bf16.msra.mxu0 %v2537
      %2615 = vmatmul.bf16.gmra.mxu0 %v2519
      %v2616 = vpop.f32.mrf.mxu0
      %v2617 = vadd.f32 0.0, %v2616
      %v2618 = vpop.f32.mrf.mxu0
      %2619 = vdwg.mxu0
      %2620 = vmatpush.bf16.msra.mxu0 0
      %2621 = vmatpush.bf16.msra.mxu0 0
      %2622 = vmatpush.bf16.msra.mxu0 0
      %2623 = vmatpush.bf16.msra.mxu0 0
      %2624 = vmatpush.bf16.msra.mxu0 0
      %2625 = vmatpush.bf16.msra.mxu0 0
      %2626 = vmatpush.bf16.msra.mxu0 0
      %2627 = vmatpush.bf16.msra.mxu0 %v2540
      %2628 = vmatmul.bf16.gmra.mxu0 %v2519
      %v2629 = vpop.f32.mrf.mxu0
      %v2630 = vadd.f32 0.0, %v2629
      %v2631 = vpop.f32.mrf.mxu0
      %2632 = vdwg.mxu0
      %v2633 = vadd.f32 %v2462, %v2552
      %v2634 = vadd.f32 %v2463, %v2565
      %v2635 = vadd.f32 %v2464, %v2578
      %v2636 = vadd.f32 %v2465, %v2591
      %v2637 = vadd.f32 %v2466, %v2604
      %v2638 = vadd.f32 %v2467, %v2617
      %v2639 = vadd.f32 %v2468, %v2630
      %s2640 = scalar_lea.vmem %s1, 30
      %v2641 = vld [vmem:[%s2640] sm:$0x3]
      %v2642 = vld [vmem:[%s165] sm:$0xff]
      %v2643 = vld [vmem:[%s165 + $0x8] sm:$0xff]
      %2645 = vst [vmem:[#allocation1] ss:$4 sm:$0xff] %v2642
      %s2647 = scalar_lea.vmem [#allocation1], 32
      %2648 = vst [vmem:[%s2647] ss:$4 sm:$0xff] %v2643
      %v2649 = vld.sshfl [vmem:[#allocation1] sm:$0xff pattern:$0x73625140]
      %v2651 = vld.sshfl [vmem:[#allocation1 + $0x8] sm:$0xff pattern:$0x73625140]
      %v2653 = vld.sshfl [vmem:[#allocation1 + $0x10] sm:$0xff pattern:$0x73625140]
      %v2655 = vld.sshfl [vmem:[#allocation1 + $0x18] sm:$0xff pattern:$0x73625140]
      %v2657 = vld.sshfl [vmem:[#allocation1 + $0x20] sm:$0xff pattern:$0x73625140]
      %v2659 = vld.sshfl [vmem:[#allocation1 + $0x28] sm:$0xff pattern:$0x73625140]
      %v2661 = vld.sshfl [vmem:[#allocation1 + $0x30] sm:$0xff pattern:$0x73625140]
      %v2663 = vld.sshfl [vmem:[#allocation1 + $0x38] sm:$0xff pattern:$0x73625140]
      %2665 = vrot.lane.b32.xlu0 %v2649, 8
      %v2666 = vpop.permute.xlu0 %2665
      %2667 = vrot.lane.b32.xlu0 %v2651, 8
      %v2668 = vpop.permute.xlu0 %2667
      %2669 = vrot.lane.b32.xlu0 %v2653, 8
      %v2670 = vpop.permute.xlu0 %2669
      %2671 = vrot.lane.b32.xlu0 %v2655, 8
      %v2672 = vpop.permute.xlu0 %2671
      %2673 = vrot.lane.b32.xlu0 %v2657, 8
      %v2674 = vpop.permute.xlu0 %2673
      %2675 = vrot.lane.b32.xlu0 %v2659, 8
      %v2676 = vpop.permute.xlu0 %2675
      %2677 = vrot.lane.b32.xlu0 %v2661, 8
      %v2678 = vpop.permute.xlu0 %2677
      %2679 = vrot.lane.b32.xlu0 %v2663, 8
      %v2680 = vpop.permute.xlu0 %2679
      %vm2681 = vcmask 64512
      %v2682 = vsel %vm2681, %v2666, %v2668
      %v2683 = vsel %vm2681, %v2668, %v2670
      %v2684 = vsel %vm2681, %v2670, %v2672
      %v2685 = vsel %vm2681, %v2672, %v2674
      %v2686 = vsel %vm2681, %v2674, %v2676
      %v2687 = vsel %vm2681, %v2676, %v2678
      %v2688 = vsel %vm2681, %v2678, %v2680
      %v2690 = vsel %vm217, %v2641, 0
      %v2693 = vsel %vm221, %v2682, 0
      %v2696 = vsel %vm221, %v2683, 0
      %v2699 = vsel %vm221, %v2684, 0
      %v2702 = vsel %vm221, %v2685, 0
      %v2705 = vsel %vm221, %v2686, 0
      %v2708 = vsel %vm221, %v2687, 0
      %v2711 = vsel %vm221, %v2688, 0
      %2713 = vmatpush.bf16.msra.mxu0 0
      %2714 = vmatpush.bf16.msra.mxu0 0
      %2715 = vmatpush.bf16.msra.mxu0 0
      %2716 = vmatpush.bf16.msra.mxu0 0
      %2717 = vmatpush.bf16.msra.mxu0 0
      %2718 = vmatpush.bf16.msra.mxu0 0
      %2719 = vmatpush.bf16.msra.mxu0 0
      %2720 = vmatpush.bf16.msra.mxu0 %v2693
      %2721 = vmatmul.bf16.gmra.mxu0 %v2690
      %v2722 = vpop.f32.mrf.mxu0
      %v2723 = vadd.f32 0.0, %v2722
      %v2724 = vpop.f32.mrf.mxu0
      %2725 = vdwg.mxu0
      %2726 = vmatpush.bf16.msra.mxu0 0
      %2727 = vmatpush.bf16.msra.mxu0 0
      %2728 = vmatpush.bf16.msra.mxu0 0
      %2729 = vmatpush.bf16.msra.mxu0 0
      %2730 = vmatpush.bf16.msra.mxu0 0
      %2731 = vmatpush.bf16.msra.mxu0 0
      %2732 = vmatpush.bf16.msra.mxu0 0
      %2733 = vmatpush.bf16.msra.mxu0 %v2696
      %2734 = vmatmul.bf16.gmra.mxu0 %v2690
      %v2735 = vpop.f32.mrf.mxu0
      %v2736 = vadd.f32 0.0, %v2735
      %v2737 = vpop.f32.mrf.mxu0
      %2738 = vdwg.mxu0
      %2739 = vmatpush.bf16.msra.mxu0 0
      %2740 = vmatpush.bf16.msra.mxu0 0
      %2741 = vmatpush.bf16.msra.mxu0 0
      %2742 = vmatpush.bf16.msra.mxu0 0
      %2743 = vmatpush.bf16.msra.mxu0 0
      %2744 = vmatpush.bf16.msra.mxu0 0
      %2745 = vmatpush.bf16.msra.mxu0 0
      %2746 = vmatpush.bf16.msra.mxu0 %v2699
      %2747 = vmatmul.bf16.gmra.mxu0 %v2690
      %v2748 = vpop.f32.mrf.mxu0
      %v2749 = vadd.f32 0.0, %v2748
      %v2750 = vpop.f32.mrf.mxu0
      %2751 = vdwg.mxu0
      %2752 = vmatpush.bf16.msra.mxu0 0
      %2753 = vmatpush.bf16.msra.mxu0 0
      %2754 = vmatpush.bf16.msra.mxu0 0
      %2755 = vmatpush.bf16.msra.mxu0 0
      %2756 = vmatpush.bf16.msra.mxu0 0
      %2757 = vmatpush.bf16.msra.mxu0 0
      %2758 = vmatpush.bf16.msra.mxu0 0
      %2759 = vmatpush.bf16.msra.mxu0 %v2702
      %2760 = vmatmul.bf16.gmra.mxu0 %v2690
      %v2761 = vpop.f32.mrf.mxu0
      %v2762 = vadd.f32 0.0, %v2761
      %v2763 = vpop.f32.mrf.mxu0
      %2764 = vdwg.mxu0
      %2765 = vmatpush.bf16.msra.mxu0 0
      %2766 = vmatpush.bf16.msra.mxu0 0
      %2767 = vmatpush.bf16.msra.mxu0 0
      %2768 = vmatpush.bf16.msra.mxu0 0
      %2769 = vmatpush.bf16.msra.mxu0 0
      %2770 = vmatpush.bf16.msra.mxu0 0
      %2771 = vmatpush.bf16.msra.mxu0 0
      %2772 = vmatpush.bf16.msra.mxu0 %v2705
      %2773 = vmatmul.bf16.gmra.mxu0 %v2690
      %v2774 = vpop.f32.mrf.mxu0
      %v2775 = vadd.f32 0.0, %v2774
      %v2776 = vpop.f32.mrf.mxu0
      %2777 = vdwg.mxu0
      %2778 = vmatpush.bf16.msra.mxu0 0
      %2779 = vmatpush.bf16.msra.mxu0 0
      %2780 = vmatpush.bf16.msra.mxu0 0
      %2781 = vmatpush.bf16.msra.mxu0 0
      %2782 = vmatpush.bf16.msra.mxu0 0
      %2783 = vmatpush.bf16.msra.mxu0 0
      %2784 = vmatpush.bf16.msra.mxu0 0
      %2785 = vmatpush.bf16.msra.mxu0 %v2708
      %2786 = vmatmul.bf16.gmra.mxu0 %v2690
      %v2787 = vpop.f32.mrf.mxu0
      %v2788 = vadd.f32 0.0, %v2787
      %v2789 = vpop.f32.mrf.mxu0
      %2790 = vdwg.mxu0
      %2791 = vmatpush.bf16.msra.mxu0 0
      %2792 = vmatpush.bf16.msra.mxu0 0
      %2793 = vmatpush.bf16.msra.mxu0 0
      %2794 = vmatpush.bf16.msra.mxu0 0
      %2795 = vmatpush.bf16.msra.mxu0 0
      %2796 = vmatpush.bf16.msra.mxu0 0
      %2797 = vmatpush.bf16.msra.mxu0 0
      %2798 = vmatpush.bf16.msra.mxu0 %v2711
      %2799 = vmatmul.bf16.gmra.mxu0 %v2690
      %v2800 = vpop.f32.mrf.mxu0
      %v2801 = vadd.f32 0.0, %v2800
      %v2802 = vpop.f32.mrf.mxu0
      %2803 = vdwg.mxu0
      %v2804 = vadd.f32 %v2633, %v2723
      %v2805 = vadd.f32 %v2634, %v2736
      %v2806 = vadd.f32 %v2635, %v2749
      %v2807 = vadd.f32 %v2636, %v2762
      %v2808 = vadd.f32 %v2637, %v2775
      %v2809 = vadd.f32 %v2638, %v2788
      %v2810 = vadd.f32 %v2639, %v2801
      %s2811 = scalar_lea.vmem %s1, 32
      %v2812 = vld [vmem:[%s2811] sm:$0x3]
      %v2813 = vld [vmem:[%s165] sm:$0xff]
      %v2814 = vld [vmem:[%s165 + $0x8] sm:$0xff]
      %2816 = vst [vmem:[#allocation1] ss:$4 sm:$0xff] %v2813
      %s2818 = scalar_lea.vmem [#allocation1], 32
      %2819 = vst [vmem:[%s2818] ss:$4 sm:$0xff] %v2814
      %v2820 = vld.sshfl [vmem:[#allocation1] sm:$0xff pattern:$0x73625140]
      %v2822 = vld.sshfl [vmem:[#allocation1 + $0x8] sm:$0xff pattern:$0x73625140]
      %v2824 = vld.sshfl [vmem:[#allocation1 + $0x10] sm:$0xff pattern:$0x73625140]
      %v2826 = vld.sshfl [vmem:[#allocation1 + $0x18] sm:$0xff pattern:$0x73625140]
      %v2828 = vld.sshfl [vmem:[#allocation1 + $0x20] sm:$0xff pattern:$0x73625140]
      %v2830 = vld.sshfl [vmem:[#allocation1 + $0x28] sm:$0xff pattern:$0x73625140]
      %v2832 = vld.sshfl [vmem:[#allocation1 + $0x30] sm:$0xff pattern:$0x73625140]
      %v2834 = vld.sshfl [vmem:[#allocation1 + $0x38] sm:$0xff pattern:$0x73625140]
      %2836 = vrot.lane.b32.xlu0 %v2820, 7
      %v2837 = vpop.permute.xlu0 %2836
      %2838 = vrot.lane.b32.xlu0 %v2822, 7
      %v2839 = vpop.permute.xlu0 %2838
      %2840 = vrot.lane.b32.xlu0 %v2824, 7
      %v2841 = vpop.permute.xlu0 %2840
      %2842 = vrot.lane.b32.xlu0 %v2826, 7
      %v2843 = vpop.permute.xlu0 %2842
      %2844 = vrot.lane.b32.xlu0 %v2828, 7
      %v2845 = vpop.permute.xlu0 %2844
      %2846 = vrot.lane.b32.xlu0 %v2830, 7
      %v2847 = vpop.permute.xlu0 %2846
      %2848 = vrot.lane.b32.xlu0 %v2832, 7
      %v2849 = vpop.permute.xlu0 %2848
      %2850 = vrot.lane.b32.xlu0 %v2834, 7
      %v2851 = vpop.permute.xlu0 %2850
      %vm2852 = vcmask 56320
      %v2853 = vsel %vm2852, %v2837, %v2839
      %v2854 = vsel %vm2852, %v2839, %v2841
      %v2855 = vsel %vm2852, %v2841, %v2843
      %v2856 = vsel %vm2852, %v2843, %v2845
      %v2857 = vsel %vm2852, %v2845, %v2847
      %v2858 = vsel %vm2852, %v2847, %v2849
      %v2859 = vsel %vm2852, %v2849, %v2851
      %v2861 = vsel %vm217, %v2812, 0
      %v2864 = vsel %vm221, %v2853, 0
      %v2867 = vsel %vm221, %v2854, 0
      %v2870 = vsel %vm221, %v2855, 0
      %v2873 = vsel %vm221, %v2856, 0
      %v2876 = vsel %vm221, %v2857, 0
      %v2879 = vsel %vm221, %v2858, 0
      %v2882 = vsel %vm221, %v2859, 0
      %2884 = vmatpush.bf16.msra.mxu0 0
      %2885 = vmatpush.bf16.msra.mxu0 0
      %2886 = vmatpush.bf16.msra.mxu0 0
      %2887 = vmatpush.bf16.msra.mxu0 0
      %2888 = vmatpush.bf16.msra.mxu0 0
      %2889 = vmatpush.bf16.msra.mxu0 0
      %2890 = vmatpush.bf16.msra.mxu0 0
      %2891 = vmatpush.bf16.msra.mxu0 %v2864
      %2892 = vmatmul.bf16.gmra.mxu0 %v2861
      %v2893 = vpop.f32.mrf.mxu0
      %v2894 = vadd.f32 0.0, %v2893
      %v2895 = vpop.f32.mrf.mxu0
      %2896 = vdwg.mxu0
      %2897 = vmatpush.bf16.msra.mxu0 0
      %2898 = vmatpush.bf16.msra.mxu0 0
      %2899 = vmatpush.bf16.msra.mxu0 0
      %2900 = vmatpush.bf16.msra.mxu0 0
      %2901 = vmatpush.bf16.msra.mxu0 0
      %2902 = vmatpush.bf16.msra.mxu0 0
      %2903 = vmatpush.bf16.msra.mxu0 0
      %2904 = vmatpush.bf16.msra.mxu0 %v2867
      %2905 = vmatmul.bf16.gmra.mxu0 %v2861
      %v2906 = vpop.f32.mrf.mxu0
      %v2907 = vadd.f32 0.0, %v2906
      %v2908 = vpop.f32.mrf.mxu0
      %2909 = vdwg.mxu0
      %2910 = vmatpush.bf16.msra.mxu0 0
      %2911 = vmatpush.bf16.msra.mxu0 0
      %2912 = vmatpush.bf16.msra.mxu0 0
      %2913 = vmatpush.bf16.msra.mxu0 0
      %2914 = vmatpush.bf16.msra.mxu0 0
      %2915 = vmatpush.bf16.msra.mxu0 0
      %2916 = vmatpush.bf16.msra.mxu0 0
      %2917 = vmatpush.bf16.msra.mxu0 %v2870
      %2918 = vmatmul.bf16.gmra.mxu0 %v2861
      %v2919 = vpop.f32.mrf.mxu0
      %v2920 = vadd.f32 0.0, %v2919
      %v2921 = vpop.f32.mrf.mxu0
      %2922 = vdwg.mxu0
      %2923 = vmatpush.bf16.msra.mxu0 0
      %2924 = vmatpush.bf16.msra.mxu0 0
      %2925 = vmatpush.bf16.msra.mxu0 0
      %2926 = vmatpush.bf16.msra.mxu0 0
      %2927 = vmatpush.bf16.msra.mxu0 0
      %2928 = vmatpush.bf16.msra.mxu0 0
      %2929 = vmatpush.bf16.msra.mxu0 0
      %2930 = vmatpush.bf16.msra.mxu0 %v2873
      %2931 = vmatmul.bf16.gmra.mxu0 %v2861
      %v2932 = vpop.f32.mrf.mxu0
      %v2933 = vadd.f32 0.0, %v2932
      %v2934 = vpop.f32.mrf.mxu0
      %2935 = vdwg.mxu0
      %2936 = vmatpush.bf16.msra.mxu0 0
      %2937 = vmatpush.bf16.msra.mxu0 0
      %2938 = vmatpush.bf16.msra.mxu0 0
      %2939 = vmatpush.bf16.msra.mxu0 0
      %2940 = vmatpush.bf16.msra.mxu0 0
      %2941 = vmatpush.bf16.msra.mxu0 0
      %2942 = vmatpush.bf16.msra.mxu0 0
      %2943 = vmatpush.bf16.msra.mxu0 %v2876
      %2944 = vmatmul.bf16.gmra.mxu0 %v2861
      %v2945 = vpop.f32.mrf.mxu0
      %v2946 = vadd.f32 0.0, %v2945
      %v2947 = vpop.f32.mrf.mxu0
      %2948 = vdwg.mxu0
      %2949 = vmatpush.bf16.msra.mxu0 0
      %2950 = vmatpush.bf16.msra.mxu0 0
      %2951 = vmatpush.bf16.msra.mxu0 0
      %2952 = vmatpush.bf16.msra.mxu0 0
      %2953 = vmatpush.bf16.msra.mxu0 0
      %2954 = vmatpush.bf16.msra.mxu0 0
      %2955 = vmatpush.bf16.msra.mxu0 0
      %2956 = vmatpush.bf16.msra.mxu0 %v2879
      %2957 = vmatmul.bf16.gmra.mxu0 %v2861
      %v2958 = vpop.f32.mrf.mxu0
      %v2959 = vadd.f32 0.0, %v2958
      %v2960 = vpop.f32.mrf.mxu0
      %2961 = vdwg.mxu0
      %2962 = vmatpush.bf16.msra.mxu0 0
      %2963 = vmatpush.bf16.msra.mxu0 0
      %2964 = vmatpush.bf16.msra.mxu0 0
      %2965 = vmatpush.bf16.msra.mxu0 0
      %2966 = vmatpush.bf16.msra.mxu0 0
      %2967 = vmatpush.bf16.msra.mxu0 0
      %2968 = vmatpush.bf16.msra.mxu0 0
      %2969 = vmatpush.bf16.msra.mxu0 %v2882
      %2970 = vmatmul.bf16.gmra.mxu0 %v2861
      %v2971 = vpop.f32.mrf.mxu0
      %v2972 = vadd.f32 0.0, %v2971
      %v2973 = vpop.f32.mrf.mxu0
      %2974 = vdwg.mxu0
      %v2975 = vadd.f32 %v2804, %v2894
      %v2976 = vadd.f32 %v2805, %v2907
      %v2977 = vadd.f32 %v2806, %v2920
      %v2978 = vadd.f32 %v2807, %v2933
      %v2979 = vadd.f32 %v2808, %v2946
      %v2980 = vadd.f32 %v2809, %v2959
      %v2981 = vadd.f32 %v2810, %v2972
      %s2982 = scalar_lea.vmem %s1, 34
      %v2983 = vld [vmem:[%s2982] sm:$0x3]
      %v2984 = vld [vmem:[%s165] sm:$0xff]
      %v2985 = vld [vmem:[%s165 + $0x8] sm:$0xff]
      %2987 = vst [vmem:[#allocation1] ss:$4 sm:$0xff] %v2984
      %s2989 = scalar_lea.vmem [#allocation1], 32
      %2990 = vst [vmem:[%s2989] ss:$4 sm:$0xff] %v2985
      %v2991 = vld.sshfl [vmem:[#allocation1] sm:$0xff pattern:$0x73625140]
      %v2993 = vld.sshfl [vmem:[#allocation1 + $0x8] sm:$0xff pattern:$0x73625140]
      %v2995 = vld.sshfl [vmem:[#allocation1 + $0x10] sm:$0xff pattern:$0x73625140]
      %v2997 = vld.sshfl [vmem:[#allocation1 + $0x18] sm:$0xff pattern:$0x73625140]
      %v2999 = vld.sshfl [vmem:[#allocation1 + $0x20] sm:$0xff pattern:$0x73625140]
      %v3001 = vld.sshfl [vmem:[#allocation1 + $0x28] sm:$0xff pattern:$0x73625140]
      %v3003 = vld.sshfl [vmem:[#allocation1 + $0x30] sm:$0xff pattern:$0x73625140]
      %v3005 = vld.sshfl [vmem:[#allocation1 + $0x38] sm:$0xff pattern:$0x73625140]
      %3007 = vrot.lane.b32.xlu0 %v2991, 6
      %v3008 = vpop.permute.xlu0 %3007
      %3009 = vrot.lane.b32.xlu0 %v2993, 6
      %v3010 = vpop.permute.xlu0 %3009
      %3011 = vrot.lane.b32.xlu0 %v2995, 6
      %v3012 = vpop.permute.xlu0 %3011
      %3013 = vrot.lane.b32.xlu0 %v2997, 6
      %v3014 = vpop.permute.xlu0 %3013
      %3015 = vrot.lane.b32.xlu0 %v2999, 6
      %v3016 = vpop.permute.xlu0 %3015
      %3017 = vrot.lane.b32.xlu0 %v3001, 6
      %v3018 = vpop.permute.xlu0 %3017
      %3019 = vrot.lane.b32.xlu0 %v3003, 6
      %v3020 = vpop.permute.xlu0 %3019
      %3021 = vrot.lane.b32.xlu0 %v3005, 6
      %v3022 = vpop.permute.xlu0 %3021
      %vm3023 = vcmask 48128
      %v3024 = vsel %vm3023, %v3008, %v3010
      %v3025 = vsel %vm3023, %v3010, %v3012
      %v3026 = vsel %vm3023, %v3012, %v3014
      %v3027 = vsel %vm3023, %v3014, %v3016
      %v3028 = vsel %vm3023, %v3016, %v3018
      %v3029 = vsel %vm3023, %v3018, %v3020
      %v3030 = vsel %vm3023, %v3020, %v3022
      %v3032 = vsel %vm217, %v2983, 0
      %v3035 = vsel %vm221, %v3024, 0
      %v3038 = vsel %vm221, %v3025, 0
      %v3041 = vsel %vm221, %v3026, 0
      %v3044 = vsel %vm221, %v3027, 0
      %v3047 = vsel %vm221, %v3028, 0
      %v3050 = vsel %vm221, %v3029, 0
      %v3053 = vsel %vm221, %v3030, 0
      %3055 = vmatpush.bf16.msra.mxu0 0
      %3056 = vmatpush.bf16.msra.mxu0 0
      %3057 = vmatpush.bf16.msra.mxu0 0
      %3058 = vmatpush.bf16.msra.mxu0 0
      %3059 = vmatpush.bf16.msra.mxu0 0
      %3060 = vmatpush.bf16.msra.mxu0 0
      %3061 = vmatpush.bf16.msra.mxu0 0
      %3062 = vmatpush.bf16.msra.mxu0 %v3035
      %3063 = vmatmul.bf16.gmra.mxu0 %v3032
      %v3064 = vpop.f32.mrf.mxu0
      %v3065 = vadd.f32 0.0, %v3064
      %v3066 = vpop.f32.mrf.mxu0
      %3067 = vdwg.mxu0
      %3068 = vmatpush.bf16.msra.mxu0 0
      %3069 = vmatpush.bf16.msra.mxu0 0
      %3070 = vmatpush.bf16.msra.mxu0 0
      %3071 = vmatpush.bf16.msra.mxu0 0
      %3072 = vmatpush.bf16.msra.mxu0 0
      %3073 = vmatpush.bf16.msra.mxu0 0
      %3074 = vmatpush.bf16.msra.mxu0 0
      %3075 = vmatpush.bf16.msra.mxu0 %v3038
      %3076 = vmatmul.bf16.gmra.mxu0 %v3032
      %v3077 = vpop.f32.mrf.mxu0
      %v3078 = vadd.f32 0.0, %v3077
      %v3079 = vpop.f32.mrf.mxu0
      %3080 = vdwg.mxu0
      %3081 = vmatpush.bf16.msra.mxu0 0
      %3082 = vmatpush.bf16.msra.mxu0 0
      %3083 = vmatpush.bf16.msra.mxu0 0
      %3084 = vmatpush.bf16.msra.mxu0 0
      %3085 = vmatpush.bf16.msra.mxu0 0
      %3086 = vmatpush.bf16.msra.mxu0 0
      %3087 = vmatpush.bf16.msra.mxu0 0
      %3088 = vmatpush.bf16.msra.mxu0 %v3041
      %3089 = vmatmul.bf16.gmra.mxu0 %v3032
      %v3090 = vpop.f32.mrf.mxu0
      %v3091 = vadd.f32 0.0, %v3090
      %v3092 = vpop.f32.mrf.mxu0
      %3093 = vdwg.mxu0
      %3094 = vmatpush.bf16.msra.mxu0 0
      %3095 = vmatpush.bf16.msra.mxu0 0
      %3096 = vmatpush.bf16.msra.mxu0 0
      %3097 = vmatpush.bf16.msra.mxu0 0
      %3098 = vmatpush.bf16.msra.mxu0 0
      %3099 = vmatpush.bf16.msra.mxu0 0
      %3100 = vmatpush.bf16.msra.mxu0 0
      %3101 = vmatpush.bf16.msra.mxu0 %v3044
      %3102 = vmatmul.bf16.gmra.mxu0 %v3032
      %v3103 = vpop.f32.mrf.mxu0
      %v3104 = vadd.f32 0.0, %v3103
      %v3105 = vpop.f32.mrf.mxu0
      %3106 = vdwg.mxu0
      %3107 = vmatpush.bf16.msra.mxu0 0
      %3108 = vmatpush.bf16.msra.mxu0 0
      %3109 = vmatpush.bf16.msra.mxu0 0
      %3110 = vmatpush.bf16.msra.mxu0 0
      %3111 = vmatpush.bf16.msra.mxu0 0
      %3112 = vmatpush.bf16.msra.mxu0 0
      %3113 = vmatpush.bf16.msra.mxu0 0
      %3114 = vmatpush.bf16.msra.mxu0 %v3047
      %3115 = vmatmul.bf16.gmra.mxu0 %v3032
      %v3116 = vpop.f32.mrf.mxu0
      %v3117 = vadd.f32 0.0, %v3116
      %v3118 = vpop.f32.mrf.mxu0
      %3119 = vdwg.mxu0
      %3120 = vmatpush.bf16.msra.mxu0 0
      %3121 = vmatpush.bf16.msra.mxu0 0
      %3122 = vmatpush.bf16.msra.mxu0 0
      %3123 = vmatpush.bf16.msra.mxu0 0
      %3124 = vmatpush.bf16.msra.mxu0 0
      %3125 = vmatpush.bf16.msra.mxu0 0
      %3126 = vmatpush.bf16.msra.mxu0 0
      %3127 = vmatpush.bf16.msra.mxu0 %v3050
      %3128 = vmatmul.bf16.gmra.mxu0 %v3032
      %v3129 = vpop.f32.mrf.mxu0
      %v3130 = vadd.f32 0.0, %v3129
      %v3131 = vpop.f32.mrf.mxu0
      %3132 = vdwg.mxu0
      %3133 = vmatpush.bf16.msra.mxu0 0
      %3134 = vmatpush.bf16.msra.mxu0 0
      %3135 = vmatpush.bf16.msra.mxu0 0
      %3136 = vmatpush.bf16.msra.mxu0 0
      %3137 = vmatpush.bf16.msra.mxu0 0
      %3138 = vmatpush.bf16.msra.mxu0 0
      %3139 = vmatpush.bf16.msra.mxu0 0
      %3140 = vmatpush.bf16.msra.mxu0 %v3053
      %3141 = vmatmul.bf16.gmra.mxu0 %v3032
      %v3142 = vpop.f32.mrf.mxu0
      %v3143 = vadd.f32 0.0, %v3142
      %v3144 = vpop.f32.mrf.mxu0
      %3145 = vdwg.mxu0
      %v3146 = vadd.f32 %v2975, %v3065
      %v3147 = vadd.f32 %v2976, %v3078
      %v3148 = vadd.f32 %v2977, %v3091
      %v3149 = vadd.f32 %v2978, %v3104
      %v3150 = vadd.f32 %v2979, %v3117
      %v3151 = vadd.f32 %v2980, %v3130
      %v3152 = vadd.f32 %v2981, %v3143
      %s3153 = scalar_lea.vmem %s1, 36
      %v3154 = vld [vmem:[%s3153] sm:$0x3]
      %v3155 = vld [vmem:[%s165 + $0x2] sm:$0xff]
      %v3156 = vld [vmem:[%s165 + $0xa] sm:$0x3f]
      %3158 = vst [vmem:[#allocation1] ss:$4 sm:$0xff] %v3155
      %s3160 = scalar_lea.vmem [#allocation1], 32
      %3161 = vst [vmem:[%s3160] ss:$4 sm:$0xff] %v3156
      %v3162 = vld.sshfl [vmem:[#allocation1] sm:$0xff pattern:$0x73625140]
      %v3164 = vld.sshfl [vmem:[#allocation1 + $0x8] sm:$0xff pattern:$0x73625140]
      %v3166 = vld.sshfl [vmem:[#allocation1 + $0x10] sm:$0xff pattern:$0x73625140]
      %v3168 = vld.sshfl [vmem:[#allocation1 + $0x18] sm:$0xff pattern:$0x73625140]
      %v3170 = vld.sshfl [vmem:[#allocation1 + $0x20] sm:$0xff pattern:$0x73625140]
      %v3172 = vld.sshfl [vmem:[#allocation1 + $0x28] sm:$0xff pattern:$0x73625140]
      %v3174 = vld.sshfl [vmem:[#allocation1 + $0x30] sm:$0xff pattern:$0x73625140]
      %3176 = vrot.lane.b32.xlu0 %v3162, 56
      %v3177 = vpop.permute.xlu0 %3176
      %3178 = vrot.lane.b32.xlu0 %v3164, 56
      %v3179 = vpop.permute.xlu0 %3178
      %3180 = vrot.lane.b32.xlu0 %v3166, 56
      %v3181 = vpop.permute.xlu0 %3180
      %3182 = vrot.lane.b32.xlu0 %v3168, 56
      %v3183 = vpop.permute.xlu0 %3182
      %3184 = vrot.lane.b32.xlu0 %v3170, 56
      %v3185 = vpop.permute.xlu0 %3184
      %3186 = vrot.lane.b32.xlu0 %v3172, 56
      %v3187 = vpop.permute.xlu0 %3186
      %3188 = vrot.lane.b32.xlu0 %v3174, 56
      %v3189 = vpop.permute.xlu0 %3188
      %vm3190 = vcmask 457728
      %v3191 = vsel %vm3190, %v3177, %v3179
      %v3192 = vsel %vm3190, %v3179, %v3181
      %v3193 = vsel %vm3190, %v3181, %v3183
      %v3194 = vsel %vm3190, %v3183, %v3185
      %v3195 = vsel %vm3190, %v3185, %v3187
      %v3196 = vsel %vm3190, %v3187, %v3189
      %v3198 = vsel %vm217, %v3154, 0
      %v3201 = vsel %vm221, %v3191, 0
      %v3204 = vsel %vm221, %v3192, 0
      %v3207 = vsel %vm221, %v3193, 0
      %v3210 = vsel %vm221, %v3194, 0
      %v3213 = vsel %vm221, %v3195, 0
      %v3216 = vsel %vm221, %v3196, 0
      %v3219 = vsel %vm221, %v3189, 0
      %3221 = vmatpush.bf16.msra.mxu0 0
      %3222 = vmatpush.bf16.msra.mxu0 0
      %3223 = vmatpush.bf16.msra.mxu0 0
      %3224 = vmatpush.bf16.msra.mxu0 0
      %3225 = vmatpush.bf16.msra.mxu0 0
      %3226 = vmatpush.bf16.msra.mxu0 0
      %3227 = vmatpush.bf16.msra.mxu0 0
      %3228 = vmatpush.bf16.msra.mxu0 %v3201
      %3229 = vmatmul.bf16.gmra.mxu0 %v3198
      %v3230 = vpop.f32.mrf.mxu0
      %v3231 = vadd.f32 0.0, %v3230
      %v3232 = vpop.f32.mrf.mxu0
      %3233 = vdwg.mxu0
      %3234 = vmatpush.bf16.msra.mxu0 0
      %3235 = vmatpush.bf16.msra.mxu0 0
      %3236 = vmatpush.bf16.msra.mxu0 0
      %3237 = vmatpush.bf16.msra.mxu0 0
      %3238 = vmatpush.bf16.msra.mxu0 0
      %3239 = vmatpush.bf16.msra.mxu0 0
      %3240 = vmatpush.bf16.msra.mxu0 0
      %3241 = vmatpush.bf16.msra.mxu0 %v3204
      %3242 = vmatmul.bf16.gmra.mxu0 %v3198
      %v3243 = vpop.f32.mrf.mxu0
      %v3244 = vadd.f32 0.0, %v3243
      %v3245 = vpop.f32.mrf.mxu0
      %3246 = vdwg.mxu0
      %3247 = vmatpush.bf16.msra.mxu0 0
      %3248 = vmatpush.bf16.msra.mxu0 0
      %3249 = vmatpush.bf16.msra.mxu0 0
      %3250 = vmatpush.bf16.msra.mxu0 0
      %3251 = vmatpush.bf16.msra.mxu0 0
      %3252 = vmatpush.bf16.msra.mxu0 0
      %3253 = vmatpush.bf16.msra.mxu0 0
      %3254 = vmatpush.bf16.msra.mxu0 %v3207
      %3255 = vmatmul.bf16.gmra.mxu0 %v3198
      %v3256 = vpop.f32.mrf.mxu0
      %v3257 = vadd.f32 0.0, %v3256
      %v3258 = vpop.f32.mrf.mxu0
      %3259 = vdwg.mxu0
      %3260 = vmatpush.bf16.msra.mxu0 0
      %3261 = vmatpush.bf16.msra.mxu0 0
      %3262 = vmatpush.bf16.msra.mxu0 0
      %3263 = vmatpush.bf16.msra.mxu0 0
      %3264 = vmatpush.bf16.msra.mxu0 0
      %3265 = vmatpush.bf16.msra.mxu0 0
      %3266 = vmatpush.bf16.msra.mxu0 0
      %3267 = vmatpush.bf16.msra.mxu0 %v3210
      %3268 = vmatmul.bf16.gmra.mxu0 %v3198
      %v3269 = vpop.f32.mrf.mxu0
      %v3270 = vadd.f32 0.0, %v3269
      %v3271 = vpop.f32.mrf.mxu0
      %3272 = vdwg.mxu0
      %3273 = vmatpush.bf16.msra.mxu0 0
      %3274 = vmatpush.bf16.msra.mxu0 0
      %3275 = vmatpush.bf16.msra.mxu0 0
      %3276 = vmatpush.bf16.msra.mxu0 0
      %3277 = vmatpush.bf16.msra.mxu0 0
      %3278 = vmatpush.bf16.msra.mxu0 0
      %3279 = vmatpush.bf16.msra.mxu0 0
      %3280 = vmatpush.bf16.msra.mxu0 %v3213
      %3281 = vmatmul.bf16.gmra.mxu0 %v3198
      %v3282 = vpop.f32.mrf.mxu0
      %v3283 = vadd.f32 0.0, %v3282
      %v3284 = vpop.f32.mrf.mxu0
      %3285 = vdwg.mxu0
      %3286 = vmatpush.bf16.msra.mxu0 0
      %3287 = vmatpush.bf16.msra.mxu0 0
      %3288 = vmatpush.bf16.msra.mxu0 0
      %3289 = vmatpush.bf16.msra.mxu0 0
      %3290 = vmatpush.bf16.msra.mxu0 0
      %3291 = vmatpush.bf16.msra.mxu0 0
      %3292 = vmatpush.bf16.msra.mxu0 0
      %3293 = vmatpush.bf16.msra.mxu0 %v3216
      %3294 = vmatmul.bf16.gmra.mxu0 %v3198
      %v3295 = vpop.f32.mrf.mxu0
      %v3296 = vadd.f32 0.0, %v3295
      %v3297 = vpop.f32.mrf.mxu0
      %3298 = vdwg.mxu0
      %3299 = vmatpush.bf16.msra.mxu0 0
      %3300 = vmatpush.bf16.msra.mxu0 0
      %3301 = vmatpush.bf16.msra.mxu0 0
      %3302 = vmatpush.bf16.msra.mxu0 0
      %3303 = vmatpush.bf16.msra.mxu0 0
      %3304 = vmatpush.bf16.msra.mxu0 0
      %3305 = vmatpush.bf16.msra.mxu0 0
      %3306 = vmatpush.bf16.msra.mxu0 %v3219
      %3307 = vmatmul.bf16.gmra.mxu0 %v3198
      %v3308 = vpop.f32.mrf.mxu0
      %v3309 = vadd.f32 0.0, %v3308
      %v3310 = vpop.f32.mrf.mxu0
      %3311 = vdwg.mxu0
      %v3312 = vadd.f32 %v3146, %v3231
      %v3313 = vadd.f32 %v3147, %v3244
      %v3314 = vadd.f32 %v3148, %v3257
      %v3315 = vadd.f32 %v3149, %v3270
      %v3316 = vadd.f32 %v3150, %v3283
      %v3317 = vadd.f32 %v3151, %v3296
      %v3318 = vadd.f32 %v3152, %v3309
      %s3319 = scalar_lea.vmem %s1, 38
      %v3320 = vld [vmem:[%s3319] sm:$0x3]
      %v3321 = vld [vmem:[%s165 + $0x2] sm:$0xff]
      %v3322 = vld [vmem:[%s165 + $0xa] sm:$0x3f]
      %3324 = vst [vmem:[#allocation1] ss:$4 sm:$0xff] %v3321
      %s3326 = scalar_lea.vmem [#allocation1], 32
      %3327 = vst [vmem:[%s3326] ss:$4 sm:$0xff] %v3322
      %v3328 = vld.sshfl [vmem:[#allocation1] sm:$0xff pattern:$0x73625140]
      %v3330 = vld.sshfl [vmem:[#allocation1 + $0x8] sm:$0xff pattern:$0x73625140]
      %v3332 = vld.sshfl [vmem:[#allocation1 + $0x10] sm:$0xff pattern:$0x73625140]
      %v3334 = vld.sshfl [vmem:[#allocation1 + $0x18] sm:$0xff pattern:$0x73625140]
      %v3336 = vld.sshfl [vmem:[#allocation1 + $0x20] sm:$0xff pattern:$0x73625140]
      %v3338 = vld.sshfl [vmem:[#allocation1 + $0x28] sm:$0xff pattern:$0x73625140]
      %v3340 = vld.sshfl [vmem:[#allocation1 + $0x30] sm:$0xff pattern:$0x73625140]
      %3342 = vrot.lane.b32.xlu0 %v3328, 55
      %v3343 = vpop.permute.xlu0 %3342
      %3344 = vrot.lane.b32.xlu0 %v3330, 55
      %v3345 = vpop.permute.xlu0 %3344
      %3346 = vrot.lane.b32.xlu0 %v3332, 55
      %v3347 = vpop.permute.xlu0 %3346
      %3348 = vrot.lane.b32.xlu0 %v3334, 55
      %v3349 = vpop.permute.xlu0 %3348
      %3350 = vrot.lane.b32.xlu0 %v3336, 55
      %v3351 = vpop.permute.xlu0 %3350
      %3352 = vrot.lane.b32.xlu0 %v3338, 55
      %v3353 = vpop.permute.xlu0 %3352
      %3354 = vrot.lane.b32.xlu0 %v3340, 55
      %v3355 = vpop.permute.xlu0 %3354
      %vm3356 = vcmask 449536
      %v3357 = vsel %vm3356, %v3343, %v3345
      %v3358 = vsel %vm3356, %v3345, %v3347
      %v3359 = vsel %vm3356, %v3347, %v3349
      %v3360 = vsel %vm3356, %v3349, %v3351
      %v3361 = vsel %vm3356, %v3351, %v3353
      %v3362 = vsel %vm3356, %v3353, %v3355
      %v3364 = vsel %vm217, %v3320, 0
      %v3367 = vsel %vm221, %v3357, 0
      %v3370 = vsel %vm221, %v3358, 0
      %v3373 = vsel %vm221, %v3359, 0
      %v3376 = vsel %vm221, %v3360, 0
      %v3379 = vsel %vm221, %v3361, 0
      %v3382 = vsel %vm221, %v3362, 0
      %v3385 = vsel %vm221, %v3355, 0
      %3387 = vmatpush.bf16.msra.mxu0 0
      %3388 = vmatpush.bf16.msra.mxu0 0
      %3389 = vmatpush.bf16.msra.mxu0 0
      %3390 = vmatpush.bf16.msra.mxu0 0
      %3391 = vmatpush.bf16.msra.mxu0 0
      %3392 = vmatpush.bf16.msra.mxu0 0
      %3393 = vmatpush.bf16.msra.mxu0 0
      %3394 = vmatpush.bf16.msra.mxu0 %v3367
      %3395 = vmatmul.bf16.gmra.mxu0 %v3364
      %v3396 = vpop.f32.mrf.mxu0
      %v3397 = vadd.f32 0.0, %v3396
      %v3398 = vpop.f32.mrf.mxu0
      %3399 = vdwg.mxu0
      %3400 = vmatpush.bf16.msra.mxu0 0
      %3401 = vmatpush.bf16.msra.mxu0 0
      %3402 = vmatpush.bf16.msra.mxu0 0
      %3403 = vmatpush.bf16.msra.mxu0 0
      %3404 = vmatpush.bf16.msra.mxu0 0
      %3405 = vmatpush.bf16.msra.mxu0 0
      %3406 = vmatpush.bf16.msra.mxu0 0
      %3407 = vmatpush.bf16.msra.mxu0 %v3370
      %3408 = vmatmul.bf16.gmra.mxu0 %v3364
      %v3409 = vpop.f32.mrf.mxu0
      %v3410 = vadd.f32 0.0, %v3409
      %v3411 = vpop.f32.mrf.mxu0
      %3412 = vdwg.mxu0
      %3413 = vmatpush.bf16.msra.mxu0 0
      %3414 = vmatpush.bf16.msra.mxu0 0
      %3415 = vmatpush.bf16.msra.mxu0 0
      %3416 = vmatpush.bf16.msra.mxu0 0
      %3417 = vmatpush.bf16.msra.mxu0 0
      %3418 = vmatpush.bf16.msra.mxu0 0
      %3419 = vmatpush.bf16.msra.mxu0 0
      %3420 = vmatpush.bf16.msra.mxu0 %v3373
      %3421 = vmatmul.bf16.gmra.mxu0 %v3364
      %v3422 = vpop.f32.mrf.mxu0
      %v3423 = vadd.f32 0.0, %v3422
      %v3424 = vpop.f32.mrf.mxu0
      %3425 = vdwg.mxu0
      %3426 = vmatpush.bf16.msra.mxu0 0
      %3427 = vmatpush.bf16.msra.mxu0 0
      %3428 = vmatpush.bf16.msra.mxu0 0
      %3429 = vmatpush.bf16.msra.mxu0 0
      %3430 = vmatpush.bf16.msra.mxu0 0
      %3431 = vmatpush.bf16.msra.mxu0 0
      %3432 = vmatpush.bf16.msra.mxu0 0
      %3433 = vmatpush.bf16.msra.mxu0 %v3376
      %3434 = vmatmul.bf16.gmra.mxu0 %v3364
      %v3435 = vpop.f32.mrf.mxu0
      %v3436 = vadd.f32 0.0, %v3435
      %v3437 = vpop.f32.mrf.mxu0
      %3438 = vdwg.mxu0
      %3439 = vmatpush.bf16.msra.mxu0 0
      %3440 = vmatpush.bf16.msra.mxu0 0
      %3441 = vmatpush.bf16.msra.mxu0 0
      %3442 = vmatpush.bf16.msra.mxu0 0
      %3443 = vmatpush.bf16.msra.mxu0 0
      %3444 = vmatpush.bf16.msra.mxu0 0
      %3445 = vmatpush.bf16.msra.mxu0 0
      %3446 = vmatpush.bf16.msra.mxu0 %v3379
      %3447 = vmatmul.bf16.gmra.mxu0 %v3364
      %v3448 = vpop.f32.mrf.mxu0
      %v3449 = vadd.f32 0.0, %v3448
      %v3450 = vpop.f32.mrf.mxu0
      %3451 = vdwg.mxu0
      %3452 = vmatpush.bf16.msra.mxu0 0
      %3453 = vmatpush.bf16.msra.mxu0 0
      %3454 = vmatpush.bf16.msra.mxu0 0
      %3455 = vmatpush.bf16.msra.mxu0 0
      %3456 = vmatpush.bf16.msra.mxu0 0
      %3457 = vmatpush.bf16.msra.mxu0 0
      %3458 = vmatpush.bf16.msra.mxu0 0
      %3459 = vmatpush.bf16.msra.mxu0 %v3382
      %3460 = vmatmul.bf16.gmra.mxu0 %v3364
      %v3461 = vpop.f32.mrf.mxu0
      %v3462 = vadd.f32 0.0, %v3461
      %v3463 = vpop.f32.mrf.mxu0
      %3464 = vdwg.mxu0
      %3465 = vmatpush.bf16.msra.mxu0 0
      %3466 = vmatpush.bf16.msra.mxu0 0
      %3467 = vmatpush.bf16.msra.mxu0 0
      %3468 = vmatpush.bf16.msra.mxu0 0
      %3469 = vmatpush.bf16.msra.mxu0 0
      %3470 = vmatpush.bf16.msra.mxu0 0
      %3471 = vmatpush.bf16.msra.mxu0 0
      %3472 = vmatpush.bf16.msra.mxu0 %v3385
      %3473 = vmatmul.bf16.gmra.mxu0 %v3364
      %v3474 = vpop.f32.mrf.mxu0
      %v3475 = vadd.f32 0.0, %v3474
      %v3476 = vpop.f32.mrf.mxu0
      %3477 = vdwg.mxu0
      %v3478 = vadd.f32 %v3312, %v3397
      %v3479 = vadd.f32 %v3313, %v3410
      %v3480 = vadd.f32 %v3314, %v3423
      %v3481 = vadd.f32 %v3315, %v3436
      %v3482 = vadd.f32 %v3316, %v3449
      %v3483 = vadd.f32 %v3317, %v3462
      %v3484 = vadd.f32 %v3318, %v3475
      %s3485 = scalar_lea.vmem %s1, 40
      %v3486 = vld [vmem:[%s3485] sm:$0x3]
      %v3487 = vld [vmem:[%s165 + $0x2] sm:$0xff]
      %v3488 = vld [vmem:[%s165 + $0xa] sm:$0x3f]
      %3490 = vst [vmem:[#allocation1] ss:$4 sm:$0xff] %v3487
      %s3492 = scalar_lea.vmem [#allocation1], 32
      %3493 = vst [vmem:[%s3492] ss:$4 sm:$0xff] %v3488
      %v3494 = vld.sshfl [vmem:[#allocation1] sm:$0xff pattern:$0x73625140]
      %v3496 = vld.sshfl [vmem:[#allocation1 + $0x8] sm:$0xff pattern:$0x73625140]
      %v3498 = vld.sshfl [vmem:[#allocation1 + $0x10] sm:$0xff pattern:$0x73625140]
      %v3500 = vld.sshfl [vmem:[#allocation1 + $0x18] sm:$0xff pattern:$0x73625140]
      %v3502 = vld.sshfl [vmem:[#allocation1 + $0x20] sm:$0xff pattern:$0x73625140]
      %v3504 = vld.sshfl [vmem:[#allocation1 + $0x28] sm:$0xff pattern:$0x73625140]
      %v3506 = vld.sshfl [vmem:[#allocation1 + $0x30] sm:$0xff pattern:$0x73625140]
      %3508 = vrot.lane.b32.xlu0 %v3494, 54
      %v3509 = vpop.permute.xlu0 %3508
      %3510 = vrot.lane.b32.xlu0 %v3496, 54
      %v3511 = vpop.permute.xlu0 %3510
      %3512 = vrot.lane.b32.xlu0 %v3498, 54
      %v3513 = vpop.permute.xlu0 %3512
      %3514 = vrot.lane.b32.xlu0 %v3500, 54
      %v3515 = vpop.permute.xlu0 %3514
      %3516 = vrot.lane.b32.xlu0 %v3502, 54
      %v3517 = vpop.permute.xlu0 %3516
      %3518 = vrot.lane.b32.xlu0 %v3504, 54
      %v3519 = vpop.permute.xlu0 %3518
      %3520 = vrot.lane.b32.xlu0 %v3506, 54
      %v3521 = vpop.permute.xlu0 %3520
      %vm3522 = vcmask 441344
      %v3523 = vsel %vm3522, %v3509, %v3511
      %v3524 = vsel %vm3522, %v3511, %v3513
      %v3525 = vsel %vm3522, %v3513, %v3515
      %v3526 = vsel %vm3522, %v3515, %v3517
      %v3527 = vsel %vm3522, %v3517, %v3519
      %v3528 = vsel %vm3522, %v3519, %v3521
      %v3530 = vsel %vm217, %v3486, 0
      %v3533 = vsel %vm221, %v3523, 0
      %v3536 = vsel %vm221, %v3524, 0
      %v3539 = vsel %vm221, %v3525, 0
      %v3542 = vsel %vm221, %v3526, 0
      %v3545 = vsel %vm221, %v3527, 0
      %v3548 = vsel %vm221, %v3528, 0
      %v3551 = vsel %vm221, %v3521, 0
      %3553 = vmatpush.bf16.msra.mxu0 0
      %3554 = vmatpush.bf16.msra.mxu0 0
      %3555 = vmatpush.bf16.msra.mxu0 0
      %3556 = vmatpush.bf16.msra.mxu0 0
      %3557 = vmatpush.bf16.msra.mxu0 0
      %3558 = vmatpush.bf16.msra.mxu0 0
      %3559 = vmatpush.bf16.msra.mxu0 0
      %3560 = vmatpush.bf16.msra.mxu0 %v3533
      %3561 = vmatmul.bf16.gmra.mxu0 %v3530
      %v3562 = vpop.f32.mrf.mxu0
      %v3563 = vadd.f32 0.0, %v3562
      %v3564 = vpop.f32.mrf.mxu0
      %3565 = vdwg.mxu0
      %3566 = vmatpush.bf16.msra.mxu0 0
      %3567 = vmatpush.bf16.msra.mxu0 0
      %3568 = vmatpush.bf16.msra.mxu0 0
      %3569 = vmatpush.bf16.msra.mxu0 0
      %3570 = vmatpush.bf16.msra.mxu0 0
      %3571 = vmatpush.bf16.msra.mxu0 0
      %3572 = vmatpush.bf16.msra.mxu0 0
      %3573 = vmatpush.bf16.msra.mxu0 %v3536
      %3574 = vmatmul.bf16.gmra.mxu0 %v3530
      %v3575 = vpop.f32.mrf.mxu0
      %v3576 = vadd.f32 0.0, %v3575
      %v3577 = vpop.f32.mrf.mxu0
      %3578 = vdwg.mxu0
      %3579 = vmatpush.bf16.msra.mxu0 0
      %3580 = vmatpush.bf16.msra.mxu0 0
      %3581 = vmatpush.bf16.msra.mxu0 0
      %3582 = vmatpush.bf16.msra.mxu0 0
      %3583 = vmatpush.bf16.msra.mxu0 0
      %3584 = vmatpush.bf16.msra.mxu0 0
      %3585 = vmatpush.bf16.msra.mxu0 0
      %3586 = vmatpush.bf16.msra.mxu0 %v3539
      %3587 = vmatmul.bf16.gmra.mxu0 %v3530
      %v3588 = vpop.f32.mrf.mxu0
      %v3589 = vadd.f32 0.0, %v3588
      %v3590 = vpop.f32.mrf.mxu0
      %3591 = vdwg.mxu0
      %3592 = vmatpush.bf16.msra.mxu0 0
      %3593 = vmatpush.bf16.msra.mxu0 0
      %3594 = vmatpush.bf16.msra.mxu0 0
      %3595 = vmatpush.bf16.msra.mxu0 0
      %3596 = vmatpush.bf16.msra.mxu0 0
      %3597 = vmatpush.bf16.msra.mxu0 0
      %3598 = vmatpush.bf16.msra.mxu0 0
      %3599 = vmatpush.bf16.msra.mxu0 %v3542
      %3600 = vmatmul.bf16.gmra.mxu0 %v3530
      %v3601 = vpop.f32.mrf.mxu0
      %v3602 = vadd.f32 0.0, %v3601
      %v3603 = vpop.f32.mrf.mxu0
      %3604 = vdwg.mxu0
      %3605 = vmatpush.bf16.msra.mxu0 0
      %3606 = vmatpush.bf16.msra.mxu0 0
      %3607 = vmatpush.bf16.msra.mxu0 0
      %3608 = vmatpush.bf16.msra.mxu0 0
      %3609 = vmatpush.bf16.msra.mxu0 0
      %3610 = vmatpush.bf16.msra.mxu0 0
      %3611 = vmatpush.bf16.msra.mxu0 0
      %3612 = vmatpush.bf16.msra.mxu0 %v3545
      %3613 = vmatmul.bf16.gmra.mxu0 %v3530
      %v3614 = vpop.f32.mrf.mxu0
      %v3615 = vadd.f32 0.0, %v3614
      %v3616 = vpop.f32.mrf.mxu0
      %3617 = vdwg.mxu0
      %3618 = vmatpush.bf16.msra.mxu0 0
      %3619 = vmatpush.bf16.msra.mxu0 0
      %3620 = vmatpush.bf16.msra.mxu0 0
      %3621 = vmatpush.bf16.msra.mxu0 0
      %3622 = vmatpush.bf16.msra.mxu0 0
      %3623 = vmatpush.bf16.msra.mxu0 0
      %3624 = vmatpush.bf16.msra.mxu0 0
      %3625 = vmatpush.bf16.msra.mxu0 %v3548
      %3626 = vmatmul.bf16.gmra.mxu0 %v3530
      %v3627 = vpop.f32.mrf.mxu0
      %v3628 = vadd.f32 0.0, %v3627
      %v3629 = vpop.f32.mrf.mxu0
      %3630 = vdwg.mxu0
      %3631 = vmatpush.bf16.msra.mxu0 0
      %3632 = vmatpush.bf16.msra.mxu0 0
      %3633 = vmatpush.bf16.msra.mxu0 0
      %3634 = vmatpush.bf16.msra.mxu0 0
      %3635 = vmatpush.bf16.msra.mxu0 0
      %3636 = vmatpush.bf16.msra.mxu0 0
      %3637 = vmatpush.bf16.msra.mxu0 0
      %3638 = vmatpush.bf16.msra.mxu0 %v3551
      %3639 = vmatmul.bf16.gmra.mxu0 %v3530
      %v3640 = vpop.f32.mrf.mxu0
      %v3641 = vadd.f32 0.0, %v3640
      %v3642 = vpop.f32.mrf.mxu0
      %3643 = vdwg.mxu0
      %v3644 = vadd.f32 %v3478, %v3563
      %v3645 = vadd.f32 %v3479, %v3576
      %v3646 = vadd.f32 %v3480, %v3589
      %v3647 = vadd.f32 %v3481, %v3602
      %v3648 = vadd.f32 %v3482, %v3615
      %v3649 = vadd.f32 %v3483, %v3628
      %v3650 = vadd.f32 %v3484, %v3641
      %s3651 = scalar_lea.vmem %s1, 42
      %v3652 = vld [vmem:[%s3651] sm:$0x3]
      %v3653 = vld [vmem:[%s165 + $0x2] sm:$0xff]
      %v3654 = vld [vmem:[%s165 + $0xa] sm:$0x3f]
      %3656 = vst [vmem:[#allocation1] ss:$4 sm:$0xff] %v3653
      %s3658 = scalar_lea.vmem [#allocation1], 32
      %3659 = vst [vmem:[%s3658] ss:$4 sm:$0xff] %v3654
      %v3660 = vld.sshfl [vmem:[#allocation1] sm:$0xff pattern:$0x73625140]
      %v3662 = vld.sshfl [vmem:[#allocation1 + $0x8] sm:$0xff pattern:$0x73625140]
      %v3664 = vld.sshfl [vmem:[#allocation1 + $0x10] sm:$0xff pattern:$0x73625140]
      %v3666 = vld.sshfl [vmem:[#allocation1 + $0x18] sm:$0xff pattern:$0x73625140]
      %v3668 = vld.sshfl [vmem:[#allocation1 + $0x20] sm:$0xff pattern:$0x73625140]
      %v3670 = vld.sshfl [vmem:[#allocation1 + $0x28] sm:$0xff pattern:$0x73625140]
      %v3672 = vld.sshfl [vmem:[#allocation1 + $0x30] sm:$0xff pattern:$0x73625140]
      %3674 = vrot.lane.b32.xlu0 %v3660, 46
      %v3675 = vpop.permute.xlu0 %3674
      %3676 = vrot.lane.b32.xlu0 %v3662, 46
      %v3677 = vpop.permute.xlu0 %3676
      %3678 = vrot.lane.b32.xlu0 %v3664, 46
      %v3679 = vpop.permute.xlu0 %3678
      %3680 = vrot.lane.b32.xlu0 %v3666, 46
      %v3681 = vpop.permute.xlu0 %3680
      %3682 = vrot.lane.b32.xlu0 %v3668, 46
      %v3683 = vpop.permute.xlu0 %3682
      %3684 = vrot.lane.b32.xlu0 %v3670, 46
      %v3685 = vpop.permute.xlu0 %3684
      %3686 = vrot.lane.b32.xlu0 %v3672, 46
      %v3687 = vpop.permute.xlu0 %3686
      %vm3688 = vcmask 375808
      %v3689 = vsel %vm3688, %v3675, %v3677
      %v3690 = vsel %vm3688, %v3677, %v3679
      %v3691 = vsel %vm3688, %v3679, %v3681
      %v3692 = vsel %vm3688, %v3681, %v3683
      %v3693 = vsel %vm3688, %v3683, %v3685
      %v3694 = vsel %vm3688, %v3685, %v3687
      %v3696 = vsel %vm217, %v3652, 0
      %v3699 = vsel %vm221, %v3689, 0
      %v3702 = vsel %vm221, %v3690, 0
      %v3705 = vsel %vm221, %v3691, 0
      %v3708 = vsel %vm221, %v3692, 0
      %v3711 = vsel %vm221, %v3693, 0
      %v3714 = vsel %vm221, %v3694, 0
      %v3717 = vsel %vm221, %v3687, 0
      %3719 = vmatpush.bf16.msra.mxu0 0
      %3720 = vmatpush.bf16.msra.mxu0 0
      %3721 = vmatpush.bf16.msra.mxu0 0
      %3722 = vmatpush.bf16.msra.mxu0 0
      %3723 = vmatpush.bf16.msra.mxu0 0
      %3724 = vmatpush.bf16.msra.mxu0 0
      %3725 = vmatpush.bf16.msra.mxu0 0
      %3726 = vmatpush.bf16.msra.mxu0 %v3699
      %3727 = vmatmul.bf16.gmra.mxu0 %v3696
      %v3728 = vpop.f32.mrf.mxu0
      %v3729 = vadd.f32 0.0, %v3728
      %v3730 = vpop.f32.mrf.mxu0
      %3731 = vdwg.mxu0
      %3732 = vmatpush.bf16.msra.mxu0 0
      %3733 = vmatpush.bf16.msra.mxu0 0
      %3734 = vmatpush.bf16.msra.mxu0 0
      %3735 = vmatpush.bf16.msra.mxu0 0
      %3736 = vmatpush.bf16.msra.mxu0 0
      %3737 = vmatpush.bf16.msra.mxu0 0
      %3738 = vmatpush.bf16.msra.mxu0 0
      %3739 = vmatpush.bf16.msra.mxu0 %v3702
      %3740 = vmatmul.bf16.gmra.mxu0 %v3696
      %v3741 = vpop.f32.mrf.mxu0
      %v3742 = vadd.f32 0.0, %v3741
      %v3743 = vpop.f32.mrf.mxu0
      %3744 = vdwg.mxu0
      %3745 = vmatpush.bf16.msra.mxu0 0
      %3746 = vmatpush.bf16.msra.mxu0 0
      %3747 = vmatpush.bf16.msra.mxu0 0
      %3748 = vmatpush.bf16.msra.mxu0 0
      %3749 = vmatpush.bf16.msra.mxu0 0
      %3750 = vmatpush.bf16.msra.mxu0 0
      %3751 = vmatpush.bf16.msra.mxu0 0
      %3752 = vmatpush.bf16.msra.mxu0 %v3705
      %3753 = vmatmul.bf16.gmra.mxu0 %v3696
      %v3754 = vpop.f32.mrf.mxu0
      %v3755 = vadd.f32 0.0, %v3754
      %v3756 = vpop.f32.mrf.mxu0
      %3757 = vdwg.mxu0
      %3758 = vmatpush.bf16.msra.mxu0 0
      %3759 = vmatpush.bf16.msra.mxu0 0
      %3760 = vmatpush.bf16.msra.mxu0 0
      %3761 = vmatpush.bf16.msra.mxu0 0
      %3762 = vmatpush.bf16.msra.mxu0 0
      %3763 = vmatpush.bf16.msra.mxu0 0
      %3764 = vmatpush.bf16.msra.mxu0 0
      %3765 = vmatpush.bf16.msra.mxu0 %v3708
      %3766 = vmatmul.bf16.gmra.mxu0 %v3696
      %v3767 = vpop.f32.mrf.mxu0
      %v3768 = vadd.f32 0.0, %v3767
      %v3769 = vpop.f32.mrf.mxu0
      %3770 = vdwg.mxu0
      %3771 = vmatpush.bf16.msra.mxu0 0
      %3772 = vmatpush.bf16.msra.mxu0 0
      %3773 = vmatpush.bf16.msra.mxu0 0
      %3774 = vmatpush.bf16.msra.mxu0 0
      %3775 = vmatpush.bf16.msra.mxu0 0
      %3776 = vmatpush.bf16.msra.mxu0 0
      %3777 = vmatpush.bf16.msra.mxu0 0
      %3778 = vmatpush.bf16.msra.mxu0 %v3711
      %3779 = vmatmul.bf16.gmra.mxu0 %v3696
      %v3780 = vpop.f32.mrf.mxu0
      %v3781 = vadd.f32 0.0, %v3780
      %v3782 = vpop.f32.mrf.mxu0
      %3783 = vdwg.mxu0
      %3784 = vmatpush.bf16.msra.mxu0 0
      %3785 = vmatpush.bf16.msra.mxu0 0
      %3786 = vmatpush.bf16.msra.mxu0 0
      %3787 = vmatpush.bf16.msra.mxu0 0
      %3788 = vmatpush.bf16.msra.mxu0 0
      %3789 = vmatpush.bf16.msra.mxu0 0
      %3790 = vmatpush.bf16.msra.mxu0 0
      %3791 = vmatpush.bf16.msra.mxu0 %v3714
      %3792 = vmatmul.bf16.gmra.mxu0 %v3696
      %v3793 = vpop.f32.mrf.mxu0
      %v3794 = vadd.f32 0.0, %v3793
      %v3795 = vpop.f32.mrf.mxu0
      %3796 = vdwg.mxu0
      %3797 = vmatpush.bf16.msra.mxu0 0
      %3798 = vmatpush.bf16.msra.mxu0 0
      %3799 = vmatpush.bf16.msra.mxu0 0
      %3800 = vmatpush.bf16.msra.mxu0 0
      %3801 = vmatpush.bf16.msra.mxu0 0
      %3802 = vmatpush.bf16.msra.mxu0 0
      %3803 = vmatpush.bf16.msra.mxu0 0
      %3804 = vmatpush.bf16.msra.mxu0 %v3717
      %3805 = vmatmul.bf16.gmra.mxu0 %v3696
      %v3806 = vpop.f32.mrf.mxu0
      %v3807 = vadd.f32 0.0, %v3806
      %v3808 = vpop.f32.mrf.mxu0
      %3809 = vdwg.mxu0
      %v3810 = vadd.f32 %v3644, %v3729
      %v3811 = vadd.f32 %v3645, %v3742
      %v3812 = vadd.f32 %v3646, %v3755
      %v3813 = vadd.f32 %v3647, %v3768
      %v3814 = vadd.f32 %v3648, %v3781
      %v3815 = vadd.f32 %v3649, %v3794
      %v3816 = vadd.f32 %v3650, %v3807
      %s3817 = scalar_lea.vmem %s1, 44
      %v3818 = vld [vmem:[%s3817] sm:$0x3]
      %v3819 = vld [vmem:[%s165 + $0x2] sm:$0xff]
      %v3820 = vld [vmem:[%s165 + $0xa] sm:$0x3f]
      %3822 = vst [vmem:[#allocation1] ss:$4 sm:$0xff] %v3819
      %s3824 = scalar_lea.vmem [#allocation1], 32
      %3825 = vst [vmem:[%s3824] ss:$4 sm:$0xff] %v3820
      %v3826 = vld.sshfl [vmem:[#allocation1] sm:$0xff pattern:$0x73625140]
      %v3828 = vld.sshfl [vmem:[#allocation1 + $0x8] sm:$0xff pattern:$0x73625140]
      %v3830 = vld.sshfl [vmem:[#allocation1 + $0x10] sm:$0xff pattern:$0x73625140]
      %v3832 = vld.sshfl [vmem:[#allocation1 + $0x18] sm:$0xff pattern:$0x73625140]
      %v3834 = vld.sshfl [vmem:[#allocation1 + $0x20] sm:$0xff pattern:$0x73625140]
      %v3836 = vld.sshfl [vmem:[#allocation1 + $0x28] sm:$0xff pattern:$0x73625140]
      %v3838 = vld.sshfl [vmem:[#allocation1 + $0x30] sm:$0xff pattern:$0x73625140]
      %3840 = vrot.lane.b32.xlu0 %v3826, 45
      %v3841 = vpop.permute.xlu0 %3840
      %3842 = vrot.lane.b32.xlu0 %v3828, 45
      %v3843 = vpop.permute.xlu0 %3842
      %3844 = vrot.lane.b32.xlu0 %v3830, 45
      %v3845 = vpop.permute.xlu0 %3844
      %3846 = vrot.lane.b32.xlu0 %v3832, 45
      %v3847 = vpop.permute.xlu0 %3846
      %3848 = vrot.lane.b32.xlu0 %v3834, 45
      %v3849 = vpop.permute.xlu0 %3848
      %3850 = vrot.lane.b32.xlu0 %v3836, 45
      %v3851 = vpop.permute.xlu0 %3850
      %3852 = vrot.lane.b32.xlu0 %v3838, 45
      %v3853 = vpop.permute.xlu0 %3852
      %vm3854 = vcmask 367616
      %v3855 = vsel %vm3854, %v3841, %v3843
      %v3856 = vsel %vm3854, %v3843, %v3845
      %v3857 = vsel %vm3854, %v3845, %v3847
      %v3858 = vsel %vm3854, %v3847, %v3849
      %v3859 = vsel %vm3854, %v3849, %v3851
      %v3860 = vsel %vm3854, %v3851, %v3853
      %v3862 = vsel %vm217, %v3818, 0
      %v3865 = vsel %vm221, %v3855, 0
      %v3868 = vsel %vm221, %v3856, 0
      %v3871 = vsel %vm221, %v3857, 0
      %v3874 = vsel %vm221, %v3858, 0
      %v3877 = vsel %vm221, %v3859, 0
      %v3880 = vsel %vm221, %v3860, 0
      %v3883 = vsel %vm221, %v3853, 0
      %3885 = vmatpush.bf16.msra.mxu0 0
      %3886 = vmatpush.bf16.msra.mxu0 0
      %3887 = vmatpush.bf16.msra.mxu0 0
      %3888 = vmatpush.bf16.msra.mxu0 0
      %3889 = vmatpush.bf16.msra.mxu0 0
      %3890 = vmatpush.bf16.msra.mxu0 0
      %3891 = vmatpush.bf16.msra.mxu0 0
      %3892 = vmatpush.bf16.msra.mxu0 %v3865
      %3893 = vmatmul.bf16.gmra.mxu0 %v3862
      %v3894 = vpop.f32.mrf.mxu0
      %v3895 = vadd.f32 0.0, %v3894
      %v3896 = vpop.f32.mrf.mxu0
      %3897 = vdwg.mxu0
      %3898 = vmatpush.bf16.msra.mxu0 0
      %3899 = vmatpush.bf16.msra.mxu0 0
      %3900 = vmatpush.bf16.msra.mxu0 0
      %3901 = vmatpush.bf16.msra.mxu0 0
      %3902 = vmatpush.bf16.msra.mxu0 0
      %3903 = vmatpush.bf16.msra.mxu0 0
      %3904 = vmatpush.bf16.msra.mxu0 0
      %3905 = vmatpush.bf16.msra.mxu0 %v3868
      %3906 = vmatmul.bf16.gmra.mxu0 %v3862
      %v3907 = vpop.f32.mrf.mxu0
      %v3908 = vadd.f32 0.0, %v3907
      %v3909 = vpop.f32.mrf.mxu0
      %3910 = vdwg.mxu0
      %3911 = vmatpush.bf16.msra.mxu0 0
      %3912 = vmatpush.bf16.msra.mxu0 0
      %3913 = vmatpush.bf16.msra.mxu0 0
      %3914 = vmatpush.bf16.msra.mxu0 0
      %3915 = vmatpush.bf16.msra.mxu0 0
      %3916 = vmatpush.bf16.msra.mxu0 0
      %3917 = vmatpush.bf16.msra.mxu0 0
      %3918 = vmatpush.bf16.msra.mxu0 %v3871
      %3919 = vmatmul.bf16.gmra.mxu0 %v3862
      %v3920 = vpop.f32.mrf.mxu0
      %v3921 = vadd.f32 0.0, %v3920
      %v3922 = vpop.f32.mrf.mxu0
      %3923 = vdwg.mxu0
      %3924 = vmatpush.bf16.msra.mxu0 0
      %3925 = vmatpush.bf16.msra.mxu0 0
      %3926 = vmatpush.bf16.msra.mxu0 0
      %3927 = vmatpush.bf16.msra.mxu0 0
      %3928 = vmatpush.bf16.msra.mxu0 0
      %3929 = vmatpush.bf16.msra.mxu0 0
      %3930 = vmatpush.bf16.msra.mxu0 0
      %3931 = vmatpush.bf16.msra.mxu0 %v3874
      %3932 = vmatmul.bf16.gmra.mxu0 %v3862
      %v3933 = vpop.f32.mrf.mxu0
      %v3934 = vadd.f32 0.0, %v3933
      %v3935 = vpop.f32.mrf.mxu0
      %3936 = vdwg.mxu0
      %3937 = vmatpush.bf16.msra.mxu0 0
      %3938 = vmatpush.bf16.msra.mxu0 0
      %3939 = vmatpush.bf16.msra.mxu0 0
      %3940 = vmatpush.bf16.msra.mxu0 0
      %3941 = vmatpush.bf16.msra.mxu0 0
      %3942 = vmatpush.bf16.msra.mxu0 0
      %3943 = vmatpush.bf16.msra.mxu0 0
      %3944 = vmatpush.bf16.msra.mxu0 %v3877
      %3945 = vmatmul.bf16.gmra.mxu0 %v3862
      %v3946 = vpop.f32.mrf.mxu0
      %v3947 = vadd.f32 0.0, %v3946
      %v3948 = vpop.f32.mrf.mxu0
      %3949 = vdwg.mxu0
      %3950 = vmatpush.bf16.msra.mxu0 0
      %3951 = vmatpush.bf16.msra.mxu0 0
      %3952 = vmatpush.bf16.msra.mxu0 0
      %3953 = vmatpush.bf16.msra.mxu0 0
      %3954 = vmatpush.bf16.msra.mxu0 0
      %3955 = vmatpush.bf16.msra.mxu0 0
      %3956 = vmatpush.bf16.msra.mxu0 0
      %3957 = vmatpush.bf16.msra.mxu0 %v3880
      %3958 = vmatmul.bf16.gmra.mxu0 %v3862
      %v3959 = vpop.f32.mrf.mxu0
      %v3960 = vadd.f32 0.0, %v3959
      %v3961 = vpop.f32.mrf.mxu0
      %3962 = vdwg.mxu0
      %3963 = vmatpush.bf16.msra.mxu0 0
      %3964 = vmatpush.bf16.msra.mxu0 0
      %3965 = vmatpush.bf16.msra.mxu0 0
      %3966 = vmatpush.bf16.msra.mxu0 0
      %3967 = vmatpush.bf16.msra.mxu0 0
      %3968 = vmatpush.bf16.msra.mxu0 0
      %3969 = vmatpush.bf16.msra.mxu0 0
      %3970 = vmatpush.bf16.msra.mxu0 %v3883
      %3971 = vmatmul.bf16.gmra.mxu0 %v3862
      %v3972 = vpop.f32.mrf.mxu0
      %v3973 = vadd.f32 0.0, %v3972
      %v3974 = vpop.f32.mrf.mxu0
      %3975 = vdwg.mxu0
      %v3976 = vadd.f32 %v3810, %v3895
      %v3977 = vadd.f32 %v3811, %v3908
      %v3978 = vadd.f32 %v3812, %v3921
      %v3979 = vadd.f32 %v3813, %v3934
      %v3980 = vadd.f32 %v3814, %v3947
      %v3981 = vadd.f32 %v3815, %v3960
      %v3982 = vadd.f32 %v3816, %v3973
      %s3983 = scalar_lea.vmem %s1, 46
      %v3984 = vld [vmem:[%s3983] sm:$0x3]
      %v3985 = vld [vmem:[%s165 + $0x2] sm:$0xff]
      %v3986 = vld [vmem:[%s165 + $0xa] sm:$0x3f]
      %3988 = vst [vmem:[#allocation1] ss:$4 sm:$0xff] %v3985
      %s3990 = scalar_lea.vmem [#allocation1], 32
      %3991 = vst [vmem:[%s3990] ss:$4 sm:$0xff] %v3986
      %v3992 = vld.sshfl [vmem:[#allocation1] sm:$0xff pattern:$0x73625140]
      %v3994 = vld.sshfl [vmem:[#allocation1 + $0x8] sm:$0xff pattern:$0x73625140]
      %v3996 = vld.sshfl [vmem:[#allocation1 + $0x10] sm:$0xff pattern:$0x73625140]
      %v3998 = vld.sshfl [vmem:[#allocation1 + $0x18] sm:$0xff pattern:$0x73625140]
      %v4000 = vld.sshfl [vmem:[#allocation1 + $0x20] sm:$0xff pattern:$0x73625140]
      %v4002 = vld.sshfl [vmem:[#allocation1 + $0x28] sm:$0xff pattern:$0x73625140]
      %v4004 = vld.sshfl [vmem:[#allocation1 + $0x30] sm:$0xff pattern:$0x73625140]
      %4006 = vrot.lane.b32.xlu0 %v3992, 44
      %v4007 = vpop.permute.xlu0 %4006
      %4008 = vrot.lane.b32.xlu0 %v3994, 44
      %v4009 = vpop.permute.xlu0 %4008
      %4010 = vrot.lane.b32.xlu0 %v3996, 44
      %v4011 = vpop.permute.xlu0 %4010
      %4012 = vrot.lane.b32.xlu0 %v3998, 44
      %v4013 = vpop.permute.xlu0 %4012
      %4014 = vrot.lane.b32.xlu0 %v4000, 44
      %v4015 = vpop.permute.xlu0 %4014
      %4016 = vrot.lane.b32.xlu0 %v4002, 44
      %v4017 = vpop.permute.xlu0 %4016
      %4018 = vrot.lane.b32.xlu0 %v4004, 44
      %v4019 = vpop.permute.xlu0 %4018
      %vm4020 = vcmask 359424
      %v4021 = vsel %vm4020, %v4007, %v4009
      %v4022 = vsel %vm4020, %v4009, %v4011
      %v4023 = vsel %vm4020, %v4011, %v4013
      %v4024 = vsel %vm4020, %v4013, %v4015
      %v4025 = vsel %vm4020, %v4015, %v4017
      %v4026 = vsel %vm4020, %v4017, %v4019
      %v4028 = vsel %vm217, %v3984, 0
      %v4031 = vsel %vm221, %v4021, 0
      %v4034 = vsel %vm221, %v4022, 0
      %v4037 = vsel %vm221, %v4023, 0
      %v4040 = vsel %vm221, %v4024, 0
      %v4043 = vsel %vm221, %v4025, 0
      %v4046 = vsel %vm221, %v4026, 0
      %v4049 = vsel %vm221, %v4019, 0
      %4051 = vmatpush.bf16.msra.mxu0 0
      %4052 = vmatpush.bf16.msra.mxu0 0
      %4053 = vmatpush.bf16.msra.mxu0 0
      %4054 = vmatpush.bf16.msra.mxu0 0
      %4055 = vmatpush.bf16.msra.mxu0 0
      %4056 = vmatpush.bf16.msra.mxu0 0
      %4057 = vmatpush.bf16.msra.mxu0 0
      %4058 = vmatpush.bf16.msra.mxu0 %v4031
      %4059 = vmatmul.bf16.gmra.mxu0 %v4028
      %v4060 = vpop.f32.mrf.mxu0
      %v4061 = vadd.f32 0.0, %v4060
      %v4062 = vpop.f32.mrf.mxu0
      %4063 = vdwg.mxu0
      %4064 = vmatpush.bf16.msra.mxu0 0
      %4065 = vmatpush.bf16.msra.mxu0 0
      %4066 = vmatpush.bf16.msra.mxu0 0
      %4067 = vmatpush.bf16.msra.mxu0 0
      %4068 = vmatpush.bf16.msra.mxu0 0
      %4069 = vmatpush.bf16.msra.mxu0 0
      %4070 = vmatpush.bf16.msra.mxu0 0
      %4071 = vmatpush.bf16.msra.mxu0 %v4034
      %4072 = vmatmul.bf16.gmra.mxu0 %v4028
      %v4073 = vpop.f32.mrf.mxu0
      %v4074 = vadd.f32 0.0, %v4073
      %v4075 = vpop.f32.mrf.mxu0
      %4076 = vdwg.mxu0
      %4077 = vmatpush.bf16.msra.mxu0 0
      %4078 = vmatpush.bf16.msra.mxu0 0
      %4079 = vmatpush.bf16.msra.mxu0 0
      %4080 = vmatpush.bf16.msra.mxu0 0
      %4081 = vmatpush.bf16.msra.mxu0 0
      %4082 = vmatpush.bf16.msra.mxu0 0
      %4083 = vmatpush.bf16.msra.mxu0 0
      %4084 = vmatpush.bf16.msra.mxu0 %v4037
      %4085 = vmatmul.bf16.gmra.mxu0 %v4028
      %v4086 = vpop.f32.mrf.mxu0
      %v4087 = vadd.f32 0.0, %v4086
      %v4088 = vpop.f32.mrf.mxu0
      %4089 = vdwg.mxu0
      %4090 = vmatpush.bf16.msra.mxu0 0
      %4091 = vmatpush.bf16.msra.mxu0 0
      %4092 = vmatpush.bf16.msra.mxu0 0
      %4093 = vmatpush.bf16.msra.mxu0 0
      %4094 = vmatpush.bf16.msra.mxu0 0
      %4095 = vmatpush.bf16.msra.mxu0 0
      %4096 = vmatpush.bf16.msra.mxu0 0
      %4097 = vmatpush.bf16.msra.mxu0 %v4040
      %4098 = vmatmul.bf16.gmra.mxu0 %v4028
      %v4099 = vpop.f32.mrf.mxu0
      %v4100 = vadd.f32 0.0, %v4099
      %v4101 = vpop.f32.mrf.mxu0
      %4102 = vdwg.mxu0
      %4103 = vmatpush.bf16.msra.mxu0 0
      %4104 = vmatpush.bf16.msra.mxu0 0
      %4105 = vmatpush.bf16.msra.mxu0 0
      %4106 = vmatpush.bf16.msra.mxu0 0
      %4107 = vmatpush.bf16.msra.mxu0 0
      %4108 = vmatpush.bf16.msra.mxu0 0
      %4109 = vmatpush.bf16.msra.mxu0 0
      %4110 = vmatpush.bf16.msra.mxu0 %v4043
      %4111 = vmatmul.bf16.gmra.mxu0 %v4028
      %v4112 = vpop.f32.mrf.mxu0
      %v4113 = vadd.f32 0.0, %v4112
      %v4114 = vpop.f32.mrf.mxu0
      %4115 = vdwg.mxu0
      %4116 = vmatpush.bf16.msra.mxu0 0
      %4117 = vmatpush.bf16.msra.mxu0 0
      %4118 = vmatpush.bf16.msra.mxu0 0
      %4119 = vmatpush.bf16.msra.mxu0 0
      %4120 = vmatpush.bf16.msra.mxu0 0
      %4121 = vmatpush.bf16.msra.mxu0 0
      %4122 = vmatpush.bf16.msra.mxu0 0
      %4123 = vmatpush.bf16.msra.mxu0 %v4046
      %4124 = vmatmul.bf16.gmra.mxu0 %v4028
      %v4125 = vpop.f32.mrf.mxu0
      %v4126 = vadd.f32 0.0, %v4125
      %v4127 = vpop.f32.mrf.mxu0
      %4128 = vdwg.mxu0
      %4129 = vmatpush.bf16.msra.mxu0 0
      %4130 = vmatpush.bf16.msra.mxu0 0
      %4131 = vmatpush.bf16.msra.mxu0 0
      %4132 = vmatpush.bf16.msra.mxu0 0
      %4133 = vmatpush.bf16.msra.mxu0 0
      %4134 = vmatpush.bf16.msra.mxu0 0
      %4135 = vmatpush.bf16.msra.mxu0 0
      %4136 = vmatpush.bf16.msra.mxu0 %v4049
      %4137 = vmatmul.bf16.gmra.mxu0 %v4028
      %v4138 = vpop.f32.mrf.mxu0
      %v4139 = vadd.f32 0.0, %v4138
      %v4140 = vpop.f32.mrf.mxu0
      %4141 = vdwg.mxu0
      %v4142 = vadd.f32 %v3976, %v4061
      %v4143 = vadd.f32 %v3977, %v4074
      %v4144 = vadd.f32 %v3978, %v4087
      %v4145 = vadd.f32 %v3979, %v4100
      %v4146 = vadd.f32 %v3980, %v4113
      %v4147 = vadd.f32 %v3981, %v4126
      %v4148 = vadd.f32 %v3982, %v4139
      %s4149 = scalar_lea.vmem %s1, 48
      %v4150 = vld [vmem:[%s4149] sm:$0x3]
      %v4151 = vld [vmem:[%s165 + $0x2] sm:$0xff]
      %v4152 = vld [vmem:[%s165 + $0xa] sm:$0x3f]
      %4154 = vst [vmem:[#allocation1] ss:$4 sm:$0xff] %v4151
      %s4156 = scalar_lea.vmem [#allocation1], 32
      %4157 = vst [vmem:[%s4156] ss:$4 sm:$0xff] %v4152
      %v4158 = vld.sshfl [vmem:[#allocation1] sm:$0xff pattern:$0x73625140]
      %v4160 = vld.sshfl [vmem:[#allocation1 + $0x8] sm:$0xff pattern:$0x73625140]
      %v4162 = vld.sshfl [vmem:[#allocation1 + $0x10] sm:$0xff pattern:$0x73625140]
      %v4164 = vld.sshfl [vmem:[#allocation1 + $0x18] sm:$0xff pattern:$0x73625140]
      %v4166 = vld.sshfl [vmem:[#allocation1 + $0x20] sm:$0xff pattern:$0x73625140]
      %v4168 = vld.sshfl [vmem:[#allocation1 + $0x28] sm:$0xff pattern:$0x73625140]
      %v4170 = vld.sshfl [vmem:[#allocation1 + $0x30] sm:$0xff pattern:$0x73625140]
      %4172 = vrot.lane.b32.xlu0 %v4158, 36
      %v4173 = vpop.permute.xlu0 %4172
      %4174 = vrot.lane.b32.xlu0 %v4160, 36
      %v4175 = vpop.permute.xlu0 %4174
      %4176 = vrot.lane.b32.xlu0 %v4162, 36
      %v4177 = vpop.permute.xlu0 %4176
      %4178 = vrot.lane.b32.xlu0 %v4164, 36
      %v4179 = vpop.permute.xlu0 %4178
      %4180 = vrot.lane.b32.xlu0 %v4166, 36
      %v4181 = vpop.permute.xlu0 %4180
      %4182 = vrot.lane.b32.xlu0 %v4168, 36
      %v4183 = vpop.permute.xlu0 %4182
      %4184 = vrot.lane.b32.xlu0 %v4170, 36
      %v4185 = vpop.permute.xlu0 %4184
      %vm4186 = vcmask 293888
      %v4187 = vsel %vm4186, %v4173, %v4175
      %v4188 = vsel %vm4186, %v4175, %v4177
      %v4189 = vsel %vm4186, %v4177, %v4179
      %v4190 = vsel %vm4186, %v4179, %v4181
      %v4191 = vsel %vm4186, %v4181, %v4183
      %v4192 = vsel %vm4186, %v4183, %v4185
      %v4194 = vsel %vm217, %v4150, 0
      %v4197 = vsel %vm221, %v4187, 0
      %v4200 = vsel %vm221, %v4188, 0
      %v4203 = vsel %vm221, %v4189, 0
      %v4206 = vsel %vm221, %v4190, 0
      %v4209 = vsel %vm221, %v4191, 0
      %v4212 = vsel %vm221, %v4192, 0
      %v4215 = vsel %vm221, %v4185, 0
      %4217 = vmatpush.bf16.msra.mxu0 0
      %4218 = vmatpush.bf16.msra.mxu0 0
      %4219 = vmatpush.bf16.msra.mxu0 0
      %4220 = vmatpush.bf16.msra.mxu0 0
      %4221 = vmatpush.bf16.msra.mxu0 0
      %4222 = vmatpush.bf16.msra.mxu0 0
      %4223 = vmatpush.bf16.msra.mxu0 0
      %4224 = vmatpush.bf16.msra.mxu0 %v4197
      %4225 = vmatmul.bf16.gmra.mxu0 %v4194
      %v4226 = vpop.f32.mrf.mxu0
      %v4227 = vadd.f32 0.0, %v4226
      %v4228 = vpop.f32.mrf.mxu0
      %4229 = vdwg.mxu0
      %4230 = vmatpush.bf16.msra.mxu0 0
      %4231 = vmatpush.bf16.msra.mxu0 0
      %4232 = vmatpush.bf16.msra.mxu0 0
      %4233 = vmatpush.bf16.msra.mxu0 0
      %4234 = vmatpush.bf16.msra.mxu0 0
      %4235 = vmatpush.bf16.msra.mxu0 0
      %4236 = vmatpush.bf16.msra.mxu0 0
      %4237 = vmatpush.bf16.msra.mxu0 %v4200
      %4238 = vmatmul.bf16.gmra.mxu0 %v4194
      %v4239 = vpop.f32.mrf.mxu0
      %v4240 = vadd.f32 0.0, %v4239
      %v4241 = vpop.f32.mrf.mxu0
      %4242 = vdwg.mxu0
      %4243 = vmatpush.bf16.msra.mxu0 0
      %4244 = vmatpush.bf16.msra.mxu0 0
      %4245 = vmatpush.bf16.msra.mxu0 0
      %4246 = vmatpush.bf16.msra.mxu0 0
      %4247 = vmatpush.bf16.msra.mxu0 0
      %4248 = vmatpush.bf16.msra.mxu0 0
      %4249 = vmatpush.bf16.msra.mxu0 0
      %4250 = vmatpush.bf16.msra.mxu0 %v4203
      %4251 = vmatmul.bf16.gmra.mxu0 %v4194
      %v4252 = vpop.f32.mrf.mxu0
      %v4253 = vadd.f32 0.0, %v4252
      %v4254 = vpop.f32.mrf.mxu0
      %4255 = vdwg.mxu0
      %4256 = vmatpush.bf16.msra.mxu0 0
      %4257 = vmatpush.bf16.msra.mxu0 0
      %4258 = vmatpush.bf16.msra.mxu0 0
      %4259 = vmatpush.bf16.msra.mxu0 0
      %4260 = vmatpush.bf16.msra.mxu0 0
      %4261 = vmatpush.bf16.msra.mxu0 0
      %4262 = vmatpush.bf16.msra.mxu0 0
      %4263 = vmatpush.bf16.msra.mxu0 %v4206
      %4264 = vmatmul.bf16.gmra.mxu0 %v4194
      %v4265 = vpop.f32.mrf.mxu0
      %v4266 = vadd.f32 0.0, %v4265
      %v4267 = vpop.f32.mrf.mxu0
      %4268 = vdwg.mxu0
      %4269 = vmatpush.bf16.msra.mxu0 0
      %4270 = vmatpush.bf16.msra.mxu0 0
      %4271 = vmatpush.bf16.msra.mxu0 0
      %4272 = vmatpush.bf16.msra.mxu0 0
      %4273 = vmatpush.bf16.msra.mxu0 0
      %4274 = vmatpush.bf16.msra.mxu0 0
      %4275 = vmatpush.bf16.msra.mxu0 0
      %4276 = vmatpush.bf16.msra.mxu0 %v4209
      %4277 = vmatmul.bf16.gmra.mxu0 %v4194
      %v4278 = vpop.f32.mrf.mxu0
      %v4279 = vadd.f32 0.0, %v4278
      %v4280 = vpop.f32.mrf.mxu0
      %4281 = vdwg.mxu0
      %4282 = vmatpush.bf16.msra.mxu0 0
      %4283 = vmatpush.bf16.msra.mxu0 0
      %4284 = vmatpush.bf16.msra.mxu0 0
      %4285 = vmatpush.bf16.msra.mxu0 0
      %4286 = vmatpush.bf16.msra.mxu0 0
      %4287 = vmatpush.bf16.msra.mxu0 0
      %4288 = vmatpush.bf16.msra.mxu0 0
      %4289 = vmatpush.bf16.msra.mxu0 %v4212
      %4290 = vmatmul.bf16.gmra.mxu0 %v4194
      %v4291 = vpop.f32.mrf.mxu0
      %v4292 = vadd.f32 0.0, %v4291
      %v4293 = vpop.f32.mrf.mxu0
      %4294 = vdwg.mxu0
      %4295 = vmatpush.bf16.msra.mxu0 0
      %4296 = vmatpush.bf16.msra.mxu0 0
      %4297 = vmatpush.bf16.msra.mxu0 0
      %4298 = vmatpush.bf16.msra.mxu0 0
      %4299 = vmatpush.bf16.msra.mxu0 0
      %4300 = vmatpush.bf16.msra.mxu0 0
      %4301 = vmatpush.bf16.msra.mxu0 0
      %4302 = vmatpush.bf16.msra.mxu0 %v4215
      %4303 = vmatmul.bf16.gmra.mxu0 %v4194
      %v4304 = vpop.f32.mrf.mxu0
      %v4305 = vadd.f32 0.0, %v4304
      %v4306 = vpop.f32.mrf.mxu0
      %4307 = vdwg.mxu0
      %v4308 = vadd.f32 %v4142, %v4227
      %v4309 = vadd.f32 %v4143, %v4240
      %v4310 = vadd.f32 %v4144, %v4253
      %v4311 = vadd.f32 %v4145, %v4266
      %v4312 = vadd.f32 %v4146, %v4279
      %v4313 = vadd.f32 %v4147, %v4292
      %v4314 = vadd.f32 %v4148, %v4305
      %s4315 = scalar_lea.vmem %s1, 50
      %v4316 = vld [vmem:[%s4315] sm:$0x3]
      %v4317 = vld [vmem:[%s165 + $0x2] sm:$0xff]
      %v4318 = vld [vmem:[%s165 + $0xa] sm:$0x3f]
      %4320 = vst [vmem:[#allocation1] ss:$4 sm:$0xff] %v4317
      %s4322 = scalar_lea.vmem [#allocation1], 32
      %4323 = vst [vmem:[%s4322] ss:$4 sm:$0xff] %v4318
      %v4324 = vld.sshfl [vmem:[#allocation1] sm:$0xff pattern:$0x73625140]
      %v4326 = vld.sshfl [vmem:[#allocation1 + $0x8] sm:$0xff pattern:$0x73625140]
      %v4328 = vld.sshfl [vmem:[#allocation1 + $0x10] sm:$0xff pattern:$0x73625140]
      %v4330 = vld.sshfl [vmem:[#allocation1 + $0x18] sm:$0xff pattern:$0x73625140]
      %v4332 = vld.sshfl [vmem:[#allocation1 + $0x20] sm:$0xff pattern:$0x73625140]
      %v4334 = vld.sshfl [vmem:[#allocation1 + $0x28] sm:$0xff pattern:$0x73625140]
      %v4336 = vld.sshfl [vmem:[#allocation1 + $0x30] sm:$0xff pattern:$0x73625140]
      %4338 = vrot.lane.b32.xlu0 %v4324, 35
      %v4339 = vpop.permute.xlu0 %4338
      %4340 = vrot.lane.b32.xlu0 %v4326, 35
      %v4341 = vpop.permute.xlu0 %4340
      %4342 = vrot.lane.b32.xlu0 %v4328, 35
      %v4343 = vpop.permute.xlu0 %4342
      %4344 = vrot.lane.b32.xlu0 %v4330, 35
      %v4345 = vpop.permute.xlu0 %4344
      %4346 = vrot.lane.b32.xlu0 %v4332, 35
      %v4347 = vpop.permute.xlu0 %4346
      %4348 = vrot.lane.b32.xlu0 %v4334, 35
      %v4349 = vpop.permute.xlu0 %4348
      %4350 = vrot.lane.b32.xlu0 %v4336, 35
      %v4351 = vpop.permute.xlu0 %4350
      %vm4352 = vcmask 285696
      %v4353 = vsel %vm4352, %v4339, %v4341
      %v4354 = vsel %vm4352, %v4341, %v4343
      %v4355 = vsel %vm4352, %v4343, %v4345
      %v4356 = vsel %vm4352, %v4345, %v4347
      %v4357 = vsel %vm4352, %v4347, %v4349
      %v4358 = vsel %vm4352, %v4349, %v4351
      %v4360 = vsel %vm217, %v4316, 0
      %v4363 = vsel %vm221, %v4353, 0
      %v4366 = vsel %vm221, %v4354, 0
      %v4369 = vsel %vm221, %v4355, 0
      %v4372 = vsel %vm221, %v4356, 0
      %v4375 = vsel %vm221, %v4357, 0
      %v4378 = vsel %vm221, %v4358, 0
      %v4381 = vsel %vm221, %v4351, 0
      %4383 = vmatpush.bf16.msra.mxu0 0
      %4384 = vmatpush.bf16.msra.mxu0 0
      %4385 = vmatpush.bf16.msra.mxu0 0
      %4386 = vmatpush.bf16.msra.mxu0 0
      %4387 = vmatpush.bf16.msra.mxu0 0
      %4388 = vmatpush.bf16.msra.mxu0 0
      %4389 = vmatpush.bf16.msra.mxu0 0
      %4390 = vmatpush.bf16.msra.mxu0 %v4363
      %4391 = vmatmul.bf16.gmra.mxu0 %v4360
      %v4392 = vpop.f32.mrf.mxu0
      %v4393 = vadd.f32 0.0, %v4392
      %v4394 = vpop.f32.mrf.mxu0
      %4395 = vdwg.mxu0
      %4396 = vmatpush.bf16.msra.mxu0 0
      %4397 = vmatpush.bf16.msra.mxu0 0
      %4398 = vmatpush.bf16.msra.mxu0 0
      %4399 = vmatpush.bf16.msra.mxu0 0
      %4400 = vmatpush.bf16.msra.mxu0 0
      %4401 = vmatpush.bf16.msra.mxu0 0
      %4402 = vmatpush.bf16.msra.mxu0 0
      %4403 = vmatpush.bf16.msra.mxu0 %v4366
      %4404 = vmatmul.bf16.gmra.mxu0 %v4360
      %v4405 = vpop.f32.mrf.mxu0
      %v4406 = vadd.f32 0.0, %v4405
      %v4407 = vpop.f32.mrf.mxu0
      %4408 = vdwg.mxu0
      %4409 = vmatpush.bf16.msra.mxu0 0
      %4410 = vmatpush.bf16.msra.mxu0 0
      %4411 = vmatpush.bf16.msra.mxu0 0
      %4412 = vmatpush.bf16.msra.mxu0 0
      %4413 = vmatpush.bf16.msra.mxu0 0
      %4414 = vmatpush.bf16.msra.mxu0 0
      %4415 = vmatpush.bf16.msra.mxu0 0
      %4416 = vmatpush.bf16.msra.mxu0 %v4369
      %4417 = vmatmul.bf16.gmra.mxu0 %v4360
      %v4418 = vpop.f32.mrf.mxu0
      %v4419 = vadd.f32 0.0, %v4418
      %v4420 = vpop.f32.mrf.mxu0
      %4421 = vdwg.mxu0
      %4422 = vmatpush.bf16.msra.mxu0 0
      %4423 = vmatpush.bf16.msra.mxu0 0
      %4424 = vmatpush.bf16.msra.mxu0 0
      %4425 = vmatpush.bf16.msra.mxu0 0
      %4426 = vmatpush.bf16.msra.mxu0 0
      %4427 = vmatpush.bf16.msra.mxu0 0
      %4428 = vmatpush.bf16.msra.mxu0 0
      %4429 = vmatpush.bf16.msra.mxu0 %v4372
      %4430 = vmatmul.bf16.gmra.mxu0 %v4360
      %v4431 = vpop.f32.mrf.mxu0
      %v4432 = vadd.f32 0.0, %v4431
      %v4433 = vpop.f32.mrf.mxu0
      %4434 = vdwg.mxu0
      %4435 = vmatpush.bf16.msra.mxu0 0
      %4436 = vmatpush.bf16.msra.mxu0 0
      %4437 = vmatpush.bf16.msra.mxu0 0
      %4438 = vmatpush.bf16.msra.mxu0 0
      %4439 = vmatpush.bf16.msra.mxu0 0
      %4440 = vmatpush.bf16.msra.mxu0 0
      %4441 = vmatpush.bf16.msra.mxu0 0
      %4442 = vmatpush.bf16.msra.mxu0 %v4375
      %4443 = vmatmul.bf16.gmra.mxu0 %v4360
      %v4444 = vpop.f32.mrf.mxu0
      %v4445 = vadd.f32 0.0, %v4444
      %v4446 = vpop.f32.mrf.mxu0
      %4447 = vdwg.mxu0
      %4448 = vmatpush.bf16.msra.mxu0 0
      %4449 = vmatpush.bf16.msra.mxu0 0
      %4450 = vmatpush.bf16.msra.mxu0 0
      %4451 = vmatpush.bf16.msra.mxu0 0
      %4452 = vmatpush.bf16.msra.mxu0 0
      %4453 = vmatpush.bf16.msra.mxu0 0
      %4454 = vmatpush.bf16.msra.mxu0 0
      %4455 = vmatpush.bf16.msra.mxu0 %v4378
      %4456 = vmatmul.bf16.gmra.mxu0 %v4360
      %v4457 = vpop.f32.mrf.mxu0
      %v4458 = vadd.f32 0.0, %v4457
      %v4459 = vpop.f32.mrf.mxu0
      %4460 = vdwg.mxu0
      %4461 = vmatpush.bf16.msra.mxu0 0
      %4462 = vmatpush.bf16.msra.mxu0 0
      %4463 = vmatpush.bf16.msra.mxu0 0
      %4464 = vmatpush.bf16.msra.mxu0 0
      %4465 = vmatpush.bf16.msra.mxu0 0
      %4466 = vmatpush.bf16.msra.mxu0 0
      %4467 = vmatpush.bf16.msra.mxu0 0
      %4468 = vmatpush.bf16.msra.mxu0 %v4381
      %4469 = vmatmul.bf16.gmra.mxu0 %v4360
      %v4470 = vpop.f32.mrf.mxu0
      %v4471 = vadd.f32 0.0, %v4470
      %v4472 = vpop.f32.mrf.mxu0
      %4473 = vdwg.mxu0
      %v4474 = vadd.f32 %v4308, %v4393
      %v4475 = vadd.f32 %v4309, %v4406
      %v4476 = vadd.f32 %v4310, %v4419
      %v4477 = vadd.f32 %v4311, %v4432
      %v4478 = vadd.f32 %v4312, %v4445
      %v4479 = vadd.f32 %v4313, %v4458
      %v4480 = vadd.f32 %v4314, %v4471
      %s4481 = scalar_lea.vmem %s1, 52
      %v4482 = vld [vmem:[%s4481] sm:$0x3]
      %v4483 = vld [vmem:[%s165 + $0x2] sm:$0xff]
      %v4484 = vld [vmem:[%s165 + $0xa] sm:$0x3f]
      %4486 = vst [vmem:[#allocation1] ss:$4 sm:$0xff] %v4483
      %s4488 = scalar_lea.vmem [#allocation1], 32
      %4489 = vst [vmem:[%s4488] ss:$4 sm:$0xff] %v4484
      %v4490 = vld.sshfl [vmem:[#allocation1] sm:$0xff pattern:$0x73625140]
      %v4492 = vld.sshfl [vmem:[#allocation1 + $0x8] sm:$0xff pattern:$0x73625140]
      %v4494 = vld.sshfl [vmem:[#allocation1 + $0x10] sm:$0xff pattern:$0x73625140]
      %v4496 = vld.sshfl [vmem:[#allocation1 + $0x18] sm:$0xff pattern:$0x73625140]
      %v4498 = vld.sshfl [vmem:[#allocation1 + $0x20] sm:$0xff pattern:$0x73625140]
      %v4500 = vld.sshfl [vmem:[#allocation1 + $0x28] sm:$0xff pattern:$0x73625140]
      %v4502 = vld.sshfl [vmem:[#allocation1 + $0x30] sm:$0xff pattern:$0x73625140]
      %4504 = vrot.lane.b32.xlu0 %v4490, 34
      %v4505 = vpop.permute.xlu0 %4504
      %4506 = vrot.lane.b32.xlu0 %v4492, 34
      %v4507 = vpop.permute.xlu0 %4506
      %4508 = vrot.lane.b32.xlu0 %v4494, 34
      %v4509 = vpop.permute.xlu0 %4508
      %4510 = vrot.lane.b32.xlu0 %v4496, 34
      %v4511 = vpop.permute.xlu0 %4510
      %4512 = vrot.lane.b32.xlu0 %v4498, 34
      %v4513 = vpop.permute.xlu0 %4512
      %4514 = vrot.lane.b32.xlu0 %v4500, 34
      %v4515 = vpop.permute.xlu0 %4514
      %4516 = vrot.lane.b32.xlu0 %v4502, 34
      %v4517 = vpop.permute.xlu0 %4516
      %vm4518 = vcmask 277504
      %v4519 = vsel %vm4518, %v4505, %v4507
      %v4520 = vsel %vm4518, %v4507, %v4509
      %v4521 = vsel %vm4518, %v4509, %v4511
      %v4522 = vsel %vm4518, %v4511, %v4513
      %v4523 = vsel %vm4518, %v4513, %v4515
      %v4524 = vsel %vm4518, %v4515, %v4517
      %v4526 = vsel %vm217, %v4482, 0
      %v4529 = vsel %vm221, %v4519, 0
      %v4532 = vsel %vm221, %v4520, 0
      %v4535 = vsel %vm221, %v4521, 0
      %v4538 = vsel %vm221, %v4522, 0
      %v4541 = vsel %vm221, %v4523, 0
      %v4544 = vsel %vm221, %v4524, 0
      %v4547 = vsel %vm221, %v4517, 0
      %4549 = vmatpush.bf16.msra.mxu0 0
      %4550 = vmatpush.bf16.msra.mxu0 0
      %4551 = vmatpush.bf16.msra.mxu0 0
      %4552 = vmatpush.bf16.msra.mxu0 0
      %4553 = vmatpush.bf16.msra.mxu0 0
      %4554 = vmatpush.bf16.msra.mxu0 0
      %4555 = vmatpush.bf16.msra.mxu0 0
      %4556 = vmatpush.bf16.msra.mxu0 %v4529
      %4557 = vmatmul.bf16.gmra.mxu0 %v4526
      %v4558 = vpop.f32.mrf.mxu0
      %v4559 = vadd.f32 0.0, %v4558
      %v4560 = vpop.f32.mrf.mxu0
      %4561 = vdwg.mxu0
      %4562 = vmatpush.bf16.msra.mxu0 0
      %4563 = vmatpush.bf16.msra.mxu0 0
      %4564 = vmatpush.bf16.msra.mxu0 0
      %4565 = vmatpush.bf16.msra.mxu0 0
      %4566 = vmatpush.bf16.msra.mxu0 0
      %4567 = vmatpush.bf16.msra.mxu0 0
      %4568 = vmatpush.bf16.msra.mxu0 0
      %4569 = vmatpush.bf16.msra.mxu0 %v4532
      %4570 = vmatmul.bf16.gmra.mxu0 %v4526
      %v4571 = vpop.f32.mrf.mxu0
      %v4572 = vadd.f32 0.0, %v4571
      %v4573 = vpop.f32.mrf.mxu0
      %4574 = vdwg.mxu0
      %4575 = vmatpush.bf16.msra.mxu0 0
      %4576 = vmatpush.bf16.msra.mxu0 0
      %4577 = vmatpush.bf16.msra.mxu0 0
      %4578 = vmatpush.bf16.msra.mxu0 0
      %4579 = vmatpush.bf16.msra.mxu0 0
      %4580 = vmatpush.bf16.msra.mxu0 0
      %4581 = vmatpush.bf16.msra.mxu0 0
      %4582 = vmatpush.bf16.msra.mxu0 %v4535
      %4583 = vmatmul.bf16.gmra.mxu0 %v4526
      %v4584 = vpop.f32.mrf.mxu0
      %v4585 = vadd.f32 0.0, %v4584
      %v4586 = vpop.f32.mrf.mxu0
      %4587 = vdwg.mxu0
      %4588 = vmatpush.bf16.msra.mxu0 0
      %4589 = vmatpush.bf16.msra.mxu0 0
      %4590 = vmatpush.bf16.msra.mxu0 0
      %4591 = vmatpush.bf16.msra.mxu0 0
      %4592 = vmatpush.bf16.msra.mxu0 0
      %4593 = vmatpush.bf16.msra.mxu0 0
      %4594 = vmatpush.bf16.msra.mxu0 0
      %4595 = vmatpush.bf16.msra.mxu0 %v4538
      %4596 = vmatmul.bf16.gmra.mxu0 %v4526
      %v4597 = vpop.f32.mrf.mxu0
      %v4598 = vadd.f32 0.0, %v4597
      %v4599 = vpop.f32.mrf.mxu0
      %4600 = vdwg.mxu0
      %4601 = vmatpush.bf16.msra.mxu0 0
      %4602 = vmatpush.bf16.msra.mxu0 0
      %4603 = vmatpush.bf16.msra.mxu0 0
      %4604 = vmatpush.bf16.msra.mxu0 0
      %4605 = vmatpush.bf16.msra.mxu0 0
      %4606 = vmatpush.bf16.msra.mxu0 0
      %4607 = vmatpush.bf16.msra.mxu0 0
      %4608 = vmatpush.bf16.msra.mxu0 %v4541
      %4609 = vmatmul.bf16.gmra.mxu0 %v4526
      %v4610 = vpop.f32.mrf.mxu0
      %v4611 = vadd.f32 0.0, %v4610
      %v4612 = vpop.f32.mrf.mxu0
      %4613 = vdwg.mxu0
      %4614 = vmatpush.bf16.msra.mxu0 0
      %4615 = vmatpush.bf16.msra.mxu0 0
      %4616 = vmatpush.bf16.msra.mxu0 0
      %4617 = vmatpush.bf16.msra.mxu0 0
      %4618 = vmatpush.bf16.msra.mxu0 0
      %4619 = vmatpush.bf16.msra.mxu0 0
      %4620 = vmatpush.bf16.msra.mxu0 0
      %4621 = vmatpush.bf16.msra.mxu0 %v4544
      %4622 = vmatmul.bf16.gmra.mxu0 %v4526
      %v4623 = vpop.f32.mrf.mxu0
      %v4624 = vadd.f32 0.0, %v4623
      %v4625 = vpop.f32.mrf.mxu0
      %4626 = vdwg.mxu0
      %4627 = vmatpush.bf16.msra.mxu0 0
      %4628 = vmatpush.bf16.msra.mxu0 0
      %4629 = vmatpush.bf16.msra.mxu0 0
      %4630 = vmatpush.bf16.msra.mxu0 0
      %4631 = vmatpush.bf16.msra.mxu0 0
      %4632 = vmatpush.bf16.msra.mxu0 0
      %4633 = vmatpush.bf16.msra.mxu0 0
      %4634 = vmatpush.bf16.msra.mxu0 %v4547
      %4635 = vmatmul.bf16.gmra.mxu0 %v4526
      %v4636 = vpop.f32.mrf.mxu0
      %v4637 = vadd.f32 0.0, %v4636
      %v4638 = vpop.f32.mrf.mxu0
      %4639 = vdwg.mxu0
      %v4640 = vadd.f32 %v4474, %v4559
      %v4641 = vadd.f32 %v4475, %v4572
      %v4642 = vadd.f32 %v4476, %v4585
      %v4643 = vadd.f32 %v4477, %v4598
      %v4644 = vadd.f32 %v4478, %v4611
      %v4645 = vadd.f32 %v4479, %v4624
      %v4646 = vadd.f32 %v4480, %v4637
      %v4647 = vld [vmem:[%s2] sm:$0xf]
      %4649 = vset.pattern.permute.xlu0 0
      %4650 = vperm.xlu0 %4649, %v4647
      %v4651 = vpop.permute.xlu0 %4650
      %v4653 = vadd.f32 %v4640, %v4651
      %v4654 = vadd.f32 %v4641, %v4651
      %v4655 = vadd.f32 %v4642, %v4651
      %v4656 = vadd.f32 %v4643, %v4651
      %v4657 = vadd.f32 %v4644, %v4651
      %v4658 = vadd.f32 %v4645, %v4651
      %v4659 = vadd.f32 %v4646, %v4651
      %v4660 = vmax.f32 %v4653, 0.0
      %v4661 = vmax.f32 %v4654, 0.0
      %v4662 = vmax.f32 %v4655, 0.0
      %v4663 = vmax.f32 %v4656, 0.0
      %v4664 = vmax.f32 %v4657, 0.0
      %v4665 = vmax.f32 %v4658, 0.0
      %v4666 = vmax.f32 %v4659, 0.0
      %v4667 = vpack.c.bf16 %v4661, %v4660
      %v4668 = vpack.c.bf16 %v4663, %v4662
      %v4669 = vpack.c.bf16 %v4665, %v4664
      %v4670 = vpack.c.bf16 %v4666, %v4666
      %v4675 = vrot.slane %v4667, 2
      %v4676 = vrot.slane %v4668, 4
      %v4677 = vrot.slane %v4668, 6
      %v4678 = vrot.slane %v4669, 2
      %v4679 = vrot.slane %v4670, 4
      %v4680 = vrot.slane %v4670, 6
      %v4683 = vsel %vm221, %v4667, %v4675
      %vm4684 = vcmask 1045508
      %v4687 = vsel %vm4684, %v4676, %v4677
      %vm4688 = vcmask 1043456
      %v4689 = vsel %vm4688, %v4683, %v4687
      %v4692 = vsel %vm221, %v4669, %v4678
      %v4695 = vsel %vm4684, %v4679, %v4680
      %v4696 = vsel %vm4688, %v4692, %v4695
      %4699 = vst [vmem:[%s170] sm:$0xff] %v4689
      %vm4700 = vcmask 1043458
      %vm4701 = vmor %vm4700, %vm221
      %vm4702 = vcmask 259076
      %vm4703 = vmor %vm4702, %vm4701
      %4704 = vst.msk [vmem:[%s170 + $0x8] sm:$0x3f] %vm4703, %v4696
      %p4705 = scmp.lt.s32.totalorder %s14, 1
      %s4706 = scalar_select %p4705, %s14, 1
      %s4707 = smul.addr %s4706, 7
      %s4708 = smul.addr %s4707, 2
      %s4709 = scalar_lea.vmem %s3, %s4708
      // Predicated region
      $region33: #{a_call__.2} parent=31 // pred_check
        %p4710 = pneg %p100
      $region34: #{a_call__.2} parent=31 // pred_check_branch
        %4712 = sbr.rel (%p4710) target = $region36
      $region35: #{a_call__.2} parent=31 // pred_region
        _
      $region36: #{a_call__.2} parent=31 // pred_fallthru
        _
    $region32: #{a_call__.2} parent=5 // pred_fallthru
      _
    %p4713 = scmp.le.s32.totalorder 2, %s9
    // Predicated region
    $region37: #{a_call__.2} parent=5 // pred_check
      %p4714 = pneg %p4713
    $region38: #{a_call__.2} parent=5 // pred_check_branch
      %4716 = sbr.rel (%p4714) target = $region40
    $region39: #{a_call__.2} parent=5 // pred_region
      %s4717 = ssub.s32 %s9, 2
      // Predicated region
      $region41: #{a_call__.2} parent=39 // pred_check
        %p4718 = pneg %p106
      $region42: #{a_call__.2} parent=39 // pred_check_branch
        %4720 = sbr.rel (%p4718) target = $region44
      $region43: #{a_call__.2} parent=39 // pred_region
        %p4721 = scmp.lt.s32.totalorder %s15, 1
        %s4722 = scalar_select %p4721, %s15, 1
        %s4723 = smul.addr %s4722, 7
        %s4724 = smul.addr %s4723, 2
        %s4725 = scalar_lea.vmem %s3, %s4724
      $region44: #{a_call__.2} parent=39 // pred_fallthru
        _
    $region40: #{a_call__.2} parent=5 // pred_fallthru
      _
  $region6: #{a_call__.2} parent=0 // loop_footer
    %s13 = sadd.s32 1, %s9
  $region7: #{a_call__.2} parent=0 // loop_footer_branch
    %8 = sbr.rel target = $region3
  $region8: #{a_call__.2} parent=0 // loop_exit
    _

// kernel: a_call__.3
$region0: #{a_call__.3}
  #allocation0 [shape = 'u32[]', space=smem, size = 0x4, offset = 0x4, fixed_abs, tag = 'smem constant byte address 0x4 - core index']
  #allocation1 [shape = 'u32[72,128]{1,0:T(1,128)}', space=vmem, size = 0x9000, scoped, tag = 'internal scratch']
  %s0 = inlined_call_operand.vmem [shape: bf16[2,4,1022], index: 0, kind: input, shape index: {}]
  %s1 = inlined_call_operand.vmem [shape: bf16[27,4,4], index: 1, kind: input, shape index: {}]
  %s2 = inlined_call_operand.vmem [shape: f32[4,1], index: 2, kind: input, shape index: {}]
  %s3 = inlined_call_operand.vmem [shape: bf16[2,4,1022], index: 3, kind: input, shape index: {}]
  %s4 = inlined_call_operand.vmem [shape: f32[2,4,800], index: 4, kind: output, shape index: {}]
  %s5 = sld [smem:[#allocation0]]
  $region49: #{a_call__.3} parent=0
    _
  %s7 = ssub.s32 1, %s5
  %s8 = scalar_select 0, %s7, %s5
  loop: start=0, step=1, limit=4
  $region2: #{a_call__.3} parent=0 // loop_pre_header
    _
  $region3: #{a_call__.3} parent=0 // loop_header
    %s10 = sphi 0, %s14
    %p11 = scmp.ge.s32.totalorder %s10, 4
    %s20 = sphi 0, %s22
    %s23 = sphi 0, %s20
    %s24 = sphi 0, %s23
    %s40 = sphi 0, %s24
    %s44 = sphi 0, %s44
    %s46 = sphi 0, %s44
    %s47 = sphi 0, %s46
    %s61 = sphi 0, %s47
    %s65 = sphi 0, %s65
    %s67 = sphi 0, %s65
    %s68 = sphi 0, %s67
    %s82 = sphi 0, %s68
    %s88 = sphi 0, %s90
    %s91 = sphi 0, %s88
    %s92 = sphi 0, %s91
    %s108 = sphi 0, %s92
    %s114 = sphi 0, %s116
    %s117 = sphi 0, %s114
    %s118 = sphi 0, %s117
    %s134 = sphi 0, %s118
  $region4: #{a_call__.3} parent=0 // loop_header_branch
    %13 = sbr.rel (%p11) target = $region8
  $region5: #{a_call__.3} parent=0 // loop_body
    %s15 = ssub.s32 %s10, 1
    %s16 = ssub.s32 %s10, 2
    %s17 = sadd.s32 %s10, 1
    %s18 = ssub.s32 %s10, %s17
    %p19 = scmp.eq.s32.totalorder %s18, 0
    %s21 = sadd.s32 %s20, 1
    %s22 = scalar_select %p19, %s20, %s21
    %p25 = pneg %p19
    %p26 = scmp.eq.s32.totalorder %s10, 1
    %p27 = por %p25, %p26
    %p28 = scmp.ne.s32.totalorder %s20, %s23
    %p29 = scmp.eq.s32.totalorder %s10, 0
    %p30 = por %p28, %p29
    %p31 = scmp.ne.s32.totalorder %s20, %s23
    %p32 = scmp.eq.s32.totalorder %s15, 1
    %p33 = por %p31, %p32
    %p34 = scmp.ne.s32.totalorder %s23, %s24
    %p35 = scmp.eq.s32.totalorder %s15, 0
    %p36 = por %p34, %p35
    %p37 = scmp.ne.s32.totalorder %s23, %s24
    %p38 = scmp.eq.s32.totalorder %s16, 1
    %p39 = por %p37, %p38
    %p41 = scmp.ne.s32.totalorder %s24, %s40
    %p42 = scmp.eq.s32.totalorder %s16, 0
    %p43 = por %p41, %p42
    %s45 = sadd.s32 %s44, 1
    %p48 = scmp.eq.s32.totalorder %s10, 1
    %p49 = scmp.ne.s32.totalorder %s44, %s46
    %p50 = scmp.eq.s32.totalorder %s10, 0
    %p51 = por %p49, %p50
    %p52 = scmp.ne.s32.totalorder %s44, %s46
    %p53 = scmp.eq.s32.totalorder %s15, 1
    %p54 = por %p52, %p53
    %p55 = scmp.ne.s32.totalorder %s46, %s47
    %p56 = scmp.eq.s32.totalorder %s15, 0
    %p57 = por %p55, %p56
    %p58 = scmp.ne.s32.totalorder %s46, %s47
    %p59 = scmp.eq.s32.totalorder %s16, 1
    %p60 = por %p58, %p59
    %p62 = scmp.ne.s32.totalorder %s47, %s61
    %p63 = scmp.eq.s32.totalorder %s16, 0
    %p64 = por %p62, %p63
    %s66 = sadd.s32 %s65, 1
    %p69 = scmp.eq.s32.totalorder %s10, 1
    %p70 = scmp.ne.s32.totalorder %s65, %s67
    %p71 = scmp.eq.s32.totalorder %s10, 0
    %p72 = por %p70, %p71
    %p73 = scmp.ne.s32.totalorder %s65, %s67
    %p74 = scmp.eq.s32.totalorder %s15, 1
    %p75 = por %p73, %p74
    %p76 = scmp.ne.s32.totalorder %s67, %s68
    %p77 = scmp.eq.s32.totalorder %s15, 0
    %p78 = por %p76, %p77
    %p79 = scmp.ne.s32.totalorder %s67, %s68
    %p80 = scmp.eq.s32.totalorder %s16, 1
    %p81 = por %p79, %p80
    %p83 = scmp.ne.s32.totalorder %s68, %s82
    %p84 = scmp.eq.s32.totalorder %s16, 0
    %p85 = por %p83, %p84
    %s86 = ssub.s32 %s10, %s17
    %p87 = scmp.eq.s32.totalorder %s86, 0
    %s89 = sadd.s32 %s88, 1
    %s90 = scalar_select %p87, %s88, %s89
    %p93 = pneg %p87
    %p94 = scmp.eq.s32.totalorder %s10, 1
    %p95 = por %p93, %p94
    %p96 = scmp.ne.s32.totalorder %s88, %s91
    %p97 = scmp.eq.s32.totalorder %s10, 0
    %p98 = por %p96, %p97
    %p99 = scmp.ne.s32.totalorder %s88, %s91
    %p100 = scmp.eq.s32.totalorder %s15, 1
    %p101 = por %p99, %p100
    %p102 = scmp.ne.s32.totalorder %s91, %s92
    %p103 = scmp.eq.s32.totalorder %s15, 0
    %p104 = por %p102, %p103
    %p105 = scmp.ne.s32.totalorder %s91, %s92
    %p106 = scmp.eq.s32.totalorder %s16, 1
    %p107 = por %p105, %p106
    %p109 = scmp.ne.s32.totalorder %s92, %s108
    %p110 = scmp.eq.s32.totalorder %s16, 0
    %p111 = por %p109, %p110
    %s112 = ssub.s32 %s10, %s17
    %p113 = scmp.eq.s32.totalorder %s112, 0
    %s115 = sadd.s32 %s114, 1
    %s116 = scalar_select %p113, %s114, %s115
    %p119 = pneg %p113
    %p120 = scmp.eq.s32.totalorder %s10, 1
    %p121 = por %p119, %p120
    %p122 = scmp.ne.s32.totalorder %s114, %s117
    %p123 = scmp.eq.s32.totalorder %s10, 0
    %p124 = por %p122, %p123
    %p125 = scmp.ne.s32.totalorder %s114, %s117
    %p126 = scmp.eq.s32.totalorder %s15, 1
    %p127 = por %p125, %p126
    %p128 = scmp.ne.s32.totalorder %s117, %s118
    %p129 = scmp.eq.s32.totalorder %s15, 0
    %p130 = por %p128, %p129
    %p131 = scmp.ne.s32.totalorder %s117, %s118
    %p132 = scmp.eq.s32.totalorder %s16, 1
    %p133 = por %p131, %p132
    %p135 = scmp.ne.s32.totalorder %s118, %s134
    %p136 = scmp.eq.s32.totalorder %s16, 0
    %p137 = por %p135, %p136
    %p138 = scmp.le.s32.totalorder 1, %s10
    %p139 = scmp.lt.s32.totalorder %s10, 3
    %p140 = pnand %p138, %p139
    %p141 = pneg %p140
    // Predicated region
    $region9: #{a_call__.3} parent=5 // pred_check
      _
    $region10: #{a_call__.3} parent=5 // pred_check_branch
      %143 = sbr.rel (%p140) target = $region12
    $region11: #{a_call__.3} parent=5 // pred_region
      %s144 = ssub.s32 %s10, 1
      // Predicated region
      $region13: #{a_call__.3} parent=11 // pred_check
        %p145 = pneg %p57
      $region14: #{a_call__.3} parent=11 // pred_check_branch
        %147 = sbr.rel (%p145) target = $region16
      $region15: #{a_call__.3} parent=11 // pred_region
        _
      $region16: #{a_call__.3} parent=11 // pred_fallthru
        _
      // Predicated region
      $region17: #{a_call__.3} parent=11 // pred_check
        %p148 = pneg %p78
      $region18: #{a_call__.3} parent=11 // pred_check_branch
        %150 = sbr.rel (%p148) target = $region20
      $region19: #{a_call__.3} parent=11 // pred_region
        _
      $region20: #{a_call__.3} parent=11 // pred_fallthru
        _
    $region12: #{a_call__.3} parent=5 // pred_fallthru
      _
    %p151 = scmp.lt.s32.totalorder %s10, 2
    // Predicated region
    $region21: #{a_call__.3} parent=5 // pred_check
      %p152 = pneg %p151
    $region22: #{a_call__.3} parent=5 // pred_check_branch
      %154 = sbr.rel (%p152) target = $region24
    $region23: #{a_call__.3} parent=5 // pred_region
      // Predicated region
      $region25: #{a_call__.3} parent=23 // pred_check
        %p155 = pneg %p30
      $region26: #{a_call__.3} parent=23 // pred_check_branch
        %157 = sbr.rel (%p155) target = $region28
      $region27: #{a_call__.3} parent=23 // pred_region
        %p158 = scmp.lt.s32.totalorder %s10, 1
        %s159 = scalar_select %p158, %s10, 1
        %s160 = smul.addr %s159, 8
        %s161 = smul.addr %s160, 2
        %s162 = scalar_lea.vmem %s0, %s161
      $region28: #{a_call__.3} parent=23 // pred_fallthru
        _
      // Predicated region
      $region29: #{a_call__.3} parent=23 // pred_check
        %p163 = pneg %p98
      $region30: #{a_call__.3} parent=23 // pred_check_branch
        %165 = sbr.rel (%p163) target = $region32
      $region31: #{a_call__.3} parent=23 // pred_region
        %p166 = scmp.lt.s32.totalorder %s10, 1
        %s167 = scalar_select %p166, %s10, 1
        %s168 = smul.addr %s167, 8
        %s169 = smul.addr %s168, 2
        %s170 = scalar_lea.vmem %s3, %s169
      $region32: #{a_call__.3} parent=23 // pred_fallthru
        _
    $region24: #{a_call__.3} parent=5 // pred_fallthru
      _
    %p171 = scmp.le.s32.totalorder 1, %s10
    %p172 = scmp.lt.s32.totalorder %s10, 3
    %p173 = pnand %p171, %p172
    %p174 = pneg %p173
    // Predicated region
    $region33: #{a_call__.3} parent=5 // pred_check
      _
    $region34: #{a_call__.3} parent=5 // pred_check_branch
      %176 = sbr.rel (%p173) target = $region36
    $region35: #{a_call__.3} parent=5 // pred_region
      %s177 = ssub.s32 %s10, 1
      %p178 = scmp.lt.s32.totalorder %s15, 1
      %s179 = scalar_select %p178, %s15, 1
      %s180 = smul.addr %s179, 8
      %s181 = smul.addr %s180, 2
      %s182 = scalar_lea.vmem %s0, %s181
      %p183 = pneg %p36
      %p184 = pneg %p33
      %p185 = pneg %p57
      %p186 = pneg %p54
      %p187 = pneg %p78
      %p188 = pneg %p75
      %p189 = scmp.lt.s32.totalorder %s15, 1
      %s190 = scalar_select %p189, %s15, 1
      %s191 = smul.addr %s190, 8
      %s192 = smul.addr %s191, 2
      %s193 = scalar_lea.vmem %s3, %s192
      %p194 = pneg %p104
      %p195 = pneg %p101
      %p196 = pneg %p130
      %p197 = pneg %p127
      %p198 = scmp.lt.s32.totalorder %s15, 1
      %s199 = scalar_select %p198, %s15, 1
      %s200 = smul.addr %s199, 7
      %s201 = smul.addr %s200, 4
      %s202 = scalar_lea.vmem %s4, %s201
      %p203 = scmp.lt.s32.totalorder %s15, 1
      %s204 = scalar_select %p203, %s15, 1
      %s205 = smul.addr %s204, 8
      %s206 = smul.addr %s205, 2
      %s207 = scalar_lea.vmem %s0, %s206
      %p208 = scmp.lt.s32.totalorder %s15, 1
      %s209 = scalar_select %p208, %s15, 1
      %s210 = smul.addr %s209, 8
      %s211 = smul.addr %s210, 2
      %s212 = scalar_lea.vmem %s3, %s211
      %p213 = scmp.lt.s32.totalorder %s15, 1
      %s214 = scalar_select %p213, %s15, 1
      %s215 = smul.addr %s214, 7
      %s216 = smul.addr %s215, 4
      %s217 = scalar_lea.vmem %s4, %s216
      %v219 = vld [vmem:[%s1] sm:$0x3]
      %v220 = vld [vmem:[%s207] sm:$0xff]
      %v221 = vld [vmem:[%s207 + $0x8] sm:$0x3f]
      %s222 = scalar_lea.vmem %s1, 2
      %v223 = vld [vmem:[%s222] sm:$0x3]
      %225 = vst [vmem:[#allocation1] ss:$4 sm:$0xff] %v220
      %s227 = scalar_lea.vmem [#allocation1], 32
      %228 = vst [vmem:[%s227] ss:$4 sm:$0xff] %v221
      %v229 = vld.sshfl [vmem:[#allocation1] sm:$0xff pattern:$0x73625140]
      %v231 = vld.sshfl [vmem:[#allocation1 + $0x8] sm:$0xff pattern:$0x73625140]
      %v233 = vld.sshfl [vmem:[#allocation1 + $0x10] sm:$0xff pattern:$0x73625140]
      %v235 = vld.sshfl [vmem:[#allocation1 + $0x18] sm:$0xff pattern:$0x73625140]
      %v237 = vld.sshfl [vmem:[#allocation1 + $0x20] sm:$0xff pattern:$0x73625140]
      %v239 = vld.sshfl [vmem:[#allocation1 + $0x28] sm:$0xff pattern:$0x73625140]
      %v241 = vld.sshfl [vmem:[#allocation1 + $0x30] sm:$0xff pattern:$0x73625140]
      %243 = vrot.lane.b32.xlu0 %v229, 127
      %v244 = vpop.permute.xlu0 %243
      %245 = vrot.lane.b32.xlu0 %v231, 127
      %v246 = vpop.permute.xlu0 %245
      %247 = vrot.lane.b32.xlu0 %v233, 127
      %v248 = vpop.permute.xlu0 %247
      %249 = vrot.lane.b32.xlu0 %v235, 127
      %v250 = vpop.permute.xlu0 %249
      %251 = vrot.lane.b32.xlu0 %v237, 127
      %v252 = vpop.permute.xlu0 %251
      %253 = vrot.lane.b32.xlu0 %v239, 127
      %v254 = vpop.permute.xlu0 %253
      %255 = vrot.lane.b32.xlu0 %v241, 127
      %v256 = vpop.permute.xlu0 %255
      %vm257 = vcmask 1039360
      %v258 = vsel %vm257, %v244, %v246
      %v259 = vsel %vm257, %v246, %v248
      %v260 = vsel %vm257, %v248, %v250
      %v261 = vsel %vm257, %v250, %v252
      %v262 = vsel %vm257, %v252, %v254
      %v263 = vsel %vm257, %v254, %v256
      %vm264 = vcmask 31744
      %v266 = vsel %vm264, %v223, 0
      %vm268 = vcmask 1041408
      %v270 = vsel %vm268, %v258, 0
      %v273 = vsel %vm268, %v259, 0
      %v276 = vsel %vm268, %v260, 0
      %v279 = vsel %vm268, %v261, 0
      %v282 = vsel %vm268, %v262, 0
      %v285 = vsel %vm268, %v263, 0
      %v288 = vsel %vm268, %v256, 0
      %290 = vmatpush.bf16.msra.mxu0 0
      %291 = vmatpush.bf16.msra.mxu0 0
      %292 = vmatpush.bf16.msra.mxu0 0
      %293 = vmatpush.bf16.msra.mxu0 0
      %294 = vmatpush.bf16.msra.mxu0 0
      %295 = vmatpush.bf16.msra.mxu0 0
      %296 = vmatpush.bf16.msra.mxu0 0
      %297 = vmatpush.bf16.msra.mxu0 %v270
      %298 = vmatmul.bf16.gmra.mxu0 %v266
      %v299 = vpop.f32.mrf.mxu0
      %v300 = vadd.f32 0.0, %v299
      %v301 = vpop.f32.mrf.mxu0
      %302 = vdwg.mxu0
      %303 = vmatpush.bf16.msra.mxu0 0
      %304 = vmatpush.bf16.msra.mxu0 0
      %305 = vmatpush.bf16.msra.mxu0 0
      %306 = vmatpush.bf16.msra.mxu0 0
      %307 = vmatpush.bf16.msra.mxu0 0
      %308 = vmatpush.bf16.msra.mxu0 0
      %309 = vmatpush.bf16.msra.mxu0 0
      %310 = vmatpush.bf16.msra.mxu0 %v273
      %311 = vmatmul.bf16.gmra.mxu0 %v266
      %v312 = vpop.f32.mrf.mxu0
      %v313 = vadd.f32 0.0, %v312
      %v314 = vpop.f32.mrf.mxu0
      %315 = vdwg.mxu0
      %316 = vmatpush.bf16.msra.mxu0 0
      %317 = vmatpush.bf16.msra.mxu0 0
      %318 = vmatpush.bf16.msra.mxu0 0
      %319 = vmatpush.bf16.msra.mxu0 0
      %320 = vmatpush.bf16.msra.mxu0 0
      %321 = vmatpush.bf16.msra.mxu0 0
      %322 = vmatpush.bf16.msra.mxu0 0
      %323 = vmatpush.bf16.msra.mxu0 %v276
      %324 = vmatmul.bf16.gmra.mxu0 %v266
      %v325 = vpop.f32.mrf.mxu0
      %v326 = vadd.f32 0.0, %v325
      %v327 = vpop.f32.mrf.mxu0
      %328 = vdwg.mxu0
      %329 = vmatpush.bf16.msra.mxu0 0
      %330 = vmatpush.bf16.msra.mxu0 0
      %331 = vmatpush.bf16.msra.mxu0 0
      %332 = vmatpush.bf16.msra.mxu0 0
      %333 = vmatpush.bf16.msra.mxu0 0
      %334 = vmatpush.bf16.msra.mxu0 0
      %335 = vmatpush.bf16.msra.mxu0 0
      %336 = vmatpush.bf16.msra.mxu0 %v279
      %337 = vmatmul.bf16.gmra.mxu0 %v266
      %v338 = vpop.f32.mrf.mxu0
      %v339 = vadd.f32 0.0, %v338
      %v340 = vpop.f32.mrf.mxu0
      %341 = vdwg.mxu0
      %342 = vmatpush.bf16.msra.mxu0 0
      %343 = vmatpush.bf16.msra.mxu0 0
      %344 = vmatpush.bf16.msra.mxu0 0
      %345 = vmatpush.bf16.msra.mxu0 0
      %346 = vmatpush.bf16.msra.mxu0 0
      %347 = vmatpush.bf16.msra.mxu0 0
      %348 = vmatpush.bf16.msra.mxu0 0
      %349 = vmatpush.bf16.msra.mxu0 %v282
      %350 = vmatmul.bf16.gmra.mxu0 %v266
      %v351 = vpop.f32.mrf.mxu0
      %v352 = vadd.f32 0.0, %v351
      %v353 = vpop.f32.mrf.mxu0
      %354 = vdwg.mxu0
      %355 = vmatpush.bf16.msra.mxu0 0
      %356 = vmatpush.bf16.msra.mxu0 0
      %357 = vmatpush.bf16.msra.mxu0 0
      %358 = vmatpush.bf16.msra.mxu0 0
      %359 = vmatpush.bf16.msra.mxu0 0
      %360 = vmatpush.bf16.msra.mxu0 0
      %361 = vmatpush.bf16.msra.mxu0 0
      %362 = vmatpush.bf16.msra.mxu0 %v285
      %363 = vmatmul.bf16.gmra.mxu0 %v266
      %v364 = vpop.f32.mrf.mxu0
      %v365 = vadd.f32 0.0, %v364
      %v366 = vpop.f32.mrf.mxu0
      %367 = vdwg.mxu0
      %368 = vmatpush.bf16.msra.mxu0 0
      %369 = vmatpush.bf16.msra.mxu0 0
      %370 = vmatpush.bf16.msra.mxu0 0
      %371 = vmatpush.bf16.msra.mxu0 0
      %372 = vmatpush.bf16.msra.mxu0 0
      %373 = vmatpush.bf16.msra.mxu0 0
      %374 = vmatpush.bf16.msra.mxu0 0
      %375 = vmatpush.bf16.msra.mxu0 %v288
      %376 = vmatmul.bf16.gmra.mxu0 %v266
      %v377 = vpop.f32.mrf.mxu0
      %v378 = vadd.f32 0.0, %v377
      %v379 = vpop.f32.mrf.mxu0
      %380 = vdwg.mxu0
      %381 = vst [vmem:[#allocation1] ss:$4 sm:$0xff] %v220
      %s382 = scalar_lea.vmem [#allocation1], 32
      %383 = vst [vmem:[%s382] ss:$4 sm:$0xff] %v221
      %v384 = vld.sshfl [vmem:[#allocation1] sm:$0xff pattern:$0x73625140]
      %v385 = vld.sshfl [vmem:[#allocation1 + $0x8] sm:$0xff pattern:$0x73625140]
      %v386 = vld.sshfl [vmem:[#allocation1 + $0x10] sm:$0xff pattern:$0x73625140]
      %v387 = vld.sshfl [vmem:[#allocation1 + $0x18] sm:$0xff pattern:$0x73625140]
      %v388 = vld.sshfl [vmem:[#allocation1 + $0x20] sm:$0xff pattern:$0x73625140]
      %v389 = vld.sshfl [vmem:[#allocation1 + $0x28] sm:$0xff pattern:$0x73625140]
      %v390 = vld.sshfl [vmem:[#allocation1 + $0x30] sm:$0xff pattern:$0x73625140]
      %v392 = vsel %vm264, %v219, 0
      %v394 = vsel %vm268, %v384, 0
      %v396 = vsel %vm268, %v385, 0
      %v398 = vsel %vm268, %v386, 0
      %v400 = vsel %vm268, %v387, 0
      %v402 = vsel %vm268, %v388, 0
      %v404 = vsel %vm268, %v389, 0
      %v406 = vsel %vm268, %v390, 0
      %408 = vmatpush.bf16.msra.mxu0 0
      %409 = vmatpush.bf16.msra.mxu0 0
      %410 = vmatpush.bf16.msra.mxu0 0
      %411 = vmatpush.bf16.msra.mxu0 0
      %412 = vmatpush.bf16.msra.mxu0 0
      %413 = vmatpush.bf16.msra.mxu0 0
      %414 = vmatpush.bf16.msra.mxu0 0
      %415 = vmatpush.bf16.msra.mxu0 %v394
      %416 = vmatmul.bf16.gmra.mxu0 %v392
      %v417 = vpop.f32.mrf.mxu0
      %v418 = vadd.f32 %v300, %v417
      %v419 = vpop.f32.mrf.mxu0
      %420 = vdwg.mxu0
      %421 = vmatpush.bf16.msra.mxu0 0
      %422 = vmatpush.bf16.msra.mxu0 0
      %423 = vmatpush.bf16.msra.mxu0 0
      %424 = vmatpush.bf16.msra.mxu0 0
      %425 = vmatpush.bf16.msra.mxu0 0
      %426 = vmatpush.bf16.msra.mxu0 0
      %427 = vmatpush.bf16.msra.mxu0 0
      %428 = vmatpush.bf16.msra.mxu0 %v396
      %429 = vmatmul.bf16.gmra.mxu0 %v392
      %v430 = vpop.f32.mrf.mxu0
      %v431 = vadd.f32 %v313, %v430
      %v432 = vpop.f32.mrf.mxu0
      %433 = vdwg.mxu0
      %434 = vmatpush.bf16.msra.mxu0 0
      %435 = vmatpush.bf16.msra.mxu0 0
      %436 = vmatpush.bf16.msra.mxu0 0
      %437 = vmatpush.bf16.msra.mxu0 0
      %438 = vmatpush.bf16.msra.mxu0 0
      %439 = vmatpush.bf16.msra.mxu0 0
      %440 = vmatpush.bf16.msra.mxu0 0
      %441 = vmatpush.bf16.msra.mxu0 %v398
      %442 = vmatmul.bf16.gmra.mxu0 %v392
      %v443 = vpop.f32.mrf.mxu0
      %v444 = vadd.f32 %v326, %v443
      %v445 = vpop.f32.mrf.mxu0
      %446 = vdwg.mxu0
      %447 = vmatpush.bf16.msra.mxu0 0
      %448 = vmatpush.bf16.msra.mxu0 0
      %449 = vmatpush.bf16.msra.mxu0 0
      %450 = vmatpush.bf16.msra.mxu0 0
      %451 = vmatpush.bf16.msra.mxu0 0
      %452 = vmatpush.bf16.msra.mxu0 0
      %453 = vmatpush.bf16.msra.mxu0 0
      %454 = vmatpush.bf16.msra.mxu0 %v400
      %455 = vmatmul.bf16.gmra.mxu0 %v392
      %v456 = vpop.f32.mrf.mxu0
      %v457 = vadd.f32 %v339, %v456
      %v458 = vpop.f32.mrf.mxu0
      %459 = vdwg.mxu0
      %460 = vmatpush.bf16.msra.mxu0 0
      %461 = vmatpush.bf16.msra.mxu0 0
      %462 = vmatpush.bf16.msra.mxu0 0
      %463 = vmatpush.bf16.msra.mxu0 0
      %464 = vmatpush.bf16.msra.mxu0 0
      %465 = vmatpush.bf16.msra.mxu0 0
      %466 = vmatpush.bf16.msra.mxu0 0
      %467 = vmatpush.bf16.msra.mxu0 %v402
      %468 = vmatmul.bf16.gmra.mxu0 %v392
      %v469 = vpop.f32.mrf.mxu0
      %v470 = vadd.f32 %v352, %v469
      %v471 = vpop.f32.mrf.mxu0
      %472 = vdwg.mxu0
      %473 = vmatpush.bf16.msra.mxu0 0
      %474 = vmatpush.bf16.msra.mxu0 0
      %475 = vmatpush.bf16.msra.mxu0 0
      %476 = vmatpush.bf16.msra.mxu0 0
      %477 = vmatpush.bf16.msra.mxu0 0
      %478 = vmatpush.bf16.msra.mxu0 0
      %479 = vmatpush.bf16.msra.mxu0 0
      %480 = vmatpush.bf16.msra.mxu0 %v404
      %481 = vmatmul.bf16.gmra.mxu0 %v392
      %v482 = vpop.f32.mrf.mxu0
      %v483 = vadd.f32 %v365, %v482
      %v484 = vpop.f32.mrf.mxu0
      %485 = vdwg.mxu0
      %486 = vmatpush.bf16.msra.mxu0 0
      %487 = vmatpush.bf16.msra.mxu0 0
      %488 = vmatpush.bf16.msra.mxu0 0
      %489 = vmatpush.bf16.msra.mxu0 0
      %490 = vmatpush.bf16.msra.mxu0 0
      %491 = vmatpush.bf16.msra.mxu0 0
      %492 = vmatpush.bf16.msra.mxu0 0
      %493 = vmatpush.bf16.msra.mxu0 %v406
      %494 = vmatmul.bf16.gmra.mxu0 %v392
      %v495 = vpop.f32.mrf.mxu0
      %v496 = vadd.f32 %v378, %v495
      %v497 = vpop.f32.mrf.mxu0
      %498 = vdwg.mxu0
      %s499 = scalar_lea.vmem %s1, 4
      %v500 = vld [vmem:[%s499] sm:$0x3]
      %v501 = vld [vmem:[%s207] sm:$0xff]
      %v502 = vld [vmem:[%s207 + $0x8] sm:$0x3f]
      %504 = vst [vmem:[#allocation1] ss:$4 sm:$0xff] %v501
      %s506 = scalar_lea.vmem [#allocation1], 32
      %507 = vst [vmem:[%s506] ss:$4 sm:$0xff] %v502
      %v508 = vld.sshfl [vmem:[#allocation1] sm:$0xff pattern:$0x73625140]
      %v510 = vld.sshfl [vmem:[#allocation1 + $0x8] sm:$0xff pattern:$0x73625140]
      %v512 = vld.sshfl [vmem:[#allocation1 + $0x10] sm:$0xff pattern:$0x73625140]
      %v514 = vld.sshfl [vmem:[#allocation1 + $0x18] sm:$0xff pattern:$0x73625140]
      %v516 = vld.sshfl [vmem:[#allocation1 + $0x20] sm:$0xff pattern:$0x73625140]
      %v518 = vld.sshfl [vmem:[#allocation1 + $0x28] sm:$0xff pattern:$0x73625140]
      %v520 = vld.sshfl [vmem:[#allocation1 + $0x30] sm:$0xff pattern:$0x73625140]
      %522 = vrot.lane.b32.xlu0 %v508, 126
      %v523 = vpop.permute.xlu0 %522
      %524 = vrot.lane.b32.xlu0 %v510, 126
      %v525 = vpop.permute.xlu0 %524
      %526 = vrot.lane.b32.xlu0 %v512, 126
      %v527 = vpop.permute.xlu0 %526
      %528 = vrot.lane.b32.xlu0 %v514, 126
      %v529 = vpop.permute.xlu0 %528
      %530 = vrot.lane.b32.xlu0 %v516, 126
      %v531 = vpop.permute.xlu0 %530
      %532 = vrot.lane.b32.xlu0 %v518, 126
      %v533 = vpop.permute.xlu0 %532
      %534 = vrot.lane.b32.xlu0 %v520, 126
      %v535 = vpop.permute.xlu0 %534
      %vm536 = vcmask 1031168
      %v537 = vsel %vm536, %v523, %v525
      %v538 = vsel %vm536, %v525, %v527
      %v539 = vsel %vm536, %v527, %v529
      %v540 = vsel %vm536, %v529, %v531
      %v541 = vsel %vm536, %v531, %v533
      %v542 = vsel %vm536, %v533, %v535
      %v544 = vsel %vm264, %v500, 0
      %v547 = vsel %vm268, %v537, 0
      %v550 = vsel %vm268, %v538, 0
      %v553 = vsel %vm268, %v539, 0
      %v556 = vsel %vm268, %v540, 0
      %v559 = vsel %vm268, %v541, 0
      %v562 = vsel %vm268, %v542, 0
      %v565 = vsel %vm268, %v535, 0
      %567 = vmatpush.bf16.msra.mxu0 0
      %568 = vmatpush.bf16.msra.mxu0 0
      %569 = vmatpush.bf16.msra.mxu0 0
      %570 = vmatpush.bf16.msra.mxu0 0
      %571 = vmatpush.bf16.msra.mxu0 0
      %572 = vmatpush.bf16.msra.mxu0 0
      %573 = vmatpush.bf16.msra.mxu0 0
      %574 = vmatpush.bf16.msra.mxu0 %v547
      %575 = vmatmul.bf16.gmra.mxu0 %v544
      %v576 = vpop.f32.mrf.mxu0
      %v577 = vadd.f32 0.0, %v576
      %v578 = vpop.f32.mrf.mxu0
      %579 = vdwg.mxu0
      %580 = vmatpush.bf16.msra.mxu0 0
      %581 = vmatpush.bf16.msra.mxu0 0
      %582 = vmatpush.bf16.msra.mxu0 0
      %583 = vmatpush.bf16.msra.mxu0 0
      %584 = vmatpush.bf16.msra.mxu0 0
      %585 = vmatpush.bf16.msra.mxu0 0
      %586 = vmatpush.bf16.msra.mxu0 0
      %587 = vmatpush.bf16.msra.mxu0 %v550
      %588 = vmatmul.bf16.gmra.mxu0 %v544
      %v589 = vpop.f32.mrf.mxu0
      %v590 = vadd.f32 0.0, %v589
      %v591 = vpop.f32.mrf.mxu0
      %592 = vdwg.mxu0
      %593 = vmatpush.bf16.msra.mxu0 0
      %594 = vmatpush.bf16.msra.mxu0 0
      %595 = vmatpush.bf16.msra.mxu0 0
      %596 = vmatpush.bf16.msra.mxu0 0
      %597 = vmatpush.bf16.msra.mxu0 0
      %598 = vmatpush.bf16.msra.mxu0 0
      %599 = vmatpush.bf16.msra.mxu0 0
      %600 = vmatpush.bf16.msra.mxu0 %v553
      %601 = vmatmul.bf16.gmra.mxu0 %v544
      %v602 = vpop.f32.mrf.mxu0
      %v603 = vadd.f32 0.0, %v602
      %v604 = vpop.f32.mrf.mxu0
      %605 = vdwg.mxu0
      %606 = vmatpush.bf16.msra.mxu0 0
      %607 = vmatpush.bf16.msra.mxu0 0
      %608 = vmatpush.bf16.msra.mxu0 0
      %609 = vmatpush.bf16.msra.mxu0 0
      %610 = vmatpush.bf16.msra.mxu0 0
      %611 = vmatpush.bf16.msra.mxu0 0
      %612 = vmatpush.bf16.msra.mxu0 0
      %613 = vmatpush.bf16.msra.mxu0 %v556
      %614 = vmatmul.bf16.gmra.mxu0 %v544
      %v615 = vpop.f32.mrf.mxu0
      %v616 = vadd.f32 0.0, %v615
      %v617 = vpop.f32.mrf.mxu0
      %618 = vdwg.mxu0
      %619 = vmatpush.bf16.msra.mxu0 0
      %620 = vmatpush.bf16.msra.mxu0 0
      %621 = vmatpush.bf16.msra.mxu0 0
      %622 = vmatpush.bf16.msra.mxu0 0
      %623 = vmatpush.bf16.msra.mxu0 0
      %624 = vmatpush.bf16.msra.mxu0 0
      %625 = vmatpush.bf16.msra.mxu0 0
      %626 = vmatpush.bf16.msra.mxu0 %v559
      %627 = vmatmul.bf16.gmra.mxu0 %v544
      %v628 = vpop.f32.mrf.mxu0
      %v629 = vadd.f32 0.0, %v628
      %v630 = vpop.f32.mrf.mxu0
      %631 = vdwg.mxu0
      %632 = vmatpush.bf16.msra.mxu0 0
      %633 = vmatpush.bf16.msra.mxu0 0
      %634 = vmatpush.bf16.msra.mxu0 0
      %635 = vmatpush.bf16.msra.mxu0 0
      %636 = vmatpush.bf16.msra.mxu0 0
      %637 = vmatpush.bf16.msra.mxu0 0
      %638 = vmatpush.bf16.msra.mxu0 0
      %639 = vmatpush.bf16.msra.mxu0 %v562
      %640 = vmatmul.bf16.gmra.mxu0 %v544
      %v641 = vpop.f32.mrf.mxu0
      %v642 = vadd.f32 0.0, %v641
      %v643 = vpop.f32.mrf.mxu0
      %644 = vdwg.mxu0
      %645 = vmatpush.bf16.msra.mxu0 0
      %646 = vmatpush.bf16.msra.mxu0 0
      %647 = vmatpush.bf16.msra.mxu0 0
      %648 = vmatpush.bf16.msra.mxu0 0
      %649 = vmatpush.bf16.msra.mxu0 0
      %650 = vmatpush.bf16.msra.mxu0 0
      %651 = vmatpush.bf16.msra.mxu0 0
      %652 = vmatpush.bf16.msra.mxu0 %v565
      %653 = vmatmul.bf16.gmra.mxu0 %v544
      %v654 = vpop.f32.mrf.mxu0
      %v655 = vadd.f32 0.0, %v654
      %v656 = vpop.f32.mrf.mxu0
      %657 = vdwg.mxu0
      %v658 = vadd.f32 %v418, %v577
      %v659 = vadd.f32 %v431, %v590
      %v660 = vadd.f32 %v444, %v603
      %v661 = vadd.f32 %v457, %v616
      %v662 = vadd.f32 %v470, %v629
      %v663 = vadd.f32 %v483, %v642
      %v664 = vadd.f32 %v496, %v655
      %s665 = scalar_lea.vmem %s1, 6
      %v666 = vld [vmem:[%s665] sm:$0x3]
      %v667 = vld [vmem:[%s207] sm:$0xff]
      %v668 = vld [vmem:[%s207 + $0x8] sm:$0x3f]
      %670 = vst [vmem:[#allocation1] ss:$4 sm:$0xff] %v667
      %s672 = scalar_lea.vmem [#allocation1], 32
      %673 = vst [vmem:[%s672] ss:$4 sm:$0xff] %v668
      %v674 = vld.sshfl [vmem:[#allocation1] sm:$0xff pattern:$0x73625140]
      %v676 = vld.sshfl [vmem:[#allocation1 + $0x8] sm:$0xff pattern:$0x73625140]
      %v678 = vld.sshfl [vmem:[#allocation1 + $0x10] sm:$0xff pattern:$0x73625140]
      %v680 = vld.sshfl [vmem:[#allocation1 + $0x18] sm:$0xff pattern:$0x73625140]
      %v682 = vld.sshfl [vmem:[#allocation1 + $0x20] sm:$0xff pattern:$0x73625140]
      %v684 = vld.sshfl [vmem:[#allocation1 + $0x28] sm:$0xff pattern:$0x73625140]
      %v686 = vld.sshfl [vmem:[#allocation1 + $0x30] sm:$0xff pattern:$0x73625140]
      %688 = vrot.lane.b32.xlu0 %v674, 118
      %v689 = vpop.permute.xlu0 %688
      %690 = vrot.lane.b32.xlu0 %v676, 118
      %v691 = vpop.permute.xlu0 %690
      %692 = vrot.lane.b32.xlu0 %v678, 118
      %v693 = vpop.permute.xlu0 %692
      %694 = vrot.lane.b32.xlu0 %v680, 118
      %v695 = vpop.permute.xlu0 %694
      %696 = vrot.lane.b32.xlu0 %v682, 118
      %v697 = vpop.permute.xlu0 %696
      %698 = vrot.lane.b32.xlu0 %v684, 118
      %v699 = vpop.permute.xlu0 %698
      %700 = vrot.lane.b32.xlu0 %v686, 118
      %v701 = vpop.permute.xlu0 %700
      %vm702 = vcmask 965632
      %v703 = vsel %vm702, %v689, %v691
      %v704 = vsel %vm702, %v691, %v693
      %v705 = vsel %vm702, %v693, %v695
      %v706 = vsel %vm702, %v695, %v697
      %v707 = vsel %vm702, %v697, %v699
      %v708 = vsel %vm702, %v699, %v701
      %v710 = vsel %vm264, %v666, 0
      %v713 = vsel %vm268, %v703, 0
      %v716 = vsel %vm268, %v704, 0
      %v719 = vsel %vm268, %v705, 0
      %v722 = vsel %vm268, %v706, 0
      %v725 = vsel %vm268, %v707, 0
      %v728 = vsel %vm268, %v708, 0
      %v731 = vsel %vm268, %v701, 0
      %733 = vmatpush.bf16.msra.mxu0 0
      %734 = vmatpush.bf16.msra.mxu0 0
      %735 = vmatpush.bf16.msra.mxu0 0
      %736 = vmatpush.bf16.msra.mxu0 0
      %737 = vmatpush.bf16.msra.mxu0 0
      %738 = vmatpush.bf16.msra.mxu0 0
      %739 = vmatpush.bf16.msra.mxu0 0
      %740 = vmatpush.bf16.msra.mxu0 %v713
      %741 = vmatmul.bf16.gmra.mxu0 %v710
      %v742 = vpop.f32.mrf.mxu0
      %v743 = vadd.f32 0.0, %v742
      %v744 = vpop.f32.mrf.mxu0
      %745 = vdwg.mxu0
      %746 = vmatpush.bf16.msra.mxu0 0
      %747 = vmatpush.bf16.msra.mxu0 0
      %748 = vmatpush.bf16.msra.mxu0 0
      %749 = vmatpush.bf16.msra.mxu0 0
      %750 = vmatpush.bf16.msra.mxu0 0
      %751 = vmatpush.bf16.msra.mxu0 0
      %752 = vmatpush.bf16.msra.mxu0 0
      %753 = vmatpush.bf16.msra.mxu0 %v716
      %754 = vmatmul.bf16.gmra.mxu0 %v710
      %v755 = vpop.f32.mrf.mxu0
      %v756 = vadd.f32 0.0, %v755
      %v757 = vpop.f32.mrf.mxu0
      %758 = vdwg.mxu0
      %759 = vmatpush.bf16.msra.mxu0 0
      %760 = vmatpush.bf16.msra.mxu0 0
      %761 = vmatpush.bf16.msra.mxu0 0
      %762 = vmatpush.bf16.msra.mxu0 0
      %763 = vmatpush.bf16.msra.mxu0 0
      %764 = vmatpush.bf16.msra.mxu0 0
      %765 = vmatpush.bf16.msra.mxu0 0
      %766 = vmatpush.bf16.msra.mxu0 %v719
      %767 = vmatmul.bf16.gmra.mxu0 %v710
      %v768 = vpop.f32.mrf.mxu0
      %v769 = vadd.f32 0.0, %v768
      %v770 = vpop.f32.mrf.mxu0
      %771 = vdwg.mxu0
      %772 = vmatpush.bf16.msra.mxu0 0
      %773 = vmatpush.bf16.msra.mxu0 0
      %774 = vmatpush.bf16.msra.mxu0 0
      %775 = vmatpush.bf16.msra.mxu0 0
      %776 = vmatpush.bf16.msra.mxu0 0
      %777 = vmatpush.bf16.msra.mxu0 0
      %778 = vmatpush.bf16.msra.mxu0 0
      %779 = vmatpush.bf16.msra.mxu0 %v722
      %780 = vmatmul.bf16.gmra.mxu0 %v710
      %v781 = vpop.f32.mrf.mxu0
      %v782 = vadd.f32 0.0, %v781
      %v783 = vpop.f32.mrf.mxu0
      %784 = vdwg.mxu0
      %785 = vmatpush.bf16.msra.mxu0 0
      %786 = vmatpush.bf16.msra.mxu0 0
      %787 = vmatpush.bf16.msra.mxu0 0
      %788 = vmatpush.bf16.msra.mxu0 0
      %789 = vmatpush.bf16.msra.mxu0 0
      %790 = vmatpush.bf16.msra.mxu0 0
      %791 = vmatpush.bf16.msra.mxu0 0
      %792 = vmatpush.bf16.msra.mxu0 %v725
      %793 = vmatmul.bf16.gmra.mxu0 %v710
      %v794 = vpop.f32.mrf.mxu0
      %v795 = vadd.f32 0.0, %v794
      %v796 = vpop.f32.mrf.mxu0
      %797 = vdwg.mxu0
      %798 = vmatpush.bf16.msra.mxu0 0
      %799 = vmatpush.bf16.msra.mxu0 0
      %800 = vmatpush.bf16.msra.mxu0 0
      %801 = vmatpush.bf16.msra.mxu0 0
      %802 = vmatpush.bf16.msra.mxu0 0
      %803 = vmatpush.bf16.msra.mxu0 0
      %804 = vmatpush.bf16.msra.mxu0 0
      %805 = vmatpush.bf16.msra.mxu0 %v728
      %806 = vmatmul.bf16.gmra.mxu0 %v710
      %v807 = vpop.f32.mrf.mxu0
      %v808 = vadd.f32 0.0, %v807
      %v809 = vpop.f32.mrf.mxu0
      %810 = vdwg.mxu0
      %811 = vmatpush.bf16.msra.mxu0 0
      %812 = vmatpush.bf16.msra.mxu0 0
      %813 = vmatpush.bf16.msra.mxu0 0
      %814 = vmatpush.bf16.msra.mxu0 0
      %815 = vmatpush.bf16.msra.mxu0 0
      %816 = vmatpush.bf16.msra.mxu0 0
      %817 = vmatpush.bf16.msra.mxu0 0
      %818 = vmatpush.bf16.msra.mxu0 %v731
      %819 = vmatmul.bf16.gmra.mxu0 %v710
      %v820 = vpop.f32.mrf.mxu0
      %v821 = vadd.f32 0.0, %v820
      %v822 = vpop.f32.mrf.mxu0
      %823 = vdwg.mxu0
      %v824 = vadd.f32 %v658, %v743
      %v825 = vadd.f32 %v659, %v756
      %v826 = vadd.f32 %v660, %v769
      %v827 = vadd.f32 %v661, %v782
      %v828 = vadd.f32 %v662, %v795
      %v829 = vadd.f32 %v663, %v808
      %v830 = vadd.f32 %v664, %v821
      %s831 = scalar_lea.vmem %s1, 8
      %v832 = vld [vmem:[%s831] sm:$0x3]
      %v833 = vld [vmem:[%s207] sm:$0xff]
      %v834 = vld [vmem:[%s207 + $0x8] sm:$0x3f]
      %836 = vst [vmem:[#allocation1] ss:$4 sm:$0xff] %v833
      %s838 = scalar_lea.vmem [#allocation1], 32
      %839 = vst [vmem:[%s838] ss:$4 sm:$0xff] %v834
      %v840 = vld.sshfl [vmem:[#allocation1] sm:$0xff pattern:$0x73625140]
      %v842 = vld.sshfl [vmem:[#allocation1 + $0x8] sm:$0xff pattern:$0x73625140]
      %v844 = vld.sshfl [vmem:[#allocation1 + $0x10] sm:$0xff pattern:$0x73625140]
      %v846 = vld.sshfl [vmem:[#allocation1 + $0x18] sm:$0xff pattern:$0x73625140]
      %v848 = vld.sshfl [vmem:[#allocation1 + $0x20] sm:$0xff pattern:$0x73625140]
      %v850 = vld.sshfl [vmem:[#allocation1 + $0x28] sm:$0xff pattern:$0x73625140]
      %v852 = vld.sshfl [vmem:[#allocation1 + $0x30] sm:$0xff pattern:$0x73625140]
      %854 = vrot.lane.b32.xlu0 %v840, 117
      %v855 = vpop.permute.xlu0 %854
      %856 = vrot.lane.b32.xlu0 %v842, 117
      %v857 = vpop.permute.xlu0 %856
      %858 = vrot.lane.b32.xlu0 %v844, 117
      %v859 = vpop.permute.xlu0 %858
      %860 = vrot.lane.b32.xlu0 %v846, 117
      %v861 = vpop.permute.xlu0 %860
      %862 = vrot.lane.b32.xlu0 %v848, 117
      %v863 = vpop.permute.xlu0 %862
      %864 = vrot.lane.b32.xlu0 %v850, 117
      %v865 = vpop.permute.xlu0 %864
      %866 = vrot.lane.b32.xlu0 %v852, 117
      %v867 = vpop.permute.xlu0 %866
      %vm868 = vcmask 957440
      %v869 = vsel %vm868, %v855, %v857
      %v870 = vsel %vm868, %v857, %v859
      %v871 = vsel %vm868, %v859, %v861
      %v872 = vsel %vm868, %v861, %v863
      %v873 = vsel %vm868, %v863, %v865
      %v874 = vsel %vm868, %v865, %v867
      %v876 = vsel %vm264, %v832, 0
      %v879 = vsel %vm268, %v869, 0
      %v882 = vsel %vm268, %v870, 0
      %v885 = vsel %vm268, %v871, 0
      %v888 = vsel %vm268, %v872, 0
      %v891 = vsel %vm268, %v873, 0
      %v894 = vsel %vm268, %v874, 0
      %v897 = vsel %vm268, %v867, 0
      %899 = vmatpush.bf16.msra.mxu0 0
      %900 = vmatpush.bf16.msra.mxu0 0
      %901 = vmatpush.bf16.msra.mxu0 0
      %902 = vmatpush.bf16.msra.mxu0 0
      %903 = vmatpush.bf16.msra.mxu0 0
      %904 = vmatpush.bf16.msra.mxu0 0
      %905 = vmatpush.bf16.msra.mxu0 0
      %906 = vmatpush.bf16.msra.mxu0 %v879
      %907 = vmatmul.bf16.gmra.mxu0 %v876
      %v908 = vpop.f32.mrf.mxu0
      %v909 = vadd.f32 0.0, %v908
      %v910 = vpop.f32.mrf.mxu0
      %911 = vdwg.mxu0
      %912 = vmatpush.bf16.msra.mxu0 0
      %913 = vmatpush.bf16.msra.mxu0 0
      %914 = vmatpush.bf16.msra.mxu0 0
      %915 = vmatpush.bf16.msra.mxu0 0
      %916 = vmatpush.bf16.msra.mxu0 0
      %917 = vmatpush.bf16.msra.mxu0 0
      %918 = vmatpush.bf16.msra.mxu0 0
      %919 = vmatpush.bf16.msra.mxu0 %v882
      %920 = vmatmul.bf16.gmra.mxu0 %v876
      %v921 = vpop.f32.mrf.mxu0
      %v922 = vadd.f32 0.0, %v921
      %v923 = vpop.f32.mrf.mxu0
      %924 = vdwg.mxu0
      %925 = vmatpush.bf16.msra.mxu0 0
      %926 = vmatpush.bf16.msra.mxu0 0
      %927 = vmatpush.bf16.msra.mxu0 0
      %928 = vmatpush.bf16.msra.mxu0 0
      %929 = vmatpush.bf16.msra.mxu0 0
      %930 = vmatpush.bf16.msra.mxu0 0
      %931 = vmatpush.bf16.msra.mxu0 0
      %932 = vmatpush.bf16.msra.mxu0 %v885
      %933 = vmatmul.bf16.gmra.mxu0 %v876
      %v934 = vpop.f32.mrf.mxu0
      %v935 = vadd.f32 0.0, %v934
      %v936 = vpop.f32.mrf.mxu0
      %937 = vdwg.mxu0
      %938 = vmatpush.bf16.msra.mxu0 0
      %939 = vmatpush.bf16.msra.mxu0 0
      %940 = vmatpush.bf16.msra.mxu0 0
      %941 = vmatpush.bf16.msra.mxu0 0
      %942 = vmatpush.bf16.msra.mxu0 0
      %943 = vmatpush.bf16.msra.mxu0 0
      %944 = vmatpush.bf16.msra.mxu0 0
      %945 = vmatpush.bf16.msra.mxu0 %v888
      %946 = vmatmul.bf16.gmra.mxu0 %v876
      %v947 = vpop.f32.mrf.mxu0
      %v948 = vadd.f32 0.0, %v947
      %v949 = vpop.f32.mrf.mxu0
      %950 = vdwg.mxu0
      %951 = vmatpush.bf16.msra.mxu0 0
      %952 = vmatpush.bf16.msra.mxu0 0
      %953 = vmatpush.bf16.msra.mxu0 0
      %954 = vmatpush.bf16.msra.mxu0 0
      %955 = vmatpush.bf16.msra.mxu0 0
      %956 = vmatpush.bf16.msra.mxu0 0
      %957 = vmatpush.bf16.msra.mxu0 0
      %958 = vmatpush.bf16.msra.mxu0 %v891
      %959 = vmatmul.bf16.gmra.mxu0 %v876
      %v960 = vpop.f32.mrf.mxu0
      %v961 = vadd.f32 0.0, %v960
      %v962 = vpop.f32.mrf.mxu0
      %963 = vdwg.mxu0
      %964 = vmatpush.bf16.msra.mxu0 0
      %965 = vmatpush.bf16.msra.mxu0 0
      %966 = vmatpush.bf16.msra.mxu0 0
      %967 = vmatpush.bf16.msra.mxu0 0
      %968 = vmatpush.bf16.msra.mxu0 0
      %969 = vmatpush.bf16.msra.mxu0 0
      %970 = vmatpush.bf16.msra.mxu0 0
      %971 = vmatpush.bf16.msra.mxu0 %v894
      %972 = vmatmul.bf16.gmra.mxu0 %v876
      %v973 = vpop.f32.mrf.mxu0
      %v974 = vadd.f32 0.0, %v973
      %v975 = vpop.f32.mrf.mxu0
      %976 = vdwg.mxu0
      %977 = vmatpush.bf16.msra.mxu0 0
      %978 = vmatpush.bf16.msra.mxu0 0
      %979 = vmatpush.bf16.msra.mxu0 0
      %980 = vmatpush.bf16.msra.mxu0 0
      %981 = vmatpush.bf16.msra.mxu0 0
      %982 = vmatpush.bf16.msra.mxu0 0
      %983 = vmatpush.bf16.msra.mxu0 0
      %984 = vmatpush.bf16.msra.mxu0 %v897
      %985 = vmatmul.bf16.gmra.mxu0 %v876
      %v986 = vpop.f32.mrf.mxu0
      %v987 = vadd.f32 0.0, %v986
      %v988 = vpop.f32.mrf.mxu0
      %989 = vdwg.mxu0
      %v990 = vadd.f32 %v824, %v909
      %v991 = vadd.f32 %v825, %v922
      %v992 = vadd.f32 %v826, %v935
      %v993 = vadd.f32 %v827, %v948
      %v994 = vadd.f32 %v828, %v961
      %v995 = vadd.f32 %v829, %v974
      %v996 = vadd.f32 %v830, %v987
      %s997 = scalar_lea.vmem %s1, 10
      %v998 = vld [vmem:[%s997] sm:$0x3]
      %v999 = vld [vmem:[%s207] sm:$0xff]
      %v1000 = vld [vmem:[%s207 + $0x8] sm:$0x3f]
      %1002 = vst [vmem:[#allocation1] ss:$4 sm:$0xff] %v999
      %s1004 = scalar_lea.vmem [#allocation1], 32
      %1005 = vst [vmem:[%s1004] ss:$4 sm:$0xff] %v1000
      %v1006 = vld.sshfl [vmem:[#allocation1] sm:$0xff pattern:$0x73625140]
      %v1008 = vld.sshfl [vmem:[#allocation1 + $0x8] sm:$0xff pattern:$0x73625140]
      %v1010 = vld.sshfl [vmem:[#allocation1 + $0x10] sm:$0xff pattern:$0x73625140]
      %v1012 = vld.sshfl [vmem:[#allocation1 + $0x18] sm:$0xff pattern:$0x73625140]
      %v1014 = vld.sshfl [vmem:[#allocation1 + $0x20] sm:$0xff pattern:$0x73625140]
      %v1016 = vld.sshfl [vmem:[#allocation1 + $0x28] sm:$0xff pattern:$0x73625140]
      %v1018 = vld.sshfl [vmem:[#allocation1 + $0x30] sm:$0xff pattern:$0x73625140]
      %1020 = vrot.lane.b32.xlu0 %v1006, 116
      %v1021 = vpop.permute.xlu0 %1020
      %1022 = vrot.lane.b32.xlu0 %v1008, 116
      %v1023 = vpop.permute.xlu0 %1022
      %1024 = vrot.lane.b32.xlu0 %v1010, 116
      %v1025 = vpop.permute.xlu0 %1024
      %1026 = vrot.lane.b32.xlu0 %v1012, 116
      %v1027 = vpop.permute.xlu0 %1026
      %1028 = vrot.lane.b32.xlu0 %v1014, 116
      %v1029 = vpop.permute.xlu0 %1028
      %1030 = vrot.lane.b32.xlu0 %v1016, 116
      %v1031 = vpop.permute.xlu0 %1030
      %1032 = vrot.lane.b32.xlu0 %v1018, 116
      %v1033 = vpop.permute.xlu0 %1032
      %vm1034 = vcmask 949248
      %v1035 = vsel %vm1034, %v1021, %v1023
      %v1036 = vsel %vm1034, %v1023, %v1025
      %v1037 = vsel %vm1034, %v1025, %v1027
      %v1038 = vsel %vm1034, %v1027, %v1029
      %v1039 = vsel %vm1034, %v1029, %v1031
      %v1040 = vsel %vm1034, %v1031, %v1033
      %v1042 = vsel %vm264, %v998, 0
      %v1045 = vsel %vm268, %v1035, 0
      %v1048 = vsel %vm268, %v1036, 0
      %v1051 = vsel %vm268, %v1037, 0
      %v1054 = vsel %vm268, %v1038, 0
      %v1057 = vsel %vm268, %v1039, 0
      %v1060 = vsel %vm268, %v1040, 0
      %v1063 = vsel %vm268, %v1033, 0
      %1065 = vmatpush.bf16.msra.mxu0 0
      %1066 = vmatpush.bf16.msra.mxu0 0
      %1067 = vmatpush.bf16.msra.mxu0 0
      %1068 = vmatpush.bf16.msra.mxu0 0
      %1069 = vmatpush.bf16.msra.mxu0 0
      %1070 = vmatpush.bf16.msra.mxu0 0
      %1071 = vmatpush.bf16.msra.mxu0 0
      %1072 = vmatpush.bf16.msra.mxu0 %v1045
      %1073 = vmatmul.bf16.gmra.mxu0 %v1042
      %v1074 = vpop.f32.mrf.mxu0
      %v1075 = vadd.f32 0.0, %v1074
      %v1076 = vpop.f32.mrf.mxu0
      %1077 = vdwg.mxu0
      %1078 = vmatpush.bf16.msra.mxu0 0
      %1079 = vmatpush.bf16.msra.mxu0 0
      %1080 = vmatpush.bf16.msra.mxu0 0
      %1081 = vmatpush.bf16.msra.mxu0 0
      %1082 = vmatpush.bf16.msra.mxu0 0
      %1083 = vmatpush.bf16.msra.mxu0 0
      %1084 = vmatpush.bf16.msra.mxu0 0
      %1085 = vmatpush.bf16.msra.mxu0 %v1048
      %1086 = vmatmul.bf16.gmra.mxu0 %v1042
      %v1087 = vpop.f32.mrf.mxu0
      %v1088 = vadd.f32 0.0, %v1087
      %v1089 = vpop.f32.mrf.mxu0
      %1090 = vdwg.mxu0
      %1091 = vmatpush.bf16.msra.mxu0 0
      %1092 = vmatpush.bf16.msra.mxu0 0
      %1093 = vmatpush.bf16.msra.mxu0 0
      %1094 = vmatpush.bf16.msra.mxu0 0
      %1095 = vmatpush.bf16.msra.mxu0 0
      %1096 = vmatpush.bf16.msra.mxu0 0
      %1097 = vmatpush.bf16.msra.mxu0 0
      %1098 = vmatpush.bf16.msra.mxu0 %v1051
      %1099 = vmatmul.bf16.gmra.mxu0 %v1042
      %v1100 = vpop.f32.mrf.mxu0
      %v1101 = vadd.f32 0.0, %v1100
      %v1102 = vpop.f32.mrf.mxu0
      %1103 = vdwg.mxu0
      %1104 = vmatpush.bf16.msra.mxu0 0
      %1105 = vmatpush.bf16.msra.mxu0 0
      %1106 = vmatpush.bf16.msra.mxu0 0
      %1107 = vmatpush.bf16.msra.mxu0 0
      %1108 = vmatpush.bf16.msra.mxu0 0
      %1109 = vmatpush.bf16.msra.mxu0 0
      %1110 = vmatpush.bf16.msra.mxu0 0
      %1111 = vmatpush.bf16.msra.mxu0 %v1054
      %1112 = vmatmul.bf16.gmra.mxu0 %v1042
      %v1113 = vpop.f32.mrf.mxu0
      %v1114 = vadd.f32 0.0, %v1113
      %v1115 = vpop.f32.mrf.mxu0
      %1116 = vdwg.mxu0
      %1117 = vmatpush.bf16.msra.mxu0 0
      %1118 = vmatpush.bf16.msra.mxu0 0
      %1119 = vmatpush.bf16.msra.mxu0 0
      %1120 = vmatpush.bf16.msra.mxu0 0
      %1121 = vmatpush.bf16.msra.mxu0 0
      %1122 = vmatpush.bf16.msra.mxu0 0
      %1123 = vmatpush.bf16.msra.mxu0 0
      %1124 = vmatpush.bf16.msra.mxu0 %v1057
      %1125 = vmatmul.bf16.gmra.mxu0 %v1042
      %v1126 = vpop.f32.mrf.mxu0
      %v1127 = vadd.f32 0.0, %v1126
      %v1128 = vpop.f32.mrf.mxu0
      %1129 = vdwg.mxu0
      %1130 = vmatpush.bf16.msra.mxu0 0
      %1131 = vmatpush.bf16.msra.mxu0 0
      %1132 = vmatpush.bf16.msra.mxu0 0
      %1133 = vmatpush.bf16.msra.mxu0 0
      %1134 = vmatpush.bf16.msra.mxu0 0
      %1135 = vmatpush.bf16.msra.mxu0 0
      %1136 = vmatpush.bf16.msra.mxu0 0
      %1137 = vmatpush.bf16.msra.mxu0 %v1060
      %1138 = vmatmul.bf16.gmra.mxu0 %v1042
      %v1139 = vpop.f32.mrf.mxu0
      %v1140 = vadd.f32 0.0, %v1139
      %v1141 = vpop.f32.mrf.mxu0
      %1142 = vdwg.mxu0
      %1143 = vmatpush.bf16.msra.mxu0 0
      %1144 = vmatpush.bf16.msra.mxu0 0
      %1145 = vmatpush.bf16.msra.mxu0 0
      %1146 = vmatpush.bf16.msra.mxu0 0
      %1147 = vmatpush.bf16.msra.mxu0 0
      %1148 = vmatpush.bf16.msra.mxu0 0
      %1149 = vmatpush.bf16.msra.mxu0 0
      %1150 = vmatpush.bf16.msra.mxu0 %v1063
      %1151 = vmatmul.bf16.gmra.mxu0 %v1042
      %v1152 = vpop.f32.mrf.mxu0
      %v1153 = vadd.f32 0.0, %v1152
      %v1154 = vpop.f32.mrf.mxu0
      %1155 = vdwg.mxu0
      %v1156 = vadd.f32 %v990, %v1075
      %v1157 = vadd.f32 %v991, %v1088
      %v1158 = vadd.f32 %v992, %v1101
      %v1159 = vadd.f32 %v993, %v1114
      %v1160 = vadd.f32 %v994, %v1127
      %v1161 = vadd.f32 %v995, %v1140
      %v1162 = vadd.f32 %v996, %v1153
      %s1163 = scalar_lea.vmem %s1, 12
      %v1164 = vld [vmem:[%s1163] sm:$0x3]
      %v1165 = vld [vmem:[%s207] sm:$0xff]
      %v1166 = vld [vmem:[%s207 + $0x8] sm:$0x3f]
      %1168 = vst [vmem:[#allocation1] ss:$4 sm:$0xff] %v1165
      %s1170 = scalar_lea.vmem [#allocation1], 32
      %1171 = vst [vmem:[%s1170] ss:$4 sm:$0xff] %v1166
      %v1172 = vld.sshfl [vmem:[#allocation1] sm:$0xff pattern:$0x73625140]
      %v1174 = vld.sshfl [vmem:[#allocation1 + $0x8] sm:$0xff pattern:$0x73625140]
      %v1176 = vld.sshfl [vmem:[#allocation1 + $0x10] sm:$0xff pattern:$0x73625140]
      %v1178 = vld.sshfl [vmem:[#allocation1 + $0x18] sm:$0xff pattern:$0x73625140]
      %v1180 = vld.sshfl [vmem:[#allocation1 + $0x20] sm:$0xff pattern:$0x73625140]
      %v1182 = vld.sshfl [vmem:[#allocation1 + $0x28] sm:$0xff pattern:$0x73625140]
      %v1184 = vld.sshfl [vmem:[#allocation1 + $0x30] sm:$0xff pattern:$0x73625140]
      %1186 = vrot.lane.b32.xlu0 %v1172, 108
      %v1187 = vpop.permute.xlu0 %1186
      %1188 = vrot.lane.b32.xlu0 %v1174, 108
      %v1189 = vpop.permute.xlu0 %1188
      %1190 = vrot.lane.b32.xlu0 %v1176, 108
      %v1191 = vpop.permute.xlu0 %1190
      %1192 = vrot.lane.b32.xlu0 %v1178, 108
      %v1193 = vpop.permute.xlu0 %1192
      %1194 = vrot.lane.b32.xlu0 %v1180, 108
      %v1195 = vpop.permute.xlu0 %1194
      %1196 = vrot.lane.b32.xlu0 %v1182, 108
      %v1197 = vpop.permute.xlu0 %1196
      %1198 = vrot.lane.b32.xlu0 %v1184, 108
      %v1199 = vpop.permute.xlu0 %1198
      %vm1200 = vcmask 883712
      %v1201 = vsel %vm1200, %v1187, %v1189
      %v1202 = vsel %vm1200, %v1189, %v1191
      %v1203 = vsel %vm1200, %v1191, %v1193
      %v1204 = vsel %vm1200, %v1193, %v1195
      %v1205 = vsel %vm1200, %v1195, %v1197
      %v1206 = vsel %vm1200, %v1197, %v1199
      %v1208 = vsel %vm264, %v1164, 0
      %v1211 = vsel %vm268, %v1201, 0
      %v1214 = vsel %vm268, %v1202, 0
      %v1217 = vsel %vm268, %v1203, 0
      %v1220 = vsel %vm268, %v1204, 0
      %v1223 = vsel %vm268, %v1205, 0
      %v1226 = vsel %vm268, %v1206, 0
      %v1229 = vsel %vm268, %v1199, 0
      %1231 = vmatpush.bf16.msra.mxu0 0
      %1232 = vmatpush.bf16.msra.mxu0 0
      %1233 = vmatpush.bf16.msra.mxu0 0
      %1234 = vmatpush.bf16.msra.mxu0 0
      %1235 = vmatpush.bf16.msra.mxu0 0
      %1236 = vmatpush.bf16.msra.mxu0 0
      %1237 = vmatpush.bf16.msra.mxu0 0
      %1238 = vmatpush.bf16.msra.mxu0 %v1211
      %1239 = vmatmul.bf16.gmra.mxu0 %v1208
      %v1240 = vpop.f32.mrf.mxu0
      %v1241 = vadd.f32 0.0, %v1240
      %v1242 = vpop.f32.mrf.mxu0
      %1243 = vdwg.mxu0
      %1244 = vmatpush.bf16.msra.mxu0 0
      %1245 = vmatpush.bf16.msra.mxu0 0
      %1246 = vmatpush.bf16.msra.mxu0 0
      %1247 = vmatpush.bf16.msra.mxu0 0
      %1248 = vmatpush.bf16.msra.mxu0 0
      %1249 = vmatpush.bf16.msra.mxu0 0
      %1250 = vmatpush.bf16.msra.mxu0 0
      %1251 = vmatpush.bf16.msra.mxu0 %v1214
      %1252 = vmatmul.bf16.gmra.mxu0 %v1208
      %v1253 = vpop.f32.mrf.mxu0
      %v1254 = vadd.f32 0.0, %v1253
      %v1255 = vpop.f32.mrf.mxu0
      %1256 = vdwg.mxu0
      %1257 = vmatpush.bf16.msra.mxu0 0
      %1258 = vmatpush.bf16.msra.mxu0 0
      %1259 = vmatpush.bf16.msra.mxu0 0
      %1260 = vmatpush.bf16.msra.mxu0 0
      %1261 = vmatpush.bf16.msra.mxu0 0
      %1262 = vmatpush.bf16.msra.mxu0 0
      %1263 = vmatpush.bf16.msra.mxu0 0
      %1264 = vmatpush.bf16.msra.mxu0 %v1217
      %1265 = vmatmul.bf16.gmra.mxu0 %v1208
      %v1266 = vpop.f32.mrf.mxu0
      %v1267 = vadd.f32 0.0, %v1266
      %v1268 = vpop.f32.mrf.mxu0
      %1269 = vdwg.mxu0
      %1270 = vmatpush.bf16.msra.mxu0 0
      %1271 = vmatpush.bf16.msra.mxu0 0
      %1272 = vmatpush.bf16.msra.mxu0 0
      %1273 = vmatpush.bf16.msra.mxu0 0
      %1274 = vmatpush.bf16.msra.mxu0 0
      %1275 = vmatpush.bf16.msra.mxu0 0
      %1276 = vmatpush.bf16.msra.mxu0 0
      %1277 = vmatpush.bf16.msra.mxu0 %v1220
      %1278 = vmatmul.bf16.gmra.mxu0 %v1208
      %v1279 = vpop.f32.mrf.mxu0
      %v1280 = vadd.f32 0.0, %v1279
      %v1281 = vpop.f32.mrf.mxu0
      %1282 = vdwg.mxu0
      %1283 = vmatpush.bf16.msra.mxu0 0
      %1284 = vmatpush.bf16.msra.mxu0 0
      %1285 = vmatpush.bf16.msra.mxu0 0
      %1286 = vmatpush.bf16.msra.mxu0 0
      %1287 = vmatpush.bf16.msra.mxu0 0
      %1288 = vmatpush.bf16.msra.mxu0 0
      %1289 = vmatpush.bf16.msra.mxu0 0
      %1290 = vmatpush.bf16.msra.mxu0 %v1223
      %1291 = vmatmul.bf16.gmra.mxu0 %v1208
      %v1292 = vpop.f32.mrf.mxu0
      %v1293 = vadd.f32 0.0, %v1292
      %v1294 = vpop.f32.mrf.mxu0
      %1295 = vdwg.mxu0
      %1296 = vmatpush.bf16.msra.mxu0 0
      %1297 = vmatpush.bf16.msra.mxu0 0
      %1298 = vmatpush.bf16.msra.mxu0 0
      %1299 = vmatpush.bf16.msra.mxu0 0
      %1300 = vmatpush.bf16.msra.mxu0 0
      %1301 = vmatpush.bf16.msra.mxu0 0
      %1302 = vmatpush.bf16.msra.mxu0 0
      %1303 = vmatpush.bf16.msra.mxu0 %v1226
      %1304 = vmatmul.bf16.gmra.mxu0 %v1208
      %v1305 = vpop.f32.mrf.mxu0
      %v1306 = vadd.f32 0.0, %v1305
      %v1307 = vpop.f32.mrf.mxu0
      %1308 = vdwg.mxu0
      %1309 = vmatpush.bf16.msra.mxu0 0
      %1310 = vmatpush.bf16.msra.mxu0 0
      %1311 = vmatpush.bf16.msra.mxu0 0
      %1312 = vmatpush.bf16.msra.mxu0 0
      %1313 = vmatpush.bf16.msra.mxu0 0
      %1314 = vmatpush.bf16.msra.mxu0 0
      %1315 = vmatpush.bf16.msra.mxu0 0
      %1316 = vmatpush.bf16.msra.mxu0 %v1229
      %1317 = vmatmul.bf16.gmra.mxu0 %v1208
      %v1318 = vpop.f32.mrf.mxu0
      %v1319 = vadd.f32 0.0, %v1318
      %v1320 = vpop.f32.mrf.mxu0
      %1321 = vdwg.mxu0
      %v1322 = vadd.f32 %v1156, %v1241
      %v1323 = vadd.f32 %v1157, %v1254
      %v1324 = vadd.f32 %v1158, %v1267
      %v1325 = vadd.f32 %v1159, %v1280
      %v1326 = vadd.f32 %v1160, %v1293
      %v1327 = vadd.f32 %v1161, %v1306
      %v1328 = vadd.f32 %v1162, %v1319
      %s1329 = scalar_lea.vmem %s1, 14
      %v1330 = vld [vmem:[%s1329] sm:$0x3]
      %v1331 = vld [vmem:[%s207] sm:$0xff]
      %v1332 = vld [vmem:[%s207 + $0x8] sm:$0x3f]
      %1334 = vst [vmem:[#allocation1] ss:$4 sm:$0xff] %v1331
      %s1336 = scalar_lea.vmem [#allocation1], 32
      %1337 = vst [vmem:[%s1336] ss:$4 sm:$0xff] %v1332
      %v1338 = vld.sshfl [vmem:[#allocation1] sm:$0xff pattern:$0x73625140]
      %v1340 = vld.sshfl [vmem:[#allocation1 + $0x8] sm:$0xff pattern:$0x73625140]
      %v1342 = vld.sshfl [vmem:[#allocation1 + $0x10] sm:$0xff pattern:$0x73625140]
      %v1344 = vld.sshfl [vmem:[#allocation1 + $0x18] sm:$0xff pattern:$0x73625140]
      %v1346 = vld.sshfl [vmem:[#allocation1 + $0x20] sm:$0xff pattern:$0x73625140]
      %v1348 = vld.sshfl [vmem:[#allocation1 + $0x28] sm:$0xff pattern:$0x73625140]
      %v1350 = vld.sshfl [vmem:[#allocation1 + $0x30] sm:$0xff pattern:$0x73625140]
      %1352 = vrot.lane.b32.xlu0 %v1338, 107
      %v1353 = vpop.permute.xlu0 %1352
      %1354 = vrot.lane.b32.xlu0 %v1340, 107
      %v1355 = vpop.permute.xlu0 %1354
      %1356 = vrot.lane.b32.xlu0 %v1342, 107
      %v1357 = vpop.permute.xlu0 %1356
      %1358 = vrot.lane.b32.xlu0 %v1344, 107
      %v1359 = vpop.permute.xlu0 %1358
      %1360 = vrot.lane.b32.xlu0 %v1346, 107
      %v1361 = vpop.permute.xlu0 %1360
      %1362 = vrot.lane.b32.xlu0 %v1348, 107
      %v1363 = vpop.permute.xlu0 %1362
      %1364 = vrot.lane.b32.xlu0 %v1350, 107
      %v1365 = vpop.permute.xlu0 %1364
      %vm1366 = vcmask 875520
      %v1367 = vsel %vm1366, %v1353, %v1355
      %v1368 = vsel %vm1366, %v1355, %v1357
      %v1369 = vsel %vm1366, %v1357, %v1359
      %v1370 = vsel %vm1366, %v1359, %v1361
      %v1371 = vsel %vm1366, %v1361, %v1363
      %v1372 = vsel %vm1366, %v1363, %v1365
      %v1374 = vsel %vm264, %v1330, 0
      %v1377 = vsel %vm268, %v1367, 0
      %v1380 = vsel %vm268, %v1368, 0
      %v1383 = vsel %vm268, %v1369, 0
      %v1386 = vsel %vm268, %v1370, 0
      %v1389 = vsel %vm268, %v1371, 0
      %v1392 = vsel %vm268, %v1372, 0
      %v1395 = vsel %vm268, %v1365, 0
      %1397 = vmatpush.bf16.msra.mxu0 0
      %1398 = vmatpush.bf16.msra.mxu0 0
      %1399 = vmatpush.bf16.msra.mxu0 0
      %1400 = vmatpush.bf16.msra.mxu0 0
      %1401 = vmatpush.bf16.msra.mxu0 0
      %1402 = vmatpush.bf16.msra.mxu0 0
      %1403 = vmatpush.bf16.msra.mxu0 0
      %1404 = vmatpush.bf16.msra.mxu0 %v1377
      %1405 = vmatmul.bf16.gmra.mxu0 %v1374
      %v1406 = vpop.f32.mrf.mxu0
      %v1407 = vadd.f32 0.0, %v1406
      %v1408 = vpop.f32.mrf.mxu0
      %1409 = vdwg.mxu0
      %1410 = vmatpush.bf16.msra.mxu0 0
      %1411 = vmatpush.bf16.msra.mxu0 0
      %1412 = vmatpush.bf16.msra.mxu0 0
      %1413 = vmatpush.bf16.msra.mxu0 0
      %1414 = vmatpush.bf16.msra.mxu0 0
      %1415 = vmatpush.bf16.msra.mxu0 0
      %1416 = vmatpush.bf16.msra.mxu0 0
      %1417 = vmatpush.bf16.msra.mxu0 %v1380
      %1418 = vmatmul.bf16.gmra.mxu0 %v1374
      %v1419 = vpop.f32.mrf.mxu0
      %v1420 = vadd.f32 0.0, %v1419
      %v1421 = vpop.f32.mrf.mxu0
      %1422 = vdwg.mxu0
      %1423 = vmatpush.bf16.msra.mxu0 0
      %1424 = vmatpush.bf16.msra.mxu0 0
      %1425 = vmatpush.bf16.msra.mxu0 0
      %1426 = vmatpush.bf16.msra.mxu0 0
      %1427 = vmatpush.bf16.msra.mxu0 0
      %1428 = vmatpush.bf16.msra.mxu0 0
      %1429 = vmatpush.bf16.msra.mxu0 0
      %1430 = vmatpush.bf16.msra.mxu0 %v1383
      %1431 = vmatmul.bf16.gmra.mxu0 %v1374
      %v1432 = vpop.f32.mrf.mxu0
      %v1433 = vadd.f32 0.0, %v1432
      %v1434 = vpop.f32.mrf.mxu0
      %1435 = vdwg.mxu0
      %1436 = vmatpush.bf16.msra.mxu0 0
      %1437 = vmatpush.bf16.msra.mxu0 0
      %1438 = vmatpush.bf16.msra.mxu0 0
      %1439 = vmatpush.bf16.msra.mxu0 0
      %1440 = vmatpush.bf16.msra.mxu0 0
      %1441 = vmatpush.bf16.msra.mxu0 0
      %1442 = vmatpush.bf16.msra.mxu0 0
      %1443 = vmatpush.bf16.msra.mxu0 %v1386
      %1444 = vmatmul.bf16.gmra.mxu0 %v1374
      %v1445 = vpop.f32.mrf.mxu0
      %v1446 = vadd.f32 0.0, %v1445
      %v1447 = vpop.f32.mrf.mxu0
      %1448 = vdwg.mxu0
      %1449 = vmatpush.bf16.msra.mxu0 0
      %1450 = vmatpush.bf16.msra.mxu0 0
      %1451 = vmatpush.bf16.msra.mxu0 0
      %1452 = vmatpush.bf16.msra.mxu0 0
      %1453 = vmatpush.bf16.msra.mxu0 0
      %1454 = vmatpush.bf16.msra.mxu0 0
      %1455 = vmatpush.bf16.msra.mxu0 0
      %1456 = vmatpush.bf16.msra.mxu0 %v1389
      %1457 = vmatmul.bf16.gmra.mxu0 %v1374
      %v1458 = vpop.f32.mrf.mxu0
      %v1459 = vadd.f32 0.0, %v1458
      %v1460 = vpop.f32.mrf.mxu0
      %1461 = vdwg.mxu0
      %1462 = vmatpush.bf16.msra.mxu0 0
      %1463 = vmatpush.bf16.msra.mxu0 0
      %1464 = vmatpush.bf16.msra.mxu0 0
      %1465 = vmatpush.bf16.msra.mxu0 0
      %1466 = vmatpush.bf16.msra.mxu0 0
      %1467 = vmatpush.bf16.msra.mxu0 0
      %1468 = vmatpush.bf16.msra.mxu0 0
      %1469 = vmatpush.bf16.msra.mxu0 %v1392
      %1470 = vmatmul.bf16.gmra.mxu0 %v1374
      %v1471 = vpop.f32.mrf.mxu0
      %v1472 = vadd.f32 0.0, %v1471
      %v1473 = vpop.f32.mrf.mxu0
      %1474 = vdwg.mxu0
      %1475 = vmatpush.bf16.msra.mxu0 0
      %1476 = vmatpush.bf16.msra.mxu0 0
      %1477 = vmatpush.bf16.msra.mxu0 0
      %1478 = vmatpush.bf16.msra.mxu0 0
      %1479 = vmatpush.bf16.msra.mxu0 0
      %1480 = vmatpush.bf16.msra.mxu0 0
      %1481 = vmatpush.bf16.msra.mxu0 0
      %1482 = vmatpush.bf16.msra.mxu0 %v1395
      %1483 = vmatmul.bf16.gmra.mxu0 %v1374
      %v1484 = vpop.f32.mrf.mxu0
      %v1485 = vadd.f32 0.0, %v1484
      %v1486 = vpop.f32.mrf.mxu0
      %1487 = vdwg.mxu0
      %v1488 = vadd.f32 %v1322, %v1407
      %v1489 = vadd.f32 %v1323, %v1420
      %v1490 = vadd.f32 %v1324, %v1433
      %v1491 = vadd.f32 %v1325, %v1446
      %v1492 = vadd.f32 %v1326, %v1459
      %v1493 = vadd.f32 %v1327, %v1472
      %v1494 = vadd.f32 %v1328, %v1485
      %s1495 = scalar_lea.vmem %s1, 16
      %v1496 = vld [vmem:[%s1495] sm:$0x3]
      %v1497 = vld [vmem:[%s207] sm:$0xff]
      %v1498 = vld [vmem:[%s207 + $0x8] sm:$0x3f]
      %1500 = vst [vmem:[#allocation1] ss:$4 sm:$0xff] %v1497
      %s1502 = scalar_lea.vmem [#allocation1], 32
      %1503 = vst [vmem:[%s1502] ss:$4 sm:$0xff] %v1498
      %v1504 = vld.sshfl [vmem:[#allocation1] sm:$0xff pattern:$0x73625140]
      %v1506 = vld.sshfl [vmem:[#allocation1 + $0x8] sm:$0xff pattern:$0x73625140]
      %v1508 = vld.sshfl [vmem:[#allocation1 + $0x10] sm:$0xff pattern:$0x73625140]
      %v1510 = vld.sshfl [vmem:[#allocation1 + $0x18] sm:$0xff pattern:$0x73625140]
      %v1512 = vld.sshfl [vmem:[#allocation1 + $0x20] sm:$0xff pattern:$0x73625140]
      %v1514 = vld.sshfl [vmem:[#allocation1 + $0x28] sm:$0xff pattern:$0x73625140]
      %v1516 = vld.sshfl [vmem:[#allocation1 + $0x30] sm:$0xff pattern:$0x73625140]
      %1518 = vrot.lane.b32.xlu0 %v1504, 106
      %v1519 = vpop.permute.xlu0 %1518
      %1520 = vrot.lane.b32.xlu0 %v1506, 106
      %v1521 = vpop.permute.xlu0 %1520
      %1522 = vrot.lane.b32.xlu0 %v1508, 106
      %v1523 = vpop.permute.xlu0 %1522
      %1524 = vrot.lane.b32.xlu0 %v1510, 106
      %v1525 = vpop.permute.xlu0 %1524
      %1526 = vrot.lane.b32.xlu0 %v1512, 106
      %v1527 = vpop.permute.xlu0 %1526
      %1528 = vrot.lane.b32.xlu0 %v1514, 106
      %v1529 = vpop.permute.xlu0 %1528
      %1530 = vrot.lane.b32.xlu0 %v1516, 106
      %v1531 = vpop.permute.xlu0 %1530
      %vm1532 = vcmask 867328
      %v1533 = vsel %vm1532, %v1519, %v1521
      %v1534 = vsel %vm1532, %v1521, %v1523
      %v1535 = vsel %vm1532, %v1523, %v1525
      %v1536 = vsel %vm1532, %v1525, %v1527
      %v1537 = vsel %vm1532, %v1527, %v1529
      %v1538 = vsel %vm1532, %v1529, %v1531
      %v1540 = vsel %vm264, %v1496, 0
      %v1543 = vsel %vm268, %v1533, 0
      %v1546 = vsel %vm268, %v1534, 0
      %v1549 = vsel %vm268, %v1535, 0
      %v1552 = vsel %vm268, %v1536, 0
      %v1555 = vsel %vm268, %v1537, 0
      %v1558 = vsel %vm268, %v1538, 0
      %v1561 = vsel %vm268, %v1531, 0
      %1563 = vmatpush.bf16.msra.mxu0 0
      %1564 = vmatpush.bf16.msra.mxu0 0
      %1565 = vmatpush.bf16.msra.mxu0 0
      %1566 = vmatpush.bf16.msra.mxu0 0
      %1567 = vmatpush.bf16.msra.mxu0 0
      %1568 = vmatpush.bf16.msra.mxu0 0
      %1569 = vmatpush.bf16.msra.mxu0 0
      %1570 = vmatpush.bf16.msra.mxu0 %v1543
      %1571 = vmatmul.bf16.gmra.mxu0 %v1540
      %v1572 = vpop.f32.mrf.mxu0
      %v1573 = vadd.f32 0.0, %v1572
      %v1574 = vpop.f32.mrf.mxu0
      %1575 = vdwg.mxu0
      %1576 = vmatpush.bf16.msra.mxu0 0
      %1577 = vmatpush.bf16.msra.mxu0 0
      %1578 = vmatpush.bf16.msra.mxu0 0
      %1579 = vmatpush.bf16.msra.mxu0 0
      %1580 = vmatpush.bf16.msra.mxu0 0
      %1581 = vmatpush.bf16.msra.mxu0 0
      %1582 = vmatpush.bf16.msra.mxu0 0
      %1583 = vmatpush.bf16.msra.mxu0 %v1546
      %1584 = vmatmul.bf16.gmra.mxu0 %v1540
      %v1585 = vpop.f32.mrf.mxu0
      %v1586 = vadd.f32 0.0, %v1585
      %v1587 = vpop.f32.mrf.mxu0
      %1588 = vdwg.mxu0
      %1589 = vmatpush.bf16.msra.mxu0 0
      %1590 = vmatpush.bf16.msra.mxu0 0
      %1591 = vmatpush.bf16.msra.mxu0 0
      %1592 = vmatpush.bf16.msra.mxu0 0
      %1593 = vmatpush.bf16.msra.mxu0 0
      %1594 = vmatpush.bf16.msra.mxu0 0
      %1595 = vmatpush.bf16.msra.mxu0 0
      %1596 = vmatpush.bf16.msra.mxu0 %v1549
      %1597 = vmatmul.bf16.gmra.mxu0 %v1540
      %v1598 = vpop.f32.mrf.mxu0
      %v1599 = vadd.f32 0.0, %v1598
      %v1600 = vpop.f32.mrf.mxu0
      %1601 = vdwg.mxu0
      %1602 = vmatpush.bf16.msra.mxu0 0
      %1603 = vmatpush.bf16.msra.mxu0 0
      %1604 = vmatpush.bf16.msra.mxu0 0
      %1605 = vmatpush.bf16.msra.mxu0 0
      %1606 = vmatpush.bf16.msra.mxu0 0
      %1607 = vmatpush.bf16.msra.mxu0 0
      %1608 = vmatpush.bf16.msra.mxu0 0
      %1609 = vmatpush.bf16.msra.mxu0 %v1552
      %1610 = vmatmul.bf16.gmra.mxu0 %v1540
      %v1611 = vpop.f32.mrf.mxu0
      %v1612 = vadd.f32 0.0, %v1611
      %v1613 = vpop.f32.mrf.mxu0
      %1614 = vdwg.mxu0
      %1615 = vmatpush.bf16.msra.mxu0 0
      %1616 = vmatpush.bf16.msra.mxu0 0
      %1617 = vmatpush.bf16.msra.mxu0 0
      %1618 = vmatpush.bf16.msra.mxu0 0
      %1619 = vmatpush.bf16.msra.mxu0 0
      %1620 = vmatpush.bf16.msra.mxu0 0
      %1621 = vmatpush.bf16.msra.mxu0 0
      %1622 = vmatpush.bf16.msra.mxu0 %v1555
      %1623 = vmatmul.bf16.gmra.mxu0 %v1540
      %v1624 = vpop.f32.mrf.mxu0
      %v1625 = vadd.f32 0.0, %v1624
      %v1626 = vpop.f32.mrf.mxu0
      %1627 = vdwg.mxu0
      %1628 = vmatpush.bf16.msra.mxu0 0
      %1629 = vmatpush.bf16.msra.mxu0 0
      %1630 = vmatpush.bf16.msra.mxu0 0
      %1631 = vmatpush.bf16.msra.mxu0 0
      %1632 = vmatpush.bf16.msra.mxu0 0
      %1633 = vmatpush.bf16.msra.mxu0 0
      %1634 = vmatpush.bf16.msra.mxu0 0
      %1635 = vmatpush.bf16.msra.mxu0 %v1558
      %1636 = vmatmul.bf16.gmra.mxu0 %v1540
      %v1637 = vpop.f32.mrf.mxu0
      %v1638 = vadd.f32 0.0, %v1637
      %v1639 = vpop.f32.mrf.mxu0
      %1640 = vdwg.mxu0
      %1641 = vmatpush.bf16.msra.mxu0 0
      %1642 = vmatpush.bf16.msra.mxu0 0
      %1643 = vmatpush.bf16.msra.mxu0 0
      %1644 = vmatpush.bf16.msra.mxu0 0
      %1645 = vmatpush.bf16.msra.mxu0 0
      %1646 = vmatpush.bf16.msra.mxu0 0
      %1647 = vmatpush.bf16.msra.mxu0 0
      %1648 = vmatpush.bf16.msra.mxu0 %v1561
      %1649 = vmatmul.bf16.gmra.mxu0 %v1540
      %v1650 = vpop.f32.mrf.mxu0
      %v1651 = vadd.f32 0.0, %v1650
      %v1652 = vpop.f32.mrf.mxu0
      %1653 = vdwg.mxu0
      %v1654 = vadd.f32 %v1488, %v1573
      %v1655 = vadd.f32 %v1489, %v1586
      %v1656 = vadd.f32 %v1490, %v1599
      %v1657 = vadd.f32 %v1491, %v1612
      %v1658 = vadd.f32 %v1492, %v1625
      %v1659 = vadd.f32 %v1493, %v1638
      %v1660 = vadd.f32 %v1494, %v1651
      %s1661 = scalar_lea.vmem %s1, 18
      %v1662 = vld [vmem:[%s1661] sm:$0x3]
      %v1663 = vld [vmem:[%s207] sm:$0xff]
      %v1664 = vld [vmem:[%s207 + $0x8] sm:$0xff]
      %1666 = vst [vmem:[#allocation1] ss:$4 sm:$0xff] %v1663
      %s1668 = scalar_lea.vmem [#allocation1], 32
      %1669 = vst [vmem:[%s1668] ss:$4 sm:$0xff] %v1664
      %v1670 = vld.sshfl [vmem:[#allocation1] sm:$0xff pattern:$0x73625140]
      %v1672 = vld.sshfl [vmem:[#allocation1 + $0x8] sm:$0xff pattern:$0x73625140]
      %v1674 = vld.sshfl [vmem:[#allocation1 + $0x10] sm:$0xff pattern:$0x73625140]
      %v1676 = vld.sshfl [vmem:[#allocation1 + $0x18] sm:$0xff pattern:$0x73625140]
      %v1678 = vld.sshfl [vmem:[#allocation1 + $0x20] sm:$0xff pattern:$0x73625140]
      %v1680 = vld.sshfl [vmem:[#allocation1 + $0x28] sm:$0xff pattern:$0x73625140]
      %v1682 = vld.sshfl [vmem:[#allocation1 + $0x30] sm:$0xff pattern:$0x73625140]
      %v1684 = vld.sshfl [vmem:[#allocation1 + $0x38] sm:$0xff pattern:$0x73625140]
      %1686 = vrot.lane.b32.xlu0 %v1670, 28
      %v1687 = vpop.permute.xlu0 %1686
      %1688 = vrot.lane.b32.xlu0 %v1672, 28
      %v1689 = vpop.permute.xlu0 %1688
      %1690 = vrot.lane.b32.xlu0 %v1674, 28
      %v1691 = vpop.permute.xlu0 %1690
      %1692 = vrot.lane.b32.xlu0 %v1676, 28
      %v1693 = vpop.permute.xlu0 %1692
      %1694 = vrot.lane.b32.xlu0 %v1678, 28
      %v1695 = vpop.permute.xlu0 %1694
      %1696 = vrot.lane.b32.xlu0 %v1680, 28
      %v1697 = vpop.permute.xlu0 %1696
      %1698 = vrot.lane.b32.xlu0 %v1682, 28
      %v1699 = vpop.permute.xlu0 %1698
      %1700 = vrot.lane.b32.xlu0 %v1684, 28
      %v1701 = vpop.permute.xlu0 %1700
      %vm1702 = vcmask 228352
      %v1703 = vsel %vm1702, %v1687, %v1689
      %v1704 = vsel %vm1702, %v1689, %v1691
      %v1705 = vsel %vm1702, %v1691, %v1693
      %v1706 = vsel %vm1702, %v1693, %v1695
      %v1707 = vsel %vm1702, %v1695, %v1697
      %v1708 = vsel %vm1702, %v1697, %v1699
      %v1709 = vsel %vm1702, %v1699, %v1701
      %v1711 = vsel %vm264, %v1662, 0
      %v1714 = vsel %vm268, %v1703, 0
      %v1717 = vsel %vm268, %v1704, 0
      %v1720 = vsel %vm268, %v1705, 0
      %v1723 = vsel %vm268, %v1706, 0
      %v1726 = vsel %vm268, %v1707, 0
      %v1729 = vsel %vm268, %v1708, 0
      %v1732 = vsel %vm268, %v1709, 0
      %1734 = vmatpush.bf16.msra.mxu0 0
      %1735 = vmatpush.bf16.msra.mxu0 0
      %1736 = vmatpush.bf16.msra.mxu0 0
      %1737 = vmatpush.bf16.msra.mxu0 0
      %1738 = vmatpush.bf16.msra.mxu0 0
      %1739 = vmatpush.bf16.msra.mxu0 0
      %1740 = vmatpush.bf16.msra.mxu0 0
      %1741 = vmatpush.bf16.msra.mxu0 %v1714
      %1742 = vmatmul.bf16.gmra.mxu0 %v1711
      %v1743 = vpop.f32.mrf.mxu0
      %v1744 = vadd.f32 0.0, %v1743
      %v1745 = vpop.f32.mrf.mxu0
      %1746 = vdwg.mxu0
      %1747 = vmatpush.bf16.msra.mxu0 0
      %1748 = vmatpush.bf16.msra.mxu0 0
      %1749 = vmatpush.bf16.msra.mxu0 0
      %1750 = vmatpush.bf16.msra.mxu0 0
      %1751 = vmatpush.bf16.msra.mxu0 0
      %1752 = vmatpush.bf16.msra.mxu0 0
      %1753 = vmatpush.bf16.msra.mxu0 0
      %1754 = vmatpush.bf16.msra.mxu0 %v1717
      %1755 = vmatmul.bf16.gmra.mxu0 %v1711
      %v1756 = vpop.f32.mrf.mxu0
      %v1757 = vadd.f32 0.0, %v1756
      %v1758 = vpop.f32.mrf.mxu0
      %1759 = vdwg.mxu0
      %1760 = vmatpush.bf16.msra.mxu0 0
      %1761 = vmatpush.bf16.msra.mxu0 0
      %1762 = vmatpush.bf16.msra.mxu0 0
      %1763 = vmatpush.bf16.msra.mxu0 0
      %1764 = vmatpush.bf16.msra.mxu0 0
      %1765 = vmatpush.bf16.msra.mxu0 0
      %1766 = vmatpush.bf16.msra.mxu0 0
      %1767 = vmatpush.bf16.msra.mxu0 %v1720
      %1768 = vmatmul.bf16.gmra.mxu0 %v1711
      %v1769 = vpop.f32.mrf.mxu0
      %v1770 = vadd.f32 0.0, %v1769
      %v1771 = vpop.f32.mrf.mxu0
      %1772 = vdwg.mxu0
      %1773 = vmatpush.bf16.msra.mxu0 0
      %1774 = vmatpush.bf16.msra.mxu0 0
      %1775 = vmatpush.bf16.msra.mxu0 0
      %1776 = vmatpush.bf16.msra.mxu0 0
      %1777 = vmatpush.bf16.msra.mxu0 0
      %1778 = vmatpush.bf16.msra.mxu0 0
      %1779 = vmatpush.bf16.msra.mxu0 0
      %1780 = vmatpush.bf16.msra.mxu0 %v1723
      %1781 = vmatmul.bf16.gmra.mxu0 %v1711
      %v1782 = vpop.f32.mrf.mxu0
      %v1783 = vadd.f32 0.0, %v1782
      %v1784 = vpop.f32.mrf.mxu0
      %1785 = vdwg.mxu0
      %1786 = vmatpush.bf16.msra.mxu0 0
      %1787 = vmatpush.bf16.msra.mxu0 0
      %1788 = vmatpush.bf16.msra.mxu0 0
      %1789 = vmatpush.bf16.msra.mxu0 0
      %1790 = vmatpush.bf16.msra.mxu0 0
      %1791 = vmatpush.bf16.msra.mxu0 0
      %1792 = vmatpush.bf16.msra.mxu0 0
      %1793 = vmatpush.bf16.msra.mxu0 %v1726
      %1794 = vmatmul.bf16.gmra.mxu0 %v1711
      %v1795 = vpop.f32.mrf.mxu0
      %v1796 = vadd.f32 0.0, %v1795
      %v1797 = vpop.f32.mrf.mxu0
      %1798 = vdwg.mxu0
      %1799 = vmatpush.bf16.msra.mxu0 0
      %1800 = vmatpush.bf16.msra.mxu0 0
      %1801 = vmatpush.bf16.msra.mxu0 0
      %1802 = vmatpush.bf16.msra.mxu0 0
      %1803 = vmatpush.bf16.msra.mxu0 0
      %1804 = vmatpush.bf16.msra.mxu0 0
      %1805 = vmatpush.bf16.msra.mxu0 0
      %1806 = vmatpush.bf16.msra.mxu0 %v1729
      %1807 = vmatmul.bf16.gmra.mxu0 %v1711
      %v1808 = vpop.f32.mrf.mxu0
      %v1809 = vadd.f32 0.0, %v1808
      %v1810 = vpop.f32.mrf.mxu0
      %1811 = vdwg.mxu0
      %1812 = vmatpush.bf16.msra.mxu0 0
      %1813 = vmatpush.bf16.msra.mxu0 0
      %1814 = vmatpush.bf16.msra.mxu0 0
      %1815 = vmatpush.bf16.msra.mxu0 0
      %1816 = vmatpush.bf16.msra.mxu0 0
      %1817 = vmatpush.bf16.msra.mxu0 0
      %1818 = vmatpush.bf16.msra.mxu0 0
      %1819 = vmatpush.bf16.msra.mxu0 %v1732
      %1820 = vmatmul.bf16.gmra.mxu0 %v1711
      %v1821 = vpop.f32.mrf.mxu0
      %v1822 = vadd.f32 0.0, %v1821
      %v1823 = vpop.f32.mrf.mxu0
      %1824 = vdwg.mxu0
      %v1825 = vadd.f32 %v1654, %v1744
      %v1826 = vadd.f32 %v1655, %v1757
      %v1827 = vadd.f32 %v1656, %v1770
      %v1828 = vadd.f32 %v1657, %v1783
      %v1829 = vadd.f32 %v1658, %v1796
      %v1830 = vadd.f32 %v1659, %v1809
      %v1831 = vadd.f32 %v1660, %v1822
      %s1832 = scalar_lea.vmem %s1, 20
      %v1833 = vld [vmem:[%s1832] sm:$0x3]
      %v1834 = vld [vmem:[%s207] sm:$0xff]
      %v1835 = vld [vmem:[%s207 + $0x8] sm:$0xff]
      %1837 = vst [vmem:[#allocation1] ss:$4 sm:$0xff] %v1834
      %s1839 = scalar_lea.vmem [#allocation1], 32
      %1840 = vst [vmem:[%s1839] ss:$4 sm:$0xff] %v1835
      %v1841 = vld.sshfl [vmem:[#allocation1] sm:$0xff pattern:$0x73625140]
      %v1843 = vld.sshfl [vmem:[#allocation1 + $0x8] sm:$0xff pattern:$0x73625140]
      %v1845 = vld.sshfl [vmem:[#allocation1 + $0x10] sm:$0xff pattern:$0x73625140]
      %v1847 = vld.sshfl [vmem:[#allocation1 + $0x18] sm:$0xff pattern:$0x73625140]
      %v1849 = vld.sshfl [vmem:[#allocation1 + $0x20] sm:$0xff pattern:$0x73625140]
      %v1851 = vld.sshfl [vmem:[#allocation1 + $0x28] sm:$0xff pattern:$0x73625140]
      %v1853 = vld.sshfl [vmem:[#allocation1 + $0x30] sm:$0xff pattern:$0x73625140]
      %v1855 = vld.sshfl [vmem:[#allocation1 + $0x38] sm:$0xff pattern:$0x73625140]
      %1857 = vrot.lane.b32.xlu0 %v1841, 27
      %v1858 = vpop.permute.xlu0 %1857
      %1859 = vrot.lane.b32.xlu0 %v1843, 27
      %v1860 = vpop.permute.xlu0 %1859
      %1861 = vrot.lane.b32.xlu0 %v1845, 27
      %v1862 = vpop.permute.xlu0 %1861
      %1863 = vrot.lane.b32.xlu0 %v1847, 27
      %v1864 = vpop.permute.xlu0 %1863
      %1865 = vrot.lane.b32.xlu0 %v1849, 27
      %v1866 = vpop.permute.xlu0 %1865
      %1867 = vrot.lane.b32.xlu0 %v1851, 27
      %v1868 = vpop.permute.xlu0 %1867
      %1869 = vrot.lane.b32.xlu0 %v1853, 27
      %v1870 = vpop.permute.xlu0 %1869
      %1871 = vrot.lane.b32.xlu0 %v1855, 27
      %v1872 = vpop.permute.xlu0 %1871
      %vm1873 = vcmask 220160
      %v1874 = vsel %vm1873, %v1858, %v1860
      %v1875 = vsel %vm1873, %v1860, %v1862
      %v1876 = vsel %vm1873, %v1862, %v1864
      %v1877 = vsel %vm1873, %v1864, %v1866
      %v1878 = vsel %vm1873, %v1866, %v1868
      %v1879 = vsel %vm1873, %v1868, %v1870
      %v1880 = vsel %vm1873, %v1870, %v1872
      %v1882 = vsel %vm264, %v1833, 0
      %v1885 = vsel %vm268, %v1874, 0
      %v1888 = vsel %vm268, %v1875, 0
      %v1891 = vsel %vm268, %v1876, 0
      %v1894 = vsel %vm268, %v1877, 0
      %v1897 = vsel %vm268, %v1878, 0
      %v1900 = vsel %vm268, %v1879, 0
      %v1903 = vsel %vm268, %v1880, 0
      %1905 = vmatpush.bf16.msra.mxu0 0
      %1906 = vmatpush.bf16.msra.mxu0 0
      %1907 = vmatpush.bf16.msra.mxu0 0
      %1908 = vmatpush.bf16.msra.mxu0 0
      %1909 = vmatpush.bf16.msra.mxu0 0
      %1910 = vmatpush.bf16.msra.mxu0 0
      %1911 = vmatpush.bf16.msra.mxu0 0
      %1912 = vmatpush.bf16.msra.mxu0 %v1885
      %1913 = vmatmul.bf16.gmra.mxu0 %v1882
      %v1914 = vpop.f32.mrf.mxu0
      %v1915 = vadd.f32 0.0, %v1914
      %v1916 = vpop.f32.mrf.mxu0
      %1917 = vdwg.mxu0
      %1918 = vmatpush.bf16.msra.mxu0 0
      %1919 = vmatpush.bf16.msra.mxu0 0
      %1920 = vmatpush.bf16.msra.mxu0 0
      %1921 = vmatpush.bf16.msra.mxu0 0
      %1922 = vmatpush.bf16.msra.mxu0 0
      %1923 = vmatpush.bf16.msra.mxu0 0
      %1924 = vmatpush.bf16.msra.mxu0 0
      %1925 = vmatpush.bf16.msra.mxu0 %v1888
      %1926 = vmatmul.bf16.gmra.mxu0 %v1882
      %v1927 = vpop.f32.mrf.mxu0
      %v1928 = vadd.f32 0.0, %v1927
      %v1929 = vpop.f32.mrf.mxu0
      %1930 = vdwg.mxu0
      %1931 = vmatpush.bf16.msra.mxu0 0
      %1932 = vmatpush.bf16.msra.mxu0 0
      %1933 = vmatpush.bf16.msra.mxu0 0
      %1934 = vmatpush.bf16.msra.mxu0 0
      %1935 = vmatpush.bf16.msra.mxu0 0
      %1936 = vmatpush.bf16.msra.mxu0 0
      %1937 = vmatpush.bf16.msra.mxu0 0
      %1938 = vmatpush.bf16.msra.mxu0 %v1891
      %1939 = vmatmul.bf16.gmra.mxu0 %v1882
      %v1940 = vpop.f32.mrf.mxu0
      %v1941 = vadd.f32 0.0, %v1940
      %v1942 = vpop.f32.mrf.mxu0
      %1943 = vdwg.mxu0
      %1944 = vmatpush.bf16.msra.mxu0 0
      %1945 = vmatpush.bf16.msra.mxu0 0
      %1946 = vmatpush.bf16.msra.mxu0 0
      %1947 = vmatpush.bf16.msra.mxu0 0
      %1948 = vmatpush.bf16.msra.mxu0 0
      %1949 = vmatpush.bf16.msra.mxu0 0
      %1950 = vmatpush.bf16.msra.mxu0 0
      %1951 = vmatpush.bf16.msra.mxu0 %v1894
      %1952 = vmatmul.bf16.gmra.mxu0 %v1882
      %v1953 = vpop.f32.mrf.mxu0
      %v1954 = vadd.f32 0.0, %v1953
      %v1955 = vpop.f32.mrf.mxu0
      %1956 = vdwg.mxu0
      %1957 = vmatpush.bf16.msra.mxu0 0
      %1958 = vmatpush.bf16.msra.mxu0 0
      %1959 = vmatpush.bf16.msra.mxu0 0
      %1960 = vmatpush.bf16.msra.mxu0 0
      %1961 = vmatpush.bf16.msra.mxu0 0
      %1962 = vmatpush.bf16.msra.mxu0 0
      %1963 = vmatpush.bf16.msra.mxu0 0
      %1964 = vmatpush.bf16.msra.mxu0 %v1897
      %1965 = vmatmul.bf16.gmra.mxu0 %v1882
      %v1966 = vpop.f32.mrf.mxu0
      %v1967 = vadd.f32 0.0, %v1966
      %v1968 = vpop.f32.mrf.mxu0
      %1969 = vdwg.mxu0
      %1970 = vmatpush.bf16.msra.mxu0 0
      %1971 = vmatpush.bf16.msra.mxu0 0
      %1972 = vmatpush.bf16.msra.mxu0 0
      %1973 = vmatpush.bf16.msra.mxu0 0
      %1974 = vmatpush.bf16.msra.mxu0 0
      %1975 = vmatpush.bf16.msra.mxu0 0
      %1976 = vmatpush.bf16.msra.mxu0 0
      %1977 = vmatpush.bf16.msra.mxu0 %v1900
      %1978 = vmatmul.bf16.gmra.mxu0 %v1882
      %v1979 = vpop.f32.mrf.mxu0
      %v1980 = vadd.f32 0.0, %v1979
      %v1981 = vpop.f32.mrf.mxu0
      %1982 = vdwg.mxu0
      %1983 = vmatpush.bf16.msra.mxu0 0
      %1984 = vmatpush.bf16.msra.mxu0 0
      %1985 = vmatpush.bf16.msra.mxu0 0
      %1986 = vmatpush.bf16.msra.mxu0 0
      %1987 = vmatpush.bf16.msra.mxu0 0
      %1988 = vmatpush.bf16.msra.mxu0 0
      %1989 = vmatpush.bf16.msra.mxu0 0
      %1990 = vmatpush.bf16.msra.mxu0 %v1903
      %1991 = vmatmul.bf16.gmra.mxu0 %v1882
      %v1992 = vpop.f32.mrf.mxu0
      %v1993 = vadd.f32 0.0, %v1992
      %v1994 = vpop.f32.mrf.mxu0
      %1995 = vdwg.mxu0
      %v1996 = vadd.f32 %v1825, %v1915
      %v1997 = vadd.f32 %v1826, %v1928
      %v1998 = vadd.f32 %v1827, %v1941
      %v1999 = vadd.f32 %v1828, %v1954
      %v2000 = vadd.f32 %v1829, %v1967
      %v2001 = vadd.f32 %v1830, %v1980
      %v2002 = vadd.f32 %v1831, %v1993
      %s2003 = scalar_lea.vmem %s1, 22
      %v2004 = vld [vmem:[%s2003] sm:$0x3]
      %v2005 = vld [vmem:[%s207] sm:$0xff]
      %v2006 = vld [vmem:[%s207 + $0x8] sm:$0xff]
      %2008 = vst [vmem:[#allocation1] ss:$4 sm:$0xff] %v2005
      %s2010 = scalar_lea.vmem [#allocation1], 32
      %2011 = vst [vmem:[%s2010] ss:$4 sm:$0xff] %v2006
      %v2012 = vld.sshfl [vmem:[#allocation1] sm:$0xff pattern:$0x73625140]
      %v2014 = vld.sshfl [vmem:[#allocation1 + $0x8] sm:$0xff pattern:$0x73625140]
      %v2016 = vld.sshfl [vmem:[#allocation1 + $0x10] sm:$0xff pattern:$0x73625140]
      %v2018 = vld.sshfl [vmem:[#allocation1 + $0x18] sm:$0xff pattern:$0x73625140]
      %v2020 = vld.sshfl [vmem:[#allocation1 + $0x20] sm:$0xff pattern:$0x73625140]
      %v2022 = vld.sshfl [vmem:[#allocation1 + $0x28] sm:$0xff pattern:$0x73625140]
      %v2024 = vld.sshfl [vmem:[#allocation1 + $0x30] sm:$0xff pattern:$0x73625140]
      %v2026 = vld.sshfl [vmem:[#allocation1 + $0x38] sm:$0xff pattern:$0x73625140]
      %2028 = vrot.lane.b32.xlu0 %v2012, 26
      %v2029 = vpop.permute.xlu0 %2028
      %2030 = vrot.lane.b32.xlu0 %v2014, 26
      %v2031 = vpop.permute.xlu0 %2030
      %2032 = vrot.lane.b32.xlu0 %v2016, 26
      %v2033 = vpop.permute.xlu0 %2032
      %2034 = vrot.lane.b32.xlu0 %v2018, 26
      %v2035 = vpop.permute.xlu0 %2034
      %2036 = vrot.lane.b32.xlu0 %v2020, 26
      %v2037 = vpop.permute.xlu0 %2036
      %2038 = vrot.lane.b32.xlu0 %v2022, 26
      %v2039 = vpop.permute.xlu0 %2038
      %2040 = vrot.lane.b32.xlu0 %v2024, 26
      %v2041 = vpop.permute.xlu0 %2040
      %2042 = vrot.lane.b32.xlu0 %v2026, 26
      %v2043 = vpop.permute.xlu0 %2042
      %vm2044 = vcmask 211968
      %v2045 = vsel %vm2044, %v2029, %v2031
      %v2046 = vsel %vm2044, %v2031, %v2033
      %v2047 = vsel %vm2044, %v2033, %v2035
      %v2048 = vsel %vm2044, %v2035, %v2037
      %v2049 = vsel %vm2044, %v2037, %v2039
      %v2050 = vsel %vm2044, %v2039, %v2041
      %v2051 = vsel %vm2044, %v2041, %v2043
      %v2053 = vsel %vm264, %v2004, 0
      %v2056 = vsel %vm268, %v2045, 0
      %v2059 = vsel %vm268, %v2046, 0
      %v2062 = vsel %vm268, %v2047, 0
      %v2065 = vsel %vm268, %v2048, 0
      %v2068 = vsel %vm268, %v2049, 0
      %v2071 = vsel %vm268, %v2050, 0
      %v2074 = vsel %vm268, %v2051, 0
      %2076 = vmatpush.bf16.msra.mxu0 0
      %2077 = vmatpush.bf16.msra.mxu0 0
      %2078 = vmatpush.bf16.msra.mxu0 0
      %2079 = vmatpush.bf16.msra.mxu0 0
      %2080 = vmatpush.bf16.msra.mxu0 0
      %2081 = vmatpush.bf16.msra.mxu0 0
      %2082 = vmatpush.bf16.msra.mxu0 0
      %2083 = vmatpush.bf16.msra.mxu0 %v2056
      %2084 = vmatmul.bf16.gmra.mxu0 %v2053
      %v2085 = vpop.f32.mrf.mxu0
      %v2086 = vadd.f32 0.0, %v2085
      %v2087 = vpop.f32.mrf.mxu0
      %2088 = vdwg.mxu0
      %2089 = vmatpush.bf16.msra.mxu0 0
      %2090 = vmatpush.bf16.msra.mxu0 0
      %2091 = vmatpush.bf16.msra.mxu0 0
      %2092 = vmatpush.bf16.msra.mxu0 0
      %2093 = vmatpush.bf16.msra.mxu0 0
      %2094 = vmatpush.bf16.msra.mxu0 0
      %2095 = vmatpush.bf16.msra.mxu0 0
      %2096 = vmatpush.bf16.msra.mxu0 %v2059
      %2097 = vmatmul.bf16.gmra.mxu0 %v2053
      %v2098 = vpop.f32.mrf.mxu0
      %v2099 = vadd.f32 0.0, %v2098
      %v2100 = vpop.f32.mrf.mxu0
      %2101 = vdwg.mxu0
      %2102 = vmatpush.bf16.msra.mxu0 0
      %2103 = vmatpush.bf16.msra.mxu0 0
      %2104 = vmatpush.bf16.msra.mxu0 0
      %2105 = vmatpush.bf16.msra.mxu0 0
      %2106 = vmatpush.bf16.msra.mxu0 0
      %2107 = vmatpush.bf16.msra.mxu0 0
      %2108 = vmatpush.bf16.msra.mxu0 0
      %2109 = vmatpush.bf16.msra.mxu0 %v2062
      %2110 = vmatmul.bf16.gmra.mxu0 %v2053
      %v2111 = vpop.f32.mrf.mxu0
      %v2112 = vadd.f32 0.0, %v2111
      %v2113 = vpop.f32.mrf.mxu0
      %2114 = vdwg.mxu0
      %2115 = vmatpush.bf16.msra.mxu0 0
      %2116 = vmatpush.bf16.msra.mxu0 0
      %2117 = vmatpush.bf16.msra.mxu0 0
      %2118 = vmatpush.bf16.msra.mxu0 0
      %2119 = vmatpush.bf16.msra.mxu0 0
      %2120 = vmatpush.bf16.msra.mxu0 0
      %2121 = vmatpush.bf16.msra.mxu0 0
      %2122 = vmatpush.bf16.msra.mxu0 %v2065
      %2123 = vmatmul.bf16.gmra.mxu0 %v2053
      %v2124 = vpop.f32.mrf.mxu0
      %v2125 = vadd.f32 0.0, %v2124
      %v2126 = vpop.f32.mrf.mxu0
      %2127 = vdwg.mxu0
      %2128 = vmatpush.bf16.msra.mxu0 0
      %2129 = vmatpush.bf16.msra.mxu0 0
      %2130 = vmatpush.bf16.msra.mxu0 0
      %2131 = vmatpush.bf16.msra.mxu0 0
      %2132 = vmatpush.bf16.msra.mxu0 0
      %2133 = vmatpush.bf16.msra.mxu0 0
      %2134 = vmatpush.bf16.msra.mxu0 0
      %2135 = vmatpush.bf16.msra.mxu0 %v2068
      %2136 = vmatmul.bf16.gmra.mxu0 %v2053
      %v2137 = vpop.f32.mrf.mxu0
      %v2138 = vadd.f32 0.0, %v2137
      %v2139 = vpop.f32.mrf.mxu0
      %2140 = vdwg.mxu0
      %2141 = vmatpush.bf16.msra.mxu0 0
      %2142 = vmatpush.bf16.msra.mxu0 0
      %2143 = vmatpush.bf16.msra.mxu0 0
      %2144 = vmatpush.bf16.msra.mxu0 0
      %2145 = vmatpush.bf16.msra.mxu0 0
      %2146 = vmatpush.bf16.msra.mxu0 0
      %2147 = vmatpush.bf16.msra.mxu0 0
      %2148 = vmatpush.bf16.msra.mxu0 %v2071
      %2149 = vmatmul.bf16.gmra.mxu0 %v2053
      %v2150 = vpop.f32.mrf.mxu0
      %v2151 = vadd.f32 0.0, %v2150
      %v2152 = vpop.f32.mrf.mxu0
      %2153 = vdwg.mxu0
      %2154 = vmatpush.bf16.msra.mxu0 0
      %2155 = vmatpush.bf16.msra.mxu0 0
      %2156 = vmatpush.bf16.msra.mxu0 0
      %2157 = vmatpush.bf16.msra.mxu0 0
      %2158 = vmatpush.bf16.msra.mxu0 0
      %2159 = vmatpush.bf16.msra.mxu0 0
      %2160 = vmatpush.bf16.msra.mxu0 0
      %2161 = vmatpush.bf16.msra.mxu0 %v2074
      %2162 = vmatmul.bf16.gmra.mxu0 %v2053
      %v2163 = vpop.f32.mrf.mxu0
      %v2164 = vadd.f32 0.0, %v2163
      %v2165 = vpop.f32.mrf.mxu0
      %2166 = vdwg.mxu0
      %v2167 = vadd.f32 %v1996, %v2086
      %v2168 = vadd.f32 %v1997, %v2099
      %v2169 = vadd.f32 %v1998, %v2112
      %v2170 = vadd.f32 %v1999, %v2125
      %v2171 = vadd.f32 %v2000, %v2138
      %v2172 = vadd.f32 %v2001, %v2151
      %v2173 = vadd.f32 %v2002, %v2164
      %s2174 = scalar_lea.vmem %s1, 24
      %v2175 = vld [vmem:[%s2174] sm:$0x3]
      %v2176 = vld [vmem:[%s207] sm:$0xff]
      %v2177 = vld [vmem:[%s207 + $0x8] sm:$0xff]
      %2179 = vst [vmem:[#allocation1] ss:$4 sm:$0xff] %v2176
      %s2181 = scalar_lea.vmem [#allocation1], 32
      %2182 = vst [vmem:[%s2181] ss:$4 sm:$0xff] %v2177
      %v2183 = vld.sshfl [vmem:[#allocation1] sm:$0xff pattern:$0x73625140]
      %v2185 = vld.sshfl [vmem:[#allocation1 + $0x8] sm:$0xff pattern:$0x73625140]
      %v2187 = vld.sshfl [vmem:[#allocation1 + $0x10] sm:$0xff pattern:$0x73625140]
      %v2189 = vld.sshfl [vmem:[#allocation1 + $0x18] sm:$0xff pattern:$0x73625140]
      %v2191 = vld.sshfl [vmem:[#allocation1 + $0x20] sm:$0xff pattern:$0x73625140]
      %v2193 = vld.sshfl [vmem:[#allocation1 + $0x28] sm:$0xff pattern:$0x73625140]
      %v2195 = vld.sshfl [vmem:[#allocation1 + $0x30] sm:$0xff pattern:$0x73625140]
      %v2197 = vld.sshfl [vmem:[#allocation1 + $0x38] sm:$0xff pattern:$0x73625140]
      %2199 = vrot.lane.b32.xlu0 %v2183, 18
      %v2200 = vpop.permute.xlu0 %2199
      %2201 = vrot.lane.b32.xlu0 %v2185, 18
      %v2202 = vpop.permute.xlu0 %2201
      %2203 = vrot.lane.b32.xlu0 %v2187, 18
      %v2204 = vpop.permute.xlu0 %2203
      %2205 = vrot.lane.b32.xlu0 %v2189, 18
      %v2206 = vpop.permute.xlu0 %2205
      %2207 = vrot.lane.b32.xlu0 %v2191, 18
      %v2208 = vpop.permute.xlu0 %2207
      %2209 = vrot.lane.b32.xlu0 %v2193, 18
      %v2210 = vpop.permute.xlu0 %2209
      %2211 = vrot.lane.b32.xlu0 %v2195, 18
      %v2212 = vpop.permute.xlu0 %2211
      %2213 = vrot.lane.b32.xlu0 %v2197, 18
      %v2214 = vpop.permute.xlu0 %2213
      %vm2215 = vcmask 146432
      %v2216 = vsel %vm2215, %v2200, %v2202
      %v2217 = vsel %vm2215, %v2202, %v2204
      %v2218 = vsel %vm2215, %v2204, %v2206
      %v2219 = vsel %vm2215, %v2206, %v2208
      %v2220 = vsel %vm2215, %v2208, %v2210
      %v2221 = vsel %vm2215, %v2210, %v2212
      %v2222 = vsel %vm2215, %v2212, %v2214
      %v2224 = vsel %vm264, %v2175, 0
      %v2227 = vsel %vm268, %v2216, 0
      %v2230 = vsel %vm268, %v2217, 0
      %v2233 = vsel %vm268, %v2218, 0
      %v2236 = vsel %vm268, %v2219, 0
      %v2239 = vsel %vm268, %v2220, 0
      %v2242 = vsel %vm268, %v2221, 0
      %v2245 = vsel %vm268, %v2222, 0
      %2247 = vmatpush.bf16.msra.mxu0 0
      %2248 = vmatpush.bf16.msra.mxu0 0
      %2249 = vmatpush.bf16.msra.mxu0 0
      %2250 = vmatpush.bf16.msra.mxu0 0
      %2251 = vmatpush.bf16.msra.mxu0 0
      %2252 = vmatpush.bf16.msra.mxu0 0
      %2253 = vmatpush.bf16.msra.mxu0 0
      %2254 = vmatpush.bf16.msra.mxu0 %v2227
      %2255 = vmatmul.bf16.gmra.mxu0 %v2224
      %v2256 = vpop.f32.mrf.mxu0
      %v2257 = vadd.f32 0.0, %v2256
      %v2258 = vpop.f32.mrf.mxu0
      %2259 = vdwg.mxu0
      %2260 = vmatpush.bf16.msra.mxu0 0
      %2261 = vmatpush.bf16.msra.mxu0 0
      %2262 = vmatpush.bf16.msra.mxu0 0
      %2263 = vmatpush.bf16.msra.mxu0 0
      %2264 = vmatpush.bf16.msra.mxu0 0
      %2265 = vmatpush.bf16.msra.mxu0 0
      %2266 = vmatpush.bf16.msra.mxu0 0
      %2267 = vmatpush.bf16.msra.mxu0 %v2230
      %2268 = vmatmul.bf16.gmra.mxu0 %v2224
      %v2269 = vpop.f32.mrf.mxu0
      %v2270 = vadd.f32 0.0, %v2269
      %v2271 = vpop.f32.mrf.mxu0
      %2272 = vdwg.mxu0
      %2273 = vmatpush.bf16.msra.mxu0 0
      %2274 = vmatpush.bf16.msra.mxu0 0
      %2275 = vmatpush.bf16.msra.mxu0 0
      %2276 = vmatpush.bf16.msra.mxu0 0
      %2277 = vmatpush.bf16.msra.mxu0 0
      %2278 = vmatpush.bf16.msra.mxu0 0
      %2279 = vmatpush.bf16.msra.mxu0 0
      %2280 = vmatpush.bf16.msra.mxu0 %v2233
      %2281 = vmatmul.bf16.gmra.mxu0 %v2224
      %v2282 = vpop.f32.mrf.mxu0
      %v2283 = vadd.f32 0.0, %v2282
      %v2284 = vpop.f32.mrf.mxu0
      %2285 = vdwg.mxu0
      %2286 = vmatpush.bf16.msra.mxu0 0
      %2287 = vmatpush.bf16.msra.mxu0 0
      %2288 = vmatpush.bf16.msra.mxu0 0
      %2289 = vmatpush.bf16.msra.mxu0 0
      %2290 = vmatpush.bf16.msra.mxu0 0
      %2291 = vmatpush.bf16.msra.mxu0 0
      %2292 = vmatpush.bf16.msra.mxu0 0
      %2293 = vmatpush.bf16.msra.mxu0 %v2236
      %2294 = vmatmul.bf16.gmra.mxu0 %v2224
      %v2295 = vpop.f32.mrf.mxu0
      %v2296 = vadd.f32 0.0, %v2295
      %v2297 = vpop.f32.mrf.mxu0
      %2298 = vdwg.mxu0
      %2299 = vmatpush.bf16.msra.mxu0 0
      %2300 = vmatpush.bf16.msra.mxu0 0
      %2301 = vmatpush.bf16.msra.mxu0 0
      %2302 = vmatpush.bf16.msra.mxu0 0
      %2303 = vmatpush.bf16.msra.mxu0 0
      %2304 = vmatpush.bf16.msra.mxu0 0
      %2305 = vmatpush.bf16.msra.mxu0 0
      %2306 = vmatpush.bf16.msra.mxu0 %v2239
      %2307 = vmatmul.bf16.gmra.mxu0 %v2224
      %v2308 = vpop.f32.mrf.mxu0
      %v2309 = vadd.f32 0.0, %v2308
      %v2310 = vpop.f32.mrf.mxu0
      %2311 = vdwg.mxu0
      %2312 = vmatpush.bf16.msra.mxu0 0
      %2313 = vmatpush.bf16.msra.mxu0 0
      %2314 = vmatpush.bf16.msra.mxu0 0
      %2315 = vmatpush.bf16.msra.mxu0 0
      %2316 = vmatpush.bf16.msra.mxu0 0
      %2317 = vmatpush.bf16.msra.mxu0 0
      %2318 = vmatpush.bf16.msra.mxu0 0
      %2319 = vmatpush.bf16.msra.mxu0 %v2242
      %2320 = vmatmul.bf16.gmra.mxu0 %v2224
      %v2321 = vpop.f32.mrf.mxu0
      %v2322 = vadd.f32 0.0, %v2321
      %v2323 = vpop.f32.mrf.mxu0
      %2324 = vdwg.mxu0
      %2325 = vmatpush.bf16.msra.mxu0 0
      %2326 = vmatpush.bf16.msra.mxu0 0
      %2327 = vmatpush.bf16.msra.mxu0 0
      %2328 = vmatpush.bf16.msra.mxu0 0
      %2329 = vmatpush.bf16.msra.mxu0 0
      %2330 = vmatpush.bf16.msra.mxu0 0
      %2331 = vmatpush.bf16.msra.mxu0 0
      %2332 = vmatpush.bf16.msra.mxu0 %v2245
      %2333 = vmatmul.bf16.gmra.mxu0 %v2224
      %v2334 = vpop.f32.mrf.mxu0
      %v2335 = vadd.f32 0.0, %v2334
      %v2336 = vpop.f32.mrf.mxu0
      %2337 = vdwg.mxu0
      %v2338 = vadd.f32 %v2167, %v2257
      %v2339 = vadd.f32 %v2168, %v2270
      %v2340 = vadd.f32 %v2169, %v2283
      %v2341 = vadd.f32 %v2170, %v2296
      %v2342 = vadd.f32 %v2171, %v2309
      %v2343 = vadd.f32 %v2172, %v2322
      %v2344 = vadd.f32 %v2173, %v2335
      %s2345 = scalar_lea.vmem %s1, 26
      %v2346 = vld [vmem:[%s2345] sm:$0x3]
      %v2347 = vld [vmem:[%s207] sm:$0xff]
      %v2348 = vld [vmem:[%s207 + $0x8] sm:$0xff]
      %2350 = vst [vmem:[#allocation1] ss:$4 sm:$0xff] %v2347
      %s2352 = scalar_lea.vmem [#allocation1], 32
      %2353 = vst [vmem:[%s2352] ss:$4 sm:$0xff] %v2348
      %v2354 = vld.sshfl [vmem:[#allocation1] sm:$0xff pattern:$0x73625140]
      %v2356 = vld.sshfl [vmem:[#allocation1 + $0x8] sm:$0xff pattern:$0x73625140]
      %v2358 = vld.sshfl [vmem:[#allocation1 + $0x10] sm:$0xff pattern:$0x73625140]
      %v2360 = vld.sshfl [vmem:[#allocation1 + $0x18] sm:$0xff pattern:$0x73625140]
      %v2362 = vld.sshfl [vmem:[#allocation1 + $0x20] sm:$0xff pattern:$0x73625140]
      %v2364 = vld.sshfl [vmem:[#allocation1 + $0x28] sm:$0xff pattern:$0x73625140]
      %v2366 = vld.sshfl [vmem:[#allocation1 + $0x30] sm:$0xff pattern:$0x73625140]
      %v2368 = vld.sshfl [vmem:[#allocation1 + $0x38] sm:$0xff pattern:$0x73625140]
      %2370 = vrot.lane.b32.xlu0 %v2354, 17
      %v2371 = vpop.permute.xlu0 %2370
      %2372 = vrot.lane.b32.xlu0 %v2356, 17
      %v2373 = vpop.permute.xlu0 %2372
      %2374 = vrot.lane.b32.xlu0 %v2358, 17
      %v2375 = vpop.permute.xlu0 %2374
      %2376 = vrot.lane.b32.xlu0 %v2360, 17
      %v2377 = vpop.permute.xlu0 %2376
      %2378 = vrot.lane.b32.xlu0 %v2362, 17
      %v2379 = vpop.permute.xlu0 %2378
      %2380 = vrot.lane.b32.xlu0 %v2364, 17
      %v2381 = vpop.permute.xlu0 %2380
      %2382 = vrot.lane.b32.xlu0 %v2366, 17
      %v2383 = vpop.permute.xlu0 %2382
      %2384 = vrot.lane.b32.xlu0 %v2368, 17
      %v2385 = vpop.permute.xlu0 %2384
      %vm2386 = vcmask 138240
      %v2387 = vsel %vm2386, %v2371, %v2373
      %v2388 = vsel %vm2386, %v2373, %v2375
      %v2389 = vsel %vm2386, %v2375, %v2377
      %v2390 = vsel %vm2386, %v2377, %v2379
      %v2391 = vsel %vm2386, %v2379, %v2381
      %v2392 = vsel %vm2386, %v2381, %v2383
      %v2393 = vsel %vm2386, %v2383, %v2385
      %v2395 = vsel %vm264, %v2346, 0
      %v2398 = vsel %vm268, %v2387, 0
      %v2401 = vsel %vm268, %v2388, 0
      %v2404 = vsel %vm268, %v2389, 0
      %v2407 = vsel %vm268, %v2390, 0
      %v2410 = vsel %vm268, %v2391, 0
      %v2413 = vsel %vm268, %v2392, 0
      %v2416 = vsel %vm268, %v2393, 0
      %2418 = vmatpush.bf16.msra.mxu0 0
      %2419 = vmatpush.bf16.msra.mxu0 0
      %2420 = vmatpush.bf16.msra.mxu0 0
      %2421 = vmatpush.bf16.msra.mxu0 0
      %2422 = vmatpush.bf16.msra.mxu0 0
      %2423 = vmatpush.bf16.msra.mxu0 0
      %2424 = vmatpush.bf16.msra.mxu0 0
      %2425 = vmatpush.bf16.msra.mxu0 %v2398
      %2426 = vmatmul.bf16.gmra.mxu0 %v2395
      %v2427 = vpop.f32.mrf.mxu0
      %v2428 = vadd.f32 0.0, %v2427
      %v2429 = vpop.f32.mrf.mxu0
      %2430 = vdwg.mxu0
      %2431 = vmatpush.bf16.msra.mxu0 0
      %2432 = vmatpush.bf16.msra.mxu0 0
      %2433 = vmatpush.bf16.msra.mxu0 0
      %2434 = vmatpush.bf16.msra.mxu0 0
      %2435 = vmatpush.bf16.msra.mxu0 0
      %2436 = vmatpush.bf16.msra.mxu0 0
      %2437 = vmatpush.bf16.msra.mxu0 0
      %2438 = vmatpush.bf16.msra.mxu0 %v2401
      %2439 = vmatmul.bf16.gmra.mxu0 %v2395
      %v2440 = vpop.f32.mrf.mxu0
      %v2441 = vadd.f32 0.0, %v2440
      %v2442 = vpop.f32.mrf.mxu0
      %2443 = vdwg.mxu0
      %2444 = vmatpush.bf16.msra.mxu0 0
      %2445 = vmatpush.bf16.msra.mxu0 0
      %2446 = vmatpush.bf16.msra.mxu0 0
      %2447 = vmatpush.bf16.msra.mxu0 0
      %2448 = vmatpush.bf16.msra.mxu0 0
      %2449 = vmatpush.bf16.msra.mxu0 0
      %2450 = vmatpush.bf16.msra.mxu0 0
      %2451 = vmatpush.bf16.msra.mxu0 %v2404
      %2452 = vmatmul.bf16.gmra.mxu0 %v2395
      %v2453 = vpop.f32.mrf.mxu0
      %v2454 = vadd.f32 0.0, %v2453
      %v2455 = vpop.f32.mrf.mxu0
      %2456 = vdwg.mxu0
      %2457 = vmatpush.bf16.msra.mxu0 0
      %2458 = vmatpush.bf16.msra.mxu0 0
      %2459 = vmatpush.bf16.msra.mxu0 0
      %2460 = vmatpush.bf16.msra.mxu0 0
      %2461 = vmatpush.bf16.msra.mxu0 0
      %2462 = vmatpush.bf16.msra.mxu0 0
      %2463 = vmatpush.bf16.msra.mxu0 0
      %2464 = vmatpush.bf16.msra.mxu0 %v2407
      %2465 = vmatmul.bf16.gmra.mxu0 %v2395
      %v2466 = vpop.f32.mrf.mxu0
      %v2467 = vadd.f32 0.0, %v2466
      %v2468 = vpop.f32.mrf.mxu0
      %2469 = vdwg.mxu0
      %2470 = vmatpush.bf16.msra.mxu0 0
      %2471 = vmatpush.bf16.msra.mxu0 0
      %2472 = vmatpush.bf16.msra.mxu0 0
      %2473 = vmatpush.bf16.msra.mxu0 0
      %2474 = vmatpush.bf16.msra.mxu0 0
      %2475 = vmatpush.bf16.msra.mxu0 0
      %2476 = vmatpush.bf16.msra.mxu0 0
      %2477 = vmatpush.bf16.msra.mxu0 %v2410
      %2478 = vmatmul.bf16.gmra.mxu0 %v2395
      %v2479 = vpop.f32.mrf.mxu0
      %v2480 = vadd.f32 0.0, %v2479
      %v2481 = vpop.f32.mrf.mxu0
      %2482 = vdwg.mxu0
      %2483 = vmatpush.bf16.msra.mxu0 0
      %2484 = vmatpush.bf16.msra.mxu0 0
      %2485 = vmatpush.bf16.msra.mxu0 0
      %2486 = vmatpush.bf16.msra.mxu0 0
      %2487 = vmatpush.bf16.msra.mxu0 0
      %2488 = vmatpush.bf16.msra.mxu0 0
      %2489 = vmatpush.bf16.msra.mxu0 0
      %2490 = vmatpush.bf16.msra.mxu0 %v2413
      %2491 = vmatmul.bf16.gmra.mxu0 %v2395
      %v2492 = vpop.f32.mrf.mxu0
      %v2493 = vadd.f32 0.0, %v2492
      %v2494 = vpop.f32.mrf.mxu0
      %2495 = vdwg.mxu0
      %2496 = vmatpush.bf16.msra.mxu0 0
      %2497 = vmatpush.bf16.msra.mxu0 0
      %2498 = vmatpush.bf16.msra.mxu0 0
      %2499 = vmatpush.bf16.msra.mxu0 0
      %2500 = vmatpush.bf16.msra.mxu0 0
      %2501 = vmatpush.bf16.msra.mxu0 0
      %2502 = vmatpush.bf16.msra.mxu0 0
      %2503 = vmatpush.bf16.msra.mxu0 %v2416
      %2504 = vmatmul.bf16.gmra.mxu0 %v2395
      %v2505 = vpop.f32.mrf.mxu0
      %v2506 = vadd.f32 0.0, %v2505
      %v2507 = vpop.f32.mrf.mxu0
      %2508 = vdwg.mxu0
      %v2509 = vadd.f32 %v2338, %v2428
      %v2510 = vadd.f32 %v2339, %v2441
      %v2511 = vadd.f32 %v2340, %v2454
      %v2512 = vadd.f32 %v2341, %v2467
      %v2513 = vadd.f32 %v2342, %v2480
      %v2514 = vadd.f32 %v2343, %v2493
      %v2515 = vadd.f32 %v2344, %v2506
      %s2516 = scalar_lea.vmem %s1, 28
      %v2517 = vld [vmem:[%s2516] sm:$0x3]
      %v2518 = vld [vmem:[%s207] sm:$0xff]
      %v2519 = vld [vmem:[%s207 + $0x8] sm:$0xff]
      %2521 = vst [vmem:[#allocation1] ss:$4 sm:$0xff] %v2518
      %s2523 = scalar_lea.vmem [#allocation1], 32
      %2524 = vst [vmem:[%s2523] ss:$4 sm:$0xff] %v2519
      %v2525 = vld.sshfl [vmem:[#allocation1] sm:$0xff pattern:$0x73625140]
      %v2527 = vld.sshfl [vmem:[#allocation1 + $0x8] sm:$0xff pattern:$0x73625140]
      %v2529 = vld.sshfl [vmem:[#allocation1 + $0x10] sm:$0xff pattern:$0x73625140]
      %v2531 = vld.sshfl [vmem:[#allocation1 + $0x18] sm:$0xff pattern:$0x73625140]
      %v2533 = vld.sshfl [vmem:[#allocation1 + $0x20] sm:$0xff pattern:$0x73625140]
      %v2535 = vld.sshfl [vmem:[#allocation1 + $0x28] sm:$0xff pattern:$0x73625140]
      %v2537 = vld.sshfl [vmem:[#allocation1 + $0x30] sm:$0xff pattern:$0x73625140]
      %v2539 = vld.sshfl [vmem:[#allocation1 + $0x38] sm:$0xff pattern:$0x73625140]
      %2541 = vrot.lane.b32.xlu0 %v2525, 16
      %v2542 = vpop.permute.xlu0 %2541
      %2543 = vrot.lane.b32.xlu0 %v2527, 16
      %v2544 = vpop.permute.xlu0 %2543
      %2545 = vrot.lane.b32.xlu0 %v2529, 16
      %v2546 = vpop.permute.xlu0 %2545
      %2547 = vrot.lane.b32.xlu0 %v2531, 16
      %v2548 = vpop.permute.xlu0 %2547
      %2549 = vrot.lane.b32.xlu0 %v2533, 16
      %v2550 = vpop.permute.xlu0 %2549
      %2551 = vrot.lane.b32.xlu0 %v2535, 16
      %v2552 = vpop.permute.xlu0 %2551
      %2553 = vrot.lane.b32.xlu0 %v2537, 16
      %v2554 = vpop.permute.xlu0 %2553
      %2555 = vrot.lane.b32.xlu0 %v2539, 16
      %v2556 = vpop.permute.xlu0 %2555
      %vm2557 = vcmask 130048
      %v2558 = vsel %vm2557, %v2542, %v2544
      %v2559 = vsel %vm2557, %v2544, %v2546
      %v2560 = vsel %vm2557, %v2546, %v2548
      %v2561 = vsel %vm2557, %v2548, %v2550
      %v2562 = vsel %vm2557, %v2550, %v2552
      %v2563 = vsel %vm2557, %v2552, %v2554
      %v2564 = vsel %vm2557, %v2554, %v2556
      %v2566 = vsel %vm264, %v2517, 0
      %v2569 = vsel %vm268, %v2558, 0
      %v2572 = vsel %vm268, %v2559, 0
      %v2575 = vsel %vm268, %v2560, 0
      %v2578 = vsel %vm268, %v2561, 0
      %v2581 = vsel %vm268, %v2562, 0
      %v2584 = vsel %vm268, %v2563, 0
      %v2587 = vsel %vm268, %v2564, 0
      %2589 = vmatpush.bf16.msra.mxu0 0
      %2590 = vmatpush.bf16.msra.mxu0 0
      %2591 = vmatpush.bf16.msra.mxu0 0
      %2592 = vmatpush.bf16.msra.mxu0 0
      %2593 = vmatpush.bf16.msra.mxu0 0
      %2594 = vmatpush.bf16.msra.mxu0 0
      %2595 = vmatpush.bf16.msra.mxu0 0
      %2596 = vmatpush.bf16.msra.mxu0 %v2569
      %2597 = vmatmul.bf16.gmra.mxu0 %v2566
      %v2598 = vpop.f32.mrf.mxu0
      %v2599 = vadd.f32 0.0, %v2598
      %v2600 = vpop.f32.mrf.mxu0
      %2601 = vdwg.mxu0
      %2602 = vmatpush.bf16.msra.mxu0 0
      %2603 = vmatpush.bf16.msra.mxu0 0
      %2604 = vmatpush.bf16.msra.mxu0 0
      %2605 = vmatpush.bf16.msra.mxu0 0
      %2606 = vmatpush.bf16.msra.mxu0 0
      %2607 = vmatpush.bf16.msra.mxu0 0
      %2608 = vmatpush.bf16.msra.mxu0 0
      %2609 = vmatpush.bf16.msra.mxu0 %v2572
      %2610 = vmatmul.bf16.gmra.mxu0 %v2566
      %v2611 = vpop.f32.mrf.mxu0
      %v2612 = vadd.f32 0.0, %v2611
      %v2613 = vpop.f32.mrf.mxu0
      %2614 = vdwg.mxu0
      %2615 = vmatpush.bf16.msra.mxu0 0
      %2616 = vmatpush.bf16.msra.mxu0 0
      %2617 = vmatpush.bf16.msra.mxu0 0
      %2618 = vmatpush.bf16.msra.mxu0 0
      %2619 = vmatpush.bf16.msra.mxu0 0
      %2620 = vmatpush.bf16.msra.mxu0 0
      %2621 = vmatpush.bf16.msra.mxu0 0
      %2622 = vmatpush.bf16.msra.mxu0 %v2575
      %2623 = vmatmul.bf16.gmra.mxu0 %v2566
      %v2624 = vpop.f32.mrf.mxu0
      %v2625 = vadd.f32 0.0, %v2624
      %v2626 = vpop.f32.mrf.mxu0
      %2627 = vdwg.mxu0
      %2628 = vmatpush.bf16.msra.mxu0 0
      %2629 = vmatpush.bf16.msra.mxu0 0
      %2630 = vmatpush.bf16.msra.mxu0 0
      %2631 = vmatpush.bf16.msra.mxu0 0
      %2632 = vmatpush.bf16.msra.mxu0 0
      %2633 = vmatpush.bf16.msra.mxu0 0
      %2634 = vmatpush.bf16.msra.mxu0 0
      %2635 = vmatpush.bf16.msra.mxu0 %v2578
      %2636 = vmatmul.bf16.gmra.mxu0 %v2566
      %v2637 = vpop.f32.mrf.mxu0
      %v2638 = vadd.f32 0.0, %v2637
      %v2639 = vpop.f32.mrf.mxu0
      %2640 = vdwg.mxu0
      %2641 = vmatpush.bf16.msra.mxu0 0
      %2642 = vmatpush.bf16.msra.mxu0 0
      %2643 = vmatpush.bf16.msra.mxu0 0
      %2644 = vmatpush.bf16.msra.mxu0 0
      %2645 = vmatpush.bf16.msra.mxu0 0
      %2646 = vmatpush.bf16.msra.mxu0 0
      %2647 = vmatpush.bf16.msra.mxu0 0
      %2648 = vmatpush.bf16.msra.mxu0 %v2581
      %2649 = vmatmul.bf16.gmra.mxu0 %v2566
      %v2650 = vpop.f32.mrf.mxu0
      %v2651 = vadd.f32 0.0, %v2650
      %v2652 = vpop.f32.mrf.mxu0
      %2653 = vdwg.mxu0
      %2654 = vmatpush.bf16.msra.mxu0 0
      %2655 = vmatpush.bf16.msra.mxu0 0
      %2656 = vmatpush.bf16.msra.mxu0 0
      %2657 = vmatpush.bf16.msra.mxu0 0
      %2658 = vmatpush.bf16.msra.mxu0 0
      %2659 = vmatpush.bf16.msra.mxu0 0
      %2660 = vmatpush.bf16.msra.mxu0 0
      %2661 = vmatpush.bf16.msra.mxu0 %v2584
      %2662 = vmatmul.bf16.gmra.mxu0 %v2566
      %v2663 = vpop.f32.mrf.mxu0
      %v2664 = vadd.f32 0.0, %v2663
      %v2665 = vpop.f32.mrf.mxu0
      %2666 = vdwg.mxu0
      %2667 = vmatpush.bf16.msra.mxu0 0
      %2668 = vmatpush.bf16.msra.mxu0 0
      %2669 = vmatpush.bf16.msra.mxu0 0
      %2670 = vmatpush.bf16.msra.mxu0 0
      %2671 = vmatpush.bf16.msra.mxu0 0
      %2672 = vmatpush.bf16.msra.mxu0 0
      %2673 = vmatpush.bf16.msra.mxu0 0
      %2674 = vmatpush.bf16.msra.mxu0 %v2587
      %2675 = vmatmul.bf16.gmra.mxu0 %v2566
      %v2676 = vpop.f32.mrf.mxu0
      %v2677 = vadd.f32 0.0, %v2676
      %v2678 = vpop.f32.mrf.mxu0
      %2679 = vdwg.mxu0
      %v2680 = vadd.f32 %v2509, %v2599
      %v2681 = vadd.f32 %v2510, %v2612
      %v2682 = vadd.f32 %v2511, %v2625
      %v2683 = vadd.f32 %v2512, %v2638
      %v2684 = vadd.f32 %v2513, %v2651
      %v2685 = vadd.f32 %v2514, %v2664
      %v2686 = vadd.f32 %v2515, %v2677
      %s2687 = scalar_lea.vmem %s1, 30
      %v2688 = vld [vmem:[%s2687] sm:$0x3]
      %v2689 = vld [vmem:[%s207] sm:$0xff]
      %v2690 = vld [vmem:[%s207 + $0x8] sm:$0xff]
      %2692 = vst [vmem:[#allocation1] ss:$4 sm:$0xff] %v2689
      %s2694 = scalar_lea.vmem [#allocation1], 32
      %2695 = vst [vmem:[%s2694] ss:$4 sm:$0xff] %v2690
      %v2696 = vld.sshfl [vmem:[#allocation1] sm:$0xff pattern:$0x73625140]
      %v2698 = vld.sshfl [vmem:[#allocation1 + $0x8] sm:$0xff pattern:$0x73625140]
      %v2700 = vld.sshfl [vmem:[#allocation1 + $0x10] sm:$0xff pattern:$0x73625140]
      %v2702 = vld.sshfl [vmem:[#allocation1 + $0x18] sm:$0xff pattern:$0x73625140]
      %v2704 = vld.sshfl [vmem:[#allocation1 + $0x20] sm:$0xff pattern:$0x73625140]
      %v2706 = vld.sshfl [vmem:[#allocation1 + $0x28] sm:$0xff pattern:$0x73625140]
      %v2708 = vld.sshfl [vmem:[#allocation1 + $0x30] sm:$0xff pattern:$0x73625140]
      %v2710 = vld.sshfl [vmem:[#allocation1 + $0x38] sm:$0xff pattern:$0x73625140]
      %2712 = vrot.lane.b32.xlu0 %v2696, 8
      %v2713 = vpop.permute.xlu0 %2712
      %2714 = vrot.lane.b32.xlu0 %v2698, 8
      %v2715 = vpop.permute.xlu0 %2714
      %2716 = vrot.lane.b32.xlu0 %v2700, 8
      %v2717 = vpop.permute.xlu0 %2716
      %2718 = vrot.lane.b32.xlu0 %v2702, 8
      %v2719 = vpop.permute.xlu0 %2718
      %2720 = vrot.lane.b32.xlu0 %v2704, 8
      %v2721 = vpop.permute.xlu0 %2720
      %2722 = vrot.lane.b32.xlu0 %v2706, 8
      %v2723 = vpop.permute.xlu0 %2722
      %2724 = vrot.lane.b32.xlu0 %v2708, 8
      %v2725 = vpop.permute.xlu0 %2724
      %2726 = vrot.lane.b32.xlu0 %v2710, 8
      %v2727 = vpop.permute.xlu0 %2726
      %vm2728 = vcmask 64512
      %v2729 = vsel %vm2728, %v2713, %v2715
      %v2730 = vsel %vm2728, %v2715, %v2717
      %v2731 = vsel %vm2728, %v2717, %v2719
      %v2732 = vsel %vm2728, %v2719, %v2721
      %v2733 = vsel %vm2728, %v2721, %v2723
      %v2734 = vsel %vm2728, %v2723, %v2725
      %v2735 = vsel %vm2728, %v2725, %v2727
      %v2737 = vsel %vm264, %v2688, 0
      %v2740 = vsel %vm268, %v2729, 0
      %v2743 = vsel %vm268, %v2730, 0
      %v2746 = vsel %vm268, %v2731, 0
      %v2749 = vsel %vm268, %v2732, 0
      %v2752 = vsel %vm268, %v2733, 0
      %v2755 = vsel %vm268, %v2734, 0
      %v2758 = vsel %vm268, %v2735, 0
      %2760 = vmatpush.bf16.msra.mxu0 0
      %2761 = vmatpush.bf16.msra.mxu0 0
      %2762 = vmatpush.bf16.msra.mxu0 0
      %2763 = vmatpush.bf16.msra.mxu0 0
      %2764 = vmatpush.bf16.msra.mxu0 0
      %2765 = vmatpush.bf16.msra.mxu0 0
      %2766 = vmatpush.bf16.msra.mxu0 0
      %2767 = vmatpush.bf16.msra.mxu0 %v2740
      %2768 = vmatmul.bf16.gmra.mxu0 %v2737
      %v2769 = vpop.f32.mrf.mxu0
      %v2770 = vadd.f32 0.0, %v2769
      %v2771 = vpop.f32.mrf.mxu0
      %2772 = vdwg.mxu0
      %2773 = vmatpush.bf16.msra.mxu0 0
      %2774 = vmatpush.bf16.msra.mxu0 0
      %2775 = vmatpush.bf16.msra.mxu0 0
      %2776 = vmatpush.bf16.msra.mxu0 0
      %2777 = vmatpush.bf16.msra.mxu0 0
      %2778 = vmatpush.bf16.msra.mxu0 0
      %2779 = vmatpush.bf16.msra.mxu0 0
      %2780 = vmatpush.bf16.msra.mxu0 %v2743
      %2781 = vmatmul.bf16.gmra.mxu0 %v2737
      %v2782 = vpop.f32.mrf.mxu0
      %v2783 = vadd.f32 0.0, %v2782
      %v2784 = vpop.f32.mrf.mxu0
      %2785 = vdwg.mxu0
      %2786 = vmatpush.bf16.msra.mxu0 0
      %2787 = vmatpush.bf16.msra.mxu0 0
      %2788 = vmatpush.bf16.msra.mxu0 0
      %2789 = vmatpush.bf16.msra.mxu0 0
      %2790 = vmatpush.bf16.msra.mxu0 0
      %2791 = vmatpush.bf16.msra.mxu0 0
      %2792 = vmatpush.bf16.msra.mxu0 0
      %2793 = vmatpush.bf16.msra.mxu0 %v2746
      %2794 = vmatmul.bf16.gmra.mxu0 %v2737
      %v2795 = vpop.f32.mrf.mxu0
      %v2796 = vadd.f32 0.0, %v2795
      %v2797 = vpop.f32.mrf.mxu0
      %2798 = vdwg.mxu0
      %2799 = vmatpush.bf16.msra.mxu0 0
      %2800 = vmatpush.bf16.msra.mxu0 0
      %2801 = vmatpush.bf16.msra.mxu0 0
      %2802 = vmatpush.bf16.msra.mxu0 0
      %2803 = vmatpush.bf16.msra.mxu0 0
      %2804 = vmatpush.bf16.msra.mxu0 0
      %2805 = vmatpush.bf16.msra.mxu0 0
      %2806 = vmatpush.bf16.msra.mxu0 %v2749
      %2807 = vmatmul.bf16.gmra.mxu0 %v2737
      %v2808 = vpop.f32.mrf.mxu0
      %v2809 = vadd.f32 0.0, %v2808
      %v2810 = vpop.f32.mrf.mxu0
      %2811 = vdwg.mxu0
      %2812 = vmatpush.bf16.msra.mxu0 0
      %2813 = vmatpush.bf16.msra.mxu0 0
      %2814 = vmatpush.bf16.msra.mxu0 0
      %2815 = vmatpush.bf16.msra.mxu0 0
      %2816 = vmatpush.bf16.msra.mxu0 0
      %2817 = vmatpush.bf16.msra.mxu0 0
      %2818 = vmatpush.bf16.msra.mxu0 0
      %2819 = vmatpush.bf16.msra.mxu0 %v2752
      %2820 = vmatmul.bf16.gmra.mxu0 %v2737
      %v2821 = vpop.f32.mrf.mxu0
      %v2822 = vadd.f32 0.0, %v2821
      %v2823 = vpop.f32.mrf.mxu0
      %2824 = vdwg.mxu0
      %2825 = vmatpush.bf16.msra.mxu0 0
      %2826 = vmatpush.bf16.msra.mxu0 0
      %2827 = vmatpush.bf16.msra.mxu0 0
      %2828 = vmatpush.bf16.msra.mxu0 0
      %2829 = vmatpush.bf16.msra.mxu0 0
      %2830 = vmatpush.bf16.msra.mxu0 0
      %2831 = vmatpush.bf16.msra.mxu0 0
      %2832 = vmatpush.bf16.msra.mxu0 %v2755
      %2833 = vmatmul.bf16.gmra.mxu0 %v2737
      %v2834 = vpop.f32.mrf.mxu0
      %v2835 = vadd.f32 0.0, %v2834
      %v2836 = vpop.f32.mrf.mxu0
      %2837 = vdwg.mxu0
      %2838 = vmatpush.bf16.msra.mxu0 0
      %2839 = vmatpush.bf16.msra.mxu0 0
      %2840 = vmatpush.bf16.msra.mxu0 0
      %2841 = vmatpush.bf16.msra.mxu0 0
      %2842 = vmatpush.bf16.msra.mxu0 0
      %2843 = vmatpush.bf16.msra.mxu0 0
      %2844 = vmatpush.bf16.msra.mxu0 0
      %2845 = vmatpush.bf16.msra.mxu0 %v2758
      %2846 = vmatmul.bf16.gmra.mxu0 %v2737
      %v2847 = vpop.f32.mrf.mxu0
      %v2848 = vadd.f32 0.0, %v2847
      %v2849 = vpop.f32.mrf.mxu0
      %2850 = vdwg.mxu0
      %v2851 = vadd.f32 %v2680, %v2770
      %v2852 = vadd.f32 %v2681, %v2783
      %v2853 = vadd.f32 %v2682, %v2796
      %v2854 = vadd.f32 %v2683, %v2809
      %v2855 = vadd.f32 %v2684, %v2822
      %v2856 = vadd.f32 %v2685, %v2835
      %v2857 = vadd.f32 %v2686, %v2848
      %s2858 = scalar_lea.vmem %s1, 32
      %v2859 = vld [vmem:[%s2858] sm:$0x3]
      %v2860 = vld [vmem:[%s207] sm:$0xff]
      %v2861 = vld [vmem:[%s207 + $0x8] sm:$0xff]
      %2863 = vst [vmem:[#allocation1] ss:$4 sm:$0xff] %v2860
      %s2865 = scalar_lea.vmem [#allocation1], 32
      %2866 = vst [vmem:[%s2865] ss:$4 sm:$0xff] %v2861
      %v2867 = vld.sshfl [vmem:[#allocation1] sm:$0xff pattern:$0x73625140]
      %v2869 = vld.sshfl [vmem:[#allocation1 + $0x8] sm:$0xff pattern:$0x73625140]
      %v2871 = vld.sshfl [vmem:[#allocation1 + $0x10] sm:$0xff pattern:$0x73625140]
      %v2873 = vld.sshfl [vmem:[#allocation1 + $0x18] sm:$0xff pattern:$0x73625140]
      %v2875 = vld.sshfl [vmem:[#allocation1 + $0x20] sm:$0xff pattern:$0x73625140]
      %v2877 = vld.sshfl [vmem:[#allocation1 + $0x28] sm:$0xff pattern:$0x73625140]
      %v2879 = vld.sshfl [vmem:[#allocation1 + $0x30] sm:$0xff pattern:$0x73625140]
      %v2881 = vld.sshfl [vmem:[#allocation1 + $0x38] sm:$0xff pattern:$0x73625140]
      %2883 = vrot.lane.b32.xlu0 %v2867, 7
      %v2884 = vpop.permute.xlu0 %2883
      %2885 = vrot.lane.b32.xlu0 %v2869, 7
      %v2886 = vpop.permute.xlu0 %2885
      %2887 = vrot.lane.b32.xlu0 %v2871, 7
      %v2888 = vpop.permute.xlu0 %2887
      %2889 = vrot.lane.b32.xlu0 %v2873, 7
      %v2890 = vpop.permute.xlu0 %2889
      %2891 = vrot.lane.b32.xlu0 %v2875, 7
      %v2892 = vpop.permute.xlu0 %2891
      %2893 = vrot.lane.b32.xlu0 %v2877, 7
      %v2894 = vpop.permute.xlu0 %2893
      %2895 = vrot.lane.b32.xlu0 %v2879, 7
      %v2896 = vpop.permute.xlu0 %2895
      %2897 = vrot.lane.b32.xlu0 %v2881, 7
      %v2898 = vpop.permute.xlu0 %2897
      %vm2899 = vcmask 56320
      %v2900 = vsel %vm2899, %v2884, %v2886
      %v2901 = vsel %vm2899, %v2886, %v2888
      %v2902 = vsel %vm2899, %v2888, %v2890
      %v2903 = vsel %vm2899, %v2890, %v2892
      %v2904 = vsel %vm2899, %v2892, %v2894
      %v2905 = vsel %vm2899, %v2894, %v2896
      %v2906 = vsel %vm2899, %v2896, %v2898
      %v2908 = vsel %vm264, %v2859, 0
      %v2911 = vsel %vm268, %v2900, 0
      %v2914 = vsel %vm268, %v2901, 0
      %v2917 = vsel %vm268, %v2902, 0
      %v2920 = vsel %vm268, %v2903, 0
      %v2923 = vsel %vm268, %v2904, 0
      %v2926 = vsel %vm268, %v2905, 0
      %v2929 = vsel %vm268, %v2906, 0
      %2931 = vmatpush.bf16.msra.mxu0 0
      %2932 = vmatpush.bf16.msra.mxu0 0
      %2933 = vmatpush.bf16.msra.mxu0 0
      %2934 = vmatpush.bf16.msra.mxu0 0
      %2935 = vmatpush.bf16.msra.mxu0 0
      %2936 = vmatpush.bf16.msra.mxu0 0
      %2937 = vmatpush.bf16.msra.mxu0 0
      %2938 = vmatpush.bf16.msra.mxu0 %v2911
      %2939 = vmatmul.bf16.gmra.mxu0 %v2908
      %v2940 = vpop.f32.mrf.mxu0
      %v2941 = vadd.f32 0.0, %v2940
      %v2942 = vpop.f32.mrf.mxu0
      %2943 = vdwg.mxu0
      %2944 = vmatpush.bf16.msra.mxu0 0
      %2945 = vmatpush.bf16.msra.mxu0 0
      %2946 = vmatpush.bf16.msra.mxu0 0
      %2947 = vmatpush.bf16.msra.mxu0 0
      %2948 = vmatpush.bf16.msra.mxu0 0
      %2949 = vmatpush.bf16.msra.mxu0 0
      %2950 = vmatpush.bf16.msra.mxu0 0
      %2951 = vmatpush.bf16.msra.mxu0 %v2914
      %2952 = vmatmul.bf16.gmra.mxu0 %v2908
      %v2953 = vpop.f32.mrf.mxu0
      %v2954 = vadd.f32 0.0, %v2953
      %v2955 = vpop.f32.mrf.mxu0
      %2956 = vdwg.mxu0
      %2957 = vmatpush.bf16.msra.mxu0 0
      %2958 = vmatpush.bf16.msra.mxu0 0
      %2959 = vmatpush.bf16.msra.mxu0 0
      %2960 = vmatpush.bf16.msra.mxu0 0
      %2961 = vmatpush.bf16.msra.mxu0 0
      %2962 = vmatpush.bf16.msra.mxu0 0
      %2963 = vmatpush.bf16.msra.mxu0 0
      %2964 = vmatpush.bf16.msra.mxu0 %v2917
      %2965 = vmatmul.bf16.gmra.mxu0 %v2908
      %v2966 = vpop.f32.mrf.mxu0
      %v2967 = vadd.f32 0.0, %v2966
      %v2968 = vpop.f32.mrf.mxu0
      %2969 = vdwg.mxu0
      %2970 = vmatpush.bf16.msra.mxu0 0
      %2971 = vmatpush.bf16.msra.mxu0 0
      %2972 = vmatpush.bf16.msra.mxu0 0
      %2973 = vmatpush.bf16.msra.mxu0 0
      %2974 = vmatpush.bf16.msra.mxu0 0
      %2975 = vmatpush.bf16.msra.mxu0 0
      %2976 = vmatpush.bf16.msra.mxu0 0
      %2977 = vmatpush.bf16.msra.mxu0 %v2920
      %2978 = vmatmul.bf16.gmra.mxu0 %v2908
      %v2979 = vpop.f32.mrf.mxu0
      %v2980 = vadd.f32 0.0, %v2979
      %v2981 = vpop.f32.mrf.mxu0
      %2982 = vdwg.mxu0
      %2983 = vmatpush.bf16.msra.mxu0 0
      %2984 = vmatpush.bf16.msra.mxu0 0
      %2985 = vmatpush.bf16.msra.mxu0 0
      %2986 = vmatpush.bf16.msra.mxu0 0
      %2987 = vmatpush.bf16.msra.mxu0 0
      %2988 = vmatpush.bf16.msra.mxu0 0
      %2989 = vmatpush.bf16.msra.mxu0 0
      %2990 = vmatpush.bf16.msra.mxu0 %v2923
      %2991 = vmatmul.bf16.gmra.mxu0 %v2908
      %v2992 = vpop.f32.mrf.mxu0
      %v2993 = vadd.f32 0.0, %v2992
      %v2994 = vpop.f32.mrf.mxu0
      %2995 = vdwg.mxu0
      %2996 = vmatpush.bf16.msra.mxu0 0
      %2997 = vmatpush.bf16.msra.mxu0 0
      %2998 = vmatpush.bf16.msra.mxu0 0
      %2999 = vmatpush.bf16.msra.mxu0 0
      %3000 = vmatpush.bf16.msra.mxu0 0
      %3001 = vmatpush.bf16.msra.mxu0 0
      %3002 = vmatpush.bf16.msra.mxu0 0
      %3003 = vmatpush.bf16.msra.mxu0 %v2926
      %3004 = vmatmul.bf16.gmra.mxu0 %v2908
      %v3005 = vpop.f32.mrf.mxu0
      %v3006 = vadd.f32 0.0, %v3005
      %v3007 = vpop.f32.mrf.mxu0
      %3008 = vdwg.mxu0
      %3009 = vmatpush.bf16.msra.mxu0 0
      %3010 = vmatpush.bf16.msra.mxu0 0
      %3011 = vmatpush.bf16.msra.mxu0 0
      %3012 = vmatpush.bf16.msra.mxu0 0
      %3013 = vmatpush.bf16.msra.mxu0 0
      %3014 = vmatpush.bf16.msra.mxu0 0
      %3015 = vmatpush.bf16.msra.mxu0 0
      %3016 = vmatpush.bf16.msra.mxu0 %v2929
      %3017 = vmatmul.bf16.gmra.mxu0 %v2908
      %v3018 = vpop.f32.mrf.mxu0
      %v3019 = vadd.f32 0.0, %v3018
      %v3020 = vpop.f32.mrf.mxu0
      %3021 = vdwg.mxu0
      %v3022 = vadd.f32 %v2851, %v2941
      %v3023 = vadd.f32 %v2852, %v2954
      %v3024 = vadd.f32 %v2853, %v2967
      %v3025 = vadd.f32 %v2854, %v2980
      %v3026 = vadd.f32 %v2855, %v2993
      %v3027 = vadd.f32 %v2856, %v3006
      %v3028 = vadd.f32 %v2857, %v3019
      %s3029 = scalar_lea.vmem %s1, 34
      %v3030 = vld [vmem:[%s3029] sm:$0x3]
      %v3031 = vld [vmem:[%s207] sm:$0xff]
      %v3032 = vld [vmem:[%s207 + $0x8] sm:$0xff]
      %3034 = vst [vmem:[#allocation1] ss:$4 sm:$0xff] %v3031
      %s3036 = scalar_lea.vmem [#allocation1], 32
      %3037 = vst [vmem:[%s3036] ss:$4 sm:$0xff] %v3032
      %v3038 = vld.sshfl [vmem:[#allocation1] sm:$0xff pattern:$0x73625140]
      %v3040 = vld.sshfl [vmem:[#allocation1 + $0x8] sm:$0xff pattern:$0x73625140]
      %v3042 = vld.sshfl [vmem:[#allocation1 + $0x10] sm:$0xff pattern:$0x73625140]
      %v3044 = vld.sshfl [vmem:[#allocation1 + $0x18] sm:$0xff pattern:$0x73625140]
      %v3046 = vld.sshfl [vmem:[#allocation1 + $0x20] sm:$0xff pattern:$0x73625140]
      %v3048 = vld.sshfl [vmem:[#allocation1 + $0x28] sm:$0xff pattern:$0x73625140]
      %v3050 = vld.sshfl [vmem:[#allocation1 + $0x30] sm:$0xff pattern:$0x73625140]
      %v3052 = vld.sshfl [vmem:[#allocation1 + $0x38] sm:$0xff pattern:$0x73625140]
      %3054 = vrot.lane.b32.xlu0 %v3038, 6
      %v3055 = vpop.permute.xlu0 %3054
      %3056 = vrot.lane.b32.xlu0 %v3040, 6
      %v3057 = vpop.permute.xlu0 %3056
      %3058 = vrot.lane.b32.xlu0 %v3042, 6
      %v3059 = vpop.permute.xlu0 %3058
      %3060 = vrot.lane.b32.xlu0 %v3044, 6
      %v3061 = vpop.permute.xlu0 %3060
      %3062 = vrot.lane.b32.xlu0 %v3046, 6
      %v3063 = vpop.permute.xlu0 %3062
      %3064 = vrot.lane.b32.xlu0 %v3048, 6
      %v3065 = vpop.permute.xlu0 %3064
      %3066 = vrot.lane.b32.xlu0 %v3050, 6
      %v3067 = vpop.permute.xlu0 %3066
      %3068 = vrot.lane.b32.xlu0 %v3052, 6
      %v3069 = vpop.permute.xlu0 %3068
      %vm3070 = vcmask 48128
      %v3071 = vsel %vm3070, %v3055, %v3057
      %v3072 = vsel %vm3070, %v3057, %v3059
      %v3073 = vsel %vm3070, %v3059, %v3061
      %v3074 = vsel %vm3070, %v3061, %v3063
      %v3075 = vsel %vm3070, %v3063, %v3065
      %v3076 = vsel %vm3070, %v3065, %v3067
      %v3077 = vsel %vm3070, %v3067, %v3069
      %v3079 = vsel %vm264, %v3030, 0
      %v3082 = vsel %vm268, %v3071, 0
      %v3085 = vsel %vm268, %v3072, 0
      %v3088 = vsel %vm268, %v3073, 0
      %v3091 = vsel %vm268, %v3074, 0
      %v3094 = vsel %vm268, %v3075, 0
      %v3097 = vsel %vm268, %v3076, 0
      %v3100 = vsel %vm268, %v3077, 0
      %3102 = vmatpush.bf16.msra.mxu0 0
      %3103 = vmatpush.bf16.msra.mxu0 0
      %3104 = vmatpush.bf16.msra.mxu0 0
      %3105 = vmatpush.bf16.msra.mxu0 0
      %3106 = vmatpush.bf16.msra.mxu0 0
      %3107 = vmatpush.bf16.msra.mxu0 0
      %3108 = vmatpush.bf16.msra.mxu0 0
      %3109 = vmatpush.bf16.msra.mxu0 %v3082
      %3110 = vmatmul.bf16.gmra.mxu0 %v3079
      %v3111 = vpop.f32.mrf.mxu0
      %v3112 = vadd.f32 0.0, %v3111
      %v3113 = vpop.f32.mrf.mxu0
      %3114 = vdwg.mxu0
      %3115 = vmatpush.bf16.msra.mxu0 0
      %3116 = vmatpush.bf16.msra.mxu0 0
      %3117 = vmatpush.bf16.msra.mxu0 0
      %3118 = vmatpush.bf16.msra.mxu0 0
      %3119 = vmatpush.bf16.msra.mxu0 0
      %3120 = vmatpush.bf16.msra.mxu0 0
      %3121 = vmatpush.bf16.msra.mxu0 0
      %3122 = vmatpush.bf16.msra.mxu0 %v3085
      %3123 = vmatmul.bf16.gmra.mxu0 %v3079
      %v3124 = vpop.f32.mrf.mxu0
      %v3125 = vadd.f32 0.0, %v3124
      %v3126 = vpop.f32.mrf.mxu0
      %3127 = vdwg.mxu0
      %3128 = vmatpush.bf16.msra.mxu0 0
      %3129 = vmatpush.bf16.msra.mxu0 0
      %3130 = vmatpush.bf16.msra.mxu0 0
      %3131 = vmatpush.bf16.msra.mxu0 0
      %3132 = vmatpush.bf16.msra.mxu0 0
      %3133 = vmatpush.bf16.msra.mxu0 0
      %3134 = vmatpush.bf16.msra.mxu0 0
      %3135 = vmatpush.bf16.msra.mxu0 %v3088
      %3136 = vmatmul.bf16.gmra.mxu0 %v3079
      %v3137 = vpop.f32.mrf.mxu0
      %v3138 = vadd.f32 0.0, %v3137
      %v3139 = vpop.f32.mrf.mxu0
      %3140 = vdwg.mxu0
      %3141 = vmatpush.bf16.msra.mxu0 0
      %3142 = vmatpush.bf16.msra.mxu0 0
      %3143 = vmatpush.bf16.msra.mxu0 0
      %3144 = vmatpush.bf16.msra.mxu0 0
      %3145 = vmatpush.bf16.msra.mxu0 0
      %3146 = vmatpush.bf16.msra.mxu0 0
      %3147 = vmatpush.bf16.msra.mxu0 0
      %3148 = vmatpush.bf16.msra.mxu0 %v3091
      %3149 = vmatmul.bf16.gmra.mxu0 %v3079
      %v3150 = vpop.f32.mrf.mxu0
      %v3151 = vadd.f32 0.0, %v3150
      %v3152 = vpop.f32.mrf.mxu0
      %3153 = vdwg.mxu0
      %3154 = vmatpush.bf16.msra.mxu0 0
      %3155 = vmatpush.bf16.msra.mxu0 0
      %3156 = vmatpush.bf16.msra.mxu0 0
      %3157 = vmatpush.bf16.msra.mxu0 0
      %3158 = vmatpush.bf16.msra.mxu0 0
      %3159 = vmatpush.bf16.msra.mxu0 0
      %3160 = vmatpush.bf16.msra.mxu0 0
      %3161 = vmatpush.bf16.msra.mxu0 %v3094
      %3162 = vmatmul.bf16.gmra.mxu0 %v3079
      %v3163 = vpop.f32.mrf.mxu0
      %v3164 = vadd.f32 0.0, %v3163
      %v3165 = vpop.f32.mrf.mxu0
      %3166 = vdwg.mxu0
      %3167 = vmatpush.bf16.msra.mxu0 0
      %3168 = vmatpush.bf16.msra.mxu0 0
      %3169 = vmatpush.bf16.msra.mxu0 0
      %3170 = vmatpush.bf16.msra.mxu0 0
      %3171 = vmatpush.bf16.msra.mxu0 0
      %3172 = vmatpush.bf16.msra.mxu0 0
      %3173 = vmatpush.bf16.msra.mxu0 0
      %3174 = vmatpush.bf16.msra.mxu0 %v3097
      %3175 = vmatmul.bf16.gmra.mxu0 %v3079
      %v3176 = vpop.f32.mrf.mxu0
      %v3177 = vadd.f32 0.0, %v3176
      %v3178 = vpop.f32.mrf.mxu0
      %3179 = vdwg.mxu0
      %3180 = vmatpush.bf16.msra.mxu0 0
      %3181 = vmatpush.bf16.msra.mxu0 0
      %3182 = vmatpush.bf16.msra.mxu0 0
      %3183 = vmatpush.bf16.msra.mxu0 0
      %3184 = vmatpush.bf16.msra.mxu0 0
      %3185 = vmatpush.bf16.msra.mxu0 0
      %3186 = vmatpush.bf16.msra.mxu0 0
      %3187 = vmatpush.bf16.msra.mxu0 %v3100
      %3188 = vmatmul.bf16.gmra.mxu0 %v3079
      %v3189 = vpop.f32.mrf.mxu0
      %v3190 = vadd.f32 0.0, %v3189
      %v3191 = vpop.f32.mrf.mxu0
      %3192 = vdwg.mxu0
      %v3193 = vadd.f32 %v3022, %v3112
      %v3194 = vadd.f32 %v3023, %v3125
      %v3195 = vadd.f32 %v3024, %v3138
      %v3196 = vadd.f32 %v3025, %v3151
      %v3197 = vadd.f32 %v3026, %v3164
      %v3198 = vadd.f32 %v3027, %v3177
      %v3199 = vadd.f32 %v3028, %v3190
      %s3200 = scalar_lea.vmem %s1, 36
      %v3201 = vld [vmem:[%s3200] sm:$0x3]
      %v3202 = vld [vmem:[%s207 + $0x2] sm:$0xff]
      %v3203 = vld [vmem:[%s207 + $0xa] sm:$0x3f]
      %3205 = vst [vmem:[#allocation1] ss:$4 sm:$0xff] %v3202
      %s3207 = scalar_lea.vmem [#allocation1], 32
      %3208 = vst [vmem:[%s3207] ss:$4 sm:$0xff] %v3203
      %v3209 = vld.sshfl [vmem:[#allocation1] sm:$0xff pattern:$0x73625140]
      %v3211 = vld.sshfl [vmem:[#allocation1 + $0x8] sm:$0xff pattern:$0x73625140]
      %v3213 = vld.sshfl [vmem:[#allocation1 + $0x10] sm:$0xff pattern:$0x73625140]
      %v3215 = vld.sshfl [vmem:[#allocation1 + $0x18] sm:$0xff pattern:$0x73625140]
      %v3217 = vld.sshfl [vmem:[#allocation1 + $0x20] sm:$0xff pattern:$0x73625140]
      %v3219 = vld.sshfl [vmem:[#allocation1 + $0x28] sm:$0xff pattern:$0x73625140]
      %v3221 = vld.sshfl [vmem:[#allocation1 + $0x30] sm:$0xff pattern:$0x73625140]
      %3223 = vrot.lane.b32.xlu0 %v3209, 56
      %v3224 = vpop.permute.xlu0 %3223
      %3225 = vrot.lane.b32.xlu0 %v3211, 56
      %v3226 = vpop.permute.xlu0 %3225
      %3227 = vrot.lane.b32.xlu0 %v3213, 56
      %v3228 = vpop.permute.xlu0 %3227
      %3229 = vrot.lane.b32.xlu0 %v3215, 56
      %v3230 = vpop.permute.xlu0 %3229
      %3231 = vrot.lane.b32.xlu0 %v3217, 56
      %v3232 = vpop.permute.xlu0 %3231
      %3233 = vrot.lane.b32.xlu0 %v3219, 56
      %v3234 = vpop.permute.xlu0 %3233
      %3235 = vrot.lane.b32.xlu0 %v3221, 56
      %v3236 = vpop.permute.xlu0 %3235
      %vm3237 = vcmask 457728
      %v3238 = vsel %vm3237, %v3224, %v3226
      %v3239 = vsel %vm3237, %v3226, %v3228
      %v3240 = vsel %vm3237, %v3228, %v3230
      %v3241 = vsel %vm3237, %v3230, %v3232
      %v3242 = vsel %vm3237, %v3232, %v3234
      %v3243 = vsel %vm3237, %v3234, %v3236
      %v3245 = vsel %vm264, %v3201, 0
      %v3248 = vsel %vm268, %v3238, 0
      %v3251 = vsel %vm268, %v3239, 0
      %v3254 = vsel %vm268, %v3240, 0
      %v3257 = vsel %vm268, %v3241, 0
      %v3260 = vsel %vm268, %v3242, 0
      %v3263 = vsel %vm268, %v3243, 0
      %v3266 = vsel %vm268, %v3236, 0
      %3268 = vmatpush.bf16.msra.mxu0 0
      %3269 = vmatpush.bf16.msra.mxu0 0
      %3270 = vmatpush.bf16.msra.mxu0 0
      %3271 = vmatpush.bf16.msra.mxu0 0
      %3272 = vmatpush.bf16.msra.mxu0 0
      %3273 = vmatpush.bf16.msra.mxu0 0
      %3274 = vmatpush.bf16.msra.mxu0 0
      %3275 = vmatpush.bf16.msra.mxu0 %v3248
      %3276 = vmatmul.bf16.gmra.mxu0 %v3245
      %v3277 = vpop.f32.mrf.mxu0
      %v3278 = vadd.f32 0.0, %v3277
      %v3279 = vpop.f32.mrf.mxu0
      %3280 = vdwg.mxu0
      %3281 = vmatpush.bf16.msra.mxu0 0
      %3282 = vmatpush.bf16.msra.mxu0 0
      %3283 = vmatpush.bf16.msra.mxu0 0
      %3284 = vmatpush.bf16.msra.mxu0 0
      %3285 = vmatpush.bf16.msra.mxu0 0
      %3286 = vmatpush.bf16.msra.mxu0 0
      %3287 = vmatpush.bf16.msra.mxu0 0
      %3288 = vmatpush.bf16.msra.mxu0 %v3251
      %3289 = vmatmul.bf16.gmra.mxu0 %v3245
      %v3290 = vpop.f32.mrf.mxu0
      %v3291 = vadd.f32 0.0, %v3290
      %v3292 = vpop.f32.mrf.mxu0
      %3293 = vdwg.mxu0
      %3294 = vmatpush.bf16.msra.mxu0 0
      %3295 = vmatpush.bf16.msra.mxu0 0
      %3296 = vmatpush.bf16.msra.mxu0 0
      %3297 = vmatpush.bf16.msra.mxu0 0
      %3298 = vmatpush.bf16.msra.mxu0 0
      %3299 = vmatpush.bf16.msra.mxu0 0
      %3300 = vmatpush.bf16.msra.mxu0 0
      %3301 = vmatpush.bf16.msra.mxu0 %v3254
      %3302 = vmatmul.bf16.gmra.mxu0 %v3245
      %v3303 = vpop.f32.mrf.mxu0
      %v3304 = vadd.f32 0.0, %v3303
      %v3305 = vpop.f32.mrf.mxu0
      %3306 = vdwg.mxu0
      %3307 = vmatpush.bf16.msra.mxu0 0
      %3308 = vmatpush.bf16.msra.mxu0 0
      %3309 = vmatpush.bf16.msra.mxu0 0
      %3310 = vmatpush.bf16.msra.mxu0 0
      %3311 = vmatpush.bf16.msra.mxu0 0
      %3312 = vmatpush.bf16.msra.mxu0 0
      %3313 = vmatpush.bf16.msra.mxu0 0
      %3314 = vmatpush.bf16.msra.mxu0 %v3257
      %3315 = vmatmul.bf16.gmra.mxu0 %v3245
      %v3316 = vpop.f32.mrf.mxu0
      %v3317 = vadd.f32 0.0, %v3316
      %v3318 = vpop.f32.mrf.mxu0
      %3319 = vdwg.mxu0
      %3320 = vmatpush.bf16.msra.mxu0 0
      %3321 = vmatpush.bf16.msra.mxu0 0
      %3322 = vmatpush.bf16.msra.mxu0 0
      %3323 = vmatpush.bf16.msra.mxu0 0
      %3324 = vmatpush.bf16.msra.mxu0 0
      %3325 = vmatpush.bf16.msra.mxu0 0
      %3326 = vmatpush.bf16.msra.mxu0 0
      %3327 = vmatpush.bf16.msra.mxu0 %v3260
      %3328 = vmatmul.bf16.gmra.mxu0 %v3245
      %v3329 = vpop.f32.mrf.mxu0
      %v3330 = vadd.f32 0.0, %v3329
      %v3331 = vpop.f32.mrf.mxu0
      %3332 = vdwg.mxu0
      %3333 = vmatpush.bf16.msra.mxu0 0
      %3334 = vmatpush.bf16.msra.mxu0 0
      %3335 = vmatpush.bf16.msra.mxu0 0
      %3336 = vmatpush.bf16.msra.mxu0 0
      %3337 = vmatpush.bf16.msra.mxu0 0
      %3338 = vmatpush.bf16.msra.mxu0 0
      %3339 = vmatpush.bf16.msra.mxu0 0
      %3340 = vmatpush.bf16.msra.mxu0 %v3263
      %3341 = vmatmul.bf16.gmra.mxu0 %v3245
      %v3342 = vpop.f32.mrf.mxu0
      %v3343 = vadd.f32 0.0, %v3342
      %v3344 = vpop.f32.mrf.mxu0
      %3345 = vdwg.mxu0
      %3346 = vmatpush.bf16.msra.mxu0 0
      %3347 = vmatpush.bf16.msra.mxu0 0
      %3348 = vmatpush.bf16.msra.mxu0 0
      %3349 = vmatpush.bf16.msra.mxu0 0
      %3350 = vmatpush.bf16.msra.mxu0 0
      %3351 = vmatpush.bf16.msra.mxu0 0
      %3352 = vmatpush.bf16.msra.mxu0 0
      %3353 = vmatpush.bf16.msra.mxu0 %v3266
      %3354 = vmatmul.bf16.gmra.mxu0 %v3245
      %v3355 = vpop.f32.mrf.mxu0
      %v3356 = vadd.f32 0.0, %v3355
      %v3357 = vpop.f32.mrf.mxu0
      %3358 = vdwg.mxu0
      %v3359 = vadd.f32 %v3193, %v3278
      %v3360 = vadd.f32 %v3194, %v3291
      %v3361 = vadd.f32 %v3195, %v3304
      %v3362 = vadd.f32 %v3196, %v3317
      %v3363 = vadd.f32 %v3197, %v3330
      %v3364 = vadd.f32 %v3198, %v3343
      %v3365 = vadd.f32 %v3199, %v3356
      %s3366 = scalar_lea.vmem %s1, 38
      %v3367 = vld [vmem:[%s3366] sm:$0x3]
      %v3368 = vld [vmem:[%s207 + $0x2] sm:$0xff]
      %v3369 = vld [vmem:[%s207 + $0xa] sm:$0x3f]
      %3371 = vst [vmem:[#allocation1] ss:$4 sm:$0xff] %v3368
      %s3373 = scalar_lea.vmem [#allocation1], 32
      %3374 = vst [vmem:[%s3373] ss:$4 sm:$0xff] %v3369
      %v3375 = vld.sshfl [vmem:[#allocation1] sm:$0xff pattern:$0x73625140]
      %v3377 = vld.sshfl [vmem:[#allocation1 + $0x8] sm:$0xff pattern:$0x73625140]
      %v3379 = vld.sshfl [vmem:[#allocation1 + $0x10] sm:$0xff pattern:$0x73625140]
      %v3381 = vld.sshfl [vmem:[#allocation1 + $0x18] sm:$0xff pattern:$0x73625140]
      %v3383 = vld.sshfl [vmem:[#allocation1 + $0x20] sm:$0xff pattern:$0x73625140]
      %v3385 = vld.sshfl [vmem:[#allocation1 + $0x28] sm:$0xff pattern:$0x73625140]
      %v3387 = vld.sshfl [vmem:[#allocation1 + $0x30] sm:$0xff pattern:$0x73625140]
      %3389 = vrot.lane.b32.xlu0 %v3375, 55
      %v3390 = vpop.permute.xlu0 %3389
      %3391 = vrot.lane.b32.xlu0 %v3377, 55
      %v3392 = vpop.permute.xlu0 %3391
      %3393 = vrot.lane.b32.xlu0 %v3379, 55
      %v3394 = vpop.permute.xlu0 %3393
      %3395 = vrot.lane.b32.xlu0 %v3381, 55
      %v3396 = vpop.permute.xlu0 %3395
      %3397 = vrot.lane.b32.xlu0 %v3383, 55
      %v3398 = vpop.permute.xlu0 %3397
      %3399 = vrot.lane.b32.xlu0 %v3385, 55
      %v3400 = vpop.permute.xlu0 %3399
      %3401 = vrot.lane.b32.xlu0 %v3387, 55
      %v3402 = vpop.permute.xlu0 %3401
      %vm3403 = vcmask 449536
      %v3404 = vsel %vm3403, %v3390, %v3392
      %v3405 = vsel %vm3403, %v3392, %v3394
      %v3406 = vsel %vm3403, %v3394, %v3396
      %v3407 = vsel %vm3403, %v3396, %v3398
      %v3408 = vsel %vm3403, %v3398, %v3400
      %v3409 = vsel %vm3403, %v3400, %v3402
      %v3411 = vsel %vm264, %v3367, 0
      %v3414 = vsel %vm268, %v3404, 0
      %v3417 = vsel %vm268, %v3405, 0
      %v3420 = vsel %vm268, %v3406, 0
      %v3423 = vsel %vm268, %v3407, 0
      %v3426 = vsel %vm268, %v3408, 0
      %v3429 = vsel %vm268, %v3409, 0
      %v3432 = vsel %vm268, %v3402, 0
      %3434 = vmatpush.bf16.msra.mxu0 0
      %3435 = vmatpush.bf16.msra.mxu0 0
      %3436 = vmatpush.bf16.msra.mxu0 0
      %3437 = vmatpush.bf16.msra.mxu0 0
      %3438 = vmatpush.bf16.msra.mxu0 0
      %3439 = vmatpush.bf16.msra.mxu0 0
      %3440 = vmatpush.bf16.msra.mxu0 0
      %3441 = vmatpush.bf16.msra.mxu0 %v3414
      %3442 = vmatmul.bf16.gmra.mxu0 %v3411
      %v3443 = vpop.f32.mrf.mxu0
      %v3444 = vadd.f32 0.0, %v3443
      %v3445 = vpop.f32.mrf.mxu0
      %3446 = vdwg.mxu0
      %3447 = vmatpush.bf16.msra.mxu0 0
      %3448 = vmatpush.bf16.msra.mxu0 0
      %3449 = vmatpush.bf16.msra.mxu0 0
      %3450 = vmatpush.bf16.msra.mxu0 0
      %3451 = vmatpush.bf16.msra.mxu0 0
      %3452 = vmatpush.bf16.msra.mxu0 0
      %3453 = vmatpush.bf16.msra.mxu0 0
      %3454 = vmatpush.bf16.msra.mxu0 %v3417
      %3455 = vmatmul.bf16.gmra.mxu0 %v3411
      %v3456 = vpop.f32.mrf.mxu0
      %v3457 = vadd.f32 0.0, %v3456
      %v3458 = vpop.f32.mrf.mxu0
      %3459 = vdwg.mxu0
      %3460 = vmatpush.bf16.msra.mxu0 0
      %3461 = vmatpush.bf16.msra.mxu0 0
      %3462 = vmatpush.bf16.msra.mxu0 0
      %3463 = vmatpush.bf16.msra.mxu0 0
      %3464 = vmatpush.bf16.msra.mxu0 0
      %3465 = vmatpush.bf16.msra.mxu0 0
      %3466 = vmatpush.bf16.msra.mxu0 0
      %3467 = vmatpush.bf16.msra.mxu0 %v3420
      %3468 = vmatmul.bf16.gmra.mxu0 %v3411
      %v3469 = vpop.f32.mrf.mxu0
      %v3470 = vadd.f32 0.0, %v3469
      %v3471 = vpop.f32.mrf.mxu0
      %3472 = vdwg.mxu0
      %3473 = vmatpush.bf16.msra.mxu0 0
      %3474 = vmatpush.bf16.msra.mxu0 0
      %3475 = vmatpush.bf16.msra.mxu0 0
      %3476 = vmatpush.bf16.msra.mxu0 0
      %3477 = vmatpush.bf16.msra.mxu0 0
      %3478 = vmatpush.bf16.msra.mxu0 0
      %3479 = vmatpush.bf16.msra.mxu0 0
      %3480 = vmatpush.bf16.msra.mxu0 %v3423
      %3481 = vmatmul.bf16.gmra.mxu0 %v3411
      %v3482 = vpop.f32.mrf.mxu0
      %v3483 = vadd.f32 0.0, %v3482
      %v3484 = vpop.f32.mrf.mxu0
      %3485 = vdwg.mxu0
      %3486 = vmatpush.bf16.msra.mxu0 0
      %3487 = vmatpush.bf16.msra.mxu0 0
      %3488 = vmatpush.bf16.msra.mxu0 0
      %3489 = vmatpush.bf16.msra.mxu0 0
      %3490 = vmatpush.bf16.msra.mxu0 0
      %3491 = vmatpush.bf16.msra.mxu0 0
      %3492 = vmatpush.bf16.msra.mxu0 0
      %3493 = vmatpush.bf16.msra.mxu0 %v3426
      %3494 = vmatmul.bf16.gmra.mxu0 %v3411
      %v3495 = vpop.f32.mrf.mxu0
      %v3496 = vadd.f32 0.0, %v3495
      %v3497 = vpop.f32.mrf.mxu0
      %3498 = vdwg.mxu0
      %3499 = vmatpush.bf16.msra.mxu0 0
      %3500 = vmatpush.bf16.msra.mxu0 0
      %3501 = vmatpush.bf16.msra.mxu0 0
      %3502 = vmatpush.bf16.msra.mxu0 0
      %3503 = vmatpush.bf16.msra.mxu0 0
      %3504 = vmatpush.bf16.msra.mxu0 0
      %3505 = vmatpush.bf16.msra.mxu0 0
      %3506 = vmatpush.bf16.msra.mxu0 %v3429
      %3507 = vmatmul.bf16.gmra.mxu0 %v3411
      %v3508 = vpop.f32.mrf.mxu0
      %v3509 = vadd.f32 0.0, %v3508
      %v3510 = vpop.f32.mrf.mxu0
      %3511 = vdwg.mxu0
      %3512 = vmatpush.bf16.msra.mxu0 0
      %3513 = vmatpush.bf16.msra.mxu0 0
      %3514 = vmatpush.bf16.msra.mxu0 0
      %3515 = vmatpush.bf16.msra.mxu0 0
      %3516 = vmatpush.bf16.msra.mxu0 0
      %3517 = vmatpush.bf16.msra.mxu0 0
      %3518 = vmatpush.bf16.msra.mxu0 0
      %3519 = vmatpush.bf16.msra.mxu0 %v3432
      %3520 = vmatmul.bf16.gmra.mxu0 %v3411
      %v3521 = vpop.f32.mrf.mxu0
      %v3522 = vadd.f32 0.0, %v3521
      %v3523 = vpop.f32.mrf.mxu0
      %3524 = vdwg.mxu0
      %v3525 = vadd.f32 %v3359, %v3444
      %v3526 = vadd.f32 %v3360, %v3457
      %v3527 = vadd.f32 %v3361, %v3470
      %v3528 = vadd.f32 %v3362, %v3483
      %v3529 = vadd.f32 %v3363, %v3496
      %v3530 = vadd.f32 %v3364, %v3509
      %v3531 = vadd.f32 %v3365, %v3522
      %s3532 = scalar_lea.vmem %s1, 40
      %v3533 = vld [vmem:[%s3532] sm:$0x3]
      %v3534 = vld [vmem:[%s207 + $0x2] sm:$0xff]
      %v3535 = vld [vmem:[%s207 + $0xa] sm:$0x3f]
      %3537 = vst [vmem:[#allocation1] ss:$4 sm:$0xff] %v3534
      %s3539 = scalar_lea.vmem [#allocation1], 32
      %3540 = vst [vmem:[%s3539] ss:$4 sm:$0xff] %v3535
      %v3541 = vld.sshfl [vmem:[#allocation1] sm:$0xff pattern:$0x73625140]
      %v3543 = vld.sshfl [vmem:[#allocation1 + $0x8] sm:$0xff pattern:$0x73625140]
      %v3545 = vld.sshfl [vmem:[#allocation1 + $0x10] sm:$0xff pattern:$0x73625140]
      %v3547 = vld.sshfl [vmem:[#allocation1 + $0x18] sm:$0xff pattern:$0x73625140]
      %v3549 = vld.sshfl [vmem:[#allocation1 + $0x20] sm:$0xff pattern:$0x73625140]
      %v3551 = vld.sshfl [vmem:[#allocation1 + $0x28] sm:$0xff pattern:$0x73625140]
      %v3553 = vld.sshfl [vmem:[#allocation1 + $0x30] sm:$0xff pattern:$0x73625140]
      %3555 = vrot.lane.b32.xlu0 %v3541, 54
      %v3556 = vpop.permute.xlu0 %3555
      %3557 = vrot.lane.b32.xlu0 %v3543, 54
      %v3558 = vpop.permute.xlu0 %3557
      %3559 = vrot.lane.b32.xlu0 %v3545, 54
      %v3560 = vpop.permute.xlu0 %3559
      %3561 = vrot.lane.b32.xlu0 %v3547, 54
      %v3562 = vpop.permute.xlu0 %3561
      %3563 = vrot.lane.b32.xlu0 %v3549, 54
      %v3564 = vpop.permute.xlu0 %3563
      %3565 = vrot.lane.b32.xlu0 %v3551, 54
      %v3566 = vpop.permute.xlu0 %3565
      %3567 = vrot.lane.b32.xlu0 %v3553, 54
      %v3568 = vpop.permute.xlu0 %3567
      %vm3569 = vcmask 441344
      %v3570 = vsel %vm3569, %v3556, %v3558
      %v3571 = vsel %vm3569, %v3558, %v3560
      %v3572 = vsel %vm3569, %v3560, %v3562
      %v3573 = vsel %vm3569, %v3562, %v3564
      %v3574 = vsel %vm3569, %v3564, %v3566
      %v3575 = vsel %vm3569, %v3566, %v3568
      %v3577 = vsel %vm264, %v3533, 0
      %v3580 = vsel %vm268, %v3570, 0
      %v3583 = vsel %vm268, %v3571, 0
      %v3586 = vsel %vm268, %v3572, 0
      %v3589 = vsel %vm268, %v3573, 0
      %v3592 = vsel %vm268, %v3574, 0
      %v3595 = vsel %vm268, %v3575, 0
      %v3598 = vsel %vm268, %v3568, 0
      %3600 = vmatpush.bf16.msra.mxu0 0
      %3601 = vmatpush.bf16.msra.mxu0 0
      %3602 = vmatpush.bf16.msra.mxu0 0
      %3603 = vmatpush.bf16.msra.mxu0 0
      %3604 = vmatpush.bf16.msra.mxu0 0
      %3605 = vmatpush.bf16.msra.mxu0 0
      %3606 = vmatpush.bf16.msra.mxu0 0
      %3607 = vmatpush.bf16.msra.mxu0 %v3580
      %3608 = vmatmul.bf16.gmra.mxu0 %v3577
      %v3609 = vpop.f32.mrf.mxu0
      %v3610 = vadd.f32 0.0, %v3609
      %v3611 = vpop.f32.mrf.mxu0
      %3612 = vdwg.mxu0
      %3613 = vmatpush.bf16.msra.mxu0 0
      %3614 = vmatpush.bf16.msra.mxu0 0
      %3615 = vmatpush.bf16.msra.mxu0 0
      %3616 = vmatpush.bf16.msra.mxu0 0
      %3617 = vmatpush.bf16.msra.mxu0 0
      %3618 = vmatpush.bf16.msra.mxu0 0
      %3619 = vmatpush.bf16.msra.mxu0 0
      %3620 = vmatpush.bf16.msra.mxu0 %v3583
      %3621 = vmatmul.bf16.gmra.mxu0 %v3577
      %v3622 = vpop.f32.mrf.mxu0
      %v3623 = vadd.f32 0.0, %v3622
      %v3624 = vpop.f32.mrf.mxu0
      %3625 = vdwg.mxu0
      %3626 = vmatpush.bf16.msra.mxu0 0
      %3627 = vmatpush.bf16.msra.mxu0 0
      %3628 = vmatpush.bf16.msra.mxu0 0
      %3629 = vmatpush.bf16.msra.mxu0 0
      %3630 = vmatpush.bf16.msra.mxu0 0
      %3631 = vmatpush.bf16.msra.mxu0 0
      %3632 = vmatpush.bf16.msra.mxu0 0
      %3633 = vmatpush.bf16.msra.mxu0 %v3586
      %3634 = vmatmul.bf16.gmra.mxu0 %v3577
      %v3635 = vpop.f32.mrf.mxu0
      %v3636 = vadd.f32 0.0, %v3635
      %v3637 = vpop.f32.mrf.mxu0
      %3638 = vdwg.mxu0
      %3639 = vmatpush.bf16.msra.mxu0 0
      %3640 = vmatpush.bf16.msra.mxu0 0
      %3641 = vmatpush.bf16.msra.mxu0 0
      %3642 = vmatpush.bf16.msra.mxu0 0
      %3643 = vmatpush.bf16.msra.mxu0 0
      %3644 = vmatpush.bf16.msra.mxu0 0
      %3645 = vmatpush.bf16.msra.mxu0 0
      %3646 = vmatpush.bf16.msra.mxu0 %v3589
      %3647 = vmatmul.bf16.gmra.mxu0 %v3577
      %v3648 = vpop.f32.mrf.mxu0
      %v3649 = vadd.f32 0.0, %v3648
      %v3650 = vpop.f32.mrf.mxu0
      %3651 = vdwg.mxu0
      %3652 = vmatpush.bf16.msra.mxu0 0
      %3653 = vmatpush.bf16.msra.mxu0 0
      %3654 = vmatpush.bf16.msra.mxu0 0
      %3655 = vmatpush.bf16.msra.mxu0 0
      %3656 = vmatpush.bf16.msra.mxu0 0
      %3657 = vmatpush.bf16.msra.mxu0 0
      %3658 = vmatpush.bf16.msra.mxu0 0
      %3659 = vmatpush.bf16.msra.mxu0 %v3592
      %3660 = vmatmul.bf16.gmra.mxu0 %v3577
      %v3661 = vpop.f32.mrf.mxu0
      %v3662 = vadd.f32 0.0, %v3661
      %v3663 = vpop.f32.mrf.mxu0
      %3664 = vdwg.mxu0
      %3665 = vmatpush.bf16.msra.mxu0 0
      %3666 = vmatpush.bf16.msra.mxu0 0
      %3667 = vmatpush.bf16.msra.mxu0 0
      %3668 = vmatpush.bf16.msra.mxu0 0
      %3669 = vmatpush.bf16.msra.mxu0 0
      %3670 = vmatpush.bf16.msra.mxu0 0
      %3671 = vmatpush.bf16.msra.mxu0 0
      %3672 = vmatpush.bf16.msra.mxu0 %v3595
      %3673 = vmatmul.bf16.gmra.mxu0 %v3577
      %v3674 = vpop.f32.mrf.mxu0
      %v3675 = vadd.f32 0.0, %v3674
      %v3676 = vpop.f32.mrf.mxu0
      %3677 = vdwg.mxu0
      %3678 = vmatpush.bf16.msra.mxu0 0
      %3679 = vmatpush.bf16.msra.mxu0 0
      %3680 = vmatpush.bf16.msra.mxu0 0
      %3681 = vmatpush.bf16.msra.mxu0 0
      %3682 = vmatpush.bf16.msra.mxu0 0
      %3683 = vmatpush.bf16.msra.mxu0 0
      %3684 = vmatpush.bf16.msra.mxu0 0
      %3685 = vmatpush.bf16.msra.mxu0 %v3598
      %3686 = vmatmul.bf16.gmra.mxu0 %v3577
      %v3687 = vpop.f32.mrf.mxu0
      %v3688 = vadd.f32 0.0, %v3687
      %v3689 = vpop.f32.mrf.mxu0
      %3690 = vdwg.mxu0
      %v3691 = vadd.f32 %v3525, %v3610
      %v3692 = vadd.f32 %v3526, %v3623
      %v3693 = vadd.f32 %v3527, %v3636
      %v3694 = vadd.f32 %v3528, %v3649
      %v3695 = vadd.f32 %v3529, %v3662
      %v3696 = vadd.f32 %v3530, %v3675
      %v3697 = vadd.f32 %v3531, %v3688
      %s3698 = scalar_lea.vmem %s1, 42
      %v3699 = vld [vmem:[%s3698] sm:$0x3]
      %v3700 = vld [vmem:[%s207 + $0x2] sm:$0xff]
      %v3701 = vld [vmem:[%s207 + $0xa] sm:$0x3f]
      %3703 = vst [vmem:[#allocation1] ss:$4 sm:$0xff] %v3700
      %s3705 = scalar_lea.vmem [#allocation1], 32
      %3706 = vst [vmem:[%s3705] ss:$4 sm:$0xff] %v3701
      %v3707 = vld.sshfl [vmem:[#allocation1] sm:$0xff pattern:$0x73625140]
      %v3709 = vld.sshfl [vmem:[#allocation1 + $0x8] sm:$0xff pattern:$0x73625140]
      %v3711 = vld.sshfl [vmem:[#allocation1 + $0x10] sm:$0xff pattern:$0x73625140]
      %v3713 = vld.sshfl [vmem:[#allocation1 + $0x18] sm:$0xff pattern:$0x73625140]
      %v3715 = vld.sshfl [vmem:[#allocation1 + $0x20] sm:$0xff pattern:$0x73625140]
      %v3717 = vld.sshfl [vmem:[#allocation1 + $0x28] sm:$0xff pattern:$0x73625140]
      %v3719 = vld.sshfl [vmem:[#allocation1 + $0x30] sm:$0xff pattern:$0x73625140]
      %3721 = vrot.lane.b32.xlu0 %v3707, 46
      %v3722 = vpop.permute.xlu0 %3721
      %3723 = vrot.lane.b32.xlu0 %v3709, 46
      %v3724 = vpop.permute.xlu0 %3723
      %3725 = vrot.lane.b32.xlu0 %v3711, 46
      %v3726 = vpop.permute.xlu0 %3725
      %3727 = vrot.lane.b32.xlu0 %v3713, 46
      %v3728 = vpop.permute.xlu0 %3727
      %3729 = vrot.lane.b32.xlu0 %v3715, 46
      %v3730 = vpop.permute.xlu0 %3729
      %3731 = vrot.lane.b32.xlu0 %v3717, 46
      %v3732 = vpop.permute.xlu0 %3731
      %3733 = vrot.lane.b32.xlu0 %v3719, 46
      %v3734 = vpop.permute.xlu0 %3733
      %vm3735 = vcmask 375808
      %v3736 = vsel %vm3735, %v3722, %v3724
      %v3737 = vsel %vm3735, %v3724, %v3726
      %v3738 = vsel %vm3735, %v3726, %v3728
      %v3739 = vsel %vm3735, %v3728, %v3730
      %v3740 = vsel %vm3735, %v3730, %v3732
      %v3741 = vsel %vm3735, %v3732, %v3734
      %v3743 = vsel %vm264, %v3699, 0
      %v3746 = vsel %vm268, %v3736, 0
      %v3749 = vsel %vm268, %v3737, 0
      %v3752 = vsel %vm268, %v3738, 0
      %v3755 = vsel %vm268, %v3739, 0
      %v3758 = vsel %vm268, %v3740, 0
      %v3761 = vsel %vm268, %v3741, 0
      %v3764 = vsel %vm268, %v3734, 0
      %3766 = vmatpush.bf16.msra.mxu0 0
      %3767 = vmatpush.bf16.msra.mxu0 0
      %3768 = vmatpush.bf16.msra.mxu0 0
      %3769 = vmatpush.bf16.msra.mxu0 0
      %3770 = vmatpush.bf16.msra.mxu0 0
      %3771 = vmatpush.bf16.msra.mxu0 0
      %3772 = vmatpush.bf16.msra.mxu0 0
      %3773 = vmatpush.bf16.msra.mxu0 %v3746
      %3774 = vmatmul.bf16.gmra.mxu0 %v3743
      %v3775 = vpop.f32.mrf.mxu0
      %v3776 = vadd.f32 0.0, %v3775
      %v3777 = vpop.f32.mrf.mxu0
      %3778 = vdwg.mxu0
      %3779 = vmatpush.bf16.msra.mxu0 0
      %3780 = vmatpush.bf16.msra.mxu0 0
      %3781 = vmatpush.bf16.msra.mxu0 0
      %3782 = vmatpush.bf16.msra.mxu0 0
      %3783 = vmatpush.bf16.msra.mxu0 0
      %3784 = vmatpush.bf16.msra.mxu0 0
      %3785 = vmatpush.bf16.msra.mxu0 0
      %3786 = vmatpush.bf16.msra.mxu0 %v3749
      %3787 = vmatmul.bf16.gmra.mxu0 %v3743
      %v3788 = vpop.f32.mrf.mxu0
      %v3789 = vadd.f32 0.0, %v3788
      %v3790 = vpop.f32.mrf.mxu0
      %3791 = vdwg.mxu0
      %3792 = vmatpush.bf16.msra.mxu0 0
      %3793 = vmatpush.bf16.msra.mxu0 0
      %3794 = vmatpush.bf16.msra.mxu0 0
      %3795 = vmatpush.bf16.msra.mxu0 0
      %3796 = vmatpush.bf16.msra.mxu0 0
      %3797 = vmatpush.bf16.msra.mxu0 0
      %3798 = vmatpush.bf16.msra.mxu0 0
      %3799 = vmatpush.bf16.msra.mxu0 %v3752
      %3800 = vmatmul.bf16.gmra.mxu0 %v3743
      %v3801 = vpop.f32.mrf.mxu0
      %v3802 = vadd.f32 0.0, %v3801
      %v3803 = vpop.f32.mrf.mxu0
      %3804 = vdwg.mxu0
      %3805 = vmatpush.bf16.msra.mxu0 0
      %3806 = vmatpush.bf16.msra.mxu0 0
      %3807 = vmatpush.bf16.msra.mxu0 0
      %3808 = vmatpush.bf16.msra.mxu0 0
      %3809 = vmatpush.bf16.msra.mxu0 0
      %3810 = vmatpush.bf16.msra.mxu0 0
      %3811 = vmatpush.bf16.msra.mxu0 0
      %3812 = vmatpush.bf16.msra.mxu0 %v3755
      %3813 = vmatmul.bf16.gmra.mxu0 %v3743
      %v3814 = vpop.f32.mrf.mxu0
      %v3815 = vadd.f32 0.0, %v3814
      %v3816 = vpop.f32.mrf.mxu0
      %3817 = vdwg.mxu0
      %3818 = vmatpush.bf16.msra.mxu0 0
      %3819 = vmatpush.bf16.msra.mxu0 0
      %3820 = vmatpush.bf16.msra.mxu0 0
      %3821 = vmatpush.bf16.msra.mxu0 0
      %3822 = vmatpush.bf16.msra.mxu0 0
      %3823 = vmatpush.bf16.msra.mxu0 0
      %3824 = vmatpush.bf16.msra.mxu0 0
      %3825 = vmatpush.bf16.msra.mxu0 %v3758
      %3826 = vmatmul.bf16.gmra.mxu0 %v3743
      %v3827 = vpop.f32.mrf.mxu0
      %v3828 = vadd.f32 0.0, %v3827
      %v3829 = vpop.f32.mrf.mxu0
      %3830 = vdwg.mxu0
      %3831 = vmatpush.bf16.msra.mxu0 0
      %3832 = vmatpush.bf16.msra.mxu0 0
      %3833 = vmatpush.bf16.msra.mxu0 0
      %3834 = vmatpush.bf16.msra.mxu0 0
      %3835 = vmatpush.bf16.msra.mxu0 0
      %3836 = vmatpush.bf16.msra.mxu0 0
      %3837 = vmatpush.bf16.msra.mxu0 0
      %3838 = vmatpush.bf16.msra.mxu0 %v3761
      %3839 = vmatmul.bf16.gmra.mxu0 %v3743
      %v3840 = vpop.f32.mrf.mxu0
      %v3841 = vadd.f32 0.0, %v3840
      %v3842 = vpop.f32.mrf.mxu0
      %3843 = vdwg.mxu0
      %3844 = vmatpush.bf16.msra.mxu0 0
      %3845 = vmatpush.bf16.msra.mxu0 0
      %3846 = vmatpush.bf16.msra.mxu0 0
      %3847 = vmatpush.bf16.msra.mxu0 0
      %3848 = vmatpush.bf16.msra.mxu0 0
      %3849 = vmatpush.bf16.msra.mxu0 0
      %3850 = vmatpush.bf16.msra.mxu0 0
      %3851 = vmatpush.bf16.msra.mxu0 %v3764
      %3852 = vmatmul.bf16.gmra.mxu0 %v3743
      %v3853 = vpop.f32.mrf.mxu0
      %v3854 = vadd.f32 0.0, %v3853
      %v3855 = vpop.f32.mrf.mxu0
      %3856 = vdwg.mxu0
      %v3857 = vadd.f32 %v3691, %v3776
      %v3858 = vadd.f32 %v3692, %v3789
      %v3859 = vadd.f32 %v3693, %v3802
      %v3860 = vadd.f32 %v3694, %v3815
      %v3861 = vadd.f32 %v3695, %v3828
      %v3862 = vadd.f32 %v3696, %v3841
      %v3863 = vadd.f32 %v3697, %v3854
      %s3864 = scalar_lea.vmem %s1, 44
      %v3865 = vld [vmem:[%s3864] sm:$0x3]
      %v3866 = vld [vmem:[%s207 + $0x2] sm:$0xff]
      %v3867 = vld [vmem:[%s207 + $0xa] sm:$0x3f]
      %3869 = vst [vmem:[#allocation1] ss:$4 sm:$0xff] %v3866
      %s3871 = scalar_lea.vmem [#allocation1], 32
      %3872 = vst [vmem:[%s3871] ss:$4 sm:$0xff] %v3867
      %v3873 = vld.sshfl [vmem:[#allocation1] sm:$0xff pattern:$0x73625140]
      %v3875 = vld.sshfl [vmem:[#allocation1 + $0x8] sm:$0xff pattern:$0x73625140]
      %v3877 = vld.sshfl [vmem:[#allocation1 + $0x10] sm:$0xff pattern:$0x73625140]
      %v3879 = vld.sshfl [vmem:[#allocation1 + $0x18] sm:$0xff pattern:$0x73625140]
      %v3881 = vld.sshfl [vmem:[#allocation1 + $0x20] sm:$0xff pattern:$0x73625140]
      %v3883 = vld.sshfl [vmem:[#allocation1 + $0x28] sm:$0xff pattern:$0x73625140]
      %v3885 = vld.sshfl [vmem:[#allocation1 + $0x30] sm:$0xff pattern:$0x73625140]
      %3887 = vrot.lane.b32.xlu0 %v3873, 45
      %v3888 = vpop.permute.xlu0 %3887
      %3889 = vrot.lane.b32.xlu0 %v3875, 45
      %v3890 = vpop.permute.xlu0 %3889
      %3891 = vrot.lane.b32.xlu0 %v3877, 45
      %v3892 = vpop.permute.xlu0 %3891
      %3893 = vrot.lane.b32.xlu0 %v3879, 45
      %v3894 = vpop.permute.xlu0 %3893
      %3895 = vrot.lane.b32.xlu0 %v3881, 45
      %v3896 = vpop.permute.xlu0 %3895
      %3897 = vrot.lane.b32.xlu0 %v3883, 45
      %v3898 = vpop.permute.xlu0 %3897
      %3899 = vrot.lane.b32.xlu0 %v3885, 45
      %v3900 = vpop.permute.xlu0 %3899
      %vm3901 = vcmask 367616
      %v3902 = vsel %vm3901, %v3888, %v3890
      %v3903 = vsel %vm3901, %v3890, %v3892
      %v3904 = vsel %vm3901, %v3892, %v3894
      %v3905 = vsel %vm3901, %v3894, %v3896
      %v3906 = vsel %vm3901, %v3896, %v3898
      %v3907 = vsel %vm3901, %v3898, %v3900
      %v3909 = vsel %vm264, %v3865, 0
      %v3912 = vsel %vm268, %v3902, 0
      %v3915 = vsel %vm268, %v3903, 0
      %v3918 = vsel %vm268, %v3904, 0
      %v3921 = vsel %vm268, %v3905, 0
      %v3924 = vsel %vm268, %v3906, 0
      %v3927 = vsel %vm268, %v3907, 0
      %v3930 = vsel %vm268, %v3900, 0
      %3932 = vmatpush.bf16.msra.mxu0 0
      %3933 = vmatpush.bf16.msra.mxu0 0
      %3934 = vmatpush.bf16.msra.mxu0 0
      %3935 = vmatpush.bf16.msra.mxu0 0
      %3936 = vmatpush.bf16.msra.mxu0 0
      %3937 = vmatpush.bf16.msra.mxu0 0
      %3938 = vmatpush.bf16.msra.mxu0 0
      %3939 = vmatpush.bf16.msra.mxu0 %v3912
      %3940 = vmatmul.bf16.gmra.mxu0 %v3909
      %v3941 = vpop.f32.mrf.mxu0
      %v3942 = vadd.f32 0.0, %v3941
      %v3943 = vpop.f32.mrf.mxu0
      %3944 = vdwg.mxu0
      %3945 = vmatpush.bf16.msra.mxu0 0
      %3946 = vmatpush.bf16.msra.mxu0 0
      %3947 = vmatpush.bf16.msra.mxu0 0
      %3948 = vmatpush.bf16.msra.mxu0 0
      %3949 = vmatpush.bf16.msra.mxu0 0
      %3950 = vmatpush.bf16.msra.mxu0 0
      %3951 = vmatpush.bf16.msra.mxu0 0
      %3952 = vmatpush.bf16.msra.mxu0 %v3915
      %3953 = vmatmul.bf16.gmra.mxu0 %v3909
      %v3954 = vpop.f32.mrf.mxu0
      %v3955 = vadd.f32 0.0, %v3954
      %v3956 = vpop.f32.mrf.mxu0
      %3957 = vdwg.mxu0
      %3958 = vmatpush.bf16.msra.mxu0 0
      %3959 = vmatpush.bf16.msra.mxu0 0
      %3960 = vmatpush.bf16.msra.mxu0 0
      %3961 = vmatpush.bf16.msra.mxu0 0
      %3962 = vmatpush.bf16.msra.mxu0 0
      %3963 = vmatpush.bf16.msra.mxu0 0
      %3964 = vmatpush.bf16.msra.mxu0 0
      %3965 = vmatpush.bf16.msra.mxu0 %v3918
      %3966 = vmatmul.bf16.gmra.mxu0 %v3909
      %v3967 = vpop.f32.mrf.mxu0
      %v3968 = vadd.f32 0.0, %v3967
      %v3969 = vpop.f32.mrf.mxu0
      %3970 = vdwg.mxu0
      %3971 = vmatpush.bf16.msra.mxu0 0
      %3972 = vmatpush.bf16.msra.mxu0 0
      %3973 = vmatpush.bf16.msra.mxu0 0
      %3974 = vmatpush.bf16.msra.mxu0 0
      %3975 = vmatpush.bf16.msra.mxu0 0
      %3976 = vmatpush.bf16.msra.mxu0 0
      %3977 = vmatpush.bf16.msra.mxu0 0
      %3978 = vmatpush.bf16.msra.mxu0 %v3921
      %3979 = vmatmul.bf16.gmra.mxu0 %v3909
      %v3980 = vpop.f32.mrf.mxu0
      %v3981 = vadd.f32 0.0, %v3980
      %v3982 = vpop.f32.mrf.mxu0
      %3983 = vdwg.mxu0
      %3984 = vmatpush.bf16.msra.mxu0 0
      %3985 = vmatpush.bf16.msra.mxu0 0
      %3986 = vmatpush.bf16.msra.mxu0 0
      %3987 = vmatpush.bf16.msra.mxu0 0
      %3988 = vmatpush.bf16.msra.mxu0 0
      %3989 = vmatpush.bf16.msra.mxu0 0
      %3990 = vmatpush.bf16.msra.mxu0 0
      %3991 = vmatpush.bf16.msra.mxu0 %v3924
      %3992 = vmatmul.bf16.gmra.mxu0 %v3909
      %v3993 = vpop.f32.mrf.mxu0
      %v3994 = vadd.f32 0.0, %v3993
      %v3995 = vpop.f32.mrf.mxu0
      %3996 = vdwg.mxu0
      %3997 = vmatpush.bf16.msra.mxu0 0
      %3998 = vmatpush.bf16.msra.mxu0 0
      %3999 = vmatpush.bf16.msra.mxu0 0
      %4000 = vmatpush.bf16.msra.mxu0 0
      %4001 = vmatpush.bf16.msra.mxu0 0
      %4002 = vmatpush.bf16.msra.mxu0 0
      %4003 = vmatpush.bf16.msra.mxu0 0
      %4004 = vmatpush.bf16.msra.mxu0 %v3927
      %4005 = vmatmul.bf16.gmra.mxu0 %v3909
      %v4006 = vpop.f32.mrf.mxu0
      %v4007 = vadd.f32 0.0, %v4006
      %v4008 = vpop.f32.mrf.mxu0
      %4009 = vdwg.mxu0
      %4010 = vmatpush.bf16.msra.mxu0 0
      %4011 = vmatpush.bf16.msra.mxu0 0
      %4012 = vmatpush.bf16.msra.mxu0 0
      %4013 = vmatpush.bf16.msra.mxu0 0
      %4014 = vmatpush.bf16.msra.mxu0 0
      %4015 = vmatpush.bf16.msra.mxu0 0
      %4016 = vmatpush.bf16.msra.mxu0 0
      %4017 = vmatpush.bf16.msra.mxu0 %v3930
      %4018 = vmatmul.bf16.gmra.mxu0 %v3909
      %v4019 = vpop.f32.mrf.mxu0
      %v4020 = vadd.f32 0.0, %v4019
      %v4021 = vpop.f32.mrf.mxu0
      %4022 = vdwg.mxu0
      %v4023 = vadd.f32 %v3857, %v3942
      %v4024 = vadd.f32 %v3858, %v3955
      %v4025 = vadd.f32 %v3859, %v3968
      %v4026 = vadd.f32 %v3860, %v3981
      %v4027 = vadd.f32 %v3861, %v3994
      %v4028 = vadd.f32 %v3862, %v4007
      %v4029 = vadd.f32 %v3863, %v4020
      %s4030 = scalar_lea.vmem %s1, 46
      %v4031 = vld [vmem:[%s4030] sm:$0x3]
      %v4032 = vld [vmem:[%s207 + $0x2] sm:$0xff]
      %v4033 = vld [vmem:[%s207 + $0xa] sm:$0x3f]
      %4035 = vst [vmem:[#allocation1] ss:$4 sm:$0xff] %v4032
      %s4037 = scalar_lea.vmem [#allocation1], 32
      %4038 = vst [vmem:[%s4037] ss:$4 sm:$0xff] %v4033
      %v4039 = vld.sshfl [vmem:[#allocation1] sm:$0xff pattern:$0x73625140]
      %v4041 = vld.sshfl [vmem:[#allocation1 + $0x8] sm:$0xff pattern:$0x73625140]
      %v4043 = vld.sshfl [vmem:[#allocation1 + $0x10] sm:$0xff pattern:$0x73625140]
      %v4045 = vld.sshfl [vmem:[#allocation1 + $0x18] sm:$0xff pattern:$0x73625140]
      %v4047 = vld.sshfl [vmem:[#allocation1 + $0x20] sm:$0xff pattern:$0x73625140]
      %v4049 = vld.sshfl [vmem:[#allocation1 + $0x28] sm:$0xff pattern:$0x73625140]
      %v4051 = vld.sshfl [vmem:[#allocation1 + $0x30] sm:$0xff pattern:$0x73625140]
      %4053 = vrot.lane.b32.xlu0 %v4039, 44
      %v4054 = vpop.permute.xlu0 %4053
      %4055 = vrot.lane.b32.xlu0 %v4041, 44
      %v4056 = vpop.permute.xlu0 %4055
      %4057 = vrot.lane.b32.xlu0 %v4043, 44
      %v4058 = vpop.permute.xlu0 %4057
      %4059 = vrot.lane.b32.xlu0 %v4045, 44
      %v4060 = vpop.permute.xlu0 %4059
      %4061 = vrot.lane.b32.xlu0 %v4047, 44
      %v4062 = vpop.permute.xlu0 %4061
      %4063 = vrot.lane.b32.xlu0 %v4049, 44
      %v4064 = vpop.permute.xlu0 %4063
      %4065 = vrot.lane.b32.xlu0 %v4051, 44
      %v4066 = vpop.permute.xlu0 %4065
      %vm4067 = vcmask 359424
      %v4068 = vsel %vm4067, %v4054, %v4056
      %v4069 = vsel %vm4067, %v4056, %v4058
      %v4070 = vsel %vm4067, %v4058, %v4060
      %v4071 = vsel %vm4067, %v4060, %v4062
      %v4072 = vsel %vm4067, %v4062, %v4064
      %v4073 = vsel %vm4067, %v4064, %v4066
      %v4075 = vsel %vm264, %v4031, 0
      %v4078 = vsel %vm268, %v4068, 0
      %v4081 = vsel %vm268, %v4069, 0
      %v4084 = vsel %vm268, %v4070, 0
      %v4087 = vsel %vm268, %v4071, 0
      %v4090 = vsel %vm268, %v4072, 0
      %v4093 = vsel %vm268, %v4073, 0
      %v4096 = vsel %vm268, %v4066, 0
      %4098 = vmatpush.bf16.msra.mxu0 0
      %4099 = vmatpush.bf16.msra.mxu0 0
      %4100 = vmatpush.bf16.msra.mxu0 0
      %4101 = vmatpush.bf16.msra.mxu0 0
      %4102 = vmatpush.bf16.msra.mxu0 0
      %4103 = vmatpush.bf16.msra.mxu0 0
      %4104 = vmatpush.bf16.msra.mxu0 0
      %4105 = vmatpush.bf16.msra.mxu0 %v4078
      %4106 = vmatmul.bf16.gmra.mxu0 %v4075
      %v4107 = vpop.f32.mrf.mxu0
      %v4108 = vadd.f32 0.0, %v4107
      %v4109 = vpop.f32.mrf.mxu0
      %4110 = vdwg.mxu0
      %4111 = vmatpush.bf16.msra.mxu0 0
      %4112 = vmatpush.bf16.msra.mxu0 0
      %4113 = vmatpush.bf16.msra.mxu0 0
      %4114 = vmatpush.bf16.msra.mxu0 0
      %4115 = vmatpush.bf16.msra.mxu0 0
      %4116 = vmatpush.bf16.msra.mxu0 0
      %4117 = vmatpush.bf16.msra.mxu0 0
      %4118 = vmatpush.bf16.msra.mxu0 %v4081
      %4119 = vmatmul.bf16.gmra.mxu0 %v4075
      %v4120 = vpop.f32.mrf.mxu0
      %v4121 = vadd.f32 0.0, %v4120
      %v4122 = vpop.f32.mrf.mxu0
      %4123 = vdwg.mxu0
      %4124 = vmatpush.bf16.msra.mxu0 0
      %4125 = vmatpush.bf16.msra.mxu0 0
      %4126 = vmatpush.bf16.msra.mxu0 0
      %4127 = vmatpush.bf16.msra.mxu0 0
      %4128 = vmatpush.bf16.msra.mxu0 0
      %4129 = vmatpush.bf16.msra.mxu0 0
      %4130 = vmatpush.bf16.msra.mxu0 0
      %4131 = vmatpush.bf16.msra.mxu0 %v4084
      %4132 = vmatmul.bf16.gmra.mxu0 %v4075
      %v4133 = vpop.f32.mrf.mxu0
      %v4134 = vadd.f32 0.0, %v4133
      %v4135 = vpop.f32.mrf.mxu0
      %4136 = vdwg.mxu0
      %4137 = vmatpush.bf16.msra.mxu0 0
      %4138 = vmatpush.bf16.msra.mxu0 0
      %4139 = vmatpush.bf16.msra.mxu0 0
      %4140 = vmatpush.bf16.msra.mxu0 0
      %4141 = vmatpush.bf16.msra.mxu0 0
      %4142 = vmatpush.bf16.msra.mxu0 0
      %4143 = vmatpush.bf16.msra.mxu0 0
      %4144 = vmatpush.bf16.msra.mxu0 %v4087
      %4145 = vmatmul.bf16.gmra.mxu0 %v4075
      %v4146 = vpop.f32.mrf.mxu0
      %v4147 = vadd.f32 0.0, %v4146
      %v4148 = vpop.f32.mrf.mxu0
      %4149 = vdwg.mxu0
      %4150 = vmatpush.bf16.msra.mxu0 0
      %4151 = vmatpush.bf16.msra.mxu0 0
      %4152 = vmatpush.bf16.msra.mxu0 0
      %4153 = vmatpush.bf16.msra.mxu0 0
      %4154 = vmatpush.bf16.msra.mxu0 0
      %4155 = vmatpush.bf16.msra.mxu0 0
      %4156 = vmatpush.bf16.msra.mxu0 0
      %4157 = vmatpush.bf16.msra.mxu0 %v4090
      %4158 = vmatmul.bf16.gmra.mxu0 %v4075
      %v4159 = vpop.f32.mrf.mxu0
      %v4160 = vadd.f32 0.0, %v4159
      %v4161 = vpop.f32.mrf.mxu0
      %4162 = vdwg.mxu0
      %4163 = vmatpush.bf16.msra.mxu0 0
      %4164 = vmatpush.bf16.msra.mxu0 0
      %4165 = vmatpush.bf16.msra.mxu0 0
      %4166 = vmatpush.bf16.msra.mxu0 0
      %4167 = vmatpush.bf16.msra.mxu0 0
      %4168 = vmatpush.bf16.msra.mxu0 0
      %4169 = vmatpush.bf16.msra.mxu0 0
      %4170 = vmatpush.bf16.msra.mxu0 %v4093
      %4171 = vmatmul.bf16.gmra.mxu0 %v4075
      %v4172 = vpop.f32.mrf.mxu0
      %v4173 = vadd.f32 0.0, %v4172
      %v4174 = vpop.f32.mrf.mxu0
      %4175 = vdwg.mxu0
      %4176 = vmatpush.bf16.msra.mxu0 0
      %4177 = vmatpush.bf16.msra.mxu0 0
      %4178 = vmatpush.bf16.msra.mxu0 0
      %4179 = vmatpush.bf16.msra.mxu0 0
      %4180 = vmatpush.bf16.msra.mxu0 0
      %4181 = vmatpush.bf16.msra.mxu0 0
      %4182 = vmatpush.bf16.msra.mxu0 0
      %4183 = vmatpush.bf16.msra.mxu0 %v4096
      %4184 = vmatmul.bf16.gmra.mxu0 %v4075
      %v4185 = vpop.f32.mrf.mxu0
      %v4186 = vadd.f32 0.0, %v4185
      %v4187 = vpop.f32.mrf.mxu0
      %4188 = vdwg.mxu0
      %v4189 = vadd.f32 %v4023, %v4108
      %v4190 = vadd.f32 %v4024, %v4121
      %v4191 = vadd.f32 %v4025, %v4134
      %v4192 = vadd.f32 %v4026, %v4147
      %v4193 = vadd.f32 %v4027, %v4160
      %v4194 = vadd.f32 %v4028, %v4173
      %v4195 = vadd.f32 %v4029, %v4186
      %s4196 = scalar_lea.vmem %s1, 48
      %v4197 = vld [vmem:[%s4196] sm:$0x3]
      %v4198 = vld [vmem:[%s207 + $0x2] sm:$0xff]
      %v4199 = vld [vmem:[%s207 + $0xa] sm:$0x3f]
      %4201 = vst [vmem:[#allocation1] ss:$4 sm:$0xff] %v4198
      %s4203 = scalar_lea.vmem [#allocation1], 32
      %4204 = vst [vmem:[%s4203] ss:$4 sm:$0xff] %v4199
      %v4205 = vld.sshfl [vmem:[#allocation1] sm:$0xff pattern:$0x73625140]
      %v4207 = vld.sshfl [vmem:[#allocation1 + $0x8] sm:$0xff pattern:$0x73625140]
      %v4209 = vld.sshfl [vmem:[#allocation1 + $0x10] sm:$0xff pattern:$0x73625140]
      %v4211 = vld.sshfl [vmem:[#allocation1 + $0x18] sm:$0xff pattern:$0x73625140]
      %v4213 = vld.sshfl [vmem:[#allocation1 + $0x20] sm:$0xff pattern:$0x73625140]
      %v4215 = vld.sshfl [vmem:[#allocation1 + $0x28] sm:$0xff pattern:$0x73625140]
      %v4217 = vld.sshfl [vmem:[#allocation1 + $0x30] sm:$0xff pattern:$0x73625140]
      %4219 = vrot.lane.b32.xlu0 %v4205, 36
      %v4220 = vpop.permute.xlu0 %4219
      %4221 = vrot.lane.b32.xlu0 %v4207, 36
      %v4222 = vpop.permute.xlu0 %4221
      %4223 = vrot.lane.b32.xlu0 %v4209, 36
      %v4224 = vpop.permute.xlu0 %4223
      %4225 = vrot.lane.b32.xlu0 %v4211, 36
      %v4226 = vpop.permute.xlu0 %4225
      %4227 = vrot.lane.b32.xlu0 %v4213, 36
      %v4228 = vpop.permute.xlu0 %4227
      %4229 = vrot.lane.b32.xlu0 %v4215, 36
      %v4230 = vpop.permute.xlu0 %4229
      %4231 = vrot.lane.b32.xlu0 %v4217, 36
      %v4232 = vpop.permute.xlu0 %4231
      %vm4233 = vcmask 293888
      %v4234 = vsel %vm4233, %v4220, %v4222
      %v4235 = vsel %vm4233, %v4222, %v4224
      %v4236 = vsel %vm4233, %v4224, %v4226
      %v4237 = vsel %vm4233, %v4226, %v4228
      %v4238 = vsel %vm4233, %v4228, %v4230
      %v4239 = vsel %vm4233, %v4230, %v4232
      %v4241 = vsel %vm264, %v4197, 0
      %v4244 = vsel %vm268, %v4234, 0
      %v4247 = vsel %vm268, %v4235, 0
      %v4250 = vsel %vm268, %v4236, 0
      %v4253 = vsel %vm268, %v4237, 0
      %v4256 = vsel %vm268, %v4238, 0
      %v4259 = vsel %vm268, %v4239, 0
      %v4262 = vsel %vm268, %v4232, 0
      %4264 = vmatpush.bf16.msra.mxu0 0
      %4265 = vmatpush.bf16.msra.mxu0 0
      %4266 = vmatpush.bf16.msra.mxu0 0
      %4267 = vmatpush.bf16.msra.mxu0 0
      %4268 = vmatpush.bf16.msra.mxu0 0
      %4269 = vmatpush.bf16.msra.mxu0 0
      %4270 = vmatpush.bf16.msra.mxu0 0
      %4271 = vmatpush.bf16.msra.mxu0 %v4244
      %4272 = vmatmul.bf16.gmra.mxu0 %v4241
      %v4273 = vpop.f32.mrf.mxu0
      %v4274 = vadd.f32 0.0, %v4273
      %v4275 = vpop.f32.mrf.mxu0
      %4276 = vdwg.mxu0
      %4277 = vmatpush.bf16.msra.mxu0 0
      %4278 = vmatpush.bf16.msra.mxu0 0
      %4279 = vmatpush.bf16.msra.mxu0 0
      %4280 = vmatpush.bf16.msra.mxu0 0
      %4281 = vmatpush.bf16.msra.mxu0 0
      %4282 = vmatpush.bf16.msra.mxu0 0
      %4283 = vmatpush.bf16.msra.mxu0 0
      %4284 = vmatpush.bf16.msra.mxu0 %v4247
      %4285 = vmatmul.bf16.gmra.mxu0 %v4241
      %v4286 = vpop.f32.mrf.mxu0
      %v4287 = vadd.f32 0.0, %v4286
      %v4288 = vpop.f32.mrf.mxu0
      %4289 = vdwg.mxu0
      %4290 = vmatpush.bf16.msra.mxu0 0
      %4291 = vmatpush.bf16.msra.mxu0 0
      %4292 = vmatpush.bf16.msra.mxu0 0
      %4293 = vmatpush.bf16.msra.mxu0 0
      %4294 = vmatpush.bf16.msra.mxu0 0
      %4295 = vmatpush.bf16.msra.mxu0 0
      %4296 = vmatpush.bf16.msra.mxu0 0
      %4297 = vmatpush.bf16.msra.mxu0 %v4250
      %4298 = vmatmul.bf16.gmra.mxu0 %v4241
      %v4299 = vpop.f32.mrf.mxu0
      %v4300 = vadd.f32 0.0, %v4299
      %v4301 = vpop.f32.mrf.mxu0
      %4302 = vdwg.mxu0
      %4303 = vmatpush.bf16.msra.mxu0 0
      %4304 = vmatpush.bf16.msra.mxu0 0
      %4305 = vmatpush.bf16.msra.mxu0 0
      %4306 = vmatpush.bf16.msra.mxu0 0
      %4307 = vmatpush.bf16.msra.mxu0 0
      %4308 = vmatpush.bf16.msra.mxu0 0
      %4309 = vmatpush.bf16.msra.mxu0 0
      %4310 = vmatpush.bf16.msra.mxu0 %v4253
      %4311 = vmatmul.bf16.gmra.mxu0 %v4241
      %v4312 = vpop.f32.mrf.mxu0
      %v4313 = vadd.f32 0.0, %v4312
      %v4314 = vpop.f32.mrf.mxu0
      %4315 = vdwg.mxu0
      %4316 = vmatpush.bf16.msra.mxu0 0
      %4317 = vmatpush.bf16.msra.mxu0 0
      %4318 = vmatpush.bf16.msra.mxu0 0
      %4319 = vmatpush.bf16.msra.mxu0 0
      %4320 = vmatpush.bf16.msra.mxu0 0
      %4321 = vmatpush.bf16.msra.mxu0 0
      %4322 = vmatpush.bf16.msra.mxu0 0
      %4323 = vmatpush.bf16.msra.mxu0 %v4256
      %4324 = vmatmul.bf16.gmra.mxu0 %v4241
      %v4325 = vpop.f32.mrf.mxu0
      %v4326 = vadd.f32 0.0, %v4325
      %v4327 = vpop.f32.mrf.mxu0
      %4328 = vdwg.mxu0
      %4329 = vmatpush.bf16.msra.mxu0 0
      %4330 = vmatpush.bf16.msra.mxu0 0
      %4331 = vmatpush.bf16.msra.mxu0 0
      %4332 = vmatpush.bf16.msra.mxu0 0
      %4333 = vmatpush.bf16.msra.mxu0 0
      %4334 = vmatpush.bf16.msra.mxu0 0
      %4335 = vmatpush.bf16.msra.mxu0 0
      %4336 = vmatpush.bf16.msra.mxu0 %v4259
      %4337 = vmatmul.bf16.gmra.mxu0 %v4241
      %v4338 = vpop.f32.mrf.mxu0
      %v4339 = vadd.f32 0.0, %v4338
      %v4340 = vpop.f32.mrf.mxu0
      %4341 = vdwg.mxu0
      %4342 = vmatpush.bf16.msra.mxu0 0
      %4343 = vmatpush.bf16.msra.mxu0 0
      %4344 = vmatpush.bf16.msra.mxu0 0
      %4345 = vmatpush.bf16.msra.mxu0 0
      %4346 = vmatpush.bf16.msra.mxu0 0
      %4347 = vmatpush.bf16.msra.mxu0 0
      %4348 = vmatpush.bf16.msra.mxu0 0
      %4349 = vmatpush.bf16.msra.mxu0 %v4262
      %4350 = vmatmul.bf16.gmra.mxu0 %v4241
      %v4351 = vpop.f32.mrf.mxu0
      %v4352 = vadd.f32 0.0, %v4351
      %v4353 = vpop.f32.mrf.mxu0
      %4354 = vdwg.mxu0
      %v4355 = vadd.f32 %v4189, %v4274
      %v4356 = vadd.f32 %v4190, %v4287
      %v4357 = vadd.f32 %v4191, %v4300
      %v4358 = vadd.f32 %v4192, %v4313
      %v4359 = vadd.f32 %v4193, %v4326
      %v4360 = vadd.f32 %v4194, %v4339
      %v4361 = vadd.f32 %v4195, %v4352
      %s4362 = scalar_lea.vmem %s1, 50
      %v4363 = vld [vmem:[%s4362] sm:$0x3]
      %v4364 = vld [vmem:[%s207 + $0x2] sm:$0xff]
      %v4365 = vld [vmem:[%s207 + $0xa] sm:$0x3f]
      %4367 = vst [vmem:[#allocation1] ss:$4 sm:$0xff] %v4364
      %s4369 = scalar_lea.vmem [#allocation1], 32
      %4370 = vst [vmem:[%s4369] ss:$4 sm:$0xff] %v4365
      %v4371 = vld.sshfl [vmem:[#allocation1] sm:$0xff pattern:$0x73625140]
      %v4373 = vld.sshfl [vmem:[#allocation1 + $0x8] sm:$0xff pattern:$0x73625140]
      %v4375 = vld.sshfl [vmem:[#allocation1 + $0x10] sm:$0xff pattern:$0x73625140]
      %v4377 = vld.sshfl [vmem:[#allocation1 + $0x18] sm:$0xff pattern:$0x73625140]
      %v4379 = vld.sshfl [vmem:[#allocation1 + $0x20] sm:$0xff pattern:$0x73625140]
      %v4381 = vld.sshfl [vmem:[#allocation1 + $0x28] sm:$0xff pattern:$0x73625140]
      %v4383 = vld.sshfl [vmem:[#allocation1 + $0x30] sm:$0xff pattern:$0x73625140]
      %4385 = vrot.lane.b32.xlu0 %v4371, 35
      %v4386 = vpop.permute.xlu0 %4385
      %4387 = vrot.lane.b32.xlu0 %v4373, 35
      %v4388 = vpop.permute.xlu0 %4387
      %4389 = vrot.lane.b32.xlu0 %v4375, 35
      %v4390 = vpop.permute.xlu0 %4389
      %4391 = vrot.lane.b32.xlu0 %v4377, 35
      %v4392 = vpop.permute.xlu0 %4391
      %4393 = vrot.lane.b32.xlu0 %v4379, 35
      %v4394 = vpop.permute.xlu0 %4393
      %4395 = vrot.lane.b32.xlu0 %v4381, 35
      %v4396 = vpop.permute.xlu0 %4395
      %4397 = vrot.lane.b32.xlu0 %v4383, 35
      %v4398 = vpop.permute.xlu0 %4397
      %vm4399 = vcmask 285696
      %v4400 = vsel %vm4399, %v4386, %v4388
      %v4401 = vsel %vm4399, %v4388, %v4390
      %v4402 = vsel %vm4399, %v4390, %v4392
      %v4403 = vsel %vm4399, %v4392, %v4394
      %v4404 = vsel %vm4399, %v4394, %v4396
      %v4405 = vsel %vm4399, %v4396, %v4398
      %v4407 = vsel %vm264, %v4363, 0
      %v4410 = vsel %vm268, %v4400, 0
      %v4413 = vsel %vm268, %v4401, 0
      %v4416 = vsel %vm268, %v4402, 0
      %v4419 = vsel %vm268, %v4403, 0
      %v4422 = vsel %vm268, %v4404, 0
      %v4425 = vsel %vm268, %v4405, 0
      %v4428 = vsel %vm268, %v4398, 0
      %4430 = vmatpush.bf16.msra.mxu0 0
      %4431 = vmatpush.bf16.msra.mxu0 0
      %4432 = vmatpush.bf16.msra.mxu0 0
      %4433 = vmatpush.bf16.msra.mxu0 0
      %4434 = vmatpush.bf16.msra.mxu0 0
      %4435 = vmatpush.bf16.msra.mxu0 0
      %4436 = vmatpush.bf16.msra.mxu0 0
      %4437 = vmatpush.bf16.msra.mxu0 %v4410
      %4438 = vmatmul.bf16.gmra.mxu0 %v4407
      %v4439 = vpop.f32.mrf.mxu0
      %v4440 = vadd.f32 0.0, %v4439
      %v4441 = vpop.f32.mrf.mxu0
      %4442 = vdwg.mxu0
      %4443 = vmatpush.bf16.msra.mxu0 0
      %4444 = vmatpush.bf16.msra.mxu0 0
      %4445 = vmatpush.bf16.msra.mxu0 0
      %4446 = vmatpush.bf16.msra.mxu0 0
      %4447 = vmatpush.bf16.msra.mxu0 0
      %4448 = vmatpush.bf16.msra.mxu0 0
      %4449 = vmatpush.bf16.msra.mxu0 0
      %4450 = vmatpush.bf16.msra.mxu0 %v4413
      %4451 = vmatmul.bf16.gmra.mxu0 %v4407
      %v4452 = vpop.f32.mrf.mxu0
      %v4453 = vadd.f32 0.0, %v4452
      %v4454 = vpop.f32.mrf.mxu0
      %4455 = vdwg.mxu0
      %4456 = vmatpush.bf16.msra.mxu0 0
      %4457 = vmatpush.bf16.msra.mxu0 0
      %4458 = vmatpush.bf16.msra.mxu0 0
      %4459 = vmatpush.bf16.msra.mxu0 0
      %4460 = vmatpush.bf16.msra.mxu0 0
      %4461 = vmatpush.bf16.msra.mxu0 0
      %4462 = vmatpush.bf16.msra.mxu0 0
      %4463 = vmatpush.bf16.msra.mxu0 %v4416
      %4464 = vmatmul.bf16.gmra.mxu0 %v4407
      %v4465 = vpop.f32.mrf.mxu0
      %v4466 = vadd.f32 0.0, %v4465
      %v4467 = vpop.f32.mrf.mxu0
      %4468 = vdwg.mxu0
      %4469 = vmatpush.bf16.msra.mxu0 0
      %4470 = vmatpush.bf16.msra.mxu0 0
      %4471 = vmatpush.bf16.msra.mxu0 0
      %4472 = vmatpush.bf16.msra.mxu0 0
      %4473 = vmatpush.bf16.msra.mxu0 0
      %4474 = vmatpush.bf16.msra.mxu0 0
      %4475 = vmatpush.bf16.msra.mxu0 0
      %4476 = vmatpush.bf16.msra.mxu0 %v4419
      %4477 = vmatmul.bf16.gmra.mxu0 %v4407
      %v4478 = vpop.f32.mrf.mxu0
      %v4479 = vadd.f32 0.0, %v4478
      %v4480 = vpop.f32.mrf.mxu0
      %4481 = vdwg.mxu0
      %4482 = vmatpush.bf16.msra.mxu0 0
      %4483 = vmatpush.bf16.msra.mxu0 0
      %4484 = vmatpush.bf16.msra.mxu0 0
      %4485 = vmatpush.bf16.msra.mxu0 0
      %4486 = vmatpush.bf16.msra.mxu0 0
      %4487 = vmatpush.bf16.msra.mxu0 0
      %4488 = vmatpush.bf16.msra.mxu0 0
      %4489 = vmatpush.bf16.msra.mxu0 %v4422
      %4490 = vmatmul.bf16.gmra.mxu0 %v4407
      %v4491 = vpop.f32.mrf.mxu0
      %v4492 = vadd.f32 0.0, %v4491
      %v4493 = vpop.f32.mrf.mxu0
      %4494 = vdwg.mxu0
      %4495 = vmatpush.bf16.msra.mxu0 0
      %4496 = vmatpush.bf16.msra.mxu0 0
      %4497 = vmatpush.bf16.msra.mxu0 0
      %4498 = vmatpush.bf16.msra.mxu0 0
      %4499 = vmatpush.bf16.msra.mxu0 0
      %4500 = vmatpush.bf16.msra.mxu0 0
      %4501 = vmatpush.bf16.msra.mxu0 0
      %4502 = vmatpush.bf16.msra.mxu0 %v4425
      %4503 = vmatmul.bf16.gmra.mxu0 %v4407
      %v4504 = vpop.f32.mrf.mxu0
      %v4505 = vadd.f32 0.0, %v4504
      %v4506 = vpop.f32.mrf.mxu0
      %4507 = vdwg.mxu0
      %4508 = vmatpush.bf16.msra.mxu0 0
      %4509 = vmatpush.bf16.msra.mxu0 0
      %4510 = vmatpush.bf16.msra.mxu0 0
      %4511 = vmatpush.bf16.msra.mxu0 0
      %4512 = vmatpush.bf16.msra.mxu0 0
      %4513 = vmatpush.bf16.msra.mxu0 0
      %4514 = vmatpush.bf16.msra.mxu0 0
      %4515 = vmatpush.bf16.msra.mxu0 %v4428
      %4516 = vmatmul.bf16.gmra.mxu0 %v4407
      %v4517 = vpop.f32.mrf.mxu0
      %v4518 = vadd.f32 0.0, %v4517
      %v4519 = vpop.f32.mrf.mxu0
      %4520 = vdwg.mxu0
      %v4521 = vadd.f32 %v4355, %v4440
      %v4522 = vadd.f32 %v4356, %v4453
      %v4523 = vadd.f32 %v4357, %v4466
      %v4524 = vadd.f32 %v4358, %v4479
      %v4525 = vadd.f32 %v4359, %v4492
      %v4526 = vadd.f32 %v4360, %v4505
      %v4527 = vadd.f32 %v4361, %v4518
      %s4528 = scalar_lea.vmem %s1, 52
      %v4529 = vld [vmem:[%s4528] sm:$0x3]
      %v4530 = vld [vmem:[%s207 + $0x2] sm:$0xff]
      %v4531 = vld [vmem:[%s207 + $0xa] sm:$0x3f]
      %4533 = vst [vmem:[#allocation1] ss:$4 sm:$0xff] %v4530
      %s4535 = scalar_lea.vmem [#allocation1], 32
      %4536 = vst [vmem:[%s4535] ss:$4 sm:$0xff] %v4531
      %v4537 = vld.sshfl [vmem:[#allocation1] sm:$0xff pattern:$0x73625140]
      %v4539 = vld.sshfl [vmem:[#allocation1 + $0x8] sm:$0xff pattern:$0x73625140]
      %v4541 = vld.sshfl [vmem:[#allocation1 + $0x10] sm:$0xff pattern:$0x73625140]
      %v4543 = vld.sshfl [vmem:[#allocation1 + $0x18] sm:$0xff pattern:$0x73625140]
      %v4545 = vld.sshfl [vmem:[#allocation1 + $0x20] sm:$0xff pattern:$0x73625140]
      %v4547 = vld.sshfl [vmem:[#allocation1 + $0x28] sm:$0xff pattern:$0x73625140]
      %v4549 = vld.sshfl [vmem:[#allocation1 + $0x30] sm:$0xff pattern:$0x73625140]
      %4551 = vrot.lane.b32.xlu0 %v4537, 34
      %v4552 = vpop.permute.xlu0 %4551
      %4553 = vrot.lane.b32.xlu0 %v4539, 34
      %v4554 = vpop.permute.xlu0 %4553
      %4555 = vrot.lane.b32.xlu0 %v4541, 34
      %v4556 = vpop.permute.xlu0 %4555
      %4557 = vrot.lane.b32.xlu0 %v4543, 34
      %v4558 = vpop.permute.xlu0 %4557
      %4559 = vrot.lane.b32.xlu0 %v4545, 34
      %v4560 = vpop.permute.xlu0 %4559
      %4561 = vrot.lane.b32.xlu0 %v4547, 34
      %v4562 = vpop.permute.xlu0 %4561
      %4563 = vrot.lane.b32.xlu0 %v4549, 34
      %v4564 = vpop.permute.xlu0 %4563
      %vm4565 = vcmask 277504
      %v4566 = vsel %vm4565, %v4552, %v4554
      %v4567 = vsel %vm4565, %v4554, %v4556
      %v4568 = vsel %vm4565, %v4556, %v4558
      %v4569 = vsel %vm4565, %v4558, %v4560
      %v4570 = vsel %vm4565, %v4560, %v4562
      %v4571 = vsel %vm4565, %v4562, %v4564
      %v4573 = vsel %vm264, %v4529, 0
      %v4576 = vsel %vm268, %v4566, 0
      %v4579 = vsel %vm268, %v4567, 0
      %v4582 = vsel %vm268, %v4568, 0
      %v4585 = vsel %vm268, %v4569, 0
      %v4588 = vsel %vm268, %v4570, 0
      %v4591 = vsel %vm268, %v4571, 0
      %v4594 = vsel %vm268, %v4564, 0
      %4596 = vmatpush.bf16.msra.mxu0 0
      %4597 = vmatpush.bf16.msra.mxu0 0
      %4598 = vmatpush.bf16.msra.mxu0 0
      %4599 = vmatpush.bf16.msra.mxu0 0
      %4600 = vmatpush.bf16.msra.mxu0 0
      %4601 = vmatpush.bf16.msra.mxu0 0
      %4602 = vmatpush.bf16.msra.mxu0 0
      %4603 = vmatpush.bf16.msra.mxu0 %v4576
      %4604 = vmatmul.bf16.gmra.mxu0 %v4573
      %v4605 = vpop.f32.mrf.mxu0
      %v4606 = vadd.f32 0.0, %v4605
      %v4607 = vpop.f32.mrf.mxu0
      %4608 = vdwg.mxu0
      %4609 = vmatpush.bf16.msra.mxu0 0
      %4610 = vmatpush.bf16.msra.mxu0 0
      %4611 = vmatpush.bf16.msra.mxu0 0
      %4612 = vmatpush.bf16.msra.mxu0 0
      %4613 = vmatpush.bf16.msra.mxu0 0
      %4614 = vmatpush.bf16.msra.mxu0 0
      %4615 = vmatpush.bf16.msra.mxu0 0
      %4616 = vmatpush.bf16.msra.mxu0 %v4579
      %4617 = vmatmul.bf16.gmra.mxu0 %v4573
      %v4618 = vpop.f32.mrf.mxu0
      %v4619 = vadd.f32 0.0, %v4618
      %v4620 = vpop.f32.mrf.mxu0
      %4621 = vdwg.mxu0
      %4622 = vmatpush.bf16.msra.mxu0 0
      %4623 = vmatpush.bf16.msra.mxu0 0
      %4624 = vmatpush.bf16.msra.mxu0 0
      %4625 = vmatpush.bf16.msra.mxu0 0
      %4626 = vmatpush.bf16.msra.mxu0 0
      %4627 = vmatpush.bf16.msra.mxu0 0
      %4628 = vmatpush.bf16.msra.mxu0 0
      %4629 = vmatpush.bf16.msra.mxu0 %v4582
      %4630 = vmatmul.bf16.gmra.mxu0 %v4573
      %v4631 = vpop.f32.mrf.mxu0
      %v4632 = vadd.f32 0.0, %v4631
      %v4633 = vpop.f32.mrf.mxu0
      %4634 = vdwg.mxu0
      %4635 = vmatpush.bf16.msra.mxu0 0
      %4636 = vmatpush.bf16.msra.mxu0 0
      %4637 = vmatpush.bf16.msra.mxu0 0
      %4638 = vmatpush.bf16.msra.mxu0 0
      %4639 = vmatpush.bf16.msra.mxu0 0
      %4640 = vmatpush.bf16.msra.mxu0 0
      %4641 = vmatpush.bf16.msra.mxu0 0
      %4642 = vmatpush.bf16.msra.mxu0 %v4585
      %4643 = vmatmul.bf16.gmra.mxu0 %v4573
      %v4644 = vpop.f32.mrf.mxu0
      %v4645 = vadd.f32 0.0, %v4644
      %v4646 = vpop.f32.mrf.mxu0
      %4647 = vdwg.mxu0
      %4648 = vmatpush.bf16.msra.mxu0 0
      %4649 = vmatpush.bf16.msra.mxu0 0
      %4650 = vmatpush.bf16.msra.mxu0 0
      %4651 = vmatpush.bf16.msra.mxu0 0
      %4652 = vmatpush.bf16.msra.mxu0 0
      %4653 = vmatpush.bf16.msra.mxu0 0
      %4654 = vmatpush.bf16.msra.mxu0 0
      %4655 = vmatpush.bf16.msra.mxu0 %v4588
      %4656 = vmatmul.bf16.gmra.mxu0 %v4573
      %v4657 = vpop.f32.mrf.mxu0
      %v4658 = vadd.f32 0.0, %v4657
      %v4659 = vpop.f32.mrf.mxu0
      %4660 = vdwg.mxu0
      %4661 = vmatpush.bf16.msra.mxu0 0
      %4662 = vmatpush.bf16.msra.mxu0 0
      %4663 = vmatpush.bf16.msra.mxu0 0
      %4664 = vmatpush.bf16.msra.mxu0 0
      %4665 = vmatpush.bf16.msra.mxu0 0
      %4666 = vmatpush.bf16.msra.mxu0 0
      %4667 = vmatpush.bf16.msra.mxu0 0
      %4668 = vmatpush.bf16.msra.mxu0 %v4591
      %4669 = vmatmul.bf16.gmra.mxu0 %v4573
      %v4670 = vpop.f32.mrf.mxu0
      %v4671 = vadd.f32 0.0, %v4670
      %v4672 = vpop.f32.mrf.mxu0
      %4673 = vdwg.mxu0
      %4674 = vmatpush.bf16.msra.mxu0 0
      %4675 = vmatpush.bf16.msra.mxu0 0
      %4676 = vmatpush.bf16.msra.mxu0 0
      %4677 = vmatpush.bf16.msra.mxu0 0
      %4678 = vmatpush.bf16.msra.mxu0 0
      %4679 = vmatpush.bf16.msra.mxu0 0
      %4680 = vmatpush.bf16.msra.mxu0 0
      %4681 = vmatpush.bf16.msra.mxu0 %v4594
      %4682 = vmatmul.bf16.gmra.mxu0 %v4573
      %v4683 = vpop.f32.mrf.mxu0
      %v4684 = vadd.f32 0.0, %v4683
      %v4685 = vpop.f32.mrf.mxu0
      %4686 = vdwg.mxu0
      %v4687 = vadd.f32 %v4521, %v4606
      %v4688 = vadd.f32 %v4522, %v4619
      %v4689 = vadd.f32 %v4523, %v4632
      %v4690 = vadd.f32 %v4524, %v4645
      %v4691 = vadd.f32 %v4525, %v4658
      %v4692 = vadd.f32 %v4526, %v4671
      %v4693 = vadd.f32 %v4527, %v4684
      %v4694 = vld [vmem:[%s2] sm:$0xf]
      %4696 = vset.pattern.permute.xlu0 0
      %4697 = vperm.xlu0 %4696, %v4694
      %v4698 = vpop.permute.xlu0 %4697
      %v4700 = vadd.f32 %v4687, %v4698
      %v4701 = vadd.f32 %v4688, %v4698
      %v4702 = vadd.f32 %v4689, %v4698
      %v4703 = vadd.f32 %v4690, %v4698
      %v4704 = vadd.f32 %v4691, %v4698
      %v4705 = vadd.f32 %v4692, %v4698
      %v4706 = vadd.f32 %v4693, %v4698
      %v4707 = vld [vmem:[%s212] sm:$0xff]
      %v4708 = vld [vmem:[%s212 + $0x8] sm:$0xff]
      %v4709 = vunpack.c.l.bf16 %v4707
      %v4710 = vunpack.c.h.bf16 %v4707
      %v4711 = vunpack.c.l.bf16 %v4708
      %v4712 = vunpack.c.h.bf16 %v4708
      %4717 = vst [vmem:[#allocation1] ss:$2 sm:$0xff] %v4709
      %s4718 = scalar_lea.vmem [#allocation1], 16
      %4719 = vst [vmem:[%s4718] ss:$2 sm:$0xff] %v4710
      %s4720 = scalar_lea.vmem [#allocation1], 32
      %4721 = vst [vmem:[%s4720] ss:$2 sm:$0xff] %v4711
      %s4722 = scalar_lea.vmem [#allocation1], 48
      %4723 = vst [vmem:[%s4722] ss:$2 sm:$0xff] %v4712
      %v4724 = vld.sshfl [vmem:[#allocation1] sm:$0xff pattern:$0x75316420]
      %v4725 = vld.sshfl [vmem:[#allocation1 + $0x8] sm:$0xff pattern:$0x75316420]
      %v4726 = vld.sshfl [vmem:[#allocation1 + $0x10] sm:$0xff pattern:$0x75316420]
      %v4727 = vld.sshfl [vmem:[#allocation1 + $0x18] sm:$0xff pattern:$0x75316420]
      %v4728 = vld.sshfl [vmem:[#allocation1 + $0x20] sm:$0xff pattern:$0x75316420]
      %v4729 = vld.sshfl [vmem:[#allocation1 + $0x28] sm:$0xff pattern:$0x75316420]
      %v4730 = vld.sshfl [vmem:[#allocation1 + $0x30] sm:$0xff pattern:$0x75316420]
      %v4731 = vld.sshfl [vmem:[#allocation1 + $0x38] sm:$0xff pattern:$0x75316420]
      %4732 = vrot.lane.b32.xlu0 %v4724, 17
      %v4733 = vpop.permute.xlu0 %4732
      %4734 = vrot.lane.b32.xlu0 %v4725, 17
      %v4735 = vpop.permute.xlu0 %4734
      %4736 = vrot.lane.b32.xlu0 %v4726, 17
      %v4737 = vpop.permute.xlu0 %4736
      %4738 = vrot.lane.b32.xlu0 %v4727, 17
      %v4739 = vpop.permute.xlu0 %4738
      %4740 = vrot.lane.b32.xlu0 %v4728, 17
      %v4741 = vpop.permute.xlu0 %4740
      %4742 = vrot.lane.b32.xlu0 %v4729, 17
      %v4743 = vpop.permute.xlu0 %4742
      %4744 = vrot.lane.b32.xlu0 %v4730, 17
      %v4745 = vpop.permute.xlu0 %4744
      %4746 = vrot.lane.b32.xlu0 %v4731, 17
      %v4747 = vpop.permute.xlu0 %4746
      %vm4748 = vcmask 138240
      %v4749 = vsel %vm4748, %v4733, %v4735
      %v4750 = vsel %vm4748, %v4735, %v4737
      %v4751 = vsel %vm4748, %v4737, %v4739
      %v4752 = vsel %vm4748, %v4739, %v4741
      %v4753 = vsel %vm4748, %v4741, %v4743
      %v4754 = vsel %vm4748, %v4743, %v4745
      %v4755 = vsel %vm4748, %v4745, %v4747
      %v4763 = vadd.f32 %v4700, %v4749
      %v4764 = vadd.f32 %v4701, %v4750
      %v4765 = vadd.f32 %v4702, %v4751
      %v4766 = vadd.f32 %v4703, %v4752
      %v4767 = vadd.f32 %v4704, %v4753
      %v4768 = vadd.f32 %v4705, %v4754
      %v4769 = vadd.f32 %v4706, %v4755
      %v4770 = vmax.f32 %v4763, 0.0
      %v4771 = vmax.f32 %v4764, 0.0
      %v4772 = vmax.f32 %v4765, 0.0
      %v4773 = vmax.f32 %v4766, 0.0
      %v4774 = vmax.f32 %v4767, 0.0
      %v4775 = vmax.f32 %v4768, 0.0
      %v4776 = vmax.f32 %v4769, 0.0
      %v4783 = vrot.slane %v4771, 4
      %v4784 = vrot.slane %v4773, 4
      %v4785 = vrot.slane %v4775, 4
      %vm4786 = vcmask 1043456
      %v4787 = vsel %vm4786, %v4770, %v4783
      %v4788 = vsel %vm4786, %v4772, %v4784
      %v4789 = vsel %vm4786, %v4774, %v4785
      %4793 = vst [vmem:[%s217] sm:$0xff] %v4787
      %4794 = vst [vmem:[%s217 + $0x8] sm:$0xff] %v4788
      %4795 = vst [vmem:[%s217 + $0x10] sm:$0xff] %v4789
      %vm4796 = vcmask 257024
      %4797 = vst.msk [vmem:[%s217 + $0x18] sm:$0xf] %vm4796, %v4776
      %p4798 = scmp.lt.s32.totalorder %s15, 1
      %s4799 = scalar_select %p4798, %s15, 1
      %s4800 = smul.addr %s4799, 7
      %s4801 = smul.addr %s4800, 4
      %s4802 = scalar_lea.vmem %s4, %s4801
      // Predicated region
      $region37: #{a_call__.3} parent=35 // pred_check
        %p4803 = pneg %p127
      $region38: #{a_call__.3} parent=35 // pred_check_branch
        %4805 = sbr.rel (%p4803) target = $region40
      $region39: #{a_call__.3} parent=35 // pred_region
        _
      $region40: #{a_call__.3} parent=35 // pred_fallthru
        _
    $region36: #{a_call__.3} parent=5 // pred_fallthru
      _
    %p4806 = scmp.le.s32.totalorder 2, %s10
    // Predicated region
    $region41: #{a_call__.3} parent=5 // pred_check
      %p4807 = pneg %p4806
    $region42: #{a_call__.3} parent=5 // pred_check_branch
      %4809 = sbr.rel (%p4807) target = $region44
    $region43: #{a_call__.3} parent=5 // pred_region
      %s4810 = ssub.s32 %s10, 2
      // Predicated region
      $region45: #{a_call__.3} parent=43 // pred_check
        %p4811 = pneg %p133
      $region46: #{a_call__.3} parent=43 // pred_check_branch
        %4813 = sbr.rel (%p4811) target = $region48
      $region47: #{a_call__.3} parent=43 // pred_region
        %p4814 = scmp.lt.s32.totalorder %s16, 1
        %s4815 = scalar_select %p4814, %s16, 1
        %s4816 = smul.addr %s4815, 7
        %s4817 = smul.addr %s4816, 4
        %s4818 = scalar_lea.vmem %s4, %s4817
      $region48: #{a_call__.3} parent=43 // pred_fallthru
        _
    $region44: #{a_call__.3} parent=5 // pred_fallthru
      _
  $region6: #{a_call__.3} parent=0 // loop_footer
    %s14 = sadd.s32 1, %s10
  $region7: #{a_call__.3} parent=0 // loop_footer_branch
    %9 = sbr.rel target = $region3
  $region8: #{a_call__.3} parent=0 // loop_exit
    _

</llo_original>
